<compile_context>
chip_gen: v5e
topology: v5e:2x2
jax: 0.10.0
libtpu: 0.0.40
codegen_flags: <defaults>
</compile_context>

<pallas_src>
import functools

import numpy as np

import jax
import jax.numpy as jnp
from jax import lax
from jax.experimental import pallas as pl
from jax.experimental.pallas import tpu as pltpu


_INV_SQRT2 = 0.7071067811865476


def _gelu(v):
    # exact erf GELU == torch.nn.GELU() default
    return 0.5 * v * (1.0 + lax.erf(v * _INV_SQRT2))


# ----------------------------------------------------------------------------
# Fused kernel
# ----------------------------------------------------------------------------
def _upconv_block(x, tm_ref, tb_ref, cm_ref, cb_ref):
    """One UpConv block on lane-dense row slabs.

    x:  (B, H, W*Cin) value  (NHWC with W and C merged onto the lane axis)
    tm_ref: (3, W*Cin, 2W*Cin)  subpixel phase matrices of the ConvTranspose2d
            [0]=even rows <- row a, [1]=odd rows <- row a, [2]=odd rows <- row a+1
    cm_ref: (3, 2W*Cin, 2W*Cout) row-Toeplitz matrices of the 3x3 Conv2d (one per dh)
    Returns (B, 2H, 2W*Cout).
    """
    B, H, L = x.shape
    R = B * H
    xf = x.reshape(R, L)
    # row a+1 neighbour (zero row at the bottom of every batch element)
    xdn = jnp.concatenate([x[:, 1:, :], jnp.zeros((B, 1, L), x.dtype)], axis=1)
    xdnf = xdn.reshape(R, L)

    # --- ConvTranspose2d(k=3, s=2, p=1, op=1) + GELU via subpixel phases -----
    ye = _gelu(jnp.dot(xf, tm_ref[0], preferred_element_type=jnp.float32)
               + tb_ref[...])
    yo = _gelu(jnp.dot(xf, tm_ref[1], preferred_element_type=jnp.float32)
               + jnp.dot(xdnf, tm_ref[2], preferred_element_type=jnp.float32)
               + tb_ref[...])
    H2 = 2 * H
    L2 = 2 * L
    # interleave even/odd output rows: row 2a <- ye[a], row 2a+1 <- yo[a]
    yf = jnp.stack([ye, yo], axis=1).reshape(R * 2, L2)          # (B*2H, 2W*Cin)

    # --- Conv2d(k=3, p=1) + GELU: 3 row matmuls, shift the outputs along H ---
    N = cm_ref.shape[2]
    u0 = jnp.dot(yf, cm_ref[0], preferred_element_type=jnp.float32).reshape(B, H2, N)
    u1 = (jnp.dot(yf, cm_ref[1], preferred_element_type=jnp.float32)
          + cb_ref[...]).reshape(B, H2, N)
    u2 = jnp.dot(yf, cm_ref[2], preferred_element_type=jnp.float32).reshape(B, H2, N)
    zrow = jnp.zeros((B, 1, N), jnp.float32)
    out = (u1
           + jnp.concatenate([zrow, u0[:, :H2 - 1, :]], axis=1)   # src row h-1
           + jnp.concatenate([u2[:, 1:, :], zrow], axis=1))       # src row h+1
    return _gelu(out)                                             # (B, 2H, 2W*Cout)


def _dcnn_kernel(z_ref, wl0_ref, bl0_ref, wl1_ref, bl1_ref,
                 tm0, tb0, cm0, cb0,
                 tm1, tb1, cm1, cb1,
                 tm2, tb2, cm2, cb2,
                 tm3, tb3, cm3, cb3,
                 out_ref):
    B = z_ref.shape[0]
    z = z_ref[...]
    # Linear + GELU; weight columns pre-grouped so row i of the 2x2 map comes
    # from its own weight slice (no minor-dim-splitting reshape in-kernel).
    h0 = _gelu(jnp.dot(z, wl0_ref[...], preferred_element_type=jnp.float32)
               + bl0_ref[...])                                    # (B, 2*c2)  row i=0
    h1 = _gelu(jnp.dot(z, wl1_ref[...], preferred_element_type=jnp.float32)
               + bl1_ref[...])                                    # (B, 2*c2)  row i=1
    x = jnp.stack([h0, h1], axis=1)                               # (B, 2, 2*c2)

    x = _upconv_block(x, tm0, tb0, cm0, cb0)                      # (B, 4,  4*c2)
    x = _upconv_block(x, tm1, tb1, cm1, cb1)                      # (B, 8,  8*c2)
    x = _upconv_block(x, tm2, tb2, cm2, cb2)                      # (B, 16, 16*c2)
    x = _upconv_block(x, tm3, tb3, cm3, cb3)                      # (B, 32, 32*ch)

    out_ref[...] = x                                              # lane-dense output


# ----------------------------------------------------------------------------
# Parameters (PyTorch layouts) + one-time weight preprocessing
# ----------------------------------------------------------------------------
def init_dcnn_params(key, z_size, channels):
    c2 = 2 * channels
    params = {}
    k = iter(jax.random.split(key, 32))

    def rnd(shape, scale=0.1):
        return scale * jax.random.normal(next(k), shape, dtype=jnp.float32)

    params["lin_w"] = rnd((c2 * 4, z_size))      # nn.Linear weight (out, in)
    params["lin_b"] = rnd((c2 * 4,))
    io = [(c2, c2), (c2, c2), (c2, c2), (c2, channels)]
    for i, (cin, cout) in enumerate(io):
        params[f"up{i}_tw"] = rnd((cin, cin, 3, 3))   # ConvTranspose2d (in,out,kh,kw)
        params[f"up{i}_tb"] = rnd((cin,))
        params[f"up{i}_cw"] = rnd((cout, cin, 3, 3))  # Conv2d (out,in,kh,kw)
        params[f"up{i}_cb"] = rnd((cout,))
    return params


def _tconv_phase_mats(tw, w_in):
    """ConvTranspose2d(k=3, s=2, p=1, op=1) -> 3 subpixel-phase matmul matrices.

    Returns (3, w_in*cin, 2*w_in*cout):
      [0] even output rows <- input row a
      [1] odd  output rows <- input row a
      [2] odd  output rows <- input row a+1
    """
    tw = np.asarray(tw, np.float32)                        # (cin, cout, 3, 3)
    cin, cout = int(tw.shape[0]), int(tw.shape[1])
    wf = np.transpose(tw[:, :, ::-1, ::-1], (2, 3, 0, 1))  # flipped, (dh,dw,ci,co)
    mats = np.zeros((3, w_in * cin, 2 * w_in * cout), np.float32)

    def put(m, src, dst, ker):
        mats[m, src * cin:(src + 1) * cin, dst * cout:(dst + 1) * cout] = ker

    for b in range(w_in):
        put(0, b, 2 * b, wf[1, 1]); put(0, b, 2 * b + 1, wf[1, 0])
        put(1, b, 2 * b, wf[0, 1]); put(1, b, 2 * b + 1, wf[0, 0])
        put(2, b, 2 * b, wf[2, 1]); put(2, b, 2 * b + 1, wf[2, 0])
        if b + 1 < w_in:
            put(0, b + 1, 2 * b + 1, wf[1, 2])
            put(1, b + 1, 2 * b + 1, wf[0, 2])
            put(2, b + 1, 2 * b + 1, wf[2, 2])
    return jnp.asarray(mats)


def _conv_row_mats(cw, w):
    """Conv2d(k=3, p=1, s=1) -> 3 row-Toeplitz matmul matrices (3, w*cin, w*cout).

    mats[dh] maps an input row (length w*cin) to the contribution it makes to
    the output row h = src_row + 1 - dh; the 1-pixel W padding is folded in.
    """
    cw = np.asarray(cw, np.float32)                        # (cout, cin, 3, 3)
    cout, cin = int(cw.shape[0]), int(cw.shape[1])
    wc = np.transpose(cw, (2, 3, 1, 0))                    # (dh, dw, cin, cout)
    mats = np.zeros((3, w * cin, w * cout), np.float32)
    for dst in range(w):
        for dw in range(3):
            src = dst - 1 + dw
            if 0 <= src < w:
                mats[:, src * cin:(src + 1) * cin,
                     dst * cout:(dst + 1) * cout] = wc[:, dw]
    return jnp.asarray(mats)


def prepare_params(params, z_size, channels):
    """Hoist all per-call weight transforms out of the forward pass."""
    c2 = 2 * channels
    prep = {}

    # Linear: transpose + regroup columns so column i*2*c2 + j*c2 + c is the
    # PyTorch feature c*4 + i*2 + j (folds nn.Unflatten + NCHW->NHWC into the
    # weight), then split by spatial row i (avoids a minor-splitting reshape).
    lw = np.asarray(params["lin_w"], np.float32).reshape(c2, 2, 2, z_size)
    lw = lw.transpose(1, 2, 0, 3).reshape(4 * c2, z_size).T       # (z, 4*c2)
    lb = np.asarray(params["lin_b"], np.float32).reshape(c2, 2, 2)
    lb = lb.transpose(1, 2, 0).reshape(4 * c2)
    prep["lin_w0"] = jnp.asarray(lw[:, :2 * c2])
    prep["lin_w1"] = jnp.asarray(lw[:, 2 * c2:])
    prep["lin_b0"] = jnp.asarray(lb[:2 * c2].reshape(1, 2 * c2))
    prep["lin_b1"] = jnp.asarray(lb[2 * c2:].reshape(1, 2 * c2))

    io = [(c2, c2), (c2, c2), (c2, c2), (c2, channels)]
    w_in = 2
    for t, (cin, cout) in enumerate(io):
        w_out = 2 * w_in
        prep[f"tm{t}"] = _tconv_phase_mats(params[f"up{t}_tw"], w_in)
        prep[f"tb{t}"] = jnp.asarray(
            np.tile(np.asarray(params[f"up{t}_tb"], np.float32), w_out
                    ).reshape(1, w_out * cin))
        prep[f"cm{t}"] = _conv_row_mats(params[f"up{t}_cw"], w_out)
        prep[f"cb{t}"] = jnp.asarray(
            np.tile(np.asarray(params[f"up{t}_cb"], np.float32), w_out
                    ).reshape(1, w_out * cout))
        w_in = w_out
    return prep


# ----------------------------------------------------------------------------
# Forward: one fused pallas_call
# ----------------------------------------------------------------------------
_WEIGHT_NAMES = ("lin_w0", "lin_b0", "lin_w1", "lin_b1",
                 "tm0", "tb0", "cm0", "cb0",
                 "tm1", "tb1", "cm1", "cb1",
                 "tm2", "tb2", "cm2", "cb2",
                 "tm3", "tb3", "cm3", "cb3")


def _const_index_map(ndim):
    def im(i):
        return (0,) * ndim
    return im


def dcnn_forward(z, prep, channels):
    B, z_size = z.shape
    # batch tile: shard batches >8 across the grid (v7x megacore), else one step
    bb = 8 if (B > 8 and B % 8 == 0) else B
    grid = (B // bb,)

    weights = [prep[n] for n in _WEIGHT_NAMES]
    in_specs = [pl.BlockSpec((bb, z_size), lambda i: (i, 0))]
    in_specs += [pl.BlockSpec(w.shape, _const_index_map(w.ndim)) for w in weights]
    out_specs = pl.BlockSpec((bb, 32, 32 * channels), lambda i: (i, 0, 0))

    out = pl.pallas_call(
        _dcnn_kernel,
        out_shape=jax.ShapeDtypeStruct((B, 32, 32 * channels), jnp.float32),
        grid=grid,
        in_specs=in_specs,
        out_specs=out_specs,
        compiler_params=pltpu.CompilerParams(
            dimension_semantics=("parallel",),
            vmem_limit_bytes=32 * 1024 * 1024),
    )(z.astype(jnp.float32), *weights)

    # lane-dense (B, 32, 32*ch) slab -> PyTorch NCHW outside the kernel
    return jnp.transpose(out.reshape(B, 32, 32, channels), (0, 3, 1, 2))


# ----------------------------------------------------------------------------
# Pure-JAX reference (verified against the PyTorch semantics)
# ----------------------------------------------------------------------------
def _reference_forward(z, params, channels):
    hp = jax.lax.Precision.HIGHEST
    c2 = 2 * channels
    B = z.shape[0]

    def conv3(x, w_oihw, b):
        Bh, H, W, cin = x.shape
        cout = w_oihw.shape[0]
        xp = jnp.pad(x, ((0, 0), (1, 1), (1, 1), (0, 0)))
        cols = jnp.concatenate([xp[:, dh:dh + H, dw:dw + W, :]
                                for dh in range(3) for dw in range(3)], axis=-1)
        wf = jnp.transpose(w_oihw, (2, 3, 1, 0)).reshape(9 * cin, cout)
        y = jnp.dot(cols.reshape(-1, 9 * cin), wf, precision=hp) + b
        return _gelu(y).reshape(Bh, H, W, cout)

    def tconv3(x, w_iohw, b):
        Bh, H, W, cin = x.shape
        cout = w_iohw.shape[1]
        xd = jnp.zeros((Bh, 2 * H - 1, 2 * W - 1, cin), x.dtype)
        xd = xd.at[:, ::2, ::2, :].set(x)
        xp = jnp.pad(xd, ((0, 0), (1, 2), (1, 2), (0, 0)))
        cols = jnp.concatenate([xp[:, dh:dh + 2 * H, dw:dw + 2 * W, :]
                                for dh in range(3) for dw in range(3)], axis=-1)
        wf = jnp.transpose(jnp.flip(w_iohw, (2, 3)), (2, 3, 0, 1)).reshape(9 * cin, cout)
        y = jnp.dot(cols.reshape(-1, 9 * cin), wf, precision=hp) + b
        return _gelu(y).reshape(Bh, 2 * H, 2 * W, cout)

    h = _gelu(jnp.dot(z, params["lin_w"].T, precision=hp) + params["lin_b"])
    x = h.reshape(B, c2, 2, 2).transpose(0, 2, 3, 1)
    for i in range(4):
        x = tconv3(x, params[f"up{i}_tw"], params[f"up{i}_tb"])
        x = conv3(x, params[f"up{i}_cw"], params[f"up{i}_cb"])
    return x.transpose(0, 3, 1, 2)


# ----------------------------------------------------------------------------
if __name__ == "__main__":
    B, Z_SIZE, CHANNELS = 2, 32, 8

    key = jax.random.PRNGKey(0)
    kz, kp = jax.random.split(key)
    z = jax.random.normal(kz, (B, Z_SIZE), dtype=jnp.float32)
    params = init_dcnn_params(kp, Z_SIZE, CHANNELS)
    prep = prepare_params(params, Z_SIZE, CHANNELS)   # one-time weight prep

    fwd = jax.jit(functools.partial(dcnn_forward, channels=CHANNELS))
    out = jax.block_until_ready(fwd(z, prep))

    # spatial: 2 -> 4 -> 8 -> 16 -> 32
    assert out.shape == (B, CHANNELS, 32, 32), out.shape
    assert out.dtype == jnp.float32
    assert bool(jnp.all(jnp.isfinite(out)))

    ref = jax.jit(functools.partial(_reference_forward, channels=CHANNELS))(z, params)
    ref = jax.block_until_ready(ref)
    assert bool(jnp.allclose(out, ref, rtol=1e-3, atol=1e-3)), \
        float(jnp.max(jnp.abs(out - ref)))

    print("KERNEL_OK")
</pallas_src>

<mosaic_0001>
module attributes {stable_mosaic.version = 11 : i64} {
  func.func @_dcnn_kernel(%arg0: i32, %arg1: memref<2x32xf32, #tpu.memory_space<vmem>>, %arg2: memref<32x32xf32, #tpu.memory_space<vmem>>, %arg3: memref<1x32xf32, #tpu.memory_space<vmem>>, %arg4: memref<32x32xf32, #tpu.memory_space<vmem>>, %arg5: memref<1x32xf32, #tpu.memory_space<vmem>>, %arg6: memref<3x32x64xf32, #tpu.memory_space<vmem>>, %arg7: memref<1x64xf32, #tpu.memory_space<vmem>>, %arg8: memref<3x64x64xf32, #tpu.memory_space<vmem>>, %arg9: memref<1x64xf32, #tpu.memory_space<vmem>>, %arg10: memref<3x64x128xf32, #tpu.memory_space<vmem>>, %arg11: memref<1x128xf32, #tpu.memory_space<vmem>>, %arg12: memref<3x128x128xf32, #tpu.memory_space<vmem>>, %arg13: memref<1x128xf32, #tpu.memory_space<vmem>>, %arg14: memref<3x128x256xf32, #tpu.memory_space<vmem>>, %arg15: memref<1x256xf32, #tpu.memory_space<vmem>>, %arg16: memref<3x256x256xf32, #tpu.memory_space<vmem>>, %arg17: memref<1x256xf32, #tpu.memory_space<vmem>>, %arg18: memref<3x256x512xf32, #tpu.memory_space<vmem>>, %arg19: memref<1x512xf32, #tpu.memory_space<vmem>>, %arg20: memref<3x512x256xf32, #tpu.memory_space<vmem>>, %arg21: memref<1x256xf32, #tpu.memory_space<vmem>>, %arg22: memref<2x32x256xf32, #tpu.memory_space<vmem>>) attributes {dimension_semantics = [#tpu.dimension_semantics<parallel>], iteration_bounds = array<i64: 1>, scalar_prefetch = 0 : i64, scratch_operands = 0 : i64, tpu.core_type = #tpu.core_type<tc>, window_params = [{transform_indices = @transform_0, window_bounds = array<i64: 2, 32>}, {pipeline_mode = #tpu.pipeline_mode<synchronous>, transform_indices = @transform_1, window_bounds = array<i64: 32, 32>}, {pipeline_mode = #tpu.pipeline_mode<synchronous>, transform_indices = @transform_2, window_bounds = array<i64: 1, 32>}, {pipeline_mode = #tpu.pipeline_mode<synchronous>, transform_indices = @transform_3, window_bounds = array<i64: 32, 32>}, {pipeline_mode = #tpu.pipeline_mode<synchronous>, transform_indices = @transform_4, window_bounds = array<i64: 1, 32>}, {pipeline_mode = #tpu.pipeline_mode<synchronous>, transform_indices = @transform_5, window_bounds = array<i64: 3, 32, 64>}, {pipeline_mode = #tpu.pipeline_mode<synchronous>, transform_indices = @transform_6, window_bounds = array<i64: 1, 64>}, {pipeline_mode = #tpu.pipeline_mode<synchronous>, transform_indices = @transform_7, window_bounds = array<i64: 3, 64, 64>}, {pipeline_mode = #tpu.pipeline_mode<synchronous>, transform_indices = @transform_8, window_bounds = array<i64: 1, 64>}, {pipeline_mode = #tpu.pipeline_mode<synchronous>, transform_indices = @transform_9, window_bounds = array<i64: 3, 64, 128>}, {pipeline_mode = #tpu.pipeline_mode<synchronous>, transform_indices = @transform_10, window_bounds = array<i64: 1, 128>}, {pipeline_mode = #tpu.pipeline_mode<synchronous>, transform_indices = @transform_11, window_bounds = array<i64: 3, 128, 128>}, {pipeline_mode = #tpu.pipeline_mode<synchronous>, transform_indices = @transform_12, window_bounds = array<i64: 1, 128>}, {pipeline_mode = #tpu.pipeline_mode<synchronous>, transform_indices = @transform_13, window_bounds = array<i64: 3, 128, 256>}, {pipeline_mode = #tpu.pipeline_mode<synchronous>, transform_indices = @transform_14, window_bounds = array<i64: 1, 256>}, {pipeline_mode = #tpu.pipeline_mode<synchronous>, transform_indices = @transform_15, window_bounds = array<i64: 3, 256, 256>}, {pipeline_mode = #tpu.pipeline_mode<synchronous>, transform_indices = @transform_16, window_bounds = array<i64: 1, 256>}, {pipeline_mode = #tpu.pipeline_mode<synchronous>, transform_indices = @transform_17, window_bounds = array<i64: 3, 256, 512>}, {pipeline_mode = #tpu.pipeline_mode<synchronous>, transform_indices = @transform_18, window_bounds = array<i64: 1, 512>}, {pipeline_mode = #tpu.pipeline_mode<synchronous>, transform_indices = @transform_19, window_bounds = array<i64: 3, 512, 256>}, {pipeline_mode = #tpu.pipeline_mode<synchronous>, transform_indices = @transform_20, window_bounds = array<i64: 1, 256>}, {transform_indices = @transform_21, window_bounds = array<i64: 2, 32, 256>}]} {
    %c0 = arith.constant 0 : index
    %c0_0 = arith.constant 0 : index
    %0 = vector.load %arg1[%c0, %c0_0] : memref<2x32xf32, #tpu.memory_space<vmem>>, vector<2x32xf32>
    %c0_1 = arith.constant 0 : index
    %c0_2 = arith.constant 0 : index
    %1 = vector.load %arg2[%c0_1, %c0_2] : memref<32x32xf32, #tpu.memory_space<vmem>>, vector<32x32xf32>
    %cst = arith.constant dense<0.000000e+00> : vector<2x32xf32>
    %2 = tpu.matmul %0, %1, %cst {dimension_numbers = #tpu.dot_dimension_numbers<[1], [0], [0], [1], [0, 0, 1, 1], [], []>} : vector<2x32xf32>, vector<32x32xf32>, vector<2x32xf32> -> vector<2x32xf32>
    %c0_3 = arith.constant 0 : index
    %c0_4 = arith.constant 0 : index
    %3 = vector.load %arg3[%c0_3, %c0_4] : memref<1x32xf32, #tpu.memory_space<vmem>>, vector<1x32xf32>
    %4 = vector.broadcast %3 : vector<1x32xf32> to vector<2x32xf32>
    %5 = arith.addf %2, %4 : vector<2x32xf32>
    %cst_5 = arith.constant 5.000000e-01 : f32
    %6 = vector.broadcast %cst_5 : f32 to vector<2x32xf32>
    %7 = arith.mulf %6, %5 : vector<2x32xf32>
    %cst_6 = arith.constant 0.707106769 : f32
    %8 = vector.broadcast %cst_6 : f32 to vector<2x32xf32>
    %9 = arith.mulf %5, %8 : vector<2x32xf32>
    %10 = math.erf %9 : vector<2x32xf32>
    %cst_7 = arith.constant 1.000000e+00 : f32
    %11 = vector.broadcast %cst_7 : f32 to vector<2x32xf32>
    %12 = arith.addf %11, %10 : vector<2x32xf32>
    %13 = arith.mulf %7, %12 : vector<2x32xf32>
    %c0_8 = arith.constant 0 : index
    %c0_9 = arith.constant 0 : index
    %14 = vector.load %arg4[%c0_8, %c0_9] : memref<32x32xf32, #tpu.memory_space<vmem>>, vector<32x32xf32>
    %cst_10 = arith.constant dense<0.000000e+00> : vector<2x32xf32>
    %15 = tpu.matmul %0, %14, %cst_10 {dimension_numbers = #tpu.dot_dimension_numbers<[1], [0], [0], [1], [0, 0, 1, 1], [], []>} : vector<2x32xf32>, vector<32x32xf32>, vector<2x32xf32> -> vector<2x32xf32>
    %c0_11 = arith.constant 0 : index
    %c0_12 = arith.constant 0 : index
    %16 = vector.load %arg5[%c0_11, %c0_12] : memref<1x32xf32, #tpu.memory_space<vmem>>, vector<1x32xf32>
    %17 = vector.broadcast %16 : vector<1x32xf32> to vector<2x32xf32>
    %18 = arith.addf %15, %17 : vector<2x32xf32>
    %cst_13 = arith.constant 5.000000e-01 : f32
    %19 = vector.broadcast %cst_13 : f32 to vector<2x32xf32>
    %20 = arith.mulf %19, %18 : vector<2x32xf32>
    %cst_14 = arith.constant 0.707106769 : f32
    %21 = vector.broadcast %cst_14 : f32 to vector<2x32xf32>
    %22 = arith.mulf %18, %21 : vector<2x32xf32>
    %23 = math.erf %22 : vector<2x32xf32>
    %cst_15 = arith.constant 1.000000e+00 : f32
    %24 = vector.broadcast %cst_15 : f32 to vector<2x32xf32>
    %25 = arith.addf %24, %23 : vector<2x32xf32>
    %26 = arith.mulf %20, %25 : vector<2x32xf32>
    %27 = vector.shape_cast %13 : vector<2x32xf32> to vector<2x1x32xf32>
    %28 = vector.shape_cast %26 : vector<2x32xf32> to vector<2x1x32xf32>
    %29 = tpu.concatenate %27, %28 in 1 : vector<2x1x32xf32>, vector<2x1x32xf32> -> vector<2x2x32xf32>
    %30 = vector.shape_cast %29 : vector<2x2x32xf32> to vector<4x32xf32>
    %31 = vector.extract_strided_slice %29 {offsets = [0, 1, 0], sizes = [2, 1, 32], strides = [1, 1, 1]} : vector<2x2x32xf32> to vector<2x1x32xf32>
    %cst_16 = arith.constant 0.000000e+00 : f32
    %32 = vector.broadcast %cst_16 : f32 to vector<2x1x32xf32>
    %33 = tpu.concatenate %31, %32 in 1 : vector<2x1x32xf32>, vector<2x1x32xf32> -> vector<2x2x32xf32>
    %34 = vector.shape_cast %33 : vector<2x2x32xf32> to vector<4x32xf32>
    %c0_17 = arith.constant 0 : index
    %c0_18 = arith.constant 0 : index
    %c0_19 = arith.constant 0 : index
    %35 = vector.load %arg6[%c0_17, %c0_18, %c0_19] : memref<3x32x64xf32, #tpu.memory_space<vmem>>, vector<1x32x64xf32>
    %36 = vector.shape_cast %35 : vector<1x32x64xf32> to vector<32x64xf32>
    %cst_20 = arith.constant dense<0.000000e+00> : vector<4x64xf32>
    %37 = tpu.matmul %30, %36, %cst_20 {dimension_numbers = #tpu.dot_dimension_numbers<[1], [0], [0], [1], [0, 0, 1, 1], [], []>} : vector<4x32xf32>, vector<32x64xf32>, vector<4x64xf32> -> vector<4x64xf32>
    %c0_21 = arith.constant 0 : index
    %c0_22 = arith.constant 0 : index
    %38 = vector.load %arg7[%c0_21, %c0_22] : memref<1x64xf32, #tpu.memory_space<vmem>>, vector<1x64xf32>
    %39 = vector.broadcast %38 : vector<1x64xf32> to vector<4x64xf32>
    %40 = arith.addf %37, %39 : vector<4x64xf32>
    %cst_23 = arith.constant 5.000000e-01 : f32
    %41 = vector.broadcast %cst_23 : f32 to vector<4x64xf32>
    %42 = arith.mulf %41, %40 : vector<4x64xf32>
    %cst_24 = arith.constant 0.707106769 : f32
    %43 = vector.broadcast %cst_24 : f32 to vector<4x64xf32>
    %44 = arith.mulf %40, %43 : vector<4x64xf32>
    %45 = math.erf %44 : vector<4x64xf32>
    %cst_25 = arith.constant 1.000000e+00 : f32
    %46 = vector.broadcast %cst_25 : f32 to vector<4x64xf32>
    %47 = arith.addf %46, %45 : vector<4x64xf32>
    %48 = arith.mulf %42, %47 : vector<4x64xf32>
    %c1 = arith.constant 1 : index
    %c0_26 = arith.constant 0 : index
    %c0_27 = arith.constant 0 : index
    %49 = vector.load %arg6[%c1, %c0_26, %c0_27] : memref<3x32x64xf32, #tpu.memory_space<vmem>>, vector<1x32x64xf32>
    %50 = vector.shape_cast %49 : vector<1x32x64xf32> to vector<32x64xf32>
    %cst_28 = arith.constant dense<0.000000e+00> : vector<4x64xf32>
    %51 = tpu.matmul %30, %50, %cst_28 {dimension_numbers = #tpu.dot_dimension_numbers<[1], [0], [0], [1], [0, 0, 1, 1], [], []>} : vector<4x32xf32>, vector<32x64xf32>, vector<4x64xf32> -> vector<4x64xf32>
    %c2 = arith.constant 2 : index
    %c0_29 = arith.constant 0 : index
    %c0_30 = arith.constant 0 : index
    %52 = vector.load %arg6[%c2, %c0_29, %c0_30] : memref<3x32x64xf32, #tpu.memory_space<vmem>>, vector<1x32x64xf32>
    %53 = vector.shape_cast %52 : vector<1x32x64xf32> to vector<32x64xf32>
    %cst_31 = arith.constant dense<0.000000e+00> : vector<4x64xf32>
    %54 = tpu.matmul %34, %53, %cst_31 {dimension_numbers = #tpu.dot_dimension_numbers<[1], [0], [0], [1], [0, 0, 1, 1], [], []>} : vector<4x32xf32>, vector<32x64xf32>, vector<4x64xf32> -> vector<4x64xf32>
    %55 = arith.addf %51, %54 : vector<4x64xf32>
    %c0_32 = arith.constant 0 : index
    %c0_33 = arith.constant 0 : index
    %56 = vector.load %arg7[%c0_32, %c0_33] : memref<1x64xf32, #tpu.memory_space<vmem>>, vector<1x64xf32>
    %57 = vector.broadcast %56 : vector<1x64xf32> to vector<4x64xf32>
    %58 = arith.addf %55, %57 : vector<4x64xf32>
    %cst_34 = arith.constant 5.000000e-01 : f32
    %59 = vector.broadcast %cst_34 : f32 to vector<4x64xf32>
    %60 = arith.mulf %59, %58 : vector<4x64xf32>
    %cst_35 = arith.constant 0.707106769 : f32
    %61 = vector.broadcast %cst_35 : f32 to vector<4x64xf32>
    %62 = arith.mulf %58, %61 : vector<4x64xf32>
    %63 = math.erf %62 : vector<4x64xf32>
    %cst_36 = arith.constant 1.000000e+00 : f32
    %64 = vector.broadcast %cst_36 : f32 to vector<4x64xf32>
    %65 = arith.addf %64, %63 : vector<4x64xf32>
    %66 = arith.mulf %60, %65 : vector<4x64xf32>
    %67 = vector.shape_cast %48 : vector<4x64xf32> to vector<4x1x64xf32>
    %68 = vector.shape_cast %66 : vector<4x64xf32> to vector<4x1x64xf32>
    %69 = tpu.concatenate %67, %68 in 1 : vector<4x1x64xf32>, vector<4x1x64xf32> -> vector<4x2x64xf32>
    %70 = vector.shape_cast %69 : vector<4x2x64xf32> to vector<8x64xf32>
    %c0_37 = arith.constant 0 : index
    %c0_38 = arith.constant 0 : index
    %c0_39 = arith.constant 0 : index
    %71 = vector.load %arg8[%c0_37, %c0_38, %c0_39] : memref<3x64x64xf32, #tpu.memory_space<vmem>>, vector<1x64x64xf32>
    %72 = vector.shape_cast %71 : vector<1x64x64xf32> to vector<64x64xf32>
    %cst_40 = arith.constant dense<0.000000e+00> : vector<8x64xf32>
    %73 = tpu.matmul %70, %72, %cst_40 {dimension_numbers = #tpu.dot_dimension_numbers<[1], [0], [0], [1], [0, 0, 1, 1], [], []>} : vector<8x64xf32>, vector<64x64xf32>, vector<8x64xf32> -> vector<8x64xf32>
    %74 = vector.shape_cast %73 : vector<8x64xf32> to vector<2x4x64xf32>
    %c1_41 = arith.constant 1 : index
    %c0_42 = arith.constant 0 : index
    %c0_43 = arith.constant 0 : index
    %75 = vector.load %arg8[%c1_41, %c0_42, %c0_43] : memref<3x64x64xf32, #tpu.memory_space<vmem>>, vector<1x64x64xf32>
    %76 = vector.shape_cast %75 : vector<1x64x64xf32> to vector<64x64xf32>
    %cst_44 = arith.constant dense<0.000000e+00> : vector<8x64xf32>
    %77 = tpu.matmul %70, %76, %cst_44 {dimension_numbers = #tpu.dot_dimension_numbers<[1], [0], [0], [1], [0, 0, 1, 1], [], []>} : vector<8x64xf32>, vector<64x64xf32>, vector<8x64xf32> -> vector<8x64xf32>
    %c0_45 = arith.constant 0 : index
    %c0_46 = arith.constant 0 : index
    %78 = vector.load %arg9[%c0_45, %c0_46] : memref<1x64xf32, #tpu.memory_space<vmem>>, vector<1x64xf32>
    %79 = vector.broadcast %78 : vector<1x64xf32> to vector<8x64xf32>
    %80 = arith.addf %77, %79 : vector<8x64xf32>
    %81 = vector.shape_cast %80 : vector<8x64xf32> to vector<2x4x64xf32>
    %c2_47 = arith.constant 2 : index
    %c0_48 = arith.constant 0 : index
    %c0_49 = arith.constant 0 : index
    %82 = vector.load %arg8[%c2_47, %c0_48, %c0_49] : memref<3x64x64xf32, #tpu.memory_space<vmem>>, vector<1x64x64xf32>
    %83 = vector.shape_cast %82 : vector<1x64x64xf32> to vector<64x64xf32>
    %cst_50 = arith.constant dense<0.000000e+00> : vector<8x64xf32>
    %84 = tpu.matmul %70, %83, %cst_50 {dimension_numbers = #tpu.dot_dimension_numbers<[1], [0], [0], [1], [0, 0, 1, 1], [], []>} : vector<8x64xf32>, vector<64x64xf32>, vector<8x64xf32> -> vector<8x64xf32>
    %85 = vector.shape_cast %84 : vector<8x64xf32> to vector<2x4x64xf32>
    %cst_51 = arith.constant 0.000000e+00 : f32
    %86 = vector.broadcast %cst_51 : f32 to vector<2x1x64xf32>
    %87 = vector.extract_strided_slice %74 {offsets = [0, 0, 0], sizes = [2, 3, 64], strides = [1, 1, 1]} : vector<2x4x64xf32> to vector<2x3x64xf32>
    %88 = tpu.concatenate %86, %87 in 1 : vector<2x1x64xf32>, vector<2x3x64xf32> -> vector<2x4x64xf32>
    %89 = arith.addf %81, %88 : vector<2x4x64xf32>
    %90 = vector.extract_strided_slice %85 {offsets = [0, 1, 0], sizes = [2, 3, 64], strides = [1, 1, 1]} : vector<2x4x64xf32> to vector<2x3x64xf32>
    %91 = tpu.concatenate %90, %86 in 1 : vector<2x3x64xf32>, vector<2x1x64xf32> -> vector<2x4x64xf32>
    %92 = arith.addf %89, %91 : vector<2x4x64xf32>
    %cst_52 = arith.constant 5.000000e-01 : f32
    %93 = vector.broadcast %cst_52 : f32 to vector<2x4x64xf32>
    %94 = arith.mulf %93, %92 : vector<2x4x64xf32>
    %cst_53 = arith.constant 0.707106769 : f32
    %95 = vector.broadcast %cst_53 : f32 to vector<2x4x64xf32>
    %96 = arith.mulf %92, %95 : vector<2x4x64xf32>
    %97 = math.erf %96 : vector<2x4x64xf32>
    %cst_54 = arith.constant 1.000000e+00 : f32
    %98 = vector.broadcast %cst_54 : f32 to vector<2x4x64xf32>
    %99 = arith.addf %98, %97 : vector<2x4x64xf32>
    %100 = arith.mulf %94, %99 : vector<2x4x64xf32>
    %101 = vector.shape_cast %100 : vector<2x4x64xf32> to vector<8x64xf32>
    %102 = vector.extract_strided_slice %100 {offsets = [0, 1, 0], sizes = [2, 3, 64], strides = [1, 1, 1]} : vector<2x4x64xf32> to vector<2x3x64xf32>
    %cst_55 = arith.constant 0.000000e+00 : f32
    %103 = vector.broadcast %cst_55 : f32 to vector<2x1x64xf32>
    %104 = tpu.concatenate %102, %103 in 1 : vector<2x3x64xf32>, vector<2x1x64xf32> -> vector<2x4x64xf32>
    %105 = vector.shape_cast %104 : vector<2x4x64xf32> to vector<8x64xf32>
    %c0_56 = arith.constant 0 : index
    %c0_57 = arith.constant 0 : index
    %c0_58 = arith.constant 0 : index
    %106 = vector.load %arg10[%c0_56, %c0_57, %c0_58] : memref<3x64x128xf32, #tpu.memory_space<vmem>>, vector<1x64x128xf32>
    %107 = vector.shape_cast %106 : vector<1x64x128xf32> to vector<64x128xf32>
    %cst_59 = arith.constant dense<0.000000e+00> : vector<8x128xf32>
    %108 = tpu.matmul %101, %107, %cst_59 {dimension_numbers = #tpu.dot_dimension_numbers<[1], [0], [0], [1], [0, 0, 1, 1], [], []>} : vector<8x64xf32>, vector<64x128xf32>, vector<8x128xf32> -> vector<8x128xf32>
    %c0_60 = arith.constant 0 : index
    %c0_61 = arith.constant 0 : index
    %109 = vector.load %arg11[%c0_60, %c0_61] : memref<1x128xf32, #tpu.memory_space<vmem>>, vector<1x128xf32>
    %110 = vector.broadcast %109 : vector<1x128xf32> to vector<8x128xf32>
    %111 = arith.addf %108, %110 : vector<8x128xf32>
    %cst_62 = arith.constant 5.000000e-01 : f32
    %112 = vector.broadcast %cst_62 : f32 to vector<8x128xf32>
    %113 = arith.mulf %112, %111 : vector<8x128xf32>
    %cst_63 = arith.constant 0.707106769 : f32
    %114 = vector.broadcast %cst_63 : f32 to vector<8x128xf32>
    %115 = arith.mulf %111, %114 : vector<8x128xf32>
    %116 = math.erf %115 : vector<8x128xf32>
    %cst_64 = arith.constant 1.000000e+00 : f32
    %117 = vector.broadcast %cst_64 : f32 to vector<8x128xf32>
    %118 = arith.addf %117, %116 : vector<8x128xf32>
    %119 = arith.mulf %113, %118 : vector<8x128xf32>
    %c1_65 = arith.constant 1 : index
    %c0_66 = arith.constant 0 : index
    %c0_67 = arith.constant 0 : index
    %120 = vector.load %arg10[%c1_65, %c0_66, %c0_67] : memref<3x64x128xf32, #tpu.memory_space<vmem>>, vector<1x64x128xf32>
    %121 = vector.shape_cast %120 : vector<1x64x128xf32> to vector<64x128xf32>
    %cst_68 = arith.constant dense<0.000000e+00> : vector<8x128xf32>
    %122 = tpu.matmul %101, %121, %cst_68 {dimension_numbers = #tpu.dot_dimension_numbers<[1], [0], [0], [1], [0, 0, 1, 1], [], []>} : vector<8x64xf32>, vector<64x128xf32>, vector<8x128xf32> -> vector<8x128xf32>
    %c2_69 = arith.constant 2 : index
    %c0_70 = arith.constant 0 : index
    %c0_71 = arith.constant 0 : index
    %123 = vector.load %arg10[%c2_69, %c0_70, %c0_71] : memref<3x64x128xf32, #tpu.memory_space<vmem>>, vector<1x64x128xf32>
    %124 = vector.shape_cast %123 : vector<1x64x128xf32> to vector<64x128xf32>
    %cst_72 = arith.constant dense<0.000000e+00> : vector<8x128xf32>
    %125 = tpu.matmul %105, %124, %cst_72 {dimension_numbers = #tpu.dot_dimension_numbers<[1], [0], [0], [1], [0, 0, 1, 1], [], []>} : vector<8x64xf32>, vector<64x128xf32>, vector<8x128xf32> -> vector<8x128xf32>
    %126 = arith.addf %122, %125 : vector<8x128xf32>
    %c0_73 = arith.constant 0 : index
    %c0_74 = arith.constant 0 : index
    %127 = vector.load %arg11[%c0_73, %c0_74] : memref<1x128xf32, #tpu.memory_space<vmem>>, vector<1x128xf32>
    %128 = vector.broadcast %127 : vector<1x128xf32> to vector<8x128xf32>
    %129 = arith.addf %126, %128 : vector<8x128xf32>
    %cst_75 = arith.constant 5.000000e-01 : f32
    %130 = vector.broadcast %cst_75 : f32 to vector<8x128xf32>
    %131 = arith.mulf %130, %129 : vector<8x128xf32>
    %cst_76 = arith.constant 0.707106769 : f32
    %132 = vector.broadcast %cst_76 : f32 to vector<8x128xf32>
    %133 = arith.mulf %129, %132 : vector<8x128xf32>
    %134 = math.erf %133 : vector<8x128xf32>
    %cst_77 = arith.constant 1.000000e+00 : f32
    %135 = vector.broadcast %cst_77 : f32 to vector<8x128xf32>
    %136 = arith.addf %135, %134 : vector<8x128xf32>
    %137 = arith.mulf %131, %136 : vector<8x128xf32>
    %138 = vector.shape_cast %119 : vector<8x128xf32> to vector<8x1x128xf32>
    %139 = vector.shape_cast %137 : vector<8x128xf32> to vector<8x1x128xf32>
    %140 = tpu.concatenate %138, %139 in 1 : vector<8x1x128xf32>, vector<8x1x128xf32> -> vector<8x2x128xf32>
    %141 = vector.shape_cast %140 : vector<8x2x128xf32> to vector<16x128xf32>
    %c0_78 = arith.constant 0 : index
    %c0_79 = arith.constant 0 : index
    %c0_80 = arith.constant 0 : index
    %142 = vector.load %arg12[%c0_78, %c0_79, %c0_80] : memref<3x128x128xf32, #tpu.memory_space<vmem>>, vector<1x128x128xf32>
    %143 = vector.shape_cast %142 : vector<1x128x128xf32> to vector<128x128xf32>
    %cst_81 = arith.constant dense<0.000000e+00> : vector<16x128xf32>
    %144 = tpu.matmul %141, %143, %cst_81 {dimension_numbers = #tpu.dot_dimension_numbers<[1], [0], [0], [1], [0, 0, 1, 1], [], []>} : vector<16x128xf32>, vector<128x128xf32>, vector<16x128xf32> -> vector<16x128xf32>
    %145 = vector.shape_cast %144 : vector<16x128xf32> to vector<2x8x128xf32>
    %c1_82 = arith.constant 1 : index
    %c0_83 = arith.constant 0 : index
    %c0_84 = arith.constant 0 : index
    %146 = vector.load %arg12[%c1_82, %c0_83, %c0_84] : memref<3x128x128xf32, #tpu.memory_space<vmem>>, vector<1x128x128xf32>
    %147 = vector.shape_cast %146 : vector<1x128x128xf32> to vector<128x128xf32>
    %cst_85 = arith.constant dense<0.000000e+00> : vector<16x128xf32>
    %148 = tpu.matmul %141, %147, %cst_85 {dimension_numbers = #tpu.dot_dimension_numbers<[1], [0], [0], [1], [0, 0, 1, 1], [], []>} : vector<16x128xf32>, vector<128x128xf32>, vector<16x128xf32> -> vector<16x128xf32>
    %c0_86 = arith.constant 0 : index
    %c0_87 = arith.constant 0 : index
    %149 = vector.load %arg13[%c0_86, %c0_87] : memref<1x128xf32, #tpu.memory_space<vmem>>, vector<1x128xf32>
    %150 = vector.broadcast %149 : vector<1x128xf32> to vector<16x128xf32>
    %151 = arith.addf %148, %150 : vector<16x128xf32>
    %152 = vector.shape_cast %151 : vector<16x128xf32> to vector<2x8x128xf32>
    %c2_88 = arith.constant 2 : index
    %c0_89 = arith.constant 0 : index
    %c0_90 = arith.constant 0 : index
    %153 = vector.load %arg12[%c2_88, %c0_89, %c0_90] : memref<3x128x128xf32, #tpu.memory_space<vmem>>, vector<1x128x128xf32>
    %154 = vector.shape_cast %153 : vector<1x128x128xf32> to vector<128x128xf32>
    %cst_91 = arith.constant dense<0.000000e+00> : vector<16x128xf32>
    %155 = tpu.matmul %141, %154, %cst_91 {dimension_numbers = #tpu.dot_dimension_numbers<[1], [0], [0], [1], [0, 0, 1, 1], [], []>} : vector<16x128xf32>, vector<128x128xf32>, vector<16x128xf32> -> vector<16x128xf32>
    %156 = vector.shape_cast %155 : vector<16x128xf32> to vector<2x8x128xf32>
    %cst_92 = arith.constant 0.000000e+00 : f32
    %157 = vector.broadcast %cst_92 : f32 to vector<2x1x128xf32>
    %158 = vector.extract_strided_slice %145 {offsets = [0, 0, 0], sizes = [2, 7, 128], strides = [1, 1, 1]} : vector<2x8x128xf32> to vector<2x7x128xf32>
    %159 = tpu.concatenate %157, %158 in 1 : vector<2x1x128xf32>, vector<2x7x128xf32> -> vector<2x8x128xf32>
    %160 = arith.addf %152, %159 : vector<2x8x128xf32>
    %161 = vector.extract_strided_slice %156 {offsets = [0, 1, 0], sizes = [2, 7, 128], strides = [1, 1, 1]} : vector<2x8x128xf32> to vector<2x7x128xf32>
    %162 = tpu.concatenate %161, %157 in 1 : vector<2x7x128xf32>, vector<2x1x128xf32> -> vector<2x8x128xf32>
    %163 = arith.addf %160, %162 : vector<2x8x128xf32>
    %cst_93 = arith.constant 5.000000e-01 : f32
    %164 = vector.broadcast %cst_93 : f32 to vector<2x8x128xf32>
    %165 = arith.mulf %164, %163 : vector<2x8x128xf32>
    %cst_94 = arith.constant 0.707106769 : f32
    %166 = vector.broadcast %cst_94 : f32 to vector<2x8x128xf32>
    %167 = arith.mulf %163, %166 : vector<2x8x128xf32>
    %168 = math.erf %167 : vector<2x8x128xf32>
    %cst_95 = arith.constant 1.000000e+00 : f32
    %169 = vector.broadcast %cst_95 : f32 to vector<2x8x128xf32>
    %170 = arith.addf %169, %168 : vector<2x8x128xf32>
    %171 = arith.mulf %165, %170 : vector<2x8x128xf32>
    %172 = vector.shape_cast %171 : vector<2x8x128xf32> to vector<16x128xf32>
    %173 = vector.extract_strided_slice %171 {offsets = [0, 1, 0], sizes = [2, 7, 128], strides = [1, 1, 1]} : vector<2x8x128xf32> to vector<2x7x128xf32>
    %cst_96 = arith.constant 0.000000e+00 : f32
    %174 = vector.broadcast %cst_96 : f32 to vector<2x1x128xf32>
    %175 = tpu.concatenate %173, %174 in 1 : vector<2x7x128xf32>, vector<2x1x128xf32> -> vector<2x8x128xf32>
    %176 = vector.shape_cast %175 : vector<2x8x128xf32> to vector<16x128xf32>
    %c0_97 = arith.constant 0 : index
    %c0_98 = arith.constant 0 : index
    %c0_99 = arith.constant 0 : index
    %177 = vector.load %arg14[%c0_97, %c0_98, %c0_99] : memref<3x128x256xf32, #tpu.memory_space<vmem>>, vector<1x128x256xf32>
    %178 = vector.shape_cast %177 : vector<1x128x256xf32> to vector<128x256xf32>
    %cst_100 = arith.constant dense<0.000000e+00> : vector<16x256xf32>
    %179 = tpu.matmul %172, %178, %cst_100 {dimension_numbers = #tpu.dot_dimension_numbers<[1], [0], [0], [1], [0, 0, 1, 1], [], []>} : vector<16x128xf32>, vector<128x256xf32>, vector<16x256xf32> -> vector<16x256xf32>
    %c0_101 = arith.constant 0 : index
    %c0_102 = arith.constant 0 : index
    %180 = vector.load %arg15[%c0_101, %c0_102] : memref<1x256xf32, #tpu.memory_space<vmem>>, vector<1x256xf32>
    %181 = vector.broadcast %180 : vector<1x256xf32> to vector<16x256xf32>
    %182 = arith.addf %179, %181 : vector<16x256xf32>
    %cst_103 = arith.constant 5.000000e-01 : f32
    %183 = vector.broadcast %cst_103 : f32 to vector<16x256xf32>
    %184 = arith.mulf %183, %182 : vector<16x256xf32>
    %cst_104 = arith.constant 0.707106769 : f32
    %185 = vector.broadcast %cst_104 : f32 to vector<16x256xf32>
    %186 = arith.mulf %182, %185 : vector<16x256xf32>
    %187 = math.erf %186 : vector<16x256xf32>
    %cst_105 = arith.constant 1.000000e+00 : f32
    %188 = vector.broadcast %cst_105 : f32 to vector<16x256xf32>
    %189 = arith.addf %188, %187 : vector<16x256xf32>
    %190 = arith.mulf %184, %189 : vector<16x256xf32>
    %c1_106 = arith.constant 1 : index
    %c0_107 = arith.constant 0 : index
    %c0_108 = arith.constant 0 : index
    %191 = vector.load %arg14[%c1_106, %c0_107, %c0_108] : memref<3x128x256xf32, #tpu.memory_space<vmem>>, vector<1x128x256xf32>
    %192 = vector.shape_cast %191 : vector<1x128x256xf32> to vector<128x256xf32>
    %cst_109 = arith.constant dense<0.000000e+00> : vector<16x256xf32>
    %193 = tpu.matmul %172, %192, %cst_109 {dimension_numbers = #tpu.dot_dimension_numbers<[1], [0], [0], [1], [0, 0, 1, 1], [], []>} : vector<16x128xf32>, vector<128x256xf32>, vector<16x256xf32> -> vector<16x256xf32>
    %c2_110 = arith.constant 2 : index
    %c0_111 = arith.constant 0 : index
    %c0_112 = arith.constant 0 : index
    %194 = vector.load %arg14[%c2_110, %c0_111, %c0_112] : memref<3x128x256xf32, #tpu.memory_space<vmem>>, vector<1x128x256xf32>
    %195 = vector.shape_cast %194 : vector<1x128x256xf32> to vector<128x256xf32>
    %cst_113 = arith.constant dense<0.000000e+00> : vector<16x256xf32>
    %196 = tpu.matmul %176, %195, %cst_113 {dimension_numbers = #tpu.dot_dimension_numbers<[1], [0], [0], [1], [0, 0, 1, 1], [], []>} : vector<16x128xf32>, vector<128x256xf32>, vector<16x256xf32> -> vector<16x256xf32>
    %197 = arith.addf %193, %196 : vector<16x256xf32>
    %c0_114 = arith.constant 0 : index
    %c0_115 = arith.constant 0 : index
    %198 = vector.load %arg15[%c0_114, %c0_115] : memref<1x256xf32, #tpu.memory_space<vmem>>, vector<1x256xf32>
    %199 = vector.broadcast %198 : vector<1x256xf32> to vector<16x256xf32>
    %200 = arith.addf %197, %199 : vector<16x256xf32>
    %cst_116 = arith.constant 5.000000e-01 : f32
    %201 = vector.broadcast %cst_116 : f32 to vector<16x256xf32>
    %202 = arith.mulf %201, %200 : vector<16x256xf32>
    %cst_117 = arith.constant 0.707106769 : f32
    %203 = vector.broadcast %cst_117 : f32 to vector<16x256xf32>
    %204 = arith.mulf %200, %203 : vector<16x256xf32>
    %205 = math.erf %204 : vector<16x256xf32>
    %cst_118 = arith.constant 1.000000e+00 : f32
    %206 = vector.broadcast %cst_118 : f32 to vector<16x256xf32>
    %207 = arith.addf %206, %205 : vector<16x256xf32>
    %208 = arith.mulf %202, %207 : vector<16x256xf32>
    %209 = vector.shape_cast %190 : vector<16x256xf32> to vector<16x1x256xf32>
    %210 = vector.shape_cast %208 : vector<16x256xf32> to vector<16x1x256xf32>
    %211 = tpu.concatenate %209, %210 in 1 : vector<16x1x256xf32>, vector<16x1x256xf32> -> vector<16x2x256xf32>
    %212 = vector.shape_cast %211 : vector<16x2x256xf32> to vector<32x256xf32>
    %c0_119 = arith.constant 0 : index
    %c0_120 = arith.constant 0 : index
    %c0_121 = arith.constant 0 : index
    %213 = vector.load %arg16[%c0_119, %c0_120, %c0_121] : memref<3x256x256xf32, #tpu.memory_space<vmem>>, vector<1x256x256xf32>
    %214 = vector.shape_cast %213 : vector<1x256x256xf32> to vector<256x256xf32>
    %cst_122 = arith.constant dense<0.000000e+00> : vector<32x256xf32>
    %215 = tpu.matmul %212, %214, %cst_122 {dimension_numbers = #tpu.dot_dimension_numbers<[1], [0], [0], [1], [0, 0, 1, 1], [], []>} : vector<32x256xf32>, vector<256x256xf32>, vector<32x256xf32> -> vector<32x256xf32>
    %216 = vector.shape_cast %215 : vector<32x256xf32> to vector<2x16x256xf32>
    %c1_123 = arith.constant 1 : index
    %c0_124 = arith.constant 0 : index
    %c0_125 = arith.constant 0 : index
    %217 = vector.load %arg16[%c1_123, %c0_124, %c0_125] : memref<3x256x256xf32, #tpu.memory_space<vmem>>, vector<1x256x256xf32>
    %218 = vector.shape_cast %217 : vector<1x256x256xf32> to vector<256x256xf32>
    %cst_126 = arith.constant dense<0.000000e+00> : vector<32x256xf32>
    %219 = tpu.matmul %212, %218, %cst_126 {dimension_numbers = #tpu.dot_dimension_numbers<[1], [0], [0], [1], [0, 0, 1, 1], [], []>} : vector<32x256xf32>, vector<256x256xf32>, vector<32x256xf32> -> vector<32x256xf32>
    %c0_127 = arith.constant 0 : index
    %c0_128 = arith.constant 0 : index
    %220 = vector.load %arg17[%c0_127, %c0_128] : memref<1x256xf32, #tpu.memory_space<vmem>>, vector<1x256xf32>
    %221 = vector.broadcast %220 : vector<1x256xf32> to vector<32x256xf32>
    %222 = arith.addf %219, %221 : vector<32x256xf32>
    %223 = vector.shape_cast %222 : vector<32x256xf32> to vector<2x16x256xf32>
    %c2_129 = arith.constant 2 : index
    %c0_130 = arith.constant 0 : index
    %c0_131 = arith.constant 0 : index
    %224 = vector.load %arg16[%c2_129, %c0_130, %c0_131] : memref<3x256x256xf32, #tpu.memory_space<vmem>>, vector<1x256x256xf32>
    %225 = vector.shape_cast %224 : vector<1x256x256xf32> to vector<256x256xf32>
    %cst_132 = arith.constant dense<0.000000e+00> : vector<32x256xf32>
    %226 = tpu.matmul %212, %225, %cst_132 {dimension_numbers = #tpu.dot_dimension_numbers<[1], [0], [0], [1], [0, 0, 1, 1], [], []>} : vector<32x256xf32>, vector<256x256xf32>, vector<32x256xf32> -> vector<32x256xf32>
    %227 = vector.shape_cast %226 : vector<32x256xf32> to vector<2x16x256xf32>
    %cst_133 = arith.constant 0.000000e+00 : f32
    %228 = vector.broadcast %cst_133 : f32 to vector<2x1x256xf32>
    %229 = vector.extract_strided_slice %216 {offsets = [0, 0, 0], sizes = [2, 15, 256], strides = [1, 1, 1]} : vector<2x16x256xf32> to vector<2x15x256xf32>
    %230 = tpu.concatenate %228, %229 in 1 : vector<2x1x256xf32>, vector<2x15x256xf32> -> vector<2x16x256xf32>
    %231 = arith.addf %223, %230 : vector<2x16x256xf32>
    %232 = vector.extract_strided_slice %227 {offsets = [0, 1, 0], sizes = [2, 15, 256], strides = [1, 1, 1]} : vector<2x16x256xf32> to vector<2x15x256xf32>
    %233 = tpu.concatenate %232, %228 in 1 : vector<2x15x256xf32>, vector<2x1x256xf32> -> vector<2x16x256xf32>
    %234 = arith.addf %231, %233 : vector<2x16x256xf32>
    %cst_134 = arith.constant 5.000000e-01 : f32
    %235 = vector.broadcast %cst_134 : f32 to vector<2x16x256xf32>
    %236 = arith.mulf %235, %234 : vector<2x16x256xf32>
    %cst_135 = arith.constant 0.707106769 : f32
    %237 = vector.broadcast %cst_135 : f32 to vector<2x16x256xf32>
    %238 = arith.mulf %234, %237 : vector<2x16x256xf32>
    %239 = math.erf %238 : vector<2x16x256xf32>
    %cst_136 = arith.constant 1.000000e+00 : f32
    %240 = vector.broadcast %cst_136 : f32 to vector<2x16x256xf32>
    %241 = arith.addf %240, %239 : vector<2x16x256xf32>
    %242 = arith.mulf %236, %241 : vector<2x16x256xf32>
    %243 = vector.shape_cast %242 : vector<2x16x256xf32> to vector<32x256xf32>
    %244 = vector.extract_strided_slice %242 {offsets = [0, 1, 0], sizes = [2, 15, 256], strides = [1, 1, 1]} : vector<2x16x256xf32> to vector<2x15x256xf32>
    %cst_137 = arith.constant 0.000000e+00 : f32
    %245 = vector.broadcast %cst_137 : f32 to vector<2x1x256xf32>
    %246 = tpu.concatenate %244, %245 in 1 : vector<2x15x256xf32>, vector<2x1x256xf32> -> vector<2x16x256xf32>
    %247 = vector.shape_cast %246 : vector<2x16x256xf32> to vector<32x256xf32>
    %c0_138 = arith.constant 0 : index
    %c0_139 = arith.constant 0 : index
    %c0_140 = arith.constant 0 : index
    %248 = vector.load %arg18[%c0_138, %c0_139, %c0_140] : memref<3x256x512xf32, #tpu.memory_space<vmem>>, vector<1x256x512xf32>
    %249 = vector.shape_cast %248 : vector<1x256x512xf32> to vector<256x512xf32>
    %cst_141 = arith.constant dense<0.000000e+00> : vector<32x512xf32>
    %250 = tpu.matmul %243, %249, %cst_141 {dimension_numbers = #tpu.dot_dimension_numbers<[1], [0], [0], [1], [0, 0, 1, 1], [], []>} : vector<32x256xf32>, vector<256x512xf32>, vector<32x512xf32> -> vector<32x512xf32>
    %c0_142 = arith.constant 0 : index
    %c0_143 = arith.constant 0 : index
    %251 = vector.load %arg19[%c0_142, %c0_143] : memref<1x512xf32, #tpu.memory_space<vmem>>, vector<1x512xf32>
    %252 = vector.broadcast %251 : vector<1x512xf32> to vector<32x512xf32>
    %253 = arith.addf %250, %252 : vector<32x512xf32>
    %cst_144 = arith.constant 5.000000e-01 : f32
    %254 = vector.broadcast %cst_144 : f32 to vector<32x512xf32>
    %255 = arith.mulf %254, %253 : vector<32x512xf32>
    %cst_145 = arith.constant 0.707106769 : f32
    %256 = vector.broadcast %cst_145 : f32 to vector<32x512xf32>
    %257 = arith.mulf %253, %256 : vector<32x512xf32>
    %258 = math.erf %257 : vector<32x512xf32>
    %cst_146 = arith.constant 1.000000e+00 : f32
    %259 = vector.broadcast %cst_146 : f32 to vector<32x512xf32>
    %260 = arith.addf %259, %258 : vector<32x512xf32>
    %261 = arith.mulf %255, %260 : vector<32x512xf32>
    %c1_147 = arith.constant 1 : index
    %c0_148 = arith.constant 0 : index
    %c0_149 = arith.constant 0 : index
    %262 = vector.load %arg18[%c1_147, %c0_148, %c0_149] : memref<3x256x512xf32, #tpu.memory_space<vmem>>, vector<1x256x512xf32>
    %263 = vector.shape_cast %262 : vector<1x256x512xf32> to vector<256x512xf32>
    %cst_150 = arith.constant dense<0.000000e+00> : vector<32x512xf32>
    %264 = tpu.matmul %243, %263, %cst_150 {dimension_numbers = #tpu.dot_dimension_numbers<[1], [0], [0], [1], [0, 0, 1, 1], [], []>} : vector<32x256xf32>, vector<256x512xf32>, vector<32x512xf32> -> vector<32x512xf32>
    %c2_151 = arith.constant 2 : index
    %c0_152 = arith.constant 0 : index
    %c0_153 = arith.constant 0 : index
    %265 = vector.load %arg18[%c2_151, %c0_152, %c0_153] : memref<3x256x512xf32, #tpu.memory_space<vmem>>, vector<1x256x512xf32>
    %266 = vector.shape_cast %265 : vector<1x256x512xf32> to vector<256x512xf32>
    %cst_154 = arith.constant dense<0.000000e+00> : vector<32x512xf32>
    %267 = tpu.matmul %247, %266, %cst_154 {dimension_numbers = #tpu.dot_dimension_numbers<[1], [0], [0], [1], [0, 0, 1, 1], [], []>} : vector<32x256xf32>, vector<256x512xf32>, vector<32x512xf32> -> vector<32x512xf32>
    %268 = arith.addf %264, %267 : vector<32x512xf32>
    %c0_155 = arith.constant 0 : index
    %c0_156 = arith.constant 0 : index
    %269 = vector.load %arg19[%c0_155, %c0_156] : memref<1x512xf32, #tpu.memory_space<vmem>>, vector<1x512xf32>
    %270 = vector.broadcast %269 : vector<1x512xf32> to vector<32x512xf32>
    %271 = arith.addf %268, %270 : vector<32x512xf32>
    %cst_157 = arith.constant 5.000000e-01 : f32
    %272 = vector.broadcast %cst_157 : f32 to vector<32x512xf32>
    %273 = arith.mulf %272, %271 : vector<32x512xf32>
    %cst_158 = arith.constant 0.707106769 : f32
    %274 = vector.broadcast %cst_158 : f32 to vector<32x512xf32>
    %275 = arith.mulf %271, %274 : vector<32x512xf32>
    %276 = math.erf %275 : vector<32x512xf32>
    %cst_159 = arith.constant 1.000000e+00 : f32
    %277 = vector.broadcast %cst_159 : f32 to vector<32x512xf32>
    %278 = arith.addf %277, %276 : vector<32x512xf32>
    %279 = arith.mulf %273, %278 : vector<32x512xf32>
    %280 = vector.shape_cast %261 : vector<32x512xf32> to vector<32x1x512xf32>
    %281 = vector.shape_cast %279 : vector<32x512xf32> to vector<32x1x512xf32>
    %282 = tpu.concatenate %280, %281 in 1 : vector<32x1x512xf32>, vector<32x1x512xf32> -> vector<32x2x512xf32>
    %283 = vector.shape_cast %282 : vector<32x2x512xf32> to vector<64x512xf32>
    %c0_160 = arith.constant 0 : index
    %c0_161 = arith.constant 0 : index
    %c0_162 = arith.constant 0 : index
    %284 = vector.load %arg20[%c0_160, %c0_161, %c0_162] : memref<3x512x256xf32, #tpu.memory_space<vmem>>, vector<1x512x256xf32>
    %285 = vector.shape_cast %284 : vector<1x512x256xf32> to vector<512x256xf32>
    %cst_163 = arith.constant dense<0.000000e+00> : vector<64x256xf32>
    %286 = tpu.matmul %283, %285, %cst_163 {dimension_numbers = #tpu.dot_dimension_numbers<[1], [0], [0], [1], [0, 0, 1, 1], [], []>} : vector<64x512xf32>, vector<512x256xf32>, vector<64x256xf32> -> vector<64x256xf32>
    %287 = vector.shape_cast %286 : vector<64x256xf32> to vector<2x32x256xf32>
    %c1_164 = arith.constant 1 : index
    %c0_165 = arith.constant 0 : index
    %c0_166 = arith.constant 0 : index
    %288 = vector.load %arg20[%c1_164, %c0_165, %c0_166] : memref<3x512x256xf32, #tpu.memory_space<vmem>>, vector<1x512x256xf32>
    %289 = vector.shape_cast %288 : vector<1x512x256xf32> to vector<512x256xf32>
    %cst_167 = arith.constant dense<0.000000e+00> : vector<64x256xf32>
    %290 = tpu.matmul %283, %289, %cst_167 {dimension_numbers = #tpu.dot_dimension_numbers<[1], [0], [0], [1], [0, 0, 1, 1], [], []>} : vector<64x512xf32>, vector<512x256xf32>, vector<64x256xf32> -> vector<64x256xf32>
    %c0_168 = arith.constant 0 : index
    %c0_169 = arith.constant 0 : index
    %291 = vector.load %arg21[%c0_168, %c0_169] : memref<1x256xf32, #tpu.memory_space<vmem>>, vector<1x256xf32>
    %292 = vector.broadcast %291 : vector<1x256xf32> to vector<64x256xf32>
    %293 = arith.addf %290, %292 : vector<64x256xf32>
    %294 = vector.shape_cast %293 : vector<64x256xf32> to vector<2x32x256xf32>
    %c2_170 = arith.constant 2 : index
    %c0_171 = arith.constant 0 : index
    %c0_172 = arith.constant 0 : index
    %295 = vector.load %arg20[%c2_170, %c0_171, %c0_172] : memref<3x512x256xf32, #tpu.memory_space<vmem>>, vector<1x512x256xf32>
    %296 = vector.shape_cast %295 : vector<1x512x256xf32> to vector<512x256xf32>
    %cst_173 = arith.constant dense<0.000000e+00> : vector<64x256xf32>
    %297 = tpu.matmul %283, %296, %cst_173 {dimension_numbers = #tpu.dot_dimension_numbers<[1], [0], [0], [1], [0, 0, 1, 1], [], []>} : vector<64x512xf32>, vector<512x256xf32>, vector<64x256xf32> -> vector<64x256xf32>
    %298 = vector.shape_cast %297 : vector<64x256xf32> to vector<2x32x256xf32>
    %cst_174 = arith.constant 0.000000e+00 : f32
    %299 = vector.broadcast %cst_174 : f32 to vector<2x1x256xf32>
    %300 = vector.extract_strided_slice %287 {offsets = [0, 0, 0], sizes = [2, 31, 256], strides = [1, 1, 1]} : vector<2x32x256xf32> to vector<2x31x256xf32>
    %301 = tpu.concatenate %299, %300 in 1 : vector<2x1x256xf32>, vector<2x31x256xf32> -> vector<2x32x256xf32>
    %302 = arith.addf %294, %301 : vector<2x32x256xf32>
    %303 = vector.extract_strided_slice %298 {offsets = [0, 1, 0], sizes = [2, 31, 256], strides = [1, 1, 1]} : vector<2x32x256xf32> to vector<2x31x256xf32>
    %304 = tpu.concatenate %303, %299 in 1 : vector<2x31x256xf32>, vector<2x1x256xf32> -> vector<2x32x256xf32>
    %305 = arith.addf %302, %304 : vector<2x32x256xf32>
    %cst_175 = arith.constant 5.000000e-01 : f32
    %306 = vector.broadcast %cst_175 : f32 to vector<2x32x256xf32>
    %307 = arith.mulf %306, %305 : vector<2x32x256xf32>
    %cst_176 = arith.constant 0.707106769 : f32
    %308 = vector.broadcast %cst_176 : f32 to vector<2x32x256xf32>
    %309 = arith.mulf %305, %308 : vector<2x32x256xf32>
    %310 = math.erf %309 : vector<2x32x256xf32>
    %cst_177 = arith.constant 1.000000e+00 : f32
    %311 = vector.broadcast %cst_177 : f32 to vector<2x32x256xf32>
    %312 = arith.addf %311, %310 : vector<2x32x256xf32>
    %313 = arith.mulf %307, %312 : vector<2x32x256xf32>
    %c0_178 = arith.constant 0 : index
    %c0_179 = arith.constant 0 : index
    %c0_180 = arith.constant 0 : index
    %314 = vector.load %arg22[%c0_178, %c0_179, %c0_180] : memref<2x32x256xf32, #tpu.memory_space<vmem>>, vector<2x32x256xf32>
    tpu.vector_store %arg22[%c0_178, %c0_179, %c0_180], %313 {strides = array<i32>} : memref<2x32x256xf32, #tpu.memory_space<vmem>>, vector<2x32x256xf32>,
    return
  }
  func.func @transform_0(%arg0: i32) -> (i32, i32) {
    %c0_i32 = arith.constant 0 : i32
    %c0_i32_0 = arith.constant 0 : i32
    return %arg0, %c0_i32 : i32, i32
  }
  func.func @transform_1(%arg0: i32) -> (i32, i32) {
    %c0_i32 = arith.constant 0 : i32
    %c0_i32_0 = arith.constant 0 : i32
    %c0_i32_1 = arith.constant 0 : i32
    return %c0_i32, %c0_i32_0 : i32, i32
  }
  func.func @transform_2(%arg0: i32) -> (i32, i32) {
    %c0_i32 = arith.constant 0 : i32
    %c0_i32_0 = arith.constant 0 : i32
    %c0_i32_1 = arith.constant 0 : i32
    return %c0_i32, %c0_i32_0 : i32, i32
  }
  func.func @transform_3(%arg0: i32) -> (i32, i32) {
    %c0_i32 = arith.constant 0 : i32
    %c0_i32_0 = arith.constant 0 : i32
    %c0_i32_1 = arith.constant 0 : i32
    return %c0_i32, %c0_i32_0 : i32, i32
  }
  func.func @transform_4(%arg0: i32) -> (i32, i32) {
    %c0_i32 = arith.constant 0 : i32
    %c0_i32_0 = arith.constant 0 : i32
    %c0_i32_1 = arith.constant 0 : i32
    return %c0_i32, %c0_i32_0 : i32, i32
  }
  func.func @transform_5(%arg0: i32) -> (i32, i32, i32) {
    %c0_i32 = arith.constant 0 : i32
    %c0_i32_0 = arith.constant 0 : i32
    %c0_i32_1 = arith.constant 0 : i32
    %c0_i32_2 = arith.constant 0 : i32
    return %c0_i32, %c0_i32_0, %c0_i32_1 : i32, i32, i32
  }
  func.func @transform_6(%arg0: i32) -> (i32, i32) {
    %c0_i32 = arith.constant 0 : i32
    %c0_i32_0 = arith.constant 0 : i32
    %c0_i32_1 = arith.constant 0 : i32
    return %c0_i32, %c0_i32_0 : i32, i32
  }
  func.func @transform_7(%arg0: i32) -> (i32, i32, i32) {
    %c0_i32 = arith.constant 0 : i32
    %c0_i32_0 = arith.constant 0 : i32
    %c0_i32_1 = arith.constant 0 : i32
    %c0_i32_2 = arith.constant 0 : i32
    return %c0_i32, %c0_i32_0, %c0_i32_1 : i32, i32, i32
  }
  func.func @transform_8(%arg0: i32) -> (i32, i32) {
    %c0_i32 = arith.constant 0 : i32
    %c0_i32_0 = arith.constant 0 : i32
    %c0_i32_1 = arith.constant 0 : i32
    return %c0_i32, %c0_i32_0 : i32, i32
  }
  func.func @transform_9(%arg0: i32) -> (i32, i32, i32) {
    %c0_i32 = arith.constant 0 : i32
    %c0_i32_0 = arith.constant 0 : i32
    %c0_i32_1 = arith.constant 0 : i32
    %c0_i32_2 = arith.constant 0 : i32
    return %c0_i32, %c0_i32_0, %c0_i32_1 : i32, i32, i32
  }
  func.func @transform_10(%arg0: i32) -> (i32, i32) {
    %c0_i32 = arith.constant 0 : i32
    %c0_i32_0 = arith.constant 0 : i32
    %c0_i32_1 = arith.constant 0 : i32
    return %c0_i32, %c0_i32_0 : i32, i32
  }
  func.func @transform_11(%arg0: i32) -> (i32, i32, i32) {
    %c0_i32 = arith.constant 0 : i32
    %c0_i32_0 = arith.constant 0 : i32
    %c0_i32_1 = arith.constant 0 : i32
    %c0_i32_2 = arith.constant 0 : i32
    return %c0_i32, %c0_i32_0, %c0_i32_1 : i32, i32, i32
  }
  func.func @transform_12(%arg0: i32) -> (i32, i32) {
    %c0_i32 = arith.constant 0 : i32
    %c0_i32_0 = arith.constant 0 : i32
    %c0_i32_1 = arith.constant 0 : i32
    return %c0_i32, %c0_i32_0 : i32, i32
  }
  func.func @transform_13(%arg0: i32) -> (i32, i32, i32) {
    %c0_i32 = arith.constant 0 : i32
    %c0_i32_0 = arith.constant 0 : i32
    %c0_i32_1 = arith.constant 0 : i32
    %c0_i32_2 = arith.constant 0 : i32
    return %c0_i32, %c0_i32_0, %c0_i32_1 : i32, i32, i32
  }
  func.func @transform_14(%arg0: i32) -> (i32, i32) {
    %c0_i32 = arith.constant 0 : i32
    %c0_i32_0 = arith.constant 0 : i32
    %c0_i32_1 = arith.constant 0 : i32
    return %c0_i32, %c0_i32_0 : i32, i32
  }
  func.func @transform_15(%arg0: i32) -> (i32, i32, i32) {
    %c0_i32 = arith.constant 0 : i32
    %c0_i32_0 = arith.constant 0 : i32
    %c0_i32_1 = arith.constant 0 : i32
    %c0_i32_2 = arith.constant 0 : i32
    return %c0_i32, %c0_i32_0, %c0_i32_1 : i32, i32, i32
  }
  func.func @transform_16(%arg0: i32) -> (i32, i32) {
    %c0_i32 = arith.constant 0 : i32
    %c0_i32_0 = arith.constant 0 : i32
    %c0_i32_1 = arith.constant 0 : i32
    return %c0_i32, %c0_i32_0 : i32, i32
  }
  func.func @transform_17(%arg0: i32) -> (i32, i32, i32) {
    %c0_i32 = arith.constant 0 : i32
    %c0_i32_0 = arith.constant 0 : i32
    %c0_i32_1 = arith.constant 0 : i32
    %c0_i32_2 = arith.constant 0 : i32
    return %c0_i32, %c0_i32_0, %c0_i32_1 : i32, i32, i32
  }
  func.func @transform_18(%arg0: i32) -> (i32, i32) {
    %c0_i32 = arith.constant 0 : i32
    %c0_i32_0 = arith.constant 0 : i32
    %c0_i32_1 = arith.constant 0 : i32
    return %c0_i32, %c0_i32_0 : i32, i32
  }
  func.func @transform_19(%arg0: i32) -> (i32, i32, i32) {
    %c0_i32 = arith.constant 0 : i32
    %c0_i32_0 = arith.constant 0 : i32
    %c0_i32_1 = arith.constant 0 : i32
    %c0_i32_2 = arith.constant 0 : i32
    return %c0_i32, %c0_i32_0, %c0_i32_1 : i32, i32, i32
  }
  func.func @transform_20(%arg0: i32) -> (i32, i32) {
    %c0_i32 = arith.constant 0 : i32
    %c0_i32_0 = arith.constant 0 : i32
    %c0_i32_1 = arith.constant 0 : i32
    return %c0_i32, %c0_i32_0 : i32, i32
  }
  func.func @transform_21(%arg0: i32) -> (i32, i32, i32) {
    %c0_i32 = arith.constant 0 : i32
    %c0_i32_0 = arith.constant 0 : i32
    %c0_i32_1 = arith.constant 0 : i32
    return %arg0, %c0_i32, %c0_i32_0 : i32, i32, i32
  }
}

</mosaic_0001>

<llo_original>
// kernel: dcnn_forward.1
$region0: #{dcnn_forward.1}
  #allocation0 [shape = 'u32[]', space=smem, size = 0x4, offset = 0x4, fixed_abs, tag = 'smem constant byte address 0x4 - core index']
  #allocation1 [shape = 'u32[72,128]{1,0:T(1,128)}', space=vmem, size = 0x9000, scoped, tag = 'internal scratch']
  %s0 = inlined_call_operand.hbm [shape: f32[2,32], index: 0, kind: input, shape index: {}]
  %s1 = inlined_call_operand.hbm [shape: f32[32,32], index: 1, kind: input, shape index: {}]
  %s2 = inlined_call_operand.hbm [shape: f32[1,32], index: 2, kind: input, shape index: {}]
  %s3 = inlined_call_operand.hbm [shape: f32[32,32], index: 3, kind: input, shape index: {}]
  %s4 = inlined_call_operand.hbm [shape: f32[1,32], index: 4, kind: input, shape index: {}]
  %s5 = inlined_call_operand.hbm [shape: f32[3,32,64], index: 5, kind: input, shape index: {}]
  %s6 = inlined_call_operand.hbm [shape: f32[1,64], index: 6, kind: input, shape index: {}]
  %s7 = inlined_call_operand.hbm [shape: f32[3,64,64], index: 7, kind: input, shape index: {}]
  %s8 = inlined_call_operand.hbm [shape: f32[1,64], index: 8, kind: input, shape index: {}]
  %s9 = inlined_call_operand.hbm [shape: f32[3,64,128], index: 9, kind: input, shape index: {}]
  %s10 = inlined_call_operand.hbm [shape: f32[1,128], index: 10, kind: input, shape index: {}]
  %s11 = inlined_call_operand.hbm [shape: f32[3,128,128], index: 11, kind: input, shape index: {}]
  %s12 = inlined_call_operand.hbm [shape: f32[1,128], index: 12, kind: input, shape index: {}]
  %s13 = inlined_call_operand.hbm [shape: f32[3,128,256], index: 13, kind: input, shape index: {}]
  %s14 = inlined_call_operand.hbm [shape: f32[1,256], index: 14, kind: input, shape index: {}]
  %s15 = inlined_call_operand.hbm [shape: f32[3,256,256], index: 15, kind: input, shape index: {}]
  %s16 = inlined_call_operand.hbm [shape: f32[1,256], index: 16, kind: input, shape index: {}]
  %s17 = inlined_call_operand.hbm [shape: f32[3,256,512], index: 17, kind: input, shape index: {}]
  %s18 = inlined_call_operand.hbm [shape: f32[1,512], index: 18, kind: input, shape index: {}]
  %s19 = inlined_call_operand.hbm [shape: f32[3,512,256], index: 19, kind: input, shape index: {}]
  %s20 = inlined_call_operand.hbm [shape: f32[1,256], index: 20, kind: input, shape index: {}]
  %s21 = inlined_call_operand.vmem [shape: f32[2,32,256], index: 21, kind: output, shape index: {}]
  %s22 = sld [smem:[#allocation0]]
  $region178: #{dcnn_forward.1} parent=0
    _
  %s24 = ssub.s32 1, %s22
  %s25 = scalar_select 0, %s24, %s22
  $region1: #{dcnn_forward.1} parent=0
    #allocation2 [shape = 'u8[1024]{0}', space=vmem, size = 0x400, scoped, tag = 'input window, operand 0, single buffered']
    #allocation3 [shape = 's32[1]{0}', space=sflag, size = 0x4, scoped, tag = 'scoped memory for dcnn_forward.1']
    #allocation4 [shape = 'u8[16384]{0}', space=vmem, size = 0x4000, scoped, tag = 'input window, operand 1, single buffered']
    #allocation5 [shape = 's32[1]{0}', space=sflag, size = 0x4, scoped, tag = 'scoped memory for dcnn_forward.1']
    #allocation6 [shape = 'u8[512]{0}', space=vmem, size = 0x400, scoped, tag = 'input window, operand 2, single buffered']
    #allocation7 [shape = 'u8[16384]{0}', space=vmem, size = 0x4000, scoped, tag = 'input window, operand 3, single buffered']
    #allocation8 [shape = 's32[1]{0}', space=sflag, size = 0x4, scoped, tag = 'scoped memory for dcnn_forward.1']
    #allocation9 [shape = 'u8[512]{0}', space=vmem, size = 0x400, scoped, tag = 'input window, operand 4, single buffered']
    #allocation10 [shape = 'u8[49152]{0}', space=vmem, size = 0xc000, scoped, tag = 'input window, operand 5, single buffered']
    #allocation11 [shape = 's32[1]{0}', space=sflag, size = 0x4, scoped, tag = 'scoped memory for dcnn_forward.1']
    #allocation12 [shape = 'u8[512]{0}', space=vmem, size = 0x400, scoped, tag = 'input window, operand 6, single buffered']
    #allocation13 [shape = 'u8[98304]{0}', space=vmem, size = 0x18000, scoped, tag = 'input window, operand 7, single buffered']
    #allocation14 [shape = 's32[1]{0}', space=sflag, size = 0x4, scoped, tag = 'scoped memory for dcnn_forward.1']
    #allocation15 [shape = 'u8[512]{0}', space=vmem, size = 0x400, scoped, tag = 'input window, operand 8, single buffered']
    #allocation16 [shape = 'u8[98304]{0}', space=vmem, size = 0x18000, scoped, tag = 'input window, operand 9, single buffered']
    #allocation17 [shape = 's32[1]{0}', space=sflag, size = 0x4, scoped, tag = 'scoped memory for dcnn_forward.1']
    #allocation18 [shape = 'u8[512]{0}', space=vmem, size = 0x400, scoped, tag = 'input window, operand 10, single buffered']
    #allocation19 [shape = 'u8[196608]{0}', space=vmem, size = 0x30000, scoped, tag = 'input window, operand 11, single buffered']
    #allocation20 [shape = 's32[1]{0}', space=sflag, size = 0x4, scoped, tag = 'scoped memory for dcnn_forward.1']
    #allocation21 [shape = 'u8[512]{0}', space=vmem, size = 0x400, scoped, tag = 'input window, operand 12, single buffered']
    #allocation22 [shape = 'u8[393216]{0}', space=vmem, size = 0x60000, scoped, tag = 'input window, operand 13, single buffered']
    #allocation23 [shape = 's32[1]{0}', space=sflag, size = 0x4, scoped, tag = 'scoped memory for dcnn_forward.1']
    #allocation24 [shape = 'u8[1024]{0}', space=vmem, size = 0x400, scoped, tag = 'input window, operand 14, single buffered']
    #allocation25 [shape = 'u8[786432]{0}', space=vmem, size = 0xc0000, scoped, tag = 'input window, operand 15, single buffered']
    #allocation26 [shape = 's32[1]{0}', space=sflag, size = 0x4, scoped, tag = 'scoped memory for dcnn_forward.1']
    #allocation27 [shape = 'u8[1024]{0}', space=vmem, size = 0x400, scoped, tag = 'input window, operand 16, single buffered']
    #allocation28 [shape = 'u8[1572864]{0}', space=vmem, size = 0x180000, scoped, tag = 'input window, operand 17, single buffered']
    #allocation29 [shape = 's32[1]{0}', space=sflag, size = 0x4, scoped, tag = 'scoped memory for dcnn_forward.1']
    #allocation30 [shape = 'u8[2048]{0}', space=vmem, size = 0x800, scoped, tag = 'input window, operand 18, single buffered']
    #allocation31 [shape = 'u8[1572864]{0}', space=vmem, size = 0x180000, scoped, tag = 'input window, operand 19, single buffered']
    #allocation32 [shape = 's32[1]{0}', space=sflag, size = 0x4, scoped, tag = 'scoped memory for dcnn_forward.1']
    #allocation33 [shape = 'u8[1024]{0}', space=vmem, size = 0x400, scoped, tag = 'input window, operand 20, single buffered']
    %26 = vsyncpa [#allocation3], 0
    %27 = vsyncpa [#allocation5], 0
    %28 = vsyncpa [#allocation8], 0
    %29 = vsyncpa [#allocation11], 0
    %30 = vsyncpa [#allocation14], 0
    %31 = vsyncpa [#allocation17], 0
    %32 = vsyncpa [#allocation20], 0
    %33 = vsyncpa [#allocation23], 0
    %34 = vsyncpa [#allocation26], 0
    %35 = vsyncpa [#allocation29], 0
    %36 = vsyncpa [#allocation32], 0
    // Predicated region
    $region2: #{dcnn_forward.1} parent=1 // pred_check
      _
    $region3: #{dcnn_forward.1} parent=1 // pred_check_branch
      %38 = sbr.rel (0) target = $region5
    $region4: #{dcnn_forward.1} parent=1 // pred_region
      %40 = vsyncadd [#allocation3], 0
      %s42 = sshll.u32 %s0, 4
      %s43 = int_to_ptr.hbm [resolvable:$true] %s42
      %s44 = sshll.u32 [#allocation2], 4
      %s45 = int_to_ptr.vmem [resolvable:$true] %s44
      %47 = dma.hbm_to_vmem [thread:$0]  %s43, 32, %s45, [#allocation3]
    $region5: #{dcnn_forward.1} parent=1 // pred_fallthru
      _
    // Predicated region
    $region6: #{dcnn_forward.1} parent=1 // pred_check
      _
    $region7: #{dcnn_forward.1} parent=1 // pred_check_branch
      %49 = sbr.rel (0) target = $region9
    $region8: #{dcnn_forward.1} parent=1 // pred_region
      %51 = vsyncadd [#allocation5], 0
      %s52 = sshll.u32 %s1, 4
      %s53 = int_to_ptr.hbm [resolvable:$true] %s52
      %s54 = sshll.u32 [#allocation4], 4
      %s55 = int_to_ptr.vmem [resolvable:$true] %s54
      %60 = dma.hbm_to_vmem [thread:$0]  %s53, 512, %s55, [#allocation5], 128, 128, 8
    $region9: #{dcnn_forward.1} parent=1 // pred_fallthru
      _
    // Predicated region
    $region10: #{dcnn_forward.1} parent=1 // pred_check
      _
    $region11: #{dcnn_forward.1} parent=1 // pred_check_branch
      %62 = sbr.rel (0) target = $region13
    $region12: #{dcnn_forward.1} parent=1 // pred_region
      %64 = vsyncadd [#allocation5], 0
      %s66 = sshll.u32 %s2, 4
      %s67 = int_to_ptr.hbm [resolvable:$true] %s66
      %s68 = sshll.u32 [#allocation6], 4
      %s69 = int_to_ptr.vmem [resolvable:$true] %s68
      %71 = dma.hbm_to_vmem [thread:$0]  %s67, 16, %s69, [#allocation5]
    $region13: #{dcnn_forward.1} parent=1 // pred_fallthru
      _
    // Predicated region
    $region14: #{dcnn_forward.1} parent=1 // pred_check
      _
    $region15: #{dcnn_forward.1} parent=1 // pred_check_branch
      %73 = sbr.rel (0) target = $region17
    $region16: #{dcnn_forward.1} parent=1 // pred_region
      %75 = vsyncadd [#allocation8], 0
      %s76 = sshll.u32 %s3, 4
      %s77 = int_to_ptr.hbm [resolvable:$true] %s76
      %s78 = sshll.u32 [#allocation7], 4
      %s79 = int_to_ptr.vmem [resolvable:$true] %s78
      %84 = dma.hbm_to_vmem [thread:$0]  %s77, 512, %s79, [#allocation8], 128, 128, 8
    $region17: #{dcnn_forward.1} parent=1 // pred_fallthru
      _
    // Predicated region
    $region18: #{dcnn_forward.1} parent=1 // pred_check
      _
    $region19: #{dcnn_forward.1} parent=1 // pred_check_branch
      %86 = sbr.rel (0) target = $region21
    $region20: #{dcnn_forward.1} parent=1 // pred_region
      %88 = vsyncadd [#allocation8], 0
      %s90 = sshll.u32 %s4, 4
      %s91 = int_to_ptr.hbm [resolvable:$true] %s90
      %s92 = sshll.u32 [#allocation9], 4
      %s93 = int_to_ptr.vmem [resolvable:$true] %s92
      %95 = dma.hbm_to_vmem [thread:$0]  %s91, 16, %s93, [#allocation8]
    $region21: #{dcnn_forward.1} parent=1 // pred_fallthru
      _
    // Predicated region
    $region22: #{dcnn_forward.1} parent=1 // pred_check
      _
    $region23: #{dcnn_forward.1} parent=1 // pred_check_branch
      %97 = sbr.rel (0) target = $region25
    $region24: #{dcnn_forward.1} parent=1 // pred_region
      %99 = vsyncadd [#allocation11], 0
      %s100 = sshll.u32 %s5, 4
      %s101 = int_to_ptr.hbm [resolvable:$true] %s100
      %s102 = sshll.u32 [#allocation10], 4
      %s103 = int_to_ptr.vmem [resolvable:$true] %s102
      %108 = dma.hbm_to_vmem [thread:$0]  %s101, 1536, %s103, [#allocation11], 128, 128, 8
    $region25: #{dcnn_forward.1} parent=1 // pred_fallthru
      _
    // Predicated region
    $region26: #{dcnn_forward.1} parent=1 // pred_check
      _
    $region27: #{dcnn_forward.1} parent=1 // pred_check_branch
      %110 = sbr.rel (0) target = $region29
    $region28: #{dcnn_forward.1} parent=1 // pred_region
      %112 = vsyncadd [#allocation11], 0
      %s114 = sshll.u32 %s6, 4
      %s115 = int_to_ptr.hbm [resolvable:$true] %s114
      %s116 = sshll.u32 [#allocation12], 4
      %s117 = int_to_ptr.vmem [resolvable:$true] %s116
      %119 = dma.hbm_to_vmem [thread:$0]  %s115, 16, %s117, [#allocation11]
    $region29: #{dcnn_forward.1} parent=1 // pred_fallthru
      _
    // Predicated region
    $region30: #{dcnn_forward.1} parent=1 // pred_check
      _
    $region31: #{dcnn_forward.1} parent=1 // pred_check_branch
      %121 = sbr.rel (0) target = $region33
    $region32: #{dcnn_forward.1} parent=1 // pred_region
      %123 = vsyncadd [#allocation14], 0
      %s124 = sshll.u32 %s7, 4
      %s125 = int_to_ptr.hbm [resolvable:$true] %s124
      %s126 = sshll.u32 [#allocation13], 4
      %s127 = int_to_ptr.vmem [resolvable:$true] %s126
      %132 = dma.hbm_to_vmem [thread:$0]  %s125, 3072, %s127, [#allocation14], 128, 128, 8
    $region33: #{dcnn_forward.1} parent=1 // pred_fallthru
      _
    // Predicated region
    $region34: #{dcnn_forward.1} parent=1 // pred_check
      _
    $region35: #{dcnn_forward.1} parent=1 // pred_check_branch
      %134 = sbr.rel (0) target = $region37
    $region36: #{dcnn_forward.1} parent=1 // pred_region
      %136 = vsyncadd [#allocation14], 0
      %s138 = sshll.u32 %s8, 4
      %s139 = int_to_ptr.hbm [resolvable:$true] %s138
      %s140 = sshll.u32 [#allocation15], 4
      %s141 = int_to_ptr.vmem [resolvable:$true] %s140
      %143 = dma.hbm_to_vmem [thread:$0]  %s139, 16, %s141, [#allocation14]
    $region37: #{dcnn_forward.1} parent=1 // pred_fallthru
      _
    // Predicated region
    $region38: #{dcnn_forward.1} parent=1 // pred_check
      _
    $region39: #{dcnn_forward.1} parent=1 // pred_check_branch
      %145 = sbr.rel (0) target = $region41
    $region40: #{dcnn_forward.1} parent=1 // pred_region
      %147 = vsyncadd [#allocation17], 0
      %s148 = sshll.u32 %s9, 4
      %s149 = int_to_ptr.hbm [resolvable:$true] %s148
      %s150 = sshll.u32 [#allocation16], 4
      %s151 = int_to_ptr.vmem [resolvable:$true] %s150
      %156 = dma.hbm_to_vmem [thread:$0]  %s149, 3072, %s151, [#allocation17], 128, 128, 8
    $region41: #{dcnn_forward.1} parent=1 // pred_fallthru
      _
    // Predicated region
    $region42: #{dcnn_forward.1} parent=1 // pred_check
      _
    $region43: #{dcnn_forward.1} parent=1 // pred_check_branch
      %158 = sbr.rel (0) target = $region45
    $region44: #{dcnn_forward.1} parent=1 // pred_region
      %160 = vsyncadd [#allocation17], 0
      %s162 = sshll.u32 %s10, 4
      %s163 = int_to_ptr.hbm [resolvable:$true] %s162
      %s164 = sshll.u32 [#allocation18], 4
      %s165 = int_to_ptr.vmem [resolvable:$true] %s164
      %167 = dma.hbm_to_vmem [thread:$0]  %s163, 16, %s165, [#allocation17]
    $region45: #{dcnn_forward.1} parent=1 // pred_fallthru
      _
    // Predicated region
    $region46: #{dcnn_forward.1} parent=1 // pred_check
      _
    $region47: #{dcnn_forward.1} parent=1 // pred_check_branch
      %169 = sbr.rel (0) target = $region49
    $region48: #{dcnn_forward.1} parent=1 // pred_region
      %171 = vsyncadd [#allocation20], 0
      %s172 = sshll.u32 %s11, 4
      %s173 = int_to_ptr.hbm [resolvable:$true] %s172
      %s174 = sshll.u32 [#allocation19], 4
      %s175 = int_to_ptr.vmem [resolvable:$true] %s174
      %180 = dma.hbm_to_vmem [thread:$0]  %s173, 6144, %s175, [#allocation20], 128, 128, 8
    $region49: #{dcnn_forward.1} parent=1 // pred_fallthru
      _
    // Predicated region
    $region50: #{dcnn_forward.1} parent=1 // pred_check
      _
    $region51: #{dcnn_forward.1} parent=1 // pred_check_branch
      %182 = sbr.rel (0) target = $region53
    $region52: #{dcnn_forward.1} parent=1 // pred_region
      %184 = vsyncadd [#allocation20], 0
      %s186 = sshll.u32 %s12, 4
      %s187 = int_to_ptr.hbm [resolvable:$true] %s186
      %s188 = sshll.u32 [#allocation21], 4
      %s189 = int_to_ptr.vmem [resolvable:$true] %s188
      %191 = dma.hbm_to_vmem [thread:$0]  %s187, 16, %s189, [#allocation20]
    $region53: #{dcnn_forward.1} parent=1 // pred_fallthru
      _
    // Predicated region
    $region54: #{dcnn_forward.1} parent=1 // pred_check
      _
    $region55: #{dcnn_forward.1} parent=1 // pred_check_branch
      %193 = sbr.rel (0) target = $region57
    $region56: #{dcnn_forward.1} parent=1 // pred_region
      %195 = vsyncadd [#allocation23], 0
      %s196 = sshll.u32 %s13, 4
      %s197 = int_to_ptr.hbm [resolvable:$true] %s196
      %s198 = sshll.u32 [#allocation22], 4
      %s199 = int_to_ptr.vmem [resolvable:$true] %s198
      %204 = dma.hbm_to_vmem [thread:$0]  %s197, 12288, %s199, [#allocation23], 256, 256, 16
    $region57: #{dcnn_forward.1} parent=1 // pred_fallthru
      _
    // Predicated region
    $region58: #{dcnn_forward.1} parent=1 // pred_check
      _
    $region59: #{dcnn_forward.1} parent=1 // pred_check_branch
      %206 = sbr.rel (0) target = $region61
    $region60: #{dcnn_forward.1} parent=1 // pred_region
      %208 = vsyncadd [#allocation23], 0
      %s210 = sshll.u32 %s14, 4
      %s211 = int_to_ptr.hbm [resolvable:$true] %s210
      %s212 = sshll.u32 [#allocation24], 4
      %s213 = int_to_ptr.vmem [resolvable:$true] %s212
      %215 = dma.hbm_to_vmem [thread:$0]  %s211, 32, %s213, [#allocation23]
    $region61: #{dcnn_forward.1} parent=1 // pred_fallthru
      _
    // Predicated region
    $region62: #{dcnn_forward.1} parent=1 // pred_check
      _
    $region63: #{dcnn_forward.1} parent=1 // pred_check_branch
      %217 = sbr.rel (0) target = $region65
    $region64: #{dcnn_forward.1} parent=1 // pred_region
      %219 = vsyncadd [#allocation26], 0
      %s220 = sshll.u32 %s15, 4
      %s221 = int_to_ptr.hbm [resolvable:$true] %s220
      %s222 = sshll.u32 [#allocation25], 4
      %s223 = int_to_ptr.vmem [resolvable:$true] %s222
      %228 = dma.hbm_to_vmem [thread:$0]  %s221, 24576, %s223, [#allocation26], 256, 256, 16
    $region65: #{dcnn_forward.1} parent=1 // pred_fallthru
      _
    // Predicated region
    $region66: #{dcnn_forward.1} parent=1 // pred_check
      _
    $region67: #{dcnn_forward.1} parent=1 // pred_check_branch
      %230 = sbr.rel (0) target = $region69
    $region68: #{dcnn_forward.1} parent=1 // pred_region
      %232 = vsyncadd [#allocation26], 0
      %s234 = sshll.u32 %s16, 4
      %s235 = int_to_ptr.hbm [resolvable:$true] %s234
      %s236 = sshll.u32 [#allocation27], 4
      %s237 = int_to_ptr.vmem [resolvable:$true] %s236
      %239 = dma.hbm_to_vmem [thread:$0]  %s235, 32, %s237, [#allocation26]
    $region69: #{dcnn_forward.1} parent=1 // pred_fallthru
      _
    // Predicated region
    $region70: #{dcnn_forward.1} parent=1 // pred_check
      _
    $region71: #{dcnn_forward.1} parent=1 // pred_check_branch
      %241 = sbr.rel (0) target = $region73
    $region72: #{dcnn_forward.1} parent=1 // pred_region
      %243 = vsyncadd [#allocation29], 0
      %s244 = sshll.u32 %s17, 4
      %s245 = int_to_ptr.hbm [resolvable:$true] %s244
      %s246 = sshll.u32 [#allocation28], 4
      %s247 = int_to_ptr.vmem [resolvable:$true] %s246
      %252 = dma.hbm_to_vmem [thread:$0]  %s245, 49152, %s247, [#allocation29], 512, 512, 32
    $region73: #{dcnn_forward.1} parent=1 // pred_fallthru
      _
    // Predicated region
    $region74: #{dcnn_forward.1} parent=1 // pred_check
      _
    $region75: #{dcnn_forward.1} parent=1 // pred_check_branch
      %254 = sbr.rel (0) target = $region77
    $region76: #{dcnn_forward.1} parent=1 // pred_region
      %256 = vsyncadd [#allocation29], 0
      %s258 = sshll.u32 %s18, 4
      %s259 = int_to_ptr.hbm [resolvable:$true] %s258
      %s260 = sshll.u32 [#allocation30], 4
      %s261 = int_to_ptr.vmem [resolvable:$true] %s260
      %263 = dma.hbm_to_vmem [thread:$0]  %s259, 64, %s261, [#allocation29]
    $region77: #{dcnn_forward.1} parent=1 // pred_fallthru
      _
    // Predicated region
    $region78: #{dcnn_forward.1} parent=1 // pred_check
      _
    $region79: #{dcnn_forward.1} parent=1 // pred_check_branch
      %265 = sbr.rel (0) target = $region81
    $region80: #{dcnn_forward.1} parent=1 // pred_region
      %267 = vsyncadd [#allocation32], 0
      %s268 = sshll.u32 %s19, 4
      %s269 = int_to_ptr.hbm [resolvable:$true] %s268
      %s270 = sshll.u32 [#allocation31], 4
      %s271 = int_to_ptr.vmem [resolvable:$true] %s270
      %276 = dma.hbm_to_vmem [thread:$0]  %s269, 49152, %s271, [#allocation32], 256, 256, 16
    $region81: #{dcnn_forward.1} parent=1 // pred_fallthru
      _
    // Predicated region
    $region82: #{dcnn_forward.1} parent=1 // pred_check
      _
    $region83: #{dcnn_forward.1} parent=1 // pred_check_branch
      %278 = sbr.rel (0) target = $region85
    $region84: #{dcnn_forward.1} parent=1 // pred_region
      %280 = vsyncadd [#allocation32], 0
      %s282 = sshll.u32 %s20, 4
      %s283 = int_to_ptr.hbm [resolvable:$true] %s282
      %s284 = sshll.u32 [#allocation33], 4
      %s285 = int_to_ptr.vmem [resolvable:$true] %s284
      %287 = dma.hbm_to_vmem [thread:$0]  %s283, 32, %s285, [#allocation32]
    $region85: #{dcnn_forward.1} parent=1 // pred_fallthru
      _
    // Predicated region
    $region86: #{dcnn_forward.1} parent=1 // pred_check
      _
    $region87: #{dcnn_forward.1} parent=1 // pred_check_branch
      %289 = sbr.rel (0) target = $region89
    $region88: #{dcnn_forward.1} parent=1 // pred_region
      %291 = dma.done [#allocation3], 32
    $region89: #{dcnn_forward.1} parent=1 // pred_fallthru
      _
    // Predicated region
    $region90: #{dcnn_forward.1} parent=1 // pred_check
      _
    $region91: #{dcnn_forward.1} parent=1 // pred_check_branch
      %293 = sbr.rel (0) target = $region93
    $region92: #{dcnn_forward.1} parent=1 // pred_region
      %295 = dma.done [#allocation5], 512
    $region93: #{dcnn_forward.1} parent=1 // pred_fallthru
      _
    // Predicated region
    $region94: #{dcnn_forward.1} parent=1 // pred_check
      _
    $region95: #{dcnn_forward.1} parent=1 // pred_check_branch
      %297 = sbr.rel (0) target = $region97
    $region96: #{dcnn_forward.1} parent=1 // pred_region
      %299 = dma.done [#allocation5], 16
    $region97: #{dcnn_forward.1} parent=1 // pred_fallthru
      _
    // Predicated region
    $region98: #{dcnn_forward.1} parent=1 // pred_check
      _
    $region99: #{dcnn_forward.1} parent=1 // pred_check_branch
      %301 = sbr.rel (0) target = $region101
    $region100: #{dcnn_forward.1} parent=1 // pred_region
      %303 = dma.done [#allocation8], 512
    $region101: #{dcnn_forward.1} parent=1 // pred_fallthru
      _
    // Predicated region
    $region102: #{dcnn_forward.1} parent=1 // pred_check
      _
    $region103: #{dcnn_forward.1} parent=1 // pred_check_branch
      %305 = sbr.rel (0) target = $region105
    $region104: #{dcnn_forward.1} parent=1 // pred_region
      %307 = dma.done [#allocation8], 16
    $region105: #{dcnn_forward.1} parent=1 // pred_fallthru
      _
    // Predicated region
    $region106: #{dcnn_forward.1} parent=1 // pred_check
      _
    $region107: #{dcnn_forward.1} parent=1 // pred_check_branch
      %309 = sbr.rel (0) target = $region109
    $region108: #{dcnn_forward.1} parent=1 // pred_region
      %311 = dma.done [#allocation11], 1536
    $region109: #{dcnn_forward.1} parent=1 // pred_fallthru
      _
    // Predicated region
    $region110: #{dcnn_forward.1} parent=1 // pred_check
      _
    $region111: #{dcnn_forward.1} parent=1 // pred_check_branch
      %313 = sbr.rel (0) target = $region113
    $region112: #{dcnn_forward.1} parent=1 // pred_region
      %315 = dma.done [#allocation11], 16
    $region113: #{dcnn_forward.1} parent=1 // pred_fallthru
      _
    // Predicated region
    $region114: #{dcnn_forward.1} parent=1 // pred_check
      _
    $region115: #{dcnn_forward.1} parent=1 // pred_check_branch
      %317 = sbr.rel (0) target = $region117
    $region116: #{dcnn_forward.1} parent=1 // pred_region
      %319 = dma.done [#allocation14], 3072
    $region117: #{dcnn_forward.1} parent=1 // pred_fallthru
      _
    // Predicated region
    $region118: #{dcnn_forward.1} parent=1 // pred_check
      _
    $region119: #{dcnn_forward.1} parent=1 // pred_check_branch
      %321 = sbr.rel (0) target = $region121
    $region120: #{dcnn_forward.1} parent=1 // pred_region
      %323 = dma.done [#allocation14], 16
    $region121: #{dcnn_forward.1} parent=1 // pred_fallthru
      _
    // Predicated region
    $region122: #{dcnn_forward.1} parent=1 // pred_check
      _
    $region123: #{dcnn_forward.1} parent=1 // pred_check_branch
      %325 = sbr.rel (0) target = $region125
    $region124: #{dcnn_forward.1} parent=1 // pred_region
      %327 = dma.done [#allocation17], 3072
    $region125: #{dcnn_forward.1} parent=1 // pred_fallthru
      _
    // Predicated region
    $region126: #{dcnn_forward.1} parent=1 // pred_check
      _
    $region127: #{dcnn_forward.1} parent=1 // pred_check_branch
      %329 = sbr.rel (0) target = $region129
    $region128: #{dcnn_forward.1} parent=1 // pred_region
      %331 = dma.done [#allocation17], 16
    $region129: #{dcnn_forward.1} parent=1 // pred_fallthru
      _
    // Predicated region
    $region130: #{dcnn_forward.1} parent=1 // pred_check
      _
    $region131: #{dcnn_forward.1} parent=1 // pred_check_branch
      %333 = sbr.rel (0) target = $region133
    $region132: #{dcnn_forward.1} parent=1 // pred_region
      %335 = dma.done [#allocation20], 6144
    $region133: #{dcnn_forward.1} parent=1 // pred_fallthru
      _
    // Predicated region
    $region134: #{dcnn_forward.1} parent=1 // pred_check
      _
    $region135: #{dcnn_forward.1} parent=1 // pred_check_branch
      %337 = sbr.rel (0) target = $region137
    $region136: #{dcnn_forward.1} parent=1 // pred_region
      %339 = dma.done [#allocation20], 16
    $region137: #{dcnn_forward.1} parent=1 // pred_fallthru
      _
    // Predicated region
    $region138: #{dcnn_forward.1} parent=1 // pred_check
      _
    $region139: #{dcnn_forward.1} parent=1 // pred_check_branch
      %341 = sbr.rel (0) target = $region141
    $region140: #{dcnn_forward.1} parent=1 // pred_region
      %343 = dma.done [#allocation23], 12288
    $region141: #{dcnn_forward.1} parent=1 // pred_fallthru
      _
    // Predicated region
    $region142: #{dcnn_forward.1} parent=1 // pred_check
      _
    $region143: #{dcnn_forward.1} parent=1 // pred_check_branch
      %345 = sbr.rel (0) target = $region145
    $region144: #{dcnn_forward.1} parent=1 // pred_region
      %347 = dma.done [#allocation23], 32
    $region145: #{dcnn_forward.1} parent=1 // pred_fallthru
      _
    // Predicated region
    $region146: #{dcnn_forward.1} parent=1 // pred_check
      _
    $region147: #{dcnn_forward.1} parent=1 // pred_check_branch
      %349 = sbr.rel (0) target = $region149
    $region148: #{dcnn_forward.1} parent=1 // pred_region
      %351 = dma.done [#allocation26], 24576
    $region149: #{dcnn_forward.1} parent=1 // pred_fallthru
      _
    // Predicated region
    $region150: #{dcnn_forward.1} parent=1 // pred_check
      _
    $region151: #{dcnn_forward.1} parent=1 // pred_check_branch
      %353 = sbr.rel (0) target = $region153
    $region152: #{dcnn_forward.1} parent=1 // pred_region
      %355 = dma.done [#allocation26], 32
    $region153: #{dcnn_forward.1} parent=1 // pred_fallthru
      _
    // Predicated region
    $region154: #{dcnn_forward.1} parent=1 // pred_check
      _
    $region155: #{dcnn_forward.1} parent=1 // pred_check_branch
      %357 = sbr.rel (0) target = $region157
    $region156: #{dcnn_forward.1} parent=1 // pred_region
      %359 = dma.done [#allocation29], 49152
    $region157: #{dcnn_forward.1} parent=1 // pred_fallthru
      _
    // Predicated region
    $region158: #{dcnn_forward.1} parent=1 // pred_check
      _
    $region159: #{dcnn_forward.1} parent=1 // pred_check_branch
      %361 = sbr.rel (0) target = $region161
    $region160: #{dcnn_forward.1} parent=1 // pred_region
      %363 = dma.done [#allocation29], 64
    $region161: #{dcnn_forward.1} parent=1 // pred_fallthru
      _
    // Predicated region
    $region162: #{dcnn_forward.1} parent=1 // pred_check
      _
    $region163: #{dcnn_forward.1} parent=1 // pred_check_branch
      %365 = sbr.rel (0) target = $region165
    $region164: #{dcnn_forward.1} parent=1 // pred_region
      %367 = dma.done [#allocation32], 49152
    $region165: #{dcnn_forward.1} parent=1 // pred_fallthru
      _
    // Predicated region
    $region166: #{dcnn_forward.1} parent=1 // pred_check
      _
    $region167: #{dcnn_forward.1} parent=1 // pred_check_branch
      %369 = sbr.rel (0) target = $region169
    $region168: #{dcnn_forward.1} parent=1 // pred_region
      %371 = dma.done [#allocation32], 32
    $region169: #{dcnn_forward.1} parent=1 // pred_fallthru
      _
    %v372 = vld [vmem:[#allocation2] sm:$0x3]
    %v373 = vld [vmem:[#allocation4] sm:$0xff]
    %v374 = vld [vmem:[#allocation4 + $0x8] sm:$0xff]
    %v375 = vld [vmem:[#allocation4 + $0x10] sm:$0xff]
    %v376 = vld [vmem:[#allocation4 + $0x18] sm:$0xff]
    %v377 = vld [vmem:[#allocation6] sm:$0x1]
    %v379 = vperm.slane %v377, 0
    %vm381 = vcmask 261120
    %v383 = vsel %vm381, %v372, 0
    %385 = vmatpush.msra.mxu0 0.0
    %386 = vmatpush.msra.mxu0 0.0
    %387 = vmatpush.msra.mxu0 0.0
    %388 = vmatpush.msra.mxu0 0.0
    %389 = vmatpush.msra.mxu0 0.0
    %390 = vmatpush.msra.mxu0 0.0
    %391 = vmatpush.msra.mxu0 0.0
    %392 = vmatpush.msra.mxu0 0.0
    %393 = vmatpush.msra.mxu0 0.0
    %394 = vmatpush.msra.mxu0 0.0
    %395 = vmatpush.msra.mxu0 0.0
    %396 = vmatpush.msra.mxu0 0.0
    %397 = vmatpush.msra.mxu0 %v376
    %398 = vmatpush.msra.mxu0 %v375
    %399 = vmatpush.msra.mxu0 %v374
    %400 = vmatpush.msra.mxu0 %v373
    %401 = vmatmul.f32.gmra.mxu0 %v383
    %v402 = vpop.f32.mrf.mxu0
    %v403 = vadd.f32 %v379, %v402
    %404 = vdwg.mxu0
    %v405 = vmul.f32 %v403, 0.5
    %v406 = vmul.f32 %v403, 0.70710677
    %v407 = vmul.f32 %v406, %v406
    %v408 = vmin.f32 16.0, %v407
    %v409 = vmul.f32 %v408, 2.1237322e-06
    %v410 = vadd.f32 %v409, 0.00028619796
    %v411 = vmul.f32 %v408, %v410
    %v412 = vadd.f32 %v411, 0.0036580483
    %v413 = vmul.f32 %v408, %v412
    %v414 = vadd.f32 %v413, 0.05243302
    %v415 = vmul.f32 %v408, %v414
    %v416 = vadd.f32 %v415, 0.18741608
    %v417 = vmul.f32 %v408, %v416
    %v418 = vadd.f32 %v417, 1.1283791
    %v419 = vmul.f32 %v406, %v418
    %v420 = vmul.f32 %v408, 3.8918573e-05
    %v421 = vadd.f32 %v420, 0.001143296
    %v422 = vmul.f32 %v408, %v421
    %v423 = vadd.f32 %v422, 0.014752088
    %v424 = vmul.f32 %v408, %v423
    %v425 = vadd.f32 %v424, 0.112945676
    %v426 = vmul.f32 %v408, %v425
    %v427 = vadd.f32 %v426, 0.4994258
    %v428 = vmul.f32 %v408, %v427
    %v429 = vadd.f32 %v428, 1.0
    %v430 = vrcp.pop %v429
    %v431 = vmul.f32 %v429, %v430
    %v432 = vsub.f32 1.0, %v431
    %v433 = vmul.f32 %v430, %v432
    %v434 = vadd.f32 %v430, %v433
    %vm435 = vweird.f32 %v429
    %vm436 = vweird.f32 %v430
    %vm437 = vmor %vm435, %vm436
    %v438 = vsel %vm437, %v430, %v434
    %v439 = vand.u32 2147483647, %v429
    %vm440 = vcmp.eq.f32.partialorder %v439, 8.507059e+37
    %v441 = vand.u32 %v429, 2147483648
    %v442 = vor.u32 1.1754944e-38, %v441
    %v443 = vsel %vm440, %v442, %v438
    %v444 = vmul.f32 %v419, %v443
    %v445 = vmin.f32 %v444, 1.0
    %v446 = vmax.f32 %v445, -1.0
    %v447 = vadd.f32 %v446, 1.0
    %v448 = vmul.f32 %v405, %v447
    %v449 = vld [vmem:[#allocation7] sm:$0xff]
    %v450 = vld [vmem:[#allocation7 + $0x8] sm:$0xff]
    %v451 = vld [vmem:[#allocation7 + $0x10] sm:$0xff]
    %v452 = vld [vmem:[#allocation7 + $0x18] sm:$0xff]
    %v453 = vld [vmem:[#allocation9] sm:$0x1]
    %v455 = vperm.slane %v453, 0
    %457 = vmatpush.msra.mxu0 0.0
    %458 = vmatpush.msra.mxu0 0.0
    %459 = vmatpush.msra.mxu0 0.0
    %460 = vmatpush.msra.mxu0 0.0
    %461 = vmatpush.msra.mxu0 0.0
    %462 = vmatpush.msra.mxu0 0.0
    %463 = vmatpush.msra.mxu0 0.0
    %464 = vmatpush.msra.mxu0 0.0
    %465 = vmatpush.msra.mxu0 0.0
    %466 = vmatpush.msra.mxu0 0.0
    %467 = vmatpush.msra.mxu0 0.0
    %468 = vmatpush.msra.mxu0 0.0
    %469 = vmatpush.msra.mxu0 %v452
    %470 = vmatpush.msra.mxu0 %v451
    %471 = vmatpush.msra.mxu0 %v450
    %472 = vmatpush.msra.mxu0 %v449
    %473 = vmatmul.f32.gmra.mxu0 %v383
    %v474 = vpop.f32.mrf.mxu0
    %v475 = vadd.f32 %v455, %v474
    %476 = vdwg.mxu0
    %v477 = vmul.f32 %v475, 0.5
    %v478 = vmul.f32 %v475, 0.70710677
    %v479 = vmul.f32 %v478, %v478
    %v480 = vmin.f32 16.0, %v479
    %v481 = vmul.f32 %v480, 2.1237322e-06
    %v482 = vadd.f32 %v481, 0.00028619796
    %v483 = vmul.f32 %v480, %v482
    %v484 = vadd.f32 %v483, 0.0036580483
    %v485 = vmul.f32 %v480, %v484
    %v486 = vadd.f32 %v485, 0.05243302
    %v487 = vmul.f32 %v480, %v486
    %v488 = vadd.f32 %v487, 0.18741608
    %v489 = vmul.f32 %v480, %v488
    %v490 = vadd.f32 %v489, 1.1283791
    %v491 = vmul.f32 %v478, %v490
    %v492 = vmul.f32 %v480, 3.8918573e-05
    %v493 = vadd.f32 %v492, 0.001143296
    %v494 = vmul.f32 %v480, %v493
    %v495 = vadd.f32 %v494, 0.014752088
    %v496 = vmul.f32 %v480, %v495
    %v497 = vadd.f32 %v496, 0.112945676
    %v498 = vmul.f32 %v480, %v497
    %v499 = vadd.f32 %v498, 0.4994258
    %v500 = vmul.f32 %v480, %v499
    %v501 = vadd.f32 %v500, 1.0
    %v502 = vrcp.pop %v501
    %v503 = vmul.f32 %v501, %v502
    %v504 = vsub.f32 1.0, %v503
    %v505 = vmul.f32 %v502, %v504
    %v506 = vadd.f32 %v502, %v505
    %vm507 = vweird.f32 %v501
    %vm508 = vweird.f32 %v502
    %vm509 = vmor %vm507, %vm508
    %v510 = vsel %vm509, %v502, %v506
    %v511 = vand.u32 2147483647, %v501
    %vm512 = vcmp.eq.f32.partialorder %v511, 8.507059e+37
    %v513 = vand.u32 %v501, 2147483648
    %v514 = vor.u32 1.1754944e-38, %v513
    %v515 = vsel %vm512, %v514, %v510
    %v516 = vmul.f32 %v491, %v515
    %v517 = vmin.f32 %v516, 1.0
    %v518 = vmax.f32 %v517, -1.0
    %v519 = vadd.f32 %v518, 1.0
    %v520 = vmul.f32 %v477, %v519
    %v522 = vrot.slane %v448, 1
    %v525 = vrot.slane %v520, 1
    %v526 = vperm.slane %v520, 0
    %v527 = vperm.slane %v525, 0
    %vm530 = vcmask 1040384
    %v531 = vsel %vm530, %v448, %v526
    %v532 = vsel %vm530, %v522, %v527
    %v535 = vrot.slane %v531, 1
    %v536 = vrot.slane %v532, 1
    %v539 = vsel %vm530, %v535, 0.0
    %v540 = vsel %vm530, %v536, 0.0
    %v541 = vld [vmem:[#allocation10] sm:$0xff]
    %v542 = vld [vmem:[#allocation10 + $0x8] sm:$0xff]
    %v543 = vld [vmem:[#allocation10 + $0x10] sm:$0xff]
    %v544 = vld [vmem:[#allocation10 + $0x18] sm:$0xff]
    %v545 = vld [vmem:[#allocation12] sm:$0x1]
    %v547 = vperm.slane %v545, 0
    %549 = vst [vmem:[#allocation1] ss:$4 sm:$0xff] %v531
    %s550 = scalar_lea.vmem [#allocation1], 1
    %551 = vst [vmem:[%s550] ss:$4 sm:$0xff] %v532
    %v552 = vld.sshfl [vmem:[#allocation1] sm:$0xff pattern:$0x73625140]
    %v553 = vsel %vm381, %v552, 0
    %555 = vmatpush.msra.mxu0 0.0
    %556 = vmatpush.msra.mxu0 0.0
    %557 = vmatpush.msra.mxu0 0.0
    %558 = vmatpush.msra.mxu0 0.0
    %559 = vmatpush.msra.mxu0 0.0
    %560 = vmatpush.msra.mxu0 0.0
    %561 = vmatpush.msra.mxu0 0.0
    %562 = vmatpush.msra.mxu0 0.0
    %563 = vmatpush.msra.mxu0 0.0
    %564 = vmatpush.msra.mxu0 0.0
    %565 = vmatpush.msra.mxu0 0.0
    %566 = vmatpush.msra.mxu0 0.0
    %567 = vmatpush.msra.mxu0 %v544
    %568 = vmatpush.msra.mxu0 %v543
    %569 = vmatpush.msra.mxu0 %v542
    %570 = vmatpush.msra.mxu0 %v541
    %571 = vmatmul.f32.gmra.mxu0 %v553
    %v572 = vpop.f32.mrf.mxu0
    %v573 = vadd.f32 %v547, %v572
    %574 = vdwg.mxu0
    %v575 = vmul.f32 %v573, 0.5
    %v576 = vmul.f32 %v573, 0.70710677
    %v577 = vmul.f32 %v576, %v576
    %v578 = vmin.f32 16.0, %v577
    %v579 = vmul.f32 %v578, 2.1237322e-06
    %v580 = vadd.f32 %v579, 0.00028619796
    %v581 = vmul.f32 %v578, %v580
    %v582 = vadd.f32 %v581, 0.0036580483
    %v583 = vmul.f32 %v578, %v582
    %v584 = vadd.f32 %v583, 0.05243302
    %v585 = vmul.f32 %v578, %v584
    %v586 = vadd.f32 %v585, 0.18741608
    %v587 = vmul.f32 %v578, %v586
    %v588 = vadd.f32 %v587, 1.1283791
    %v589 = vmul.f32 %v576, %v588
    %v590 = vmul.f32 %v578, 3.8918573e-05
    %v591 = vadd.f32 %v590, 0.001143296
    %v592 = vmul.f32 %v578, %v591
    %v593 = vadd.f32 %v592, 0.014752088
    %v594 = vmul.f32 %v578, %v593
    %v595 = vadd.f32 %v594, 0.112945676
    %v596 = vmul.f32 %v578, %v595
    %v597 = vadd.f32 %v596, 0.4994258
    %v598 = vmul.f32 %v578, %v597
    %v599 = vadd.f32 %v598, 1.0
    %v600 = vrcp.pop %v599
    %v601 = vmul.f32 %v599, %v600
    %v602 = vsub.f32 1.0, %v601
    %v603 = vmul.f32 %v600, %v602
    %v604 = vadd.f32 %v600, %v603
    %vm605 = vweird.f32 %v599
    %vm606 = vweird.f32 %v600
    %vm607 = vmor %vm605, %vm606
    %v608 = vsel %vm607, %v600, %v604
    %v609 = vand.u32 2147483647, %v599
    %vm610 = vcmp.eq.f32.partialorder %v609, 8.507059e+37
    %v611 = vand.u32 %v599, 2147483648
    %v612 = vor.u32 1.1754944e-38, %v611
    %v613 = vsel %vm610, %v612, %v608
    %v614 = vmul.f32 %v589, %v613
    %v615 = vmin.f32 %v614, 1.0
    %v616 = vmax.f32 %v615, -1.0
    %v617 = vadd.f32 %v616, 1.0
    %v618 = vmul.f32 %v575, %v617
    %s619 = scalar_lea.vmem [#allocation10], 32
    %v620 = vld [vmem:[%s619] sm:$0xff]
    %v621 = vld [vmem:[%s619 + $0x8] sm:$0xff]
    %v622 = vld [vmem:[%s619 + $0x10] sm:$0xff]
    %v623 = vld [vmem:[%s619 + $0x18] sm:$0xff]
    %s624 = scalar_lea.vmem [#allocation10], 64
    %v625 = vld [vmem:[%s624] sm:$0xff]
    %v626 = vld [vmem:[%s624 + $0x8] sm:$0xff]
    %v627 = vld [vmem:[%s624 + $0x10] sm:$0xff]
    %v628 = vld [vmem:[%s624 + $0x18] sm:$0xff]
    %631 = vst [vmem:[#allocation1] ss:$4 sm:$0xff] %v539
    %s632 = scalar_lea.vmem [#allocation1], 1
    %633 = vst [vmem:[%s632] ss:$4 sm:$0xff] %v540
    %v634 = vld.sshfl [vmem:[#allocation1] sm:$0xff pattern:$0x73625140]
    %v635 = vsel %vm381, %v634, 0
    %637 = vmatpush.msra.mxu0 0.0
    %638 = vmatpush.msra.mxu0 0.0
    %639 = vmatpush.msra.mxu0 0.0
    %640 = vmatpush.msra.mxu0 0.0
    %641 = vmatpush.msra.mxu0 0.0
    %642 = vmatpush.msra.mxu0 0.0
    %643 = vmatpush.msra.mxu0 0.0
    %644 = vmatpush.msra.mxu0 0.0
    %645 = vmatpush.msra.mxu0 0.0
    %646 = vmatpush.msra.mxu0 0.0
    %647 = vmatpush.msra.mxu0 0.0
    %648 = vmatpush.msra.mxu0 0.0
    %649 = vmatpush.msra.mxu0 %v628
    %650 = vmatpush.msra.mxu0 %v627
    %651 = vmatpush.msra.mxu0 %v626
    %652 = vmatpush.msra.mxu0 %v625
    %653 = vmatmul.f32.gmra.mxu0 %v635
    %v654 = vpop.f32.mrf.mxu0
    %v655 = vadd.f32 0.0, %v654
    %656 = vdwg.mxu0
    %657 = vst [vmem:[#allocation1] ss:$4 sm:$0xff] %v531
    %s658 = scalar_lea.vmem [#allocation1], 1
    %659 = vst [vmem:[%s658] ss:$4 sm:$0xff] %v532
    %v660 = vld.sshfl [vmem:[#allocation1] sm:$0xff pattern:$0x73625140]
    %v661 = vsel %vm381, %v660, 0
    %663 = vmatpush.msra.mxu0 0.0
    %664 = vmatpush.msra.mxu0 0.0
    %665 = vmatpush.msra.mxu0 0.0
    %666 = vmatpush.msra.mxu0 0.0
    %667 = vmatpush.msra.mxu0 0.0
    %668 = vmatpush.msra.mxu0 0.0
    %669 = vmatpush.msra.mxu0 0.0
    %670 = vmatpush.msra.mxu0 0.0
    %671 = vmatpush.msra.mxu0 0.0
    %672 = vmatpush.msra.mxu0 0.0
    %673 = vmatpush.msra.mxu0 0.0
    %674 = vmatpush.msra.mxu0 0.0
    %675 = vmatpush.msra.mxu0 %v623
    %676 = vmatpush.msra.mxu0 %v622
    %677 = vmatpush.msra.mxu0 %v621
    %678 = vmatpush.msra.mxu0 %v620
    %679 = vmatmul.f32.gmra.mxu0 %v661
    %v680 = vpop.f32.mrf.mxu0
    %v681 = vadd.f32 %v655, %v680
    %682 = vdwg.mxu0
    %v683 = vadd.f32 %v681, %v547
    %v684 = vmul.f32 %v683, 0.5
    %v685 = vmul.f32 %v683, 0.70710677
    %v686 = vmul.f32 %v685, %v685
    %v687 = vmin.f32 16.0, %v686
    %v688 = vmul.f32 %v687, 2.1237322e-06
    %v689 = vadd.f32 %v688, 0.00028619796
    %v690 = vmul.f32 %v687, %v689
    %v691 = vadd.f32 %v690, 0.0036580483
    %v692 = vmul.f32 %v687, %v691
    %v693 = vadd.f32 %v692, 0.05243302
    %v694 = vmul.f32 %v687, %v693
    %v695 = vadd.f32 %v694, 0.18741608
    %v696 = vmul.f32 %v687, %v695
    %v697 = vadd.f32 %v696, 1.1283791
    %v698 = vmul.f32 %v685, %v697
    %v699 = vmul.f32 %v687, 3.8918573e-05
    %v700 = vadd.f32 %v699, 0.001143296
    %v701 = vmul.f32 %v687, %v700
    %v702 = vadd.f32 %v701, 0.014752088
    %v703 = vmul.f32 %v687, %v702
    %v704 = vadd.f32 %v703, 0.112945676
    %v705 = vmul.f32 %v687, %v704
    %v706 = vadd.f32 %v705, 0.4994258
    %v707 = vmul.f32 %v687, %v706
    %v708 = vadd.f32 %v707, 1.0
    %v709 = vrcp.pop %v708
    %v710 = vmul.f32 %v708, %v709
    %v711 = vsub.f32 1.0, %v710
    %v712 = vmul.f32 %v709, %v711
    %v713 = vadd.f32 %v709, %v712
    %vm714 = vweird.f32 %v708
    %vm715 = vweird.f32 %v709
    %vm716 = vmor %vm714, %vm715
    %v717 = vsel %vm716, %v709, %v713
    %v718 = vand.u32 2147483647, %v708
    %vm719 = vcmp.eq.f32.partialorder %v718, 8.507059e+37
    %v720 = vand.u32 %v708, 2147483648
    %v721 = vor.u32 1.1754944e-38, %v720
    %v722 = vsel %vm719, %v721, %v717
    %v723 = vmul.f32 %v698, %v722
    %v724 = vmin.f32 %v723, 1.0
    %v725 = vmax.f32 %v724, -1.0
    %v726 = vadd.f32 %v725, 1.0
    %v727 = vmul.f32 %v684, %v726
    %v729 = vrot.slane %v618, 1
    %v730 = vrot.slane %v618, 2
    %v731 = vrot.slane %v618, 3
    %v736 = vrot.slane %v727, 1
    %v737 = vrot.slane %v727, 2
    %v738 = vrot.slane %v727, 3
    %v739 = vperm.slane %v727, 0
    %v740 = vperm.slane %v736, 0
    %v741 = vperm.slane %v737, 0
    %v742 = vperm.slane %v738, 0
    %v747 = vsel %vm530, %v618, %v739
    %v748 = vsel %vm530, %v729, %v740
    %v749 = vsel %vm530, %v730, %v741
    %v750 = vsel %vm530, %v731, %v742
    %v751 = vld [vmem:[#allocation13] sm:$0xff]
    %v752 = vld [vmem:[#allocation13 + $0x8] sm:$0xff]
    %v753 = vld [vmem:[#allocation13 + $0x10] sm:$0xff]
    %v754 = vld [vmem:[#allocation13 + $0x18] sm:$0xff]
    %v755 = vld [vmem:[#allocation13 + $0x20] sm:$0xff]
    %v756 = vld [vmem:[#allocation13 + $0x28] sm:$0xff]
    %v757 = vld [vmem:[#allocation13 + $0x30] sm:$0xff]
    %v758 = vld [vmem:[#allocation13 + $0x38] sm:$0xff]
    %763 = vst [vmem:[#allocation1] ss:$4 sm:$0xff] %v747
    %s764 = scalar_lea.vmem [#allocation1], 1
    %765 = vst [vmem:[%s764] ss:$4 sm:$0xff] %v748
    %s766 = scalar_lea.vmem [#allocation1], 2
    %767 = vst [vmem:[%s766] ss:$4 sm:$0xff] %v749
    %s768 = scalar_lea.vmem [#allocation1], 3
    %769 = vst [vmem:[%s768] ss:$4 sm:$0xff] %v750
    %v770 = vld.sshfl [vmem:[#allocation1] sm:$0xff pattern:$0x73625140]
    %vm771 = vcmask 523264
    %v772 = vsel %vm771, %v770, 0
    %774 = vmatpush.msra.mxu0 0.0
    %775 = vmatpush.msra.mxu0 0.0
    %776 = vmatpush.msra.mxu0 0.0
    %777 = vmatpush.msra.mxu0 0.0
    %778 = vmatpush.msra.mxu0 0.0
    %779 = vmatpush.msra.mxu0 0.0
    %780 = vmatpush.msra.mxu0 0.0
    %781 = vmatpush.msra.mxu0 0.0
    %782 = vmatpush.msra.mxu0 %v758
    %783 = vmatpush.msra.mxu0 %v757
    %784 = vmatpush.msra.mxu0 %v756
    %785 = vmatpush.msra.mxu0 %v755
    %786 = vmatpush.msra.mxu0 %v754
    %787 = vmatpush.msra.mxu0 %v753
    %788 = vmatpush.msra.mxu0 %v752
    %789 = vmatpush.msra.mxu0 %v751
    %790 = vmatmul.f32.gmra.mxu0 %v772
    %v791 = vpop.f32.mrf.mxu0
    %v792 = vadd.f32 0.0, %v791
    %793 = vdwg.mxu0
    %v795 = vrot.slane %v792, 4
    %s796 = scalar_lea.vmem [#allocation13], 64
    %v797 = vld [vmem:[%s796] sm:$0xff]
    %v798 = vld [vmem:[%s796 + $0x8] sm:$0xff]
    %v799 = vld [vmem:[%s796 + $0x10] sm:$0xff]
    %v800 = vld [vmem:[%s796 + $0x18] sm:$0xff]
    %v801 = vld [vmem:[%s796 + $0x20] sm:$0xff]
    %v802 = vld [vmem:[%s796 + $0x28] sm:$0xff]
    %v803 = vld [vmem:[%s796 + $0x30] sm:$0xff]
    %v804 = vld [vmem:[%s796 + $0x38] sm:$0xff]
    %v805 = vld [vmem:[#allocation15] sm:$0x1]
    %v807 = vperm.slane %v805, 0
    %809 = vst [vmem:[#allocation1] ss:$4 sm:$0xff] %v747
    %s810 = scalar_lea.vmem [#allocation1], 1
    %811 = vst [vmem:[%s810] ss:$4 sm:$0xff] %v748
    %s812 = scalar_lea.vmem [#allocation1], 2
    %813 = vst [vmem:[%s812] ss:$4 sm:$0xff] %v749
    %s814 = scalar_lea.vmem [#allocation1], 3
    %815 = vst [vmem:[%s814] ss:$4 sm:$0xff] %v750
    %v816 = vld.sshfl [vmem:[#allocation1] sm:$0xff pattern:$0x73625140]
    %v817 = vsel %vm771, %v816, 0
    %819 = vmatpush.msra.mxu0 0.0
    %820 = vmatpush.msra.mxu0 0.0
    %821 = vmatpush.msra.mxu0 0.0
    %822 = vmatpush.msra.mxu0 0.0
    %823 = vmatpush.msra.mxu0 0.0
    %824 = vmatpush.msra.mxu0 0.0
    %825 = vmatpush.msra.mxu0 0.0
    %826 = vmatpush.msra.mxu0 0.0
    %827 = vmatpush.msra.mxu0 %v804
    %828 = vmatpush.msra.mxu0 %v803
    %829 = vmatpush.msra.mxu0 %v802
    %830 = vmatpush.msra.mxu0 %v801
    %831 = vmatpush.msra.mxu0 %v800
    %832 = vmatpush.msra.mxu0 %v799
    %833 = vmatpush.msra.mxu0 %v798
    %834 = vmatpush.msra.mxu0 %v797
    %835 = vmatmul.f32.gmra.mxu0 %v817
    %v836 = vpop.f32.mrf.mxu0
    %v837 = vadd.f32 %v807, %v836
    %838 = vdwg.mxu0
    %v840 = vrot.slane %v837, 4
    %s842 = scalar_lea.vmem [#allocation13], 128
    %v843 = vld [vmem:[%s842] sm:$0xff]
    %v844 = vld [vmem:[%s842 + $0x8] sm:$0xff]
    %v845 = vld [vmem:[%s842 + $0x10] sm:$0xff]
    %v846 = vld [vmem:[%s842 + $0x18] sm:$0xff]
    %v847 = vld [vmem:[%s842 + $0x20] sm:$0xff]
    %v848 = vld [vmem:[%s842 + $0x28] sm:$0xff]
    %v849 = vld [vmem:[%s842 + $0x30] sm:$0xff]
    %v850 = vld [vmem:[%s842 + $0x38] sm:$0xff]
    %851 = vst [vmem:[#allocation1] ss:$4 sm:$0xff] %v747
    %s852 = scalar_lea.vmem [#allocation1], 1
    %853 = vst [vmem:[%s852] ss:$4 sm:$0xff] %v748
    %s854 = scalar_lea.vmem [#allocation1], 2
    %855 = vst [vmem:[%s854] ss:$4 sm:$0xff] %v749
    %s856 = scalar_lea.vmem [#allocation1], 3
    %857 = vst [vmem:[%s856] ss:$4 sm:$0xff] %v750
    %v858 = vld.sshfl [vmem:[#allocation1] sm:$0xff pattern:$0x73625140]
    %v859 = vsel %vm771, %v858, 0
    %861 = vmatpush.msra.mxu0 0.0
    %862 = vmatpush.msra.mxu0 0.0
    %863 = vmatpush.msra.mxu0 0.0
    %864 = vmatpush.msra.mxu0 0.0
    %865 = vmatpush.msra.mxu0 0.0
    %866 = vmatpush.msra.mxu0 0.0
    %867 = vmatpush.msra.mxu0 0.0
    %868 = vmatpush.msra.mxu0 0.0
    %869 = vmatpush.msra.mxu0 %v850
    %870 = vmatpush.msra.mxu0 %v849
    %871 = vmatpush.msra.mxu0 %v848
    %872 = vmatpush.msra.mxu0 %v847
    %873 = vmatpush.msra.mxu0 %v846
    %874 = vmatpush.msra.mxu0 %v845
    %875 = vmatpush.msra.mxu0 %v844
    %876 = vmatpush.msra.mxu0 %v843
    %877 = vmatmul.f32.gmra.mxu0 %v859
    %v878 = vpop.f32.mrf.mxu0
    %v879 = vadd.f32 0.0, %v878
    %880 = vdwg.mxu0
    %v882 = vrot.slane %v879, 4
    %883 = vst [vmem:[#allocation1] ss:$2 sm:$0xff] %v792
    %v884 = vld.sshfl [vmem:[#allocation1] sm:$0xff pattern:$0x75316420]
    %s885 = scalar_lea.vmem [#allocation1], 16
    %886 = vst [vmem:[%s885] ss:$2 sm:$0xff] %v795
    %v887 = vld.sshfl [vmem:[#allocation1 + $0x10] sm:$0xff pattern:$0x75316420]
    %v888 = vrot.slane %v884, 7
    %v889 = vrot.slane %v887, 7
    %v892 = vsel %vm530, 0.0, %v888
    %v893 = vsel %vm530, 0.0, %v889
    %v894 = vadd.f32 %v837, %v892
    %v895 = vadd.f32 %v840, %v893
    %896 = vst [vmem:[#allocation1] ss:$2 sm:$0xff] %v879
    %v897 = vld.sshfl [vmem:[#allocation1] sm:$0xff pattern:$0x75316420]
    %s898 = scalar_lea.vmem [#allocation1], 16
    %899 = vst [vmem:[%s898] ss:$2 sm:$0xff] %v882
    %v900 = vld.sshfl [vmem:[#allocation1 + $0x10] sm:$0xff pattern:$0x75316420]
    %v901 = vrot.slane %v897, 1
    %v902 = vrot.slane %v900, 1
    %vm905 = vcmask 1042432
    %v906 = vsel %vm905, %v901, 0.0
    %v907 = vsel %vm905, %v902, 0.0
    %v908 = vadd.f32 %v894, %v906
    %v909 = vadd.f32 %v895, %v907
    %v910 = vmul.f32 %v908, 0.5
    %v911 = vmul.f32 %v909, 0.5
    %v912 = vmul.f32 %v908, 0.70710677
    %v913 = vmul.f32 %v909, 0.70710677
    %v914 = vmul.f32 %v912, %v912
    %v915 = vmin.f32 16.0, %v914
    %v916 = vmul.f32 %v915, 2.1237322e-06
    %v917 = vadd.f32 %v916, 0.00028619796
    %v918 = vmul.f32 %v915, %v917
    %v919 = vadd.f32 %v918, 0.0036580483
    %v920 = vmul.f32 %v915, %v919
    %v921 = vadd.f32 %v920, 0.05243302
    %v922 = vmul.f32 %v915, %v921
    %v923 = vadd.f32 %v922, 0.18741608
    %v924 = vmul.f32 %v915, %v923
    %v925 = vadd.f32 %v924, 1.1283791
    %v926 = vmul.f32 %v912, %v925
    %v927 = vmul.f32 %v915, 3.8918573e-05
    %v928 = vadd.f32 %v927, 0.001143296
    %v929 = vmul.f32 %v915, %v928
    %v930 = vadd.f32 %v929, 0.014752088
    %v931 = vmul.f32 %v915, %v930
    %v932 = vadd.f32 %v931, 0.112945676
    %v933 = vmul.f32 %v915, %v932
    %v934 = vadd.f32 %v933, 0.4994258
    %v935 = vmul.f32 %v915, %v934
    %v936 = vadd.f32 %v935, 1.0
    %v937 = vrcp.pop %v936
    %v938 = vmul.f32 %v936, %v937
    %v939 = vsub.f32 1.0, %v938
    %v940 = vmul.f32 %v937, %v939
    %v941 = vadd.f32 %v937, %v940
    %vm942 = vweird.f32 %v936
    %vm943 = vweird.f32 %v937
    %vm944 = vmor %vm942, %vm943
    %v945 = vsel %vm944, %v937, %v941
    %v946 = vand.u32 2147483647, %v936
    %vm947 = vcmp.eq.f32.partialorder %v946, 8.507059e+37
    %v948 = vand.u32 %v936, 2147483648
    %v949 = vor.u32 1.1754944e-38, %v948
    %v950 = vsel %vm947, %v949, %v945
    %v951 = vmul.f32 %v926, %v950
    %v952 = vmin.f32 %v951, 1.0
    %v953 = vmax.f32 %v952, -1.0
    %v954 = vmul.f32 %v913, %v913
    %v955 = vmin.f32 16.0, %v954
    %v956 = vmul.f32 %v955, 2.1237322e-06
    %v957 = vadd.f32 %v956, 0.00028619796
    %v958 = vmul.f32 %v955, %v957
    %v959 = vadd.f32 %v958, 0.0036580483
    %v960 = vmul.f32 %v955, %v959
    %v961 = vadd.f32 %v960, 0.05243302
    %v962 = vmul.f32 %v955, %v961
    %v963 = vadd.f32 %v962, 0.18741608
    %v964 = vmul.f32 %v955, %v963
    %v965 = vadd.f32 %v964, 1.1283791
    %v966 = vmul.f32 %v913, %v965
    %v967 = vmul.f32 %v955, 3.8918573e-05
    %v968 = vadd.f32 %v967, 0.001143296
    %v969 = vmul.f32 %v955, %v968
    %v970 = vadd.f32 %v969, 0.014752088
    %v971 = vmul.f32 %v955, %v970
    %v972 = vadd.f32 %v971, 0.112945676
    %v973 = vmul.f32 %v955, %v972
    %v974 = vadd.f32 %v973, 0.4994258
    %v975 = vmul.f32 %v955, %v974
    %v976 = vadd.f32 %v975, 1.0
    %v977 = vrcp.pop %v976
    %v978 = vmul.f32 %v976, %v977
    %v979 = vsub.f32 1.0, %v978
    %v980 = vmul.f32 %v977, %v979
    %v981 = vadd.f32 %v977, %v980
    %vm982 = vweird.f32 %v976
    %vm983 = vweird.f32 %v977
    %vm984 = vmor %vm982, %vm983
    %v985 = vsel %vm984, %v977, %v981
    %v986 = vand.u32 2147483647, %v976
    %vm987 = vcmp.eq.f32.partialorder %v986, 8.507059e+37
    %v988 = vand.u32 %v976, 2147483648
    %v989 = vor.u32 1.1754944e-38, %v988
    %v990 = vsel %vm987, %v989, %v985
    %v991 = vmul.f32 %v966, %v990
    %v992 = vmin.f32 %v991, 1.0
    %v993 = vmax.f32 %v992, -1.0
    %v994 = vadd.f32 %v953, 1.0
    %v995 = vadd.f32 %v993, 1.0
    %v996 = vmul.f32 %v910, %v994
    %v997 = vmul.f32 %v911, %v995
    %1000 = vst [vmem:[#allocation1] ss:$2 sm:$0xff] %v996
    %v1001 = vld.sshfl [vmem:[#allocation1] sm:$0xff pattern:$0x75316420]
    %s1002 = scalar_lea.vmem [#allocation1], 16
    %1003 = vst [vmem:[%s1002] ss:$2 sm:$0xff] %v997
    %v1004 = vld.sshfl [vmem:[#allocation1 + $0x10] sm:$0xff pattern:$0x75316420]
    %v1005 = vrot.slane %v1001, 1
    %v1006 = vrot.slane %v1004, 1
    %v1009 = vsel %vm905, %v1005, 0.0
    %v1010 = vsel %vm905, %v1006, 0.0
    %v1011 = vld [vmem:[#allocation16] sm:$0xff]
    %v1012 = vld [vmem:[#allocation16 + $0x8] sm:$0xff]
    %v1013 = vld [vmem:[#allocation16 + $0x10] sm:$0xff]
    %v1014 = vld [vmem:[#allocation16 + $0x18] sm:$0xff]
    %v1015 = vld [vmem:[#allocation16 + $0x20] sm:$0xff]
    %v1016 = vld [vmem:[#allocation16 + $0x28] sm:$0xff]
    %v1017 = vld [vmem:[#allocation16 + $0x30] sm:$0xff]
    %v1018 = vld [vmem:[#allocation16 + $0x38] sm:$0xff]
    %v1019 = vld [vmem:[#allocation18] sm:$0x1]
    %v1021 = vperm.slane %v1019, 0
    %1023 = vst [vmem:[#allocation1] ss:$2 sm:$0xff] %v996
    %s1024 = scalar_lea.vmem [#allocation1], 1
    %1025 = vst [vmem:[%s1024] ss:$2 sm:$0xff] %v997
    %v1026 = vld.sshfl [vmem:[#allocation1] sm:$0xff pattern:$0x75316420]
    %v1027 = vsel %vm771, %v1026, 0
    %1029 = vmatpush.msra.mxu0 0.0
    %1030 = vmatpush.msra.mxu0 0.0
    %1031 = vmatpush.msra.mxu0 0.0
    %1032 = vmatpush.msra.mxu0 0.0
    %1033 = vmatpush.msra.mxu0 0.0
    %1034 = vmatpush.msra.mxu0 0.0
    %1035 = vmatpush.msra.mxu0 0.0
    %1036 = vmatpush.msra.mxu0 0.0
    %1037 = vmatpush.msra.mxu0 %v1018
    %1038 = vmatpush.msra.mxu0 %v1017
    %1039 = vmatpush.msra.mxu0 %v1016
    %1040 = vmatpush.msra.mxu0 %v1015
    %1041 = vmatpush.msra.mxu0 %v1014
    %1042 = vmatpush.msra.mxu0 %v1013
    %1043 = vmatpush.msra.mxu0 %v1012
    %1044 = vmatpush.msra.mxu0 %v1011
    %1045 = vmatmul.f32.gmra.mxu0 %v1027
    %v1046 = vpop.f32.mrf.mxu0
    %v1047 = vadd.f32 %v1021, %v1046
    %1048 = vdwg.mxu0
    %v1049 = vmul.f32 %v1047, 0.5
    %v1050 = vmul.f32 %v1047, 0.70710677
    %v1051 = vmul.f32 %v1050, %v1050
    %v1052 = vmin.f32 16.0, %v1051
    %v1053 = vmul.f32 %v1052, 2.1237322e-06
    %v1054 = vadd.f32 %v1053, 0.00028619796
    %v1055 = vmul.f32 %v1052, %v1054
    %v1056 = vadd.f32 %v1055, 0.0036580483
    %v1057 = vmul.f32 %v1052, %v1056
    %v1058 = vadd.f32 %v1057, 0.05243302
    %v1059 = vmul.f32 %v1052, %v1058
    %v1060 = vadd.f32 %v1059, 0.18741608
    %v1061 = vmul.f32 %v1052, %v1060
    %v1062 = vadd.f32 %v1061, 1.1283791
    %v1063 = vmul.f32 %v1050, %v1062
    %v1064 = vmul.f32 %v1052, 3.8918573e-05
    %v1065 = vadd.f32 %v1064, 0.001143296
    %v1066 = vmul.f32 %v1052, %v1065
    %v1067 = vadd.f32 %v1066, 0.014752088
    %v1068 = vmul.f32 %v1052, %v1067
    %v1069 = vadd.f32 %v1068, 0.112945676
    %v1070 = vmul.f32 %v1052, %v1069
    %v1071 = vadd.f32 %v1070, 0.4994258
    %v1072 = vmul.f32 %v1052, %v1071
    %v1073 = vadd.f32 %v1072, 1.0
    %v1074 = vrcp.pop %v1073
    %v1075 = vmul.f32 %v1073, %v1074
    %v1076 = vsub.f32 1.0, %v1075
    %v1077 = vmul.f32 %v1074, %v1076
    %v1078 = vadd.f32 %v1074, %v1077
    %vm1079 = vweird.f32 %v1073
    %vm1080 = vweird.f32 %v1074
    %vm1081 = vmor %vm1079, %vm1080
    %v1082 = vsel %vm1081, %v1074, %v1078
    %v1083 = vand.u32 2147483647, %v1073
    %vm1084 = vcmp.eq.f32.partialorder %v1083, 8.507059e+37
    %v1085 = vand.u32 %v1073, 2147483648
    %v1086 = vor.u32 1.1754944e-38, %v1085
    %v1087 = vsel %vm1084, %v1086, %v1082
    %v1088 = vmul.f32 %v1063, %v1087
    %v1089 = vmin.f32 %v1088, 1.0
    %v1090 = vmax.f32 %v1089, -1.0
    %v1091 = vadd.f32 %v1090, 1.0
    %v1092 = vmul.f32 %v1049, %v1091
    %s1093 = scalar_lea.vmem [#allocation16], 64
    %v1094 = vld [vmem:[%s1093] sm:$0xff]
    %v1095 = vld [vmem:[%s1093 + $0x8] sm:$0xff]
    %v1096 = vld [vmem:[%s1093 + $0x10] sm:$0xff]
    %v1097 = vld [vmem:[%s1093 + $0x18] sm:$0xff]
    %v1098 = vld [vmem:[%s1093 + $0x20] sm:$0xff]
    %v1099 = vld [vmem:[%s1093 + $0x28] sm:$0xff]
    %v1100 = vld [vmem:[%s1093 + $0x30] sm:$0xff]
    %v1101 = vld [vmem:[%s1093 + $0x38] sm:$0xff]
    %s1102 = scalar_lea.vmem [#allocation16], 128
    %v1103 = vld [vmem:[%s1102] sm:$0xff]
    %v1104 = vld [vmem:[%s1102 + $0x8] sm:$0xff]
    %v1105 = vld [vmem:[%s1102 + $0x10] sm:$0xff]
    %v1106 = vld [vmem:[%s1102 + $0x18] sm:$0xff]
    %v1107 = vld [vmem:[%s1102 + $0x20] sm:$0xff]
    %v1108 = vld [vmem:[%s1102 + $0x28] sm:$0xff]
    %v1109 = vld [vmem:[%s1102 + $0x30] sm:$0xff]
    %v1110 = vld [vmem:[%s1102 + $0x38] sm:$0xff]
    %1113 = vst [vmem:[#allocation1] ss:$2 sm:$0xff] %v1009
    %s1114 = scalar_lea.vmem [#allocation1], 1
    %1115 = vst [vmem:[%s1114] ss:$2 sm:$0xff] %v1010
    %v1116 = vld.sshfl [vmem:[#allocation1] sm:$0xff pattern:$0x75316420]
    %v1117 = vsel %vm771, %v1116, 0
    %1119 = vmatpush.msra.mxu0 0.0
    %1120 = vmatpush.msra.mxu0 0.0
    %1121 = vmatpush.msra.mxu0 0.0
    %1122 = vmatpush.msra.mxu0 0.0
    %1123 = vmatpush.msra.mxu0 0.0
    %1124 = vmatpush.msra.mxu0 0.0
    %1125 = vmatpush.msra.mxu0 0.0
    %1126 = vmatpush.msra.mxu0 0.0
    %1127 = vmatpush.msra.mxu0 %v1110
    %1128 = vmatpush.msra.mxu0 %v1109
    %1129 = vmatpush.msra.mxu0 %v1108
    %1130 = vmatpush.msra.mxu0 %v1107
    %1131 = vmatpush.msra.mxu0 %v1106
    %1132 = vmatpush.msra.mxu0 %v1105
    %1133 = vmatpush.msra.mxu0 %v1104
    %1134 = vmatpush.msra.mxu0 %v1103
    %1135 = vmatmul.f32.gmra.mxu0 %v1117
    %v1136 = vpop.f32.mrf.mxu0
    %v1137 = vadd.f32 0.0, %v1136
    %1138 = vdwg.mxu0
    %1139 = vst [vmem:[#allocation1] ss:$2 sm:$0xff] %v996
    %s1140 = scalar_lea.vmem [#allocation1], 1
    %1141 = vst [vmem:[%s1140] ss:$2 sm:$0xff] %v997
    %v1142 = vld.sshfl [vmem:[#allocation1] sm:$0xff pattern:$0x75316420]
    %v1143 = vsel %vm771, %v1142, 0
    %1145 = vmatpush.msra.mxu0 0.0
    %1146 = vmatpush.msra.mxu0 0.0
    %1147 = vmatpush.msra.mxu0 0.0
    %1148 = vmatpush.msra.mxu0 0.0
    %1149 = vmatpush.msra.mxu0 0.0
    %1150 = vmatpush.msra.mxu0 0.0
    %1151 = vmatpush.msra.mxu0 0.0
    %1152 = vmatpush.msra.mxu0 0.0
    %1153 = vmatpush.msra.mxu0 %v1101
    %1154 = vmatpush.msra.mxu0 %v1100
    %1155 = vmatpush.msra.mxu0 %v1099
    %1156 = vmatpush.msra.mxu0 %v1098
    %1157 = vmatpush.msra.mxu0 %v1097
    %1158 = vmatpush.msra.mxu0 %v1096
    %1159 = vmatpush.msra.mxu0 %v1095
    %1160 = vmatpush.msra.mxu0 %v1094
    %1161 = vmatmul.f32.gmra.mxu0 %v1143
    %v1162 = vpop.f32.mrf.mxu0
    %v1163 = vadd.f32 %v1137, %v1162
    %1164 = vdwg.mxu0
    %v1165 = vadd.f32 %v1163, %v1021
    %v1166 = vmul.f32 %v1165, 0.5
    %v1167 = vmul.f32 %v1165, 0.70710677
    %v1168 = vmul.f32 %v1167, %v1167
    %v1169 = vmin.f32 16.0, %v1168
    %v1170 = vmul.f32 %v1169, 2.1237322e-06
    %v1171 = vadd.f32 %v1170, 0.00028619796
    %v1172 = vmul.f32 %v1169, %v1171
    %v1173 = vadd.f32 %v1172, 0.0036580483
    %v1174 = vmul.f32 %v1169, %v1173
    %v1175 = vadd.f32 %v1174, 0.05243302
    %v1176 = vmul.f32 %v1169, %v1175
    %v1177 = vadd.f32 %v1176, 0.18741608
    %v1178 = vmul.f32 %v1169, %v1177
    %v1179 = vadd.f32 %v1178, 1.1283791
    %v1180 = vmul.f32 %v1167, %v1179
    %v1181 = vmul.f32 %v1169, 3.8918573e-05
    %v1182 = vadd.f32 %v1181, 0.001143296
    %v1183 = vmul.f32 %v1169, %v1182
    %v1184 = vadd.f32 %v1183, 0.014752088
    %v1185 = vmul.f32 %v1169, %v1184
    %v1186 = vadd.f32 %v1185, 0.112945676
    %v1187 = vmul.f32 %v1169, %v1186
    %v1188 = vadd.f32 %v1187, 0.4994258
    %v1189 = vmul.f32 %v1169, %v1188
    %v1190 = vadd.f32 %v1189, 1.0
    %v1191 = vrcp.pop %v1190
    %v1192 = vmul.f32 %v1190, %v1191
    %v1193 = vsub.f32 1.0, %v1192
    %v1194 = vmul.f32 %v1191, %v1193
    %v1195 = vadd.f32 %v1191, %v1194
    %vm1196 = vweird.f32 %v1190
    %vm1197 = vweird.f32 %v1191
    %vm1198 = vmor %vm1196, %vm1197
    %v1199 = vsel %vm1198, %v1191, %v1195
    %v1200 = vand.u32 2147483647, %v1190
    %vm1201 = vcmp.eq.f32.partialorder %v1200, 8.507059e+37
    %v1202 = vand.u32 %v1190, 2147483648
    %v1203 = vor.u32 1.1754944e-38, %v1202
    %v1204 = vsel %vm1201, %v1203, %v1199
    %v1205 = vmul.f32 %v1180, %v1204
    %v1206 = vmin.f32 %v1205, 1.0
    %v1207 = vmax.f32 %v1206, -1.0
    %v1208 = vadd.f32 %v1207, 1.0
    %v1209 = vmul.f32 %v1166, %v1208
    %v1211 = vrot.slane %v1092, 1
    %v1212 = vrot.slane %v1092, 2
    %v1213 = vrot.slane %v1092, 3
    %v1214 = vrot.slane %v1092, 4
    %v1215 = vrot.slane %v1092, 5
    %v1216 = vrot.slane %v1092, 6
    %v1217 = vrot.slane %v1092, 7
    %v1226 = vrot.slane %v1209, 1
    %v1227 = vrot.slane %v1209, 2
    %v1228 = vrot.slane %v1209, 3
    %v1229 = vrot.slane %v1209, 4
    %v1230 = vrot.slane %v1209, 5
    %v1231 = vrot.slane %v1209, 6
    %v1232 = vrot.slane %v1209, 7
    %v1233 = vperm.slane %v1209, 0
    %v1234 = vperm.slane %v1226, 0
    %v1235 = vperm.slane %v1227, 0
    %v1236 = vperm.slane %v1228, 0
    %v1237 = vperm.slane %v1229, 0
    %v1238 = vperm.slane %v1230, 0
    %v1239 = vperm.slane %v1231, 0
    %v1240 = vperm.slane %v1232, 0
    %v1249 = vsel %vm530, %v1092, %v1233
    %v1250 = vsel %vm530, %v1211, %v1234
    %v1251 = vsel %vm530, %v1212, %v1235
    %v1252 = vsel %vm530, %v1213, %v1236
    %v1253 = vsel %vm530, %v1214, %v1237
    %v1254 = vsel %vm530, %v1215, %v1238
    %v1255 = vsel %vm530, %v1216, %v1239
    %v1256 = vsel %vm530, %v1217, %v1240
    %v1257 = vld [vmem:[#allocation19] sm:$0xff]
    %v1258 = vld [vmem:[#allocation19 + $0x8] sm:$0xff]
    %v1259 = vld [vmem:[#allocation19 + $0x10] sm:$0xff]
    %v1260 = vld [vmem:[#allocation19 + $0x18] sm:$0xff]
    %v1261 = vld [vmem:[#allocation19 + $0x20] sm:$0xff]
    %v1262 = vld [vmem:[#allocation19 + $0x28] sm:$0xff]
    %v1263 = vld [vmem:[#allocation19 + $0x30] sm:$0xff]
    %v1264 = vld [vmem:[#allocation19 + $0x38] sm:$0xff]
    %v1265 = vld [vmem:[#allocation19 + $0x40] sm:$0xff]
    %v1266 = vld [vmem:[#allocation19 + $0x48] sm:$0xff]
    %v1267 = vld [vmem:[#allocation19 + $0x50] sm:$0xff]
    %v1268 = vld [vmem:[#allocation19 + $0x58] sm:$0xff]
    %v1269 = vld [vmem:[#allocation19 + $0x60] sm:$0xff]
    %v1270 = vld [vmem:[#allocation19 + $0x68] sm:$0xff]
    %v1271 = vld [vmem:[#allocation19 + $0x70] sm:$0xff]
    %v1272 = vld [vmem:[#allocation19 + $0x78] sm:$0xff]
    %1281 = vst [vmem:[#allocation1] ss:$4 sm:$0xff] %v1249
    %s1282 = scalar_lea.vmem [#allocation1], 1
    %1283 = vst [vmem:[%s1282] ss:$4 sm:$0xff] %v1250
    %s1284 = scalar_lea.vmem [#allocation1], 2
    %1285 = vst [vmem:[%s1284] ss:$4 sm:$0xff] %v1251
    %s1286 = scalar_lea.vmem [#allocation1], 3
    %1287 = vst [vmem:[%s1286] ss:$4 sm:$0xff] %v1252
    %s1288 = scalar_lea.vmem [#allocation1], 32
    %1289 = vst [vmem:[%s1288] ss:$4 sm:$0xff] %v1253
    %s1290 = scalar_lea.vmem [#allocation1], 33
    %1291 = vst [vmem:[%s1290] ss:$4 sm:$0xff] %v1254
    %s1292 = scalar_lea.vmem [#allocation1], 34
    %1293 = vst [vmem:[%s1292] ss:$4 sm:$0xff] %v1255
    %s1294 = scalar_lea.vmem [#allocation1], 35
    %1295 = vst [vmem:[%s1294] ss:$4 sm:$0xff] %v1256
    %v1296 = vld.sshfl [vmem:[#allocation1] sm:$0xff pattern:$0x73625140]
    %v1297 = vld.sshfl [vmem:[#allocation1 + $0x20] sm:$0xff pattern:$0x73625140]
    %1300 = vmatpush.msra.mxu0 %v1272
    %1301 = vmatpush.msra.mxu0 %v1271
    %1302 = vmatpush.msra.mxu0 %v1270
    %1303 = vmatpush.msra.mxu0 %v1269
    %1304 = vmatpush.msra.mxu0 %v1268
    %1305 = vmatpush.msra.mxu0 %v1267
    %1306 = vmatpush.msra.mxu0 %v1266
    %1307 = vmatpush.msra.mxu0 %v1265
    %1308 = vmatpush.msra.mxu0 %v1264
    %1309 = vmatpush.msra.mxu0 %v1263
    %1310 = vmatpush.msra.mxu0 %v1262
    %1311 = vmatpush.msra.mxu0 %v1261
    %1312 = vmatpush.msra.mxu0 %v1260
    %1313 = vmatpush.msra.mxu0 %v1259
    %1314 = vmatpush.msra.mxu0 %v1258
    %1315 = vmatpush.msra.mxu0 %v1257
    %1316 = vmatmul.f32.gmra.mxu0 %v1296
    %v1317 = vpop.f32.mrf.mxu0
    %v1318 = vadd.f32 0.0, %v1317
    %1319 = vmatmul.f32.gmra.mxu0 %v1297
    %v1320 = vpop.f32.mrf.mxu0
    %v1321 = vadd.f32 0.0, %v1320
    %1322 = vdwg.mxu0
    %s1323 = scalar_lea.vmem [#allocation19], 128
    %v1324 = vld [vmem:[%s1323] sm:$0xff]
    %v1325 = vld [vmem:[%s1323 + $0x8] sm:$0xff]
    %v1326 = vld [vmem:[%s1323 + $0x10] sm:$0xff]
    %v1327 = vld [vmem:[%s1323 + $0x18] sm:$0xff]
    %v1328 = vld [vmem:[%s1323 + $0x20] sm:$0xff]
    %v1329 = vld [vmem:[%s1323 + $0x28] sm:$0xff]
    %v1330 = vld [vmem:[%s1323 + $0x30] sm:$0xff]
    %v1331 = vld [vmem:[%s1323 + $0x38] sm:$0xff]
    %v1332 = vld [vmem:[%s1323 + $0x40] sm:$0xff]
    %v1333 = vld [vmem:[%s1323 + $0x48] sm:$0xff]
    %v1334 = vld [vmem:[%s1323 + $0x50] sm:$0xff]
    %v1335 = vld [vmem:[%s1323 + $0x58] sm:$0xff]
    %v1336 = vld [vmem:[%s1323 + $0x60] sm:$0xff]
    %v1337 = vld [vmem:[%s1323 + $0x68] sm:$0xff]
    %v1338 = vld [vmem:[%s1323 + $0x70] sm:$0xff]
    %v1339 = vld [vmem:[%s1323 + $0x78] sm:$0xff]
    %v1340 = vld [vmem:[#allocation21] sm:$0x1]
    %v1342 = vperm.slane %v1340, 0
    %1344 = vst [vmem:[#allocation1] ss:$4 sm:$0xff] %v1249
    %s1345 = scalar_lea.vmem [#allocation1], 1
    %1346 = vst [vmem:[%s1345] ss:$4 sm:$0xff] %v1250
    %s1347 = scalar_lea.vmem [#allocation1], 2
    %1348 = vst [vmem:[%s1347] ss:$4 sm:$0xff] %v1251
    %s1349 = scalar_lea.vmem [#allocation1], 3
    %1350 = vst [vmem:[%s1349] ss:$4 sm:$0xff] %v1252
    %s1351 = scalar_lea.vmem [#allocation1], 32
    %1352 = vst [vmem:[%s1351] ss:$4 sm:$0xff] %v1253
    %s1353 = scalar_lea.vmem [#allocation1], 33
    %1354 = vst [vmem:[%s1353] ss:$4 sm:$0xff] %v1254
    %s1355 = scalar_lea.vmem [#allocation1], 34
    %1356 = vst [vmem:[%s1355] ss:$4 sm:$0xff] %v1255
    %s1357 = scalar_lea.vmem [#allocation1], 35
    %1358 = vst [vmem:[%s1357] ss:$4 sm:$0xff] %v1256
    %v1359 = vld.sshfl [vmem:[#allocation1] sm:$0xff pattern:$0x73625140]
    %v1360 = vld.sshfl [vmem:[#allocation1 + $0x20] sm:$0xff pattern:$0x73625140]
    %1363 = vmatpush.msra.mxu0 %v1339
    %1364 = vmatpush.msra.mxu0 %v1338
    %1365 = vmatpush.msra.mxu0 %v1337
    %1366 = vmatpush.msra.mxu0 %v1336
    %1367 = vmatpush.msra.mxu0 %v1335
    %1368 = vmatpush.msra.mxu0 %v1334
    %1369 = vmatpush.msra.mxu0 %v1333
    %1370 = vmatpush.msra.mxu0 %v1332
    %1371 = vmatpush.msra.mxu0 %v1331
    %1372 = vmatpush.msra.mxu0 %v1330
    %1373 = vmatpush.msra.mxu0 %v1329
    %1374 = vmatpush.msra.mxu0 %v1328
    %1375 = vmatpush.msra.mxu0 %v1327
    %1376 = vmatpush.msra.mxu0 %v1326
    %1377 = vmatpush.msra.mxu0 %v1325
    %1378 = vmatpush.msra.mxu0 %v1324
    %1379 = vmatmul.f32.gmra.mxu0 %v1359
    %v1380 = vpop.f32.mrf.mxu0
    %v1381 = vadd.f32 %v1342, %v1380
    %1382 = vmatmul.f32.gmra.mxu0 %v1360
    %v1383 = vpop.f32.mrf.mxu0
    %v1384 = vadd.f32 %v1342, %v1383
    %1385 = vdwg.mxu0
    %s1386 = scalar_lea.vmem [#allocation19], 256
    %v1387 = vld [vmem:[%s1386] sm:$0xff]
    %v1388 = vld [vmem:[%s1386 + $0x8] sm:$0xff]
    %v1389 = vld [vmem:[%s1386 + $0x10] sm:$0xff]
    %v1390 = vld [vmem:[%s1386 + $0x18] sm:$0xff]
    %v1391 = vld [vmem:[%s1386 + $0x20] sm:$0xff]
    %v1392 = vld [vmem:[%s1386 + $0x28] sm:$0xff]
    %v1393 = vld [vmem:[%s1386 + $0x30] sm:$0xff]
    %v1394 = vld [vmem:[%s1386 + $0x38] sm:$0xff]
    %v1395 = vld [vmem:[%s1386 + $0x40] sm:$0xff]
    %v1396 = vld [vmem:[%s1386 + $0x48] sm:$0xff]
    %v1397 = vld [vmem:[%s1386 + $0x50] sm:$0xff]
    %v1398 = vld [vmem:[%s1386 + $0x58] sm:$0xff]
    %v1399 = vld [vmem:[%s1386 + $0x60] sm:$0xff]
    %v1400 = vld [vmem:[%s1386 + $0x68] sm:$0xff]
    %v1401 = vld [vmem:[%s1386 + $0x70] sm:$0xff]
    %v1402 = vld [vmem:[%s1386 + $0x78] sm:$0xff]
    %1403 = vst [vmem:[#allocation1] ss:$4 sm:$0xff] %v1249
    %s1404 = scalar_lea.vmem [#allocation1], 1
    %1405 = vst [vmem:[%s1404] ss:$4 sm:$0xff] %v1250
    %s1406 = scalar_lea.vmem [#allocation1], 2
    %1407 = vst [vmem:[%s1406] ss:$4 sm:$0xff] %v1251
    %s1408 = scalar_lea.vmem [#allocation1], 3
    %1409 = vst [vmem:[%s1408] ss:$4 sm:$0xff] %v1252
    %s1410 = scalar_lea.vmem [#allocation1], 32
    %1411 = vst [vmem:[%s1410] ss:$4 sm:$0xff] %v1253
    %s1412 = scalar_lea.vmem [#allocation1], 33
    %1413 = vst [vmem:[%s1412] ss:$4 sm:$0xff] %v1254
    %s1414 = scalar_lea.vmem [#allocation1], 34
    %1415 = vst [vmem:[%s1414] ss:$4 sm:$0xff] %v1255
    %s1416 = scalar_lea.vmem [#allocation1], 35
    %1417 = vst [vmem:[%s1416] ss:$4 sm:$0xff] %v1256
    %v1418 = vld.sshfl [vmem:[#allocation1] sm:$0xff pattern:$0x73625140]
    %v1419 = vld.sshfl [vmem:[#allocation1 + $0x20] sm:$0xff pattern:$0x73625140]
    %1422 = vmatpush.msra.mxu0 %v1402
    %1423 = vmatpush.msra.mxu0 %v1401
    %1424 = vmatpush.msra.mxu0 %v1400
    %1425 = vmatpush.msra.mxu0 %v1399
    %1426 = vmatpush.msra.mxu0 %v1398
    %1427 = vmatpush.msra.mxu0 %v1397
    %1428 = vmatpush.msra.mxu0 %v1396
    %1429 = vmatpush.msra.mxu0 %v1395
    %1430 = vmatpush.msra.mxu0 %v1394
    %1431 = vmatpush.msra.mxu0 %v1393
    %1432 = vmatpush.msra.mxu0 %v1392
    %1433 = vmatpush.msra.mxu0 %v1391
    %1434 = vmatpush.msra.mxu0 %v1390
    %1435 = vmatpush.msra.mxu0 %v1389
    %1436 = vmatpush.msra.mxu0 %v1388
    %1437 = vmatpush.msra.mxu0 %v1387
    %1438 = vmatmul.f32.gmra.mxu0 %v1418
    %v1439 = vpop.f32.mrf.mxu0
    %v1440 = vadd.f32 0.0, %v1439
    %1441 = vmatmul.f32.gmra.mxu0 %v1419
    %v1442 = vpop.f32.mrf.mxu0
    %v1443 = vadd.f32 0.0, %v1442
    %1444 = vdwg.mxu0
    %v1447 = vrot.slane %v1318, 7
    %v1448 = vrot.slane %v1321, 7
    %v1451 = vsel %vm530, 0.0, %v1447
    %v1452 = vsel %vm530, 0.0, %v1448
    %v1453 = vadd.f32 %v1381, %v1451
    %v1454 = vadd.f32 %v1384, %v1452
    %v1457 = vrot.slane %v1440, 1
    %v1458 = vrot.slane %v1443, 1
    %vm1461 = vcmask 1046528
    %v1462 = vsel %vm1461, %v1457, 0.0
    %v1463 = vsel %vm1461, %v1458, 0.0
    %v1464 = vadd.f32 %v1453, %v1462
    %v1465 = vadd.f32 %v1454, %v1463
    %v1466 = vmul.f32 %v1464, 0.5
    %v1467 = vmul.f32 %v1465, 0.5
    %v1468 = vmul.f32 %v1464, 0.70710677
    %v1469 = vmul.f32 %v1465, 0.70710677
    %v1470 = vmul.f32 %v1468, %v1468
    %v1471 = vmin.f32 16.0, %v1470
    %v1472 = vmul.f32 %v1471, 2.1237322e-06
    %v1473 = vadd.f32 %v1472, 0.00028619796
    %v1474 = vmul.f32 %v1471, %v1473
    %v1475 = vadd.f32 %v1474, 0.0036580483
    %v1476 = vmul.f32 %v1471, %v1475
    %v1477 = vadd.f32 %v1476, 0.05243302
    %v1478 = vmul.f32 %v1471, %v1477
    %v1479 = vadd.f32 %v1478, 0.18741608
    %v1480 = vmul.f32 %v1471, %v1479
    %v1481 = vadd.f32 %v1480, 1.1283791
    %v1482 = vmul.f32 %v1468, %v1481
    %v1483 = vmul.f32 %v1471, 3.8918573e-05
    %v1484 = vadd.f32 %v1483, 0.001143296
    %v1485 = vmul.f32 %v1471, %v1484
    %v1486 = vadd.f32 %v1485, 0.014752088
    %v1487 = vmul.f32 %v1471, %v1486
    %v1488 = vadd.f32 %v1487, 0.112945676
    %v1489 = vmul.f32 %v1471, %v1488
    %v1490 = vadd.f32 %v1489, 0.4994258
    %v1491 = vmul.f32 %v1471, %v1490
    %v1492 = vadd.f32 %v1491, 1.0
    %v1493 = vrcp.pop %v1492
    %v1494 = vmul.f32 %v1492, %v1493
    %v1495 = vsub.f32 1.0, %v1494
    %v1496 = vmul.f32 %v1493, %v1495
    %v1497 = vadd.f32 %v1493, %v1496
    %vm1498 = vweird.f32 %v1492
    %vm1499 = vweird.f32 %v1493
    %vm1500 = vmor %vm1498, %vm1499
    %v1501 = vsel %vm1500, %v1493, %v1497
    %v1502 = vand.u32 2147483647, %v1492
    %vm1503 = vcmp.eq.f32.partialorder %v1502, 8.507059e+37
    %v1504 = vand.u32 %v1492, 2147483648
    %v1505 = vor.u32 1.1754944e-38, %v1504
    %v1506 = vsel %vm1503, %v1505, %v1501
    %v1507 = vmul.f32 %v1482, %v1506
    %v1508 = vmin.f32 %v1507, 1.0
    %v1509 = vmax.f32 %v1508, -1.0
    %v1510 = vmul.f32 %v1469, %v1469
    %v1511 = vmin.f32 16.0, %v1510
    %v1512 = vmul.f32 %v1511, 2.1237322e-06
    %v1513 = vadd.f32 %v1512, 0.00028619796
    %v1514 = vmul.f32 %v1511, %v1513
    %v1515 = vadd.f32 %v1514, 0.0036580483
    %v1516 = vmul.f32 %v1511, %v1515
    %v1517 = vadd.f32 %v1516, 0.05243302
    %v1518 = vmul.f32 %v1511, %v1517
    %v1519 = vadd.f32 %v1518, 0.18741608
    %v1520 = vmul.f32 %v1511, %v1519
    %v1521 = vadd.f32 %v1520, 1.1283791
    %v1522 = vmul.f32 %v1469, %v1521
    %v1523 = vmul.f32 %v1511, 3.8918573e-05
    %v1524 = vadd.f32 %v1523, 0.001143296
    %v1525 = vmul.f32 %v1511, %v1524
    %v1526 = vadd.f32 %v1525, 0.014752088
    %v1527 = vmul.f32 %v1511, %v1526
    %v1528 = vadd.f32 %v1527, 0.112945676
    %v1529 = vmul.f32 %v1511, %v1528
    %v1530 = vadd.f32 %v1529, 0.4994258
    %v1531 = vmul.f32 %v1511, %v1530
    %v1532 = vadd.f32 %v1531, 1.0
    %v1533 = vrcp.pop %v1532
    %v1534 = vmul.f32 %v1532, %v1533
    %v1535 = vsub.f32 1.0, %v1534
    %v1536 = vmul.f32 %v1533, %v1535
    %v1537 = vadd.f32 %v1533, %v1536
    %vm1538 = vweird.f32 %v1532
    %vm1539 = vweird.f32 %v1533
    %vm1540 = vmor %vm1538, %vm1539
    %v1541 = vsel %vm1540, %v1533, %v1537
    %v1542 = vand.u32 2147483647, %v1532
    %vm1543 = vcmp.eq.f32.partialorder %v1542, 8.507059e+37
    %v1544 = vand.u32 %v1532, 2147483648
    %v1545 = vor.u32 1.1754944e-38, %v1544
    %v1546 = vsel %vm1543, %v1545, %v1541
    %v1547 = vmul.f32 %v1522, %v1546
    %v1548 = vmin.f32 %v1547, 1.0
    %v1549 = vmax.f32 %v1548, -1.0
    %v1550 = vadd.f32 %v1509, 1.0
    %v1551 = vadd.f32 %v1549, 1.0
    %v1552 = vmul.f32 %v1466, %v1550
    %v1553 = vmul.f32 %v1467, %v1551
    %v1556 = vrot.slane %v1552, 1
    %v1557 = vrot.slane %v1553, 1
    %v1560 = vsel %vm1461, %v1556, 0.0
    %v1561 = vsel %vm1461, %v1557, 0.0
    %v1562 = vld [vmem:[#allocation22] sm:$0xff]
    %v1563 = vld [vmem:[#allocation22 + $0x8] sm:$0xff]
    %v1564 = vld [vmem:[#allocation22 + $0x10] sm:$0xff]
    %v1565 = vld [vmem:[#allocation22 + $0x18] sm:$0xff]
    %v1566 = vld [vmem:[#allocation22 + $0x20] sm:$0xff]
    %v1567 = vld [vmem:[#allocation22 + $0x28] sm:$0xff]
    %v1568 = vld [vmem:[#allocation22 + $0x30] sm:$0xff]
    %v1569 = vld [vmem:[#allocation22 + $0x38] sm:$0xff]
    %v1570 = vld [vmem:[#allocation22 + $0x40] sm:$0xff]
    %v1571 = vld [vmem:[#allocation22 + $0x48] sm:$0xff]
    %v1572 = vld [vmem:[#allocation22 + $0x50] sm:$0xff]
    %v1573 = vld [vmem:[#allocation22 + $0x58] sm:$0xff]
    %v1574 = vld [vmem:[#allocation22 + $0x60] sm:$0xff]
    %v1575 = vld [vmem:[#allocation22 + $0x68] sm:$0xff]
    %v1576 = vld [vmem:[#allocation22 + $0x70] sm:$0xff]
    %v1577 = vld [vmem:[#allocation22 + $0x78] sm:$0xff]
    %v1578 = vld [vmem:[#allocation22 + $0x80] sm:$0xff]
    %v1579 = vld [vmem:[#allocation22 + $0x88] sm:$0xff]
    %v1580 = vld [vmem:[#allocation22 + $0x90] sm:$0xff]
    %v1581 = vld [vmem:[#allocation22 + $0x98] sm:$0xff]
    %v1582 = vld [vmem:[#allocation22 + $0xa0] sm:$0xff]
    %v1583 = vld [vmem:[#allocation22 + $0xa8] sm:$0xff]
    %v1584 = vld [vmem:[#allocation22 + $0xb0] sm:$0xff]
    %v1585 = vld [vmem:[#allocation22 + $0xb8] sm:$0xff]
    %v1586 = vld [vmem:[#allocation22 + $0xc0] sm:$0xff]
    %v1587 = vld [vmem:[#allocation22 + $0xc8] sm:$0xff]
    %v1588 = vld [vmem:[#allocation22 + $0xd0] sm:$0xff]
    %v1589 = vld [vmem:[#allocation22 + $0xd8] sm:$0xff]
    %v1590 = vld [vmem:[#allocation22 + $0xe0] sm:$0xff]
    %v1591 = vld [vmem:[#allocation22 + $0xe8] sm:$0xff]
    %v1592 = vld [vmem:[#allocation22 + $0xf0] sm:$0xff]
    %v1593 = vld [vmem:[#allocation22 + $0xf8] sm:$0xff]
    %v1594 = vld [vmem:[#allocation24] sm:$0x3]
    %v1596 = vperm.slane %v1594, 0
    %v1597 = vperm.slane %v1594, 1
    %1600 = vmatpush.msra.mxu0 %v1592
    %1601 = vmatpush.msra.mxu0 %v1590
    %1602 = vmatpush.msra.mxu0 %v1588
    %1603 = vmatpush.msra.mxu0 %v1586
    %1604 = vmatpush.msra.mxu0 %v1584
    %1605 = vmatpush.msra.mxu0 %v1582
    %1606 = vmatpush.msra.mxu0 %v1580
    %1607 = vmatpush.msra.mxu0 %v1578
    %1608 = vmatpush.msra.mxu0 %v1576
    %1609 = vmatpush.msra.mxu0 %v1574
    %1610 = vmatpush.msra.mxu0 %v1572
    %1611 = vmatpush.msra.mxu0 %v1570
    %1612 = vmatpush.msra.mxu0 %v1568
    %1613 = vmatpush.msra.mxu0 %v1566
    %1614 = vmatpush.msra.mxu0 %v1564
    %1615 = vmatpush.msra.mxu0 %v1562
    %1616 = vmatmul.f32.gmra.mxu0 %v1552
    %v1617 = vpop.f32.mrf.mxu0
    %v1618 = vadd.f32 %v1596, %v1617
    %1619 = vmatmul.f32.gmra.mxu0 %v1553
    %v1620 = vpop.f32.mrf.mxu0
    %v1621 = vadd.f32 %v1596, %v1620
    %1622 = vdwg.mxu0
    %1623 = vmatpush.msra.mxu0 %v1593
    %1624 = vmatpush.msra.mxu0 %v1591
    %1625 = vmatpush.msra.mxu0 %v1589
    %1626 = vmatpush.msra.mxu0 %v1587
    %1627 = vmatpush.msra.mxu0 %v1585
    %1628 = vmatpush.msra.mxu0 %v1583
    %1629 = vmatpush.msra.mxu0 %v1581
    %1630 = vmatpush.msra.mxu0 %v1579
    %1631 = vmatpush.msra.mxu0 %v1577
    %1632 = vmatpush.msra.mxu0 %v1575
    %1633 = vmatpush.msra.mxu0 %v1573
    %1634 = vmatpush.msra.mxu0 %v1571
    %1635 = vmatpush.msra.mxu0 %v1569
    %1636 = vmatpush.msra.mxu0 %v1567
    %1637 = vmatpush.msra.mxu0 %v1565
    %1638 = vmatpush.msra.mxu0 %v1563
    %1639 = vmatmul.f32.gmra.mxu0 %v1552
    %v1640 = vpop.f32.mrf.mxu0
    %v1641 = vadd.f32 %v1597, %v1640
    %1642 = vmatmul.f32.gmra.mxu0 %v1553
    %v1643 = vpop.f32.mrf.mxu0
    %v1644 = vadd.f32 %v1597, %v1643
    %1645 = vdwg.mxu0
    %v1646 = vmul.f32 %v1618, 0.5
    %v1647 = vmul.f32 %v1641, 0.5
    %v1648 = vmul.f32 %v1621, 0.5
    %v1649 = vmul.f32 %v1644, 0.5
    %v1650 = vmul.f32 %v1618, 0.70710677
    %v1651 = vmul.f32 %v1641, 0.70710677
    %v1652 = vmul.f32 %v1621, 0.70710677
    %v1653 = vmul.f32 %v1644, 0.70710677
    %v1654 = vmul.f32 %v1650, %v1650
    %v1655 = vmin.f32 16.0, %v1654
    %v1656 = vmul.f32 %v1655, 2.1237322e-06
    %v1657 = vadd.f32 %v1656, 0.00028619796
    %v1658 = vmul.f32 %v1655, %v1657
    %v1659 = vadd.f32 %v1658, 0.0036580483
    %v1660 = vmul.f32 %v1655, %v1659
    %v1661 = vadd.f32 %v1660, 0.05243302
    %v1662 = vmul.f32 %v1655, %v1661
    %v1663 = vadd.f32 %v1662, 0.18741608
    %v1664 = vmul.f32 %v1655, %v1663
    %v1665 = vadd.f32 %v1664, 1.1283791
    %v1666 = vmul.f32 %v1650, %v1665
    %v1667 = vmul.f32 %v1655, 3.8918573e-05
    %v1668 = vadd.f32 %v1667, 0.001143296
    %v1669 = vmul.f32 %v1655, %v1668
    %v1670 = vadd.f32 %v1669, 0.014752088
    %v1671 = vmul.f32 %v1655, %v1670
    %v1672 = vadd.f32 %v1671, 0.112945676
    %v1673 = vmul.f32 %v1655, %v1672
    %v1674 = vadd.f32 %v1673, 0.4994258
    %v1675 = vmul.f32 %v1655, %v1674
    %v1676 = vadd.f32 %v1675, 1.0
    %v1677 = vrcp.pop %v1676
    %v1678 = vmul.f32 %v1676, %v1677
    %v1679 = vsub.f32 1.0, %v1678
    %v1680 = vmul.f32 %v1677, %v1679
    %v1681 = vadd.f32 %v1677, %v1680
    %vm1682 = vweird.f32 %v1676
    %vm1683 = vweird.f32 %v1677
    %vm1684 = vmor %vm1682, %vm1683
    %v1685 = vsel %vm1684, %v1677, %v1681
    %v1686 = vand.u32 2147483647, %v1676
    %vm1687 = vcmp.eq.f32.partialorder %v1686, 8.507059e+37
    %v1688 = vand.u32 %v1676, 2147483648
    %v1689 = vor.u32 1.1754944e-38, %v1688
    %v1690 = vsel %vm1687, %v1689, %v1685
    %v1691 = vmul.f32 %v1666, %v1690
    %v1692 = vmin.f32 %v1691, 1.0
    %v1693 = vmax.f32 %v1692, -1.0
    %v1694 = vmul.f32 %v1651, %v1651
    %v1695 = vmin.f32 16.0, %v1694
    %v1696 = vmul.f32 %v1695, 2.1237322e-06
    %v1697 = vadd.f32 %v1696, 0.00028619796
    %v1698 = vmul.f32 %v1695, %v1697
    %v1699 = vadd.f32 %v1698, 0.0036580483
    %v1700 = vmul.f32 %v1695, %v1699
    %v1701 = vadd.f32 %v1700, 0.05243302
    %v1702 = vmul.f32 %v1695, %v1701
    %v1703 = vadd.f32 %v1702, 0.18741608
    %v1704 = vmul.f32 %v1695, %v1703
    %v1705 = vadd.f32 %v1704, 1.1283791
    %v1706 = vmul.f32 %v1651, %v1705
    %v1707 = vmul.f32 %v1695, 3.8918573e-05
    %v1708 = vadd.f32 %v1707, 0.001143296
    %v1709 = vmul.f32 %v1695, %v1708
    %v1710 = vadd.f32 %v1709, 0.014752088
    %v1711 = vmul.f32 %v1695, %v1710
    %v1712 = vadd.f32 %v1711, 0.112945676
    %v1713 = vmul.f32 %v1695, %v1712
    %v1714 = vadd.f32 %v1713, 0.4994258
    %v1715 = vmul.f32 %v1695, %v1714
    %v1716 = vadd.f32 %v1715, 1.0
    %v1717 = vrcp.pop %v1716
    %v1718 = vmul.f32 %v1716, %v1717
    %v1719 = vsub.f32 1.0, %v1718
    %v1720 = vmul.f32 %v1717, %v1719
    %v1721 = vadd.f32 %v1717, %v1720
    %vm1722 = vweird.f32 %v1716
    %vm1723 = vweird.f32 %v1717
    %vm1724 = vmor %vm1722, %vm1723
    %v1725 = vsel %vm1724, %v1717, %v1721
    %v1726 = vand.u32 2147483647, %v1716
    %vm1727 = vcmp.eq.f32.partialorder %v1726, 8.507059e+37
    %v1728 = vand.u32 %v1716, 2147483648
    %v1729 = vor.u32 1.1754944e-38, %v1728
    %v1730 = vsel %vm1727, %v1729, %v1725
    %v1731 = vmul.f32 %v1706, %v1730
    %v1732 = vmin.f32 %v1731, 1.0
    %v1733 = vmax.f32 %v1732, -1.0
    %v1734 = vmul.f32 %v1652, %v1652
    %v1735 = vmin.f32 16.0, %v1734
    %v1736 = vmul.f32 %v1735, 2.1237322e-06
    %v1737 = vadd.f32 %v1736, 0.00028619796
    %v1738 = vmul.f32 %v1735, %v1737
    %v1739 = vadd.f32 %v1738, 0.0036580483
    %v1740 = vmul.f32 %v1735, %v1739
    %v1741 = vadd.f32 %v1740, 0.05243302
    %v1742 = vmul.f32 %v1735, %v1741
    %v1743 = vadd.f32 %v1742, 0.18741608
    %v1744 = vmul.f32 %v1735, %v1743
    %v1745 = vadd.f32 %v1744, 1.1283791
    %v1746 = vmul.f32 %v1652, %v1745
    %v1747 = vmul.f32 %v1735, 3.8918573e-05
    %v1748 = vadd.f32 %v1747, 0.001143296
    %v1749 = vmul.f32 %v1735, %v1748
    %v1750 = vadd.f32 %v1749, 0.014752088
    %v1751 = vmul.f32 %v1735, %v1750
    %v1752 = vadd.f32 %v1751, 0.112945676
    %v1753 = vmul.f32 %v1735, %v1752
    %v1754 = vadd.f32 %v1753, 0.4994258
    %v1755 = vmul.f32 %v1735, %v1754
    %v1756 = vadd.f32 %v1755, 1.0
    %v1757 = vrcp.pop %v1756
    %v1758 = vmul.f32 %v1756, %v1757
    %v1759 = vsub.f32 1.0, %v1758
    %v1760 = vmul.f32 %v1757, %v1759
    %v1761 = vadd.f32 %v1757, %v1760
    %vm1762 = vweird.f32 %v1756
    %vm1763 = vweird.f32 %v1757
    %vm1764 = vmor %vm1762, %vm1763
    %v1765 = vsel %vm1764, %v1757, %v1761
    %v1766 = vand.u32 2147483647, %v1756
    %vm1767 = vcmp.eq.f32.partialorder %v1766, 8.507059e+37
    %v1768 = vand.u32 %v1756, 2147483648
    %v1769 = vor.u32 1.1754944e-38, %v1768
    %v1770 = vsel %vm1767, %v1769, %v1765
    %v1771 = vmul.f32 %v1746, %v1770
    %v1772 = vmin.f32 %v1771, 1.0
    %v1773 = vmax.f32 %v1772, -1.0
    %v1774 = vmul.f32 %v1653, %v1653
    %v1775 = vmin.f32 16.0, %v1774
    %v1776 = vmul.f32 %v1775, 2.1237322e-06
    %v1777 = vadd.f32 %v1776, 0.00028619796
    %v1778 = vmul.f32 %v1775, %v1777
    %v1779 = vadd.f32 %v1778, 0.0036580483
    %v1780 = vmul.f32 %v1775, %v1779
    %v1781 = vadd.f32 %v1780, 0.05243302
    %v1782 = vmul.f32 %v1775, %v1781
    %v1783 = vadd.f32 %v1782, 0.18741608
    %v1784 = vmul.f32 %v1775, %v1783
    %v1785 = vadd.f32 %v1784, 1.1283791
    %v1786 = vmul.f32 %v1653, %v1785
    %v1787 = vmul.f32 %v1775, 3.8918573e-05
    %v1788 = vadd.f32 %v1787, 0.001143296
    %v1789 = vmul.f32 %v1775, %v1788
    %v1790 = vadd.f32 %v1789, 0.014752088
    %v1791 = vmul.f32 %v1775, %v1790
    %v1792 = vadd.f32 %v1791, 0.112945676
    %v1793 = vmul.f32 %v1775, %v1792
    %v1794 = vadd.f32 %v1793, 0.4994258
    %v1795 = vmul.f32 %v1775, %v1794
    %v1796 = vadd.f32 %v1795, 1.0
    %v1797 = vrcp.pop %v1796
    %v1798 = vmul.f32 %v1796, %v1797
    %v1799 = vsub.f32 1.0, %v1798
    %v1800 = vmul.f32 %v1797, %v1799
    %v1801 = vadd.f32 %v1797, %v1800
    %vm1802 = vweird.f32 %v1796
    %vm1803 = vweird.f32 %v1797
    %vm1804 = vmor %vm1802, %vm1803
    %v1805 = vsel %vm1804, %v1797, %v1801
    %v1806 = vand.u32 2147483647, %v1796
    %vm1807 = vcmp.eq.f32.partialorder %v1806, 8.507059e+37
    %v1808 = vand.u32 %v1796, 2147483648
    %v1809 = vor.u32 1.1754944e-38, %v1808
    %v1810 = vsel %vm1807, %v1809, %v1805
    %v1811 = vmul.f32 %v1786, %v1810
    %v1812 = vmin.f32 %v1811, 1.0
    %v1813 = vmax.f32 %v1812, -1.0
    %v1814 = vadd.f32 %v1693, 1.0
    %v1815 = vadd.f32 %v1733, 1.0
    %v1816 = vadd.f32 %v1773, 1.0
    %v1817 = vadd.f32 %v1813, 1.0
    %v1818 = vmul.f32 %v1646, %v1814
    %v1819 = vmul.f32 %v1647, %v1815
    %v1820 = vmul.f32 %v1648, %v1816
    %v1821 = vmul.f32 %v1649, %v1817
    %s1822 = scalar_lea.vmem [#allocation22], 256
    %v1823 = vld [vmem:[%s1822] sm:$0xff]
    %v1824 = vld [vmem:[%s1822 + $0x8] sm:$0xff]
    %v1825 = vld [vmem:[%s1822 + $0x10] sm:$0xff]
    %v1826 = vld [vmem:[%s1822 + $0x18] sm:$0xff]
    %v1827 = vld [vmem:[%s1822 + $0x20] sm:$0xff]
    %v1828 = vld [vmem:[%s1822 + $0x28] sm:$0xff]
    %v1829 = vld [vmem:[%s1822 + $0x30] sm:$0xff]
    %v1830 = vld [vmem:[%s1822 + $0x38] sm:$0xff]
    %v1831 = vld [vmem:[%s1822 + $0x40] sm:$0xff]
    %v1832 = vld [vmem:[%s1822 + $0x48] sm:$0xff]
    %v1833 = vld [vmem:[%s1822 + $0x50] sm:$0xff]
    %v1834 = vld [vmem:[%s1822 + $0x58] sm:$0xff]
    %v1835 = vld [vmem:[%s1822 + $0x60] sm:$0xff]
    %v1836 = vld [vmem:[%s1822 + $0x68] sm:$0xff]
    %v1837 = vld [vmem:[%s1822 + $0x70] sm:$0xff]
    %v1838 = vld [vmem:[%s1822 + $0x78] sm:$0xff]
    %v1839 = vld [vmem:[%s1822 + $0x80] sm:$0xff]
    %v1840 = vld [vmem:[%s1822 + $0x88] sm:$0xff]
    %v1841 = vld [vmem:[%s1822 + $0x90] sm:$0xff]
    %v1842 = vld [vmem:[%s1822 + $0x98] sm:$0xff]
    %v1843 = vld [vmem:[%s1822 + $0xa0] sm:$0xff]
    %v1844 = vld [vmem:[%s1822 + $0xa8] sm:$0xff]
    %v1845 = vld [vmem:[%s1822 + $0xb0] sm:$0xff]
    %v1846 = vld [vmem:[%s1822 + $0xb8] sm:$0xff]
    %v1847 = vld [vmem:[%s1822 + $0xc0] sm:$0xff]
    %v1848 = vld [vmem:[%s1822 + $0xc8] sm:$0xff]
    %v1849 = vld [vmem:[%s1822 + $0xd0] sm:$0xff]
    %v1850 = vld [vmem:[%s1822 + $0xd8] sm:$0xff]
    %v1851 = vld [vmem:[%s1822 + $0xe0] sm:$0xff]
    %v1852 = vld [vmem:[%s1822 + $0xe8] sm:$0xff]
    %v1853 = vld [vmem:[%s1822 + $0xf0] sm:$0xff]
    %v1854 = vld [vmem:[%s1822 + $0xf8] sm:$0xff]
    %s1855 = scalar_lea.vmem [#allocation22], 512
    %v1856 = vld [vmem:[%s1855] sm:$0xff]
    %v1857 = vld [vmem:[%s1855 + $0x8] sm:$0xff]
    %v1858 = vld [vmem:[%s1855 + $0x10] sm:$0xff]
    %v1859 = vld [vmem:[%s1855 + $0x18] sm:$0xff]
    %v1860 = vld [vmem:[%s1855 + $0x20] sm:$0xff]
    %v1861 = vld [vmem:[%s1855 + $0x28] sm:$0xff]
    %v1862 = vld [vmem:[%s1855 + $0x30] sm:$0xff]
    %v1863 = vld [vmem:[%s1855 + $0x38] sm:$0xff]
    %v1864 = vld [vmem:[%s1855 + $0x40] sm:$0xff]
    %v1865 = vld [vmem:[%s1855 + $0x48] sm:$0xff]
    %v1866 = vld [vmem:[%s1855 + $0x50] sm:$0xff]
    %v1867 = vld [vmem:[%s1855 + $0x58] sm:$0xff]
    %v1868 = vld [vmem:[%s1855 + $0x60] sm:$0xff]
    %v1869 = vld [vmem:[%s1855 + $0x68] sm:$0xff]
    %v1870 = vld [vmem:[%s1855 + $0x70] sm:$0xff]
    %v1871 = vld [vmem:[%s1855 + $0x78] sm:$0xff]
    %v1872 = vld [vmem:[%s1855 + $0x80] sm:$0xff]
    %v1873 = vld [vmem:[%s1855 + $0x88] sm:$0xff]
    %v1874 = vld [vmem:[%s1855 + $0x90] sm:$0xff]
    %v1875 = vld [vmem:[%s1855 + $0x98] sm:$0xff]
    %v1876 = vld [vmem:[%s1855 + $0xa0] sm:$0xff]
    %v1877 = vld [vmem:[%s1855 + $0xa8] sm:$0xff]
    %v1878 = vld [vmem:[%s1855 + $0xb0] sm:$0xff]
    %v1879 = vld [vmem:[%s1855 + $0xb8] sm:$0xff]
    %v1880 = vld [vmem:[%s1855 + $0xc0] sm:$0xff]
    %v1881 = vld [vmem:[%s1855 + $0xc8] sm:$0xff]
    %v1882 = vld [vmem:[%s1855 + $0xd0] sm:$0xff]
    %v1883 = vld [vmem:[%s1855 + $0xd8] sm:$0xff]
    %v1884 = vld [vmem:[%s1855 + $0xe0] sm:$0xff]
    %v1885 = vld [vmem:[%s1855 + $0xe8] sm:$0xff]
    %v1886 = vld [vmem:[%s1855 + $0xf0] sm:$0xff]
    %v1887 = vld [vmem:[%s1855 + $0xf8] sm:$0xff]
    %1888 = vmatpush.msra.mxu0 %v1886
    %1889 = vmatpush.msra.mxu0 %v1884
    %1890 = vmatpush.msra.mxu0 %v1882
    %1891 = vmatpush.msra.mxu0 %v1880
    %1892 = vmatpush.msra.mxu0 %v1878
    %1893 = vmatpush.msra.mxu0 %v1876
    %1894 = vmatpush.msra.mxu0 %v1874
    %1895 = vmatpush.msra.mxu0 %v1872
    %1896 = vmatpush.msra.mxu0 %v1870
    %1897 = vmatpush.msra.mxu0 %v1868
    %1898 = vmatpush.msra.mxu0 %v1866
    %1899 = vmatpush.msra.mxu0 %v1864
    %1900 = vmatpush.msra.mxu0 %v1862
    %1901 = vmatpush.msra.mxu0 %v1860
    %1902 = vmatpush.msra.mxu0 %v1858
    %1903 = vmatpush.msra.mxu0 %v1856
    %1904 = vmatmul.f32.gmra.mxu0 %v1560
    %v1905 = vpop.f32.mrf.mxu0
    %v1906 = vadd.f32 0.0, %v1905
    %1907 = vmatmul.f32.gmra.mxu0 %v1561
    %v1908 = vpop.f32.mrf.mxu0
    %v1909 = vadd.f32 0.0, %v1908
    %1910 = vdwg.mxu0
    %1911 = vmatpush.msra.mxu0 %v1887
    %1912 = vmatpush.msra.mxu0 %v1885
    %1913 = vmatpush.msra.mxu0 %v1883
    %1914 = vmatpush.msra.mxu0 %v1881
    %1915 = vmatpush.msra.mxu0 %v1879
    %1916 = vmatpush.msra.mxu0 %v1877
    %1917 = vmatpush.msra.mxu0 %v1875
    %1918 = vmatpush.msra.mxu0 %v1873
    %1919 = vmatpush.msra.mxu0 %v1871
    %1920 = vmatpush.msra.mxu0 %v1869
    %1921 = vmatpush.msra.mxu0 %v1867
    %1922 = vmatpush.msra.mxu0 %v1865
    %1923 = vmatpush.msra.mxu0 %v1863
    %1924 = vmatpush.msra.mxu0 %v1861
    %1925 = vmatpush.msra.mxu0 %v1859
    %1926 = vmatpush.msra.mxu0 %v1857
    %1927 = vmatmul.f32.gmra.mxu0 %v1560
    %v1928 = vpop.f32.mrf.mxu0
    %v1929 = vadd.f32 0.0, %v1928
    %1930 = vmatmul.f32.gmra.mxu0 %v1561
    %v1931 = vpop.f32.mrf.mxu0
    %v1932 = vadd.f32 0.0, %v1931
    %1933 = vdwg.mxu0
    %1934 = vmatpush.msra.mxu0 %v1853
    %1935 = vmatpush.msra.mxu0 %v1851
    %1936 = vmatpush.msra.mxu0 %v1849
    %1937 = vmatpush.msra.mxu0 %v1847
    %1938 = vmatpush.msra.mxu0 %v1845
    %1939 = vmatpush.msra.mxu0 %v1843
    %1940 = vmatpush.msra.mxu0 %v1841
    %1941 = vmatpush.msra.mxu0 %v1839
    %1942 = vmatpush.msra.mxu0 %v1837
    %1943 = vmatpush.msra.mxu0 %v1835
    %1944 = vmatpush.msra.mxu0 %v1833
    %1945 = vmatpush.msra.mxu0 %v1831
    %1946 = vmatpush.msra.mxu0 %v1829
    %1947 = vmatpush.msra.mxu0 %v1827
    %1948 = vmatpush.msra.mxu0 %v1825
    %1949 = vmatpush.msra.mxu0 %v1823
    %1950 = vmatmul.f32.gmra.mxu0 %v1552
    %v1951 = vpop.f32.mrf.mxu0
    %v1952 = vadd.f32 %v1906, %v1951
    %1953 = vmatmul.f32.gmra.mxu0 %v1553
    %v1954 = vpop.f32.mrf.mxu0
    %v1955 = vadd.f32 %v1909, %v1954
    %1956 = vdwg.mxu0
    %1957 = vmatpush.msra.mxu0 %v1854
    %1958 = vmatpush.msra.mxu0 %v1852
    %1959 = vmatpush.msra.mxu0 %v1850
    %1960 = vmatpush.msra.mxu0 %v1848
    %1961 = vmatpush.msra.mxu0 %v1846
    %1962 = vmatpush.msra.mxu0 %v1844
    %1963 = vmatpush.msra.mxu0 %v1842
    %1964 = vmatpush.msra.mxu0 %v1840
    %1965 = vmatpush.msra.mxu0 %v1838
    %1966 = vmatpush.msra.mxu0 %v1836
    %1967 = vmatpush.msra.mxu0 %v1834
    %1968 = vmatpush.msra.mxu0 %v1832
    %1969 = vmatpush.msra.mxu0 %v1830
    %1970 = vmatpush.msra.mxu0 %v1828
    %1971 = vmatpush.msra.mxu0 %v1826
    %1972 = vmatpush.msra.mxu0 %v1824
    %1973 = vmatmul.f32.gmra.mxu0 %v1552
    %v1974 = vpop.f32.mrf.mxu0
    %v1975 = vadd.f32 %v1929, %v1974
    %1976 = vmatmul.f32.gmra.mxu0 %v1553
    %v1977 = vpop.f32.mrf.mxu0
    %v1978 = vadd.f32 %v1932, %v1977
    %1979 = vdwg.mxu0
    %v1980 = vadd.f32 %v1952, %v1596
    %v1981 = vadd.f32 %v1975, %v1597
    %v1982 = vadd.f32 %v1955, %v1596
    %v1983 = vadd.f32 %v1978, %v1597
    %v1984 = vmul.f32 %v1980, 0.5
    %v1985 = vmul.f32 %v1981, 0.5
    %v1986 = vmul.f32 %v1982, 0.5
    %v1987 = vmul.f32 %v1983, 0.5
    %v1988 = vmul.f32 %v1980, 0.70710677
    %v1989 = vmul.f32 %v1981, 0.70710677
    %v1990 = vmul.f32 %v1982, 0.70710677
    %v1991 = vmul.f32 %v1983, 0.70710677
    %v1992 = vmul.f32 %v1988, %v1988
    %v1993 = vmin.f32 16.0, %v1992
    %v1994 = vmul.f32 %v1993, 2.1237322e-06
    %v1995 = vadd.f32 %v1994, 0.00028619796
    %v1996 = vmul.f32 %v1993, %v1995
    %v1997 = vadd.f32 %v1996, 0.0036580483
    %v1998 = vmul.f32 %v1993, %v1997
    %v1999 = vadd.f32 %v1998, 0.05243302
    %v2000 = vmul.f32 %v1993, %v1999
    %v2001 = vadd.f32 %v2000, 0.18741608
    %v2002 = vmul.f32 %v1993, %v2001
    %v2003 = vadd.f32 %v2002, 1.1283791
    %v2004 = vmul.f32 %v1988, %v2003
    %v2005 = vmul.f32 %v1993, 3.8918573e-05
    %v2006 = vadd.f32 %v2005, 0.001143296
    %v2007 = vmul.f32 %v1993, %v2006
    %v2008 = vadd.f32 %v2007, 0.014752088
    %v2009 = vmul.f32 %v1993, %v2008
    %v2010 = vadd.f32 %v2009, 0.112945676
    %v2011 = vmul.f32 %v1993, %v2010
    %v2012 = vadd.f32 %v2011, 0.4994258
    %v2013 = vmul.f32 %v1993, %v2012
    %v2014 = vadd.f32 %v2013, 1.0
    %v2015 = vrcp.pop %v2014
    %v2016 = vmul.f32 %v2014, %v2015
    %v2017 = vsub.f32 1.0, %v2016
    %v2018 = vmul.f32 %v2015, %v2017
    %v2019 = vadd.f32 %v2015, %v2018
    %vm2020 = vweird.f32 %v2014
    %vm2021 = vweird.f32 %v2015
    %vm2022 = vmor %vm2020, %vm2021
    %v2023 = vsel %vm2022, %v2015, %v2019
    %v2024 = vand.u32 2147483647, %v2014
    %vm2025 = vcmp.eq.f32.partialorder %v2024, 8.507059e+37
    %v2026 = vand.u32 %v2014, 2147483648
    %v2027 = vor.u32 1.1754944e-38, %v2026
    %v2028 = vsel %vm2025, %v2027, %v2023
    %v2029 = vmul.f32 %v2004, %v2028
    %v2030 = vmin.f32 %v2029, 1.0
    %v2031 = vmax.f32 %v2030, -1.0
    %v2032 = vmul.f32 %v1989, %v1989
    %v2033 = vmin.f32 16.0, %v2032
    %v2034 = vmul.f32 %v2033, 2.1237322e-06
    %v2035 = vadd.f32 %v2034, 0.00028619796
    %v2036 = vmul.f32 %v2033, %v2035
    %v2037 = vadd.f32 %v2036, 0.0036580483
    %v2038 = vmul.f32 %v2033, %v2037
    %v2039 = vadd.f32 %v2038, 0.05243302
    %v2040 = vmul.f32 %v2033, %v2039
    %v2041 = vadd.f32 %v2040, 0.18741608
    %v2042 = vmul.f32 %v2033, %v2041
    %v2043 = vadd.f32 %v2042, 1.1283791
    %v2044 = vmul.f32 %v1989, %v2043
    %v2045 = vmul.f32 %v2033, 3.8918573e-05
    %v2046 = vadd.f32 %v2045, 0.001143296
    %v2047 = vmul.f32 %v2033, %v2046
    %v2048 = vadd.f32 %v2047, 0.014752088
    %v2049 = vmul.f32 %v2033, %v2048
    %v2050 = vadd.f32 %v2049, 0.112945676
    %v2051 = vmul.f32 %v2033, %v2050
    %v2052 = vadd.f32 %v2051, 0.4994258
    %v2053 = vmul.f32 %v2033, %v2052
    %v2054 = vadd.f32 %v2053, 1.0
    %v2055 = vrcp.pop %v2054
    %v2056 = vmul.f32 %v2054, %v2055
    %v2057 = vsub.f32 1.0, %v2056
    %v2058 = vmul.f32 %v2055, %v2057
    %v2059 = vadd.f32 %v2055, %v2058
    %vm2060 = vweird.f32 %v2054
    %vm2061 = vweird.f32 %v2055
    %vm2062 = vmor %vm2060, %vm2061
    %v2063 = vsel %vm2062, %v2055, %v2059
    %v2064 = vand.u32 2147483647, %v2054
    %vm2065 = vcmp.eq.f32.partialorder %v2064, 8.507059e+37
    %v2066 = vand.u32 %v2054, 2147483648
    %v2067 = vor.u32 1.1754944e-38, %v2066
    %v2068 = vsel %vm2065, %v2067, %v2063
    %v2069 = vmul.f32 %v2044, %v2068
    %v2070 = vmin.f32 %v2069, 1.0
    %v2071 = vmax.f32 %v2070, -1.0
    %v2072 = vmul.f32 %v1990, %v1990
    %v2073 = vmin.f32 16.0, %v2072
    %v2074 = vmul.f32 %v2073, 2.1237322e-06
    %v2075 = vadd.f32 %v2074, 0.00028619796
    %v2076 = vmul.f32 %v2073, %v2075
    %v2077 = vadd.f32 %v2076, 0.0036580483
    %v2078 = vmul.f32 %v2073, %v2077
    %v2079 = vadd.f32 %v2078, 0.05243302
    %v2080 = vmul.f32 %v2073, %v2079
    %v2081 = vadd.f32 %v2080, 0.18741608
    %v2082 = vmul.f32 %v2073, %v2081
    %v2083 = vadd.f32 %v2082, 1.1283791
    %v2084 = vmul.f32 %v1990, %v2083
    %v2085 = vmul.f32 %v2073, 3.8918573e-05
    %v2086 = vadd.f32 %v2085, 0.001143296
    %v2087 = vmul.f32 %v2073, %v2086
    %v2088 = vadd.f32 %v2087, 0.014752088
    %v2089 = vmul.f32 %v2073, %v2088
    %v2090 = vadd.f32 %v2089, 0.112945676
    %v2091 = vmul.f32 %v2073, %v2090
    %v2092 = vadd.f32 %v2091, 0.4994258
    %v2093 = vmul.f32 %v2073, %v2092
    %v2094 = vadd.f32 %v2093, 1.0
    %v2095 = vrcp.pop %v2094
    %v2096 = vmul.f32 %v2094, %v2095
    %v2097 = vsub.f32 1.0, %v2096
    %v2098 = vmul.f32 %v2095, %v2097
    %v2099 = vadd.f32 %v2095, %v2098
    %vm2100 = vweird.f32 %v2094
    %vm2101 = vweird.f32 %v2095
    %vm2102 = vmor %vm2100, %vm2101
    %v2103 = vsel %vm2102, %v2095, %v2099
    %v2104 = vand.u32 2147483647, %v2094
    %vm2105 = vcmp.eq.f32.partialorder %v2104, 8.507059e+37
    %v2106 = vand.u32 %v2094, 2147483648
    %v2107 = vor.u32 1.1754944e-38, %v2106
    %v2108 = vsel %vm2105, %v2107, %v2103
    %v2109 = vmul.f32 %v2084, %v2108
    %v2110 = vmin.f32 %v2109, 1.0
    %v2111 = vmax.f32 %v2110, -1.0
    %v2112 = vmul.f32 %v1991, %v1991
    %v2113 = vmin.f32 16.0, %v2112
    %v2114 = vmul.f32 %v2113, 2.1237322e-06
    %v2115 = vadd.f32 %v2114, 0.00028619796
    %v2116 = vmul.f32 %v2113, %v2115
    %v2117 = vadd.f32 %v2116, 0.0036580483
    %v2118 = vmul.f32 %v2113, %v2117
    %v2119 = vadd.f32 %v2118, 0.05243302
    %v2120 = vmul.f32 %v2113, %v2119
    %v2121 = vadd.f32 %v2120, 0.18741608
    %v2122 = vmul.f32 %v2113, %v2121
    %v2123 = vadd.f32 %v2122, 1.1283791
    %v2124 = vmul.f32 %v1991, %v2123
    %v2125 = vmul.f32 %v2113, 3.8918573e-05
    %v2126 = vadd.f32 %v2125, 0.001143296
    %v2127 = vmul.f32 %v2113, %v2126
    %v2128 = vadd.f32 %v2127, 0.014752088
    %v2129 = vmul.f32 %v2113, %v2128
    %v2130 = vadd.f32 %v2129, 0.112945676
    %v2131 = vmul.f32 %v2113, %v2130
    %v2132 = vadd.f32 %v2131, 0.4994258
    %v2133 = vmul.f32 %v2113, %v2132
    %v2134 = vadd.f32 %v2133, 1.0
    %v2135 = vrcp.pop %v2134
    %v2136 = vmul.f32 %v2134, %v2135
    %v2137 = vsub.f32 1.0, %v2136
    %v2138 = vmul.f32 %v2135, %v2137
    %v2139 = vadd.f32 %v2135, %v2138
    %vm2140 = vweird.f32 %v2134
    %vm2141 = vweird.f32 %v2135
    %vm2142 = vmor %vm2140, %vm2141
    %v2143 = vsel %vm2142, %v2135, %v2139
    %v2144 = vand.u32 2147483647, %v2134
    %vm2145 = vcmp.eq.f32.partialorder %v2144, 8.507059e+37
    %v2146 = vand.u32 %v2134, 2147483648
    %v2147 = vor.u32 1.1754944e-38, %v2146
    %v2148 = vsel %vm2145, %v2147, %v2143
    %v2149 = vmul.f32 %v2124, %v2148
    %v2150 = vmin.f32 %v2149, 1.0
    %v2151 = vmax.f32 %v2150, -1.0
    %v2152 = vadd.f32 %v2031, 1.0
    %v2153 = vadd.f32 %v2071, 1.0
    %v2154 = vadd.f32 %v2111, 1.0
    %v2155 = vadd.f32 %v2151, 1.0
    %v2156 = vmul.f32 %v1984, %v2152
    %v2157 = vmul.f32 %v1985, %v2153
    %v2158 = vmul.f32 %v1986, %v2154
    %v2159 = vmul.f32 %v1987, %v2155
    %v2164 = vrot.slane %v1819, 7
    %v2165 = vrot.slane %v1821, 7
    %v2166 = vsel %vm530, %v1818, %v2164
    %vm2167 = vcmask 1041409
    %v2168 = vsel %vm2167, %v1818, %v2164
    %v2169 = vrot.slane %v2168, 1
    %vm2170 = vcmask 1042434
    %v2171 = vsel %vm2170, %v1818, %v2164
    %v2172 = vrot.slane %v2171, 2
    %vm2173 = vcmask 1043459
    %v2174 = vsel %vm2173, %v1818, %v2164
    %v2175 = vrot.slane %v2174, 3
    %vm2176 = vcmask 1044484
    %v2177 = vsel %vm2176, %v1818, %v2164
    %v2178 = vrot.slane %v2177, 4
    %vm2179 = vcmask 1045509
    %v2180 = vsel %vm2179, %v1818, %v2164
    %v2181 = vrot.slane %v2180, 5
    %vm2182 = vcmask 1046534
    %v2183 = vsel %vm2182, %v1818, %v2164
    %v2184 = vrot.slane %v2183, 6
    %v2185 = vsel %vm1461, %v2164, %v1818
    %v2186 = vrot.slane %v2185, 7
    %v2187 = vsel %vm530, %v1820, %v2165
    %v2188 = vsel %vm2167, %v1820, %v2165
    %v2189 = vrot.slane %v2188, 1
    %v2190 = vsel %vm2170, %v1820, %v2165
    %v2191 = vrot.slane %v2190, 2
    %v2192 = vsel %vm2173, %v1820, %v2165
    %v2193 = vrot.slane %v2192, 3
    %v2194 = vsel %vm2176, %v1820, %v2165
    %v2195 = vrot.slane %v2194, 4
    %v2196 = vsel %vm2179, %v1820, %v2165
    %v2197 = vrot.slane %v2196, 5
    %v2198 = vsel %vm2182, %v1820, %v2165
    %v2199 = vrot.slane %v2198, 6
    %v2200 = vsel %vm1461, %v2165, %v1820
    %v2201 = vrot.slane %v2200, 7
    %v2206 = vrot.slane %v2157, 7
    %v2207 = vrot.slane %v2159, 7
    %v2208 = vsel %vm530, %v2156, %v2206
    %v2209 = vsel %vm2167, %v2156, %v2206
    %v2210 = vrot.slane %v2209, 1
    %v2211 = vsel %vm2170, %v2156, %v2206
    %v2212 = vrot.slane %v2211, 2
    %v2213 = vsel %vm2173, %v2156, %v2206
    %v2214 = vrot.slane %v2213, 3
    %v2215 = vsel %vm2176, %v2156, %v2206
    %v2216 = vrot.slane %v2215, 4
    %v2217 = vsel %vm2179, %v2156, %v2206
    %v2218 = vrot.slane %v2217, 5
    %v2219 = vsel %vm2182, %v2156, %v2206
    %v2220 = vrot.slane %v2219, 6
    %v2221 = vsel %vm1461, %v2206, %v2156
    %v2222 = vrot.slane %v2221, 7
    %v2223 = vsel %vm530, %v2158, %v2207
    %v2224 = vsel %vm2167, %v2158, %v2207
    %v2225 = vrot.slane %v2224, 1
    %v2226 = vsel %vm2170, %v2158, %v2207
    %v2227 = vrot.slane %v2226, 2
    %v2228 = vsel %vm2173, %v2158, %v2207
    %v2229 = vrot.slane %v2228, 3
    %v2230 = vsel %vm2176, %v2158, %v2207
    %v2231 = vrot.slane %v2230, 4
    %v2232 = vsel %vm2179, %v2158, %v2207
    %v2233 = vrot.slane %v2232, 5
    %v2234 = vsel %vm2182, %v2158, %v2207
    %v2235 = vrot.slane %v2234, 6
    %v2236 = vsel %vm1461, %v2207, %v2158
    %v2237 = vrot.slane %v2236, 7
    %v2238 = vperm.slane %v2166, 0
    %v2239 = vperm.slane %v2166, 1
    %v2240 = vperm.slane %v2169, 0
    %v2241 = vperm.slane %v2169, 1
    %v2242 = vperm.slane %v2172, 0
    %v2243 = vperm.slane %v2172, 1
    %v2244 = vperm.slane %v2175, 0
    %v2245 = vperm.slane %v2175, 1
    %v2246 = vperm.slane %v2178, 0
    %v2247 = vperm.slane %v2178, 1
    %v2248 = vperm.slane %v2181, 0
    %v2249 = vperm.slane %v2181, 1
    %v2250 = vperm.slane %v2184, 0
    %v2251 = vperm.slane %v2184, 1
    %v2252 = vperm.slane %v2186, 0
    %v2253 = vperm.slane %v2186, 1
    %v2254 = vperm.slane %v2187, 0
    %v2255 = vperm.slane %v2187, 1
    %v2256 = vperm.slane %v2189, 0
    %v2257 = vperm.slane %v2189, 1
    %v2258 = vperm.slane %v2191, 0
    %v2259 = vperm.slane %v2191, 1
    %v2260 = vperm.slane %v2193, 0
    %v2261 = vperm.slane %v2193, 1
    %v2262 = vperm.slane %v2195, 0
    %v2263 = vperm.slane %v2195, 1
    %v2264 = vperm.slane %v2197, 0
    %v2265 = vperm.slane %v2197, 1
    %v2266 = vperm.slane %v2199, 0
    %v2267 = vperm.slane %v2199, 1
    %v2268 = vperm.slane %v2201, 0
    %v2269 = vperm.slane %v2201, 1
    %v2302 = vperm.slane %v2208, 0
    %v2303 = vperm.slane %v2208, 1
    %v2304 = vperm.slane %v2210, 0
    %v2305 = vperm.slane %v2210, 1
    %v2306 = vperm.slane %v2212, 0
    %v2307 = vperm.slane %v2212, 1
    %v2308 = vperm.slane %v2214, 0
    %v2309 = vperm.slane %v2214, 1
    %v2310 = vperm.slane %v2216, 0
    %v2311 = vperm.slane %v2216, 1
    %v2312 = vperm.slane %v2218, 0
    %v2313 = vperm.slane %v2218, 1
    %v2314 = vperm.slane %v2220, 0
    %v2315 = vperm.slane %v2220, 1
    %v2316 = vperm.slane %v2222, 0
    %v2317 = vperm.slane %v2222, 1
    %v2318 = vperm.slane %v2223, 0
    %v2319 = vperm.slane %v2223, 1
    %v2320 = vperm.slane %v2225, 0
    %v2321 = vperm.slane %v2225, 1
    %v2322 = vperm.slane %v2227, 0
    %v2323 = vperm.slane %v2227, 1
    %v2324 = vperm.slane %v2229, 0
    %v2325 = vperm.slane %v2229, 1
    %v2326 = vperm.slane %v2231, 0
    %v2327 = vperm.slane %v2231, 1
    %v2328 = vperm.slane %v2233, 0
    %v2329 = vperm.slane %v2233, 1
    %v2330 = vperm.slane %v2235, 0
    %v2331 = vperm.slane %v2235, 1
    %v2332 = vperm.slane %v2237, 0
    %v2333 = vperm.slane %v2237, 1
    %v2366 = vsel %vm530, %v2238, %v2302
    %v2367 = vsel %vm530, %v2239, %v2303
    %v2368 = vsel %vm530, %v2240, %v2304
    %v2369 = vsel %vm530, %v2241, %v2305
    %v2370 = vsel %vm530, %v2242, %v2306
    %v2371 = vsel %vm530, %v2243, %v2307
    %v2372 = vsel %vm530, %v2244, %v2308
    %v2373 = vsel %vm530, %v2245, %v2309
    %v2374 = vsel %vm530, %v2246, %v2310
    %v2375 = vsel %vm530, %v2247, %v2311
    %v2376 = vsel %vm530, %v2248, %v2312
    %v2377 = vsel %vm530, %v2249, %v2313
    %v2378 = vsel %vm530, %v2250, %v2314
    %v2379 = vsel %vm530, %v2251, %v2315
    %v2380 = vsel %vm530, %v2252, %v2316
    %v2381 = vsel %vm530, %v2253, %v2317
    %v2382 = vsel %vm530, %v2254, %v2318
    %v2383 = vsel %vm530, %v2255, %v2319
    %v2384 = vsel %vm530, %v2256, %v2320
    %v2385 = vsel %vm530, %v2257, %v2321
    %v2386 = vsel %vm530, %v2258, %v2322
    %v2387 = vsel %vm530, %v2259, %v2323
    %v2388 = vsel %vm530, %v2260, %v2324
    %v2389 = vsel %vm530, %v2261, %v2325
    %v2390 = vsel %vm530, %v2262, %v2326
    %v2391 = vsel %vm530, %v2263, %v2327
    %v2392 = vsel %vm530, %v2264, %v2328
    %v2393 = vsel %vm530, %v2265, %v2329
    %v2394 = vsel %vm530, %v2266, %v2330
    %v2395 = vsel %vm530, %v2267, %v2331
    %v2396 = vsel %vm530, %v2268, %v2332
    %v2397 = vsel %vm530, %v2269, %v2333
    %v2430 = vrot.slane %v2367, 6
    %v2431 = vrot.slane %v2369, 6
    %v2432 = vrot.slane %v2371, 6
    %v2433 = vrot.slane %v2373, 6
    %v2434 = vrot.slane %v2375, 6
    %v2435 = vrot.slane %v2377, 6
    %v2436 = vrot.slane %v2379, 6
    %v2437 = vrot.slane %v2381, 6
    %v2438 = vrot.slane %v2383, 6
    %v2439 = vrot.slane %v2385, 6
    %v2440 = vrot.slane %v2387, 6
    %v2441 = vrot.slane %v2389, 6
    %v2442 = vrot.slane %v2391, 6
    %v2443 = vrot.slane %v2393, 6
    %v2444 = vrot.slane %v2395, 6
    %v2445 = vrot.slane %v2397, 6
    %vm2446 = vcmask 1041408
    %v2447 = vsel %vm2446, %v2366, %v2430
    %v2448 = vsel %vm2446, %v2368, %v2431
    %v2449 = vsel %vm2446, %v2370, %v2432
    %v2450 = vsel %vm2446, %v2372, %v2433
    %v2451 = vsel %vm2446, %v2374, %v2434
    %v2452 = vsel %vm2446, %v2376, %v2435
    %v2453 = vsel %vm2446, %v2378, %v2436
    %v2454 = vsel %vm2446, %v2380, %v2437
    %v2455 = vsel %vm2446, %v2382, %v2438
    %v2456 = vsel %vm2446, %v2384, %v2439
    %v2457 = vsel %vm2446, %v2386, %v2440
    %v2458 = vsel %vm2446, %v2388, %v2441
    %v2459 = vsel %vm2446, %v2390, %v2442
    %v2460 = vsel %vm2446, %v2392, %v2443
    %v2461 = vsel %vm2446, %v2394, %v2444
    %v2462 = vsel %vm2446, %v2396, %v2445
    %v2463 = vld [vmem:[#allocation25] sm:$0xff]
    %v2464 = vld [vmem:[#allocation25 + $0x8] sm:$0xff]
    %v2465 = vld [vmem:[#allocation25 + $0x10] sm:$0xff]
    %v2466 = vld [vmem:[#allocation25 + $0x18] sm:$0xff]
    %v2467 = vld [vmem:[#allocation25 + $0x20] sm:$0xff]
    %v2468 = vld [vmem:[#allocation25 + $0x28] sm:$0xff]
    %v2469 = vld [vmem:[#allocation25 + $0x30] sm:$0xff]
    %v2470 = vld [vmem:[#allocation25 + $0x38] sm:$0xff]
    %v2471 = vld [vmem:[#allocation25 + $0x40] sm:$0xff]
    %v2472 = vld [vmem:[#allocation25 + $0x48] sm:$0xff]
    %v2473 = vld [vmem:[#allocation25 + $0x50] sm:$0xff]
    %v2474 = vld [vmem:[#allocation25 + $0x58] sm:$0xff]
    %v2475 = vld [vmem:[#allocation25 + $0x60] sm:$0xff]
    %v2476 = vld [vmem:[#allocation25 + $0x68] sm:$0xff]
    %v2477 = vld [vmem:[#allocation25 + $0x70] sm:$0xff]
    %v2478 = vld [vmem:[#allocation25 + $0x78] sm:$0xff]
    %v2479 = vld [vmem:[#allocation25 + $0x80] sm:$0xff]
    %v2480 = vld [vmem:[#allocation25 + $0x88] sm:$0xff]
    %v2481 = vld [vmem:[#allocation25 + $0x90] sm:$0xff]
    %v2482 = vld [vmem:[#allocation25 + $0x98] sm:$0xff]
    %v2483 = vld [vmem:[#allocation25 + $0xa0] sm:$0xff]
    %v2484 = vld [vmem:[#allocation25 + $0xa8] sm:$0xff]
    %v2485 = vld [vmem:[#allocation25 + $0xb0] sm:$0xff]
    %v2486 = vld [vmem:[#allocation25 + $0xb8] sm:$0xff]
    %v2487 = vld [vmem:[#allocation25 + $0xc0] sm:$0xff]
    %v2488 = vld [vmem:[#allocation25 + $0xc8] sm:$0xff]
    %v2489 = vld [vmem:[#allocation25 + $0xd0] sm:$0xff]
    %v2490 = vld [vmem:[#allocation25 + $0xd8] sm:$0xff]
    %v2491 = vld [vmem:[#allocation25 + $0xe0] sm:$0xff]
    %v2492 = vld [vmem:[#allocation25 + $0xe8] sm:$0xff]
    %v2493 = vld [vmem:[#allocation25 + $0xf0] sm:$0xff]
    %v2494 = vld [vmem:[#allocation25 + $0xf8] sm:$0xff]
    %v2495 = vld [vmem:[#allocation25 + $0x100] sm:$0xff]
    %v2496 = vld [vmem:[#allocation25 + $0x108] sm:$0xff]
    %v2497 = vld [vmem:[#allocation25 + $0x110] sm:$0xff]
    %v2498 = vld [vmem:[#allocation25 + $0x118] sm:$0xff]
    %v2499 = vld [vmem:[#allocation25 + $0x120] sm:$0xff]
    %v2500 = vld [vmem:[#allocation25 + $0x128] sm:$0xff]
    %v2501 = vld [vmem:[#allocation25 + $0x130] sm:$0xff]
    %v2502 = vld [vmem:[#allocation25 + $0x138] sm:$0xff]
    %v2503 = vld [vmem:[#allocation25 + $0x140] sm:$0xff]
    %v2504 = vld [vmem:[#allocation25 + $0x148] sm:$0xff]
    %v2505 = vld [vmem:[#allocation25 + $0x150] sm:$0xff]
    %v2506 = vld [vmem:[#allocation25 + $0x158] sm:$0xff]
    %v2507 = vld [vmem:[#allocation25 + $0x160] sm:$0xff]
    %v2508 = vld [vmem:[#allocation25 + $0x168] sm:$0xff]
    %v2509 = vld [vmem:[#allocation25 + $0x170] sm:$0xff]
    %v2510 = vld [vmem:[#allocation25 + $0x178] sm:$0xff]
    %v2511 = vld [vmem:[#allocation25 + $0x180] sm:$0xff]
    %v2512 = vld [vmem:[#allocation25 + $0x188] sm:$0xff]
    %v2513 = vld [vmem:[#allocation25 + $0x190] sm:$0xff]
    %v2514 = vld [vmem:[#allocation25 + $0x198] sm:$0xff]
    %v2515 = vld [vmem:[#allocation25 + $0x1a0] sm:$0xff]
    %v2516 = vld [vmem:[#allocation25 + $0x1a8] sm:$0xff]
    %v2517 = vld [vmem:[#allocation25 + $0x1b0] sm:$0xff]
    %v2518 = vld [vmem:[#allocation25 + $0x1b8] sm:$0xff]
    %v2519 = vld [vmem:[#allocation25 + $0x1c0] sm:$0xff]
    %v2520 = vld [vmem:[#allocation25 + $0x1c8] sm:$0xff]
    %v2521 = vld [vmem:[#allocation25 + $0x1d0] sm:$0xff]
    %v2522 = vld [vmem:[#allocation25 + $0x1d8] sm:$0xff]
    %v2523 = vld [vmem:[#allocation25 + $0x1e0] sm:$0xff]
    %v2524 = vld [vmem:[#allocation25 + $0x1e8] sm:$0xff]
    %v2525 = vld [vmem:[#allocation25 + $0x1f0] sm:$0xff]
    %v2526 = vld [vmem:[#allocation25 + $0x1f8] sm:$0xff]
    %2527 = vst [vmem:[#allocation1] ss:$4 sm:$0xff] %v2447
    %s2528 = scalar_lea.vmem [#allocation1], 1
    %2529 = vst [vmem:[%s2528] ss:$4 sm:$0xff] %v2448
    %s2530 = scalar_lea.vmem [#allocation1], 2
    %2531 = vst [vmem:[%s2530] ss:$4 sm:$0xff] %v2449
    %s2532 = scalar_lea.vmem [#allocation1], 3
    %2533 = vst [vmem:[%s2532] ss:$4 sm:$0xff] %v2450
    %s2534 = scalar_lea.vmem [#allocation1], 32
    %2535 = vst [vmem:[%s2534] ss:$4 sm:$0xff] %v2451
    %s2536 = scalar_lea.vmem [#allocation1], 33
    %2537 = vst [vmem:[%s2536] ss:$4 sm:$0xff] %v2452
    %s2538 = scalar_lea.vmem [#allocation1], 34
    %2539 = vst [vmem:[%s2538] ss:$4 sm:$0xff] %v2453
    %s2540 = scalar_lea.vmem [#allocation1], 35
    %2541 = vst [vmem:[%s2540] ss:$4 sm:$0xff] %v2454
    %v2542 = vld.sshfl [vmem:[#allocation1] sm:$0xff pattern:$0x73625140]
    %v2543 = vld.sshfl [vmem:[#allocation1 + $0x8] sm:$0xff pattern:$0x73625140]
    %v2544 = vld.sshfl [vmem:[#allocation1 + $0x20] sm:$0xff pattern:$0x73625140]
    %v2545 = vld.sshfl [vmem:[#allocation1 + $0x28] sm:$0xff pattern:$0x73625140]
    %2546 = vst [vmem:[#allocation1] ss:$4 sm:$0xff] %v2455
    %2547 = vst [vmem:[%s2528] ss:$4 sm:$0xff] %v2456
    %2548 = vst [vmem:[%s2530] ss:$4 sm:$0xff] %v2457
    %2549 = vst [vmem:[%s2532] ss:$4 sm:$0xff] %v2458
    %2550 = vst [vmem:[%s2534] ss:$4 sm:$0xff] %v2459
    %2551 = vst [vmem:[%s2536] ss:$4 sm:$0xff] %v2460
    %2552 = vst [vmem:[%s2538] ss:$4 sm:$0xff] %v2461
    %2553 = vst [vmem:[%s2540] ss:$4 sm:$0xff] %v2462
    %v2554 = vld.sshfl [vmem:[#allocation1] sm:$0xff pattern:$0x73625140]
    %v2555 = vld.sshfl [vmem:[#allocation1 + $0x8] sm:$0xff pattern:$0x73625140]
    %v2556 = vld.sshfl [vmem:[#allocation1 + $0x20] sm:$0xff pattern:$0x73625140]
    %v2557 = vld.sshfl [vmem:[#allocation1 + $0x28] sm:$0xff pattern:$0x73625140]
    %2566 = vmatpush.msra.mxu0 %v2493
    %2567 = vmatpush.msra.mxu0 %v2491
    %2568 = vmatpush.msra.mxu0 %v2489
    %2569 = vmatpush.msra.mxu0 %v2487
    %2570 = vmatpush.msra.mxu0 %v2485
    %2571 = vmatpush.msra.mxu0 %v2483
    %2572 = vmatpush.msra.mxu0 %v2481
    %2573 = vmatpush.msra.mxu0 %v2479
    %2574 = vmatpush.msra.mxu0 %v2477
    %2575 = vmatpush.msra.mxu0 %v2475
    %2576 = vmatpush.msra.mxu0 %v2473
    %2577 = vmatpush.msra.mxu0 %v2471
    %2578 = vmatpush.msra.mxu0 %v2469
    %2579 = vmatpush.msra.mxu0 %v2467
    %2580 = vmatpush.msra.mxu0 %v2465
    %2581 = vmatpush.msra.mxu0 %v2463
    %2582 = vmatmul.f32.gmra.mxu0 %v2542
    %v2583 = vpop.f32.mrf.mxu0
    %v2584 = vadd.f32 0.0, %v2583
    %2585 = vmatmul.f32.gmra.mxu0 %v2544
    %v2586 = vpop.f32.mrf.mxu0
    %v2587 = vadd.f32 0.0, %v2586
    %2588 = vmatmul.f32.gmra.mxu0 %v2554
    %v2589 = vpop.f32.mrf.mxu0
    %v2590 = vadd.f32 0.0, %v2589
    %2591 = vmatmul.f32.gmra.mxu0 %v2556
    %v2592 = vpop.f32.mrf.mxu0
    %v2593 = vadd.f32 0.0, %v2592
    %2594 = vdwg.mxu0
    %2595 = vmatpush.msra.mxu0 %v2525
    %2596 = vmatpush.msra.mxu0 %v2523
    %2597 = vmatpush.msra.mxu0 %v2521
    %2598 = vmatpush.msra.mxu0 %v2519
    %2599 = vmatpush.msra.mxu0 %v2517
    %2600 = vmatpush.msra.mxu0 %v2515
    %2601 = vmatpush.msra.mxu0 %v2513
    %2602 = vmatpush.msra.mxu0 %v2511
    %2603 = vmatpush.msra.mxu0 %v2509
    %2604 = vmatpush.msra.mxu0 %v2507
    %2605 = vmatpush.msra.mxu0 %v2505
    %2606 = vmatpush.msra.mxu0 %v2503
    %2607 = vmatpush.msra.mxu0 %v2501
    %2608 = vmatpush.msra.mxu0 %v2499
    %2609 = vmatpush.msra.mxu0 %v2497
    %2610 = vmatpush.msra.mxu0 %v2495
    %2611 = vmatmul.f32.gmra.mxu0 %v2543
    %v2612 = vpop.f32.mrf.mxu0
    %v2613 = vadd.f32 %v2584, %v2612
    %2614 = vmatmul.f32.gmra.mxu0 %v2545
    %v2615 = vpop.f32.mrf.mxu0
    %v2616 = vadd.f32 %v2587, %v2615
    %2617 = vmatmul.f32.gmra.mxu0 %v2555
    %v2618 = vpop.f32.mrf.mxu0
    %v2619 = vadd.f32 %v2590, %v2618
    %2620 = vmatmul.f32.gmra.mxu0 %v2557
    %v2621 = vpop.f32.mrf.mxu0
    %v2622 = vadd.f32 %v2593, %v2621
    %2623 = vdwg.mxu0
    %2624 = vmatpush.msra.mxu0 %v2494
    %2625 = vmatpush.msra.mxu0 %v2492
    %2626 = vmatpush.msra.mxu0 %v2490
    %2627 = vmatpush.msra.mxu0 %v2488
    %2628 = vmatpush.msra.mxu0 %v2486
    %2629 = vmatpush.msra.mxu0 %v2484
    %2630 = vmatpush.msra.mxu0 %v2482
    %2631 = vmatpush.msra.mxu0 %v2480
    %2632 = vmatpush.msra.mxu0 %v2478
    %2633 = vmatpush.msra.mxu0 %v2476
    %2634 = vmatpush.msra.mxu0 %v2474
    %2635 = vmatpush.msra.mxu0 %v2472
    %2636 = vmatpush.msra.mxu0 %v2470
    %2637 = vmatpush.msra.mxu0 %v2468
    %2638 = vmatpush.msra.mxu0 %v2466
    %2639 = vmatpush.msra.mxu0 %v2464
    %2640 = vmatmul.f32.gmra.mxu0 %v2542
    %v2641 = vpop.f32.mrf.mxu0
    %v2642 = vadd.f32 0.0, %v2641
    %2643 = vmatmul.f32.gmra.mxu0 %v2544
    %v2644 = vpop.f32.mrf.mxu0
    %v2645 = vadd.f32 0.0, %v2644
    %2646 = vmatmul.f32.gmra.mxu0 %v2554
    %v2647 = vpop.f32.mrf.mxu0
    %v2648 = vadd.f32 0.0, %v2647
    %2649 = vmatmul.f32.gmra.mxu0 %v2556
    %v2650 = vpop.f32.mrf.mxu0
    %v2651 = vadd.f32 0.0, %v2650
    %2652 = vdwg.mxu0
    %2653 = vmatpush.msra.mxu0 %v2526
    %2654 = vmatpush.msra.mxu0 %v2524
    %2655 = vmatpush.msra.mxu0 %v2522
    %2656 = vmatpush.msra.mxu0 %v2520
    %2657 = vmatpush.msra.mxu0 %v2518
    %2658 = vmatpush.msra.mxu0 %v2516
    %2659 = vmatpush.msra.mxu0 %v2514
    %2660 = vmatpush.msra.mxu0 %v2512
    %2661 = vmatpush.msra.mxu0 %v2510
    %2662 = vmatpush.msra.mxu0 %v2508
    %2663 = vmatpush.msra.mxu0 %v2506
    %2664 = vmatpush.msra.mxu0 %v2504
    %2665 = vmatpush.msra.mxu0 %v2502
    %2666 = vmatpush.msra.mxu0 %v2500
    %2667 = vmatpush.msra.mxu0 %v2498
    %2668 = vmatpush.msra.mxu0 %v2496
    %2669 = vmatmul.f32.gmra.mxu0 %v2543
    %v2670 = vpop.f32.mrf.mxu0
    %v2671 = vadd.f32 %v2642, %v2670
    %2672 = vmatmul.f32.gmra.mxu0 %v2545
    %v2673 = vpop.f32.mrf.mxu0
    %v2674 = vadd.f32 %v2645, %v2673
    %2675 = vmatmul.f32.gmra.mxu0 %v2555
    %v2676 = vpop.f32.mrf.mxu0
    %v2677 = vadd.f32 %v2648, %v2676
    %2678 = vmatmul.f32.gmra.mxu0 %v2557
    %v2679 = vpop.f32.mrf.mxu0
    %v2680 = vadd.f32 %v2651, %v2679
    %2681 = vdwg.mxu0
    %s2682 = scalar_lea.vmem [#allocation25], 512
    %v2683 = vld [vmem:[%s2682] sm:$0xff]
    %v2684 = vld [vmem:[%s2682 + $0x8] sm:$0xff]
    %v2685 = vld [vmem:[%s2682 + $0x10] sm:$0xff]
    %v2686 = vld [vmem:[%s2682 + $0x18] sm:$0xff]
    %v2687 = vld [vmem:[%s2682 + $0x20] sm:$0xff]
    %v2688 = vld [vmem:[%s2682 + $0x28] sm:$0xff]
    %v2689 = vld [vmem:[%s2682 + $0x30] sm:$0xff]
    %v2690 = vld [vmem:[%s2682 + $0x38] sm:$0xff]
    %v2691 = vld [vmem:[%s2682 + $0x40] sm:$0xff]
    %v2692 = vld [vmem:[%s2682 + $0x48] sm:$0xff]
    %v2693 = vld [vmem:[%s2682 + $0x50] sm:$0xff]
    %v2694 = vld [vmem:[%s2682 + $0x58] sm:$0xff]
    %v2695 = vld [vmem:[%s2682 + $0x60] sm:$0xff]
    %v2696 = vld [vmem:[%s2682 + $0x68] sm:$0xff]
    %v2697 = vld [vmem:[%s2682 + $0x70] sm:$0xff]
    %v2698 = vld [vmem:[%s2682 + $0x78] sm:$0xff]
    %v2699 = vld [vmem:[%s2682 + $0x80] sm:$0xff]
    %v2700 = vld [vmem:[%s2682 + $0x88] sm:$0xff]
    %v2701 = vld [vmem:[%s2682 + $0x90] sm:$0xff]
    %v2702 = vld [vmem:[%s2682 + $0x98] sm:$0xff]
    %v2703 = vld [vmem:[%s2682 + $0xa0] sm:$0xff]
    %v2704 = vld [vmem:[%s2682 + $0xa8] sm:$0xff]
    %v2705 = vld [vmem:[%s2682 + $0xb0] sm:$0xff]
    %v2706 = vld [vmem:[%s2682 + $0xb8] sm:$0xff]
    %v2707 = vld [vmem:[%s2682 + $0xc0] sm:$0xff]
    %v2708 = vld [vmem:[%s2682 + $0xc8] sm:$0xff]
    %v2709 = vld [vmem:[%s2682 + $0xd0] sm:$0xff]
    %v2710 = vld [vmem:[%s2682 + $0xd8] sm:$0xff]
    %v2711 = vld [vmem:[%s2682 + $0xe0] sm:$0xff]
    %v2712 = vld [vmem:[%s2682 + $0xe8] sm:$0xff]
    %v2713 = vld [vmem:[%s2682 + $0xf0] sm:$0xff]
    %v2714 = vld [vmem:[%s2682 + $0xf8] sm:$0xff]
    %v2715 = vld [vmem:[%s2682 + $0x100] sm:$0xff]
    %v2716 = vld [vmem:[%s2682 + $0x108] sm:$0xff]
    %v2717 = vld [vmem:[%s2682 + $0x110] sm:$0xff]
    %v2718 = vld [vmem:[%s2682 + $0x118] sm:$0xff]
    %v2719 = vld [vmem:[%s2682 + $0x120] sm:$0xff]
    %v2720 = vld [vmem:[%s2682 + $0x128] sm:$0xff]
    %v2721 = vld [vmem:[%s2682 + $0x130] sm:$0xff]
    %v2722 = vld [vmem:[%s2682 + $0x138] sm:$0xff]
    %v2723 = vld [vmem:[%s2682 + $0x140] sm:$0xff]
    %v2724 = vld [vmem:[%s2682 + $0x148] sm:$0xff]
    %v2725 = vld [vmem:[%s2682 + $0x150] sm:$0xff]
    %v2726 = vld [vmem:[%s2682 + $0x158] sm:$0xff]
    %v2727 = vld [vmem:[%s2682 + $0x160] sm:$0xff]
    %v2728 = vld [vmem:[%s2682 + $0x168] sm:$0xff]
    %v2729 = vld [vmem:[%s2682 + $0x170] sm:$0xff]
    %v2730 = vld [vmem:[%s2682 + $0x178] sm:$0xff]
    %v2731 = vld [vmem:[%s2682 + $0x180] sm:$0xff]
    %v2732 = vld [vmem:[%s2682 + $0x188] sm:$0xff]
    %v2733 = vld [vmem:[%s2682 + $0x190] sm:$0xff]
    %v2734 = vld [vmem:[%s2682 + $0x198] sm:$0xff]
    %v2735 = vld [vmem:[%s2682 + $0x1a0] sm:$0xff]
    %v2736 = vld [vmem:[%s2682 + $0x1a8] sm:$0xff]
    %v2737 = vld [vmem:[%s2682 + $0x1b0] sm:$0xff]
    %v2738 = vld [vmem:[%s2682 + $0x1b8] sm:$0xff]
    %v2739 = vld [vmem:[%s2682 + $0x1c0] sm:$0xff]
    %v2740 = vld [vmem:[%s2682 + $0x1c8] sm:$0xff]
    %v2741 = vld [vmem:[%s2682 + $0x1d0] sm:$0xff]
    %v2742 = vld [vmem:[%s2682 + $0x1d8] sm:$0xff]
    %v2743 = vld [vmem:[%s2682 + $0x1e0] sm:$0xff]
    %v2744 = vld [vmem:[%s2682 + $0x1e8] sm:$0xff]
    %v2745 = vld [vmem:[%s2682 + $0x1f0] sm:$0xff]
    %v2746 = vld [vmem:[%s2682 + $0x1f8] sm:$0xff]
    %v2747 = vld [vmem:[#allocation27] sm:$0x3]
    %v2749 = vperm.slane %v2747, 0
    %v2750 = vperm.slane %v2747, 1
    %2753 = vst [vmem:[#allocation1] ss:$4 sm:$0xff] %v2447
    %s2754 = scalar_lea.vmem [#allocation1], 1
    %2755 = vst [vmem:[%s2754] ss:$4 sm:$0xff] %v2448
    %s2756 = scalar_lea.vmem [#allocation1], 2
    %2757 = vst [vmem:[%s2756] ss:$4 sm:$0xff] %v2449
    %s2758 = scalar_lea.vmem [#allocation1], 3
    %2759 = vst [vmem:[%s2758] ss:$4 sm:$0xff] %v2450
    %s2760 = scalar_lea.vmem [#allocation1], 32
    %2761 = vst [vmem:[%s2760] ss:$4 sm:$0xff] %v2451
    %s2762 = scalar_lea.vmem [#allocation1], 33
    %2763 = vst [vmem:[%s2762] ss:$4 sm:$0xff] %v2452
    %s2764 = scalar_lea.vmem [#allocation1], 34
    %2765 = vst [vmem:[%s2764] ss:$4 sm:$0xff] %v2453
    %s2766 = scalar_lea.vmem [#allocation1], 35
    %2767 = vst [vmem:[%s2766] ss:$4 sm:$0xff] %v2454
    %v2768 = vld.sshfl [vmem:[#allocation1] sm:$0xff pattern:$0x73625140]
    %v2769 = vld.sshfl [vmem:[#allocation1 + $0x8] sm:$0xff pattern:$0x73625140]
    %v2770 = vld.sshfl [vmem:[#allocation1 + $0x20] sm:$0xff pattern:$0x73625140]
    %v2771 = vld.sshfl [vmem:[#allocation1 + $0x28] sm:$0xff pattern:$0x73625140]
    %2772 = vst [vmem:[#allocation1] ss:$4 sm:$0xff] %v2455
    %2773 = vst [vmem:[%s2754] ss:$4 sm:$0xff] %v2456
    %2774 = vst [vmem:[%s2756] ss:$4 sm:$0xff] %v2457
    %2775 = vst [vmem:[%s2758] ss:$4 sm:$0xff] %v2458
    %2776 = vst [vmem:[%s2760] ss:$4 sm:$0xff] %v2459
    %2777 = vst [vmem:[%s2762] ss:$4 sm:$0xff] %v2460
    %2778 = vst [vmem:[%s2764] ss:$4 sm:$0xff] %v2461
    %2779 = vst [vmem:[%s2766] ss:$4 sm:$0xff] %v2462
    %v2780 = vld.sshfl [vmem:[#allocation1] sm:$0xff pattern:$0x73625140]
    %v2781 = vld.sshfl [vmem:[#allocation1 + $0x8] sm:$0xff pattern:$0x73625140]
    %v2782 = vld.sshfl [vmem:[#allocation1 + $0x20] sm:$0xff pattern:$0x73625140]
    %v2783 = vld.sshfl [vmem:[#allocation1 + $0x28] sm:$0xff pattern:$0x73625140]
    %2792 = vmatpush.msra.mxu0 %v2713
    %2793 = vmatpush.msra.mxu0 %v2711
    %2794 = vmatpush.msra.mxu0 %v2709
    %2795 = vmatpush.msra.mxu0 %v2707
    %2796 = vmatpush.msra.mxu0 %v2705
    %2797 = vmatpush.msra.mxu0 %v2703
    %2798 = vmatpush.msra.mxu0 %v2701
    %2799 = vmatpush.msra.mxu0 %v2699
    %2800 = vmatpush.msra.mxu0 %v2697
    %2801 = vmatpush.msra.mxu0 %v2695
    %2802 = vmatpush.msra.mxu0 %v2693
    %2803 = vmatpush.msra.mxu0 %v2691
    %2804 = vmatpush.msra.mxu0 %v2689
    %2805 = vmatpush.msra.mxu0 %v2687
    %2806 = vmatpush.msra.mxu0 %v2685
    %2807 = vmatpush.msra.mxu0 %v2683
    %2808 = vmatmul.f32.gmra.mxu0 %v2768
    %v2809 = vpop.f32.mrf.mxu0
    %v2810 = vadd.f32 %v2749, %v2809
    %2811 = vmatmul.f32.gmra.mxu0 %v2770
    %v2812 = vpop.f32.mrf.mxu0
    %v2813 = vadd.f32 %v2749, %v2812
    %2814 = vmatmul.f32.gmra.mxu0 %v2780
    %v2815 = vpop.f32.mrf.mxu0
    %v2816 = vadd.f32 %v2749, %v2815
    %2817 = vmatmul.f32.gmra.mxu0 %v2782
    %v2818 = vpop.f32.mrf.mxu0
    %v2819 = vadd.f32 %v2749, %v2818
    %2820 = vdwg.mxu0
    %2821 = vmatpush.msra.mxu0 %v2745
    %2822 = vmatpush.msra.mxu0 %v2743
    %2823 = vmatpush.msra.mxu0 %v2741
    %2824 = vmatpush.msra.mxu0 %v2739
    %2825 = vmatpush.msra.mxu0 %v2737
    %2826 = vmatpush.msra.mxu0 %v2735
    %2827 = vmatpush.msra.mxu0 %v2733
    %2828 = vmatpush.msra.mxu0 %v2731
    %2829 = vmatpush.msra.mxu0 %v2729
    %2830 = vmatpush.msra.mxu0 %v2727
    %2831 = vmatpush.msra.mxu0 %v2725
    %2832 = vmatpush.msra.mxu0 %v2723
    %2833 = vmatpush.msra.mxu0 %v2721
    %2834 = vmatpush.msra.mxu0 %v2719
    %2835 = vmatpush.msra.mxu0 %v2717
    %2836 = vmatpush.msra.mxu0 %v2715
    %2837 = vmatmul.f32.gmra.mxu0 %v2769
    %v2838 = vpop.f32.mrf.mxu0
    %v2839 = vadd.f32 %v2810, %v2838
    %2840 = vmatmul.f32.gmra.mxu0 %v2771
    %v2841 = vpop.f32.mrf.mxu0
    %v2842 = vadd.f32 %v2813, %v2841
    %2843 = vmatmul.f32.gmra.mxu0 %v2781
    %v2844 = vpop.f32.mrf.mxu0
    %v2845 = vadd.f32 %v2816, %v2844
    %2846 = vmatmul.f32.gmra.mxu0 %v2783
    %v2847 = vpop.f32.mrf.mxu0
    %v2848 = vadd.f32 %v2819, %v2847
    %2849 = vdwg.mxu0
    %2850 = vmatpush.msra.mxu0 %v2714
    %2851 = vmatpush.msra.mxu0 %v2712
    %2852 = vmatpush.msra.mxu0 %v2710
    %2853 = vmatpush.msra.mxu0 %v2708
    %2854 = vmatpush.msra.mxu0 %v2706
    %2855 = vmatpush.msra.mxu0 %v2704
    %2856 = vmatpush.msra.mxu0 %v2702
    %2857 = vmatpush.msra.mxu0 %v2700
    %2858 = vmatpush.msra.mxu0 %v2698
    %2859 = vmatpush.msra.mxu0 %v2696
    %2860 = vmatpush.msra.mxu0 %v2694
    %2861 = vmatpush.msra.mxu0 %v2692
    %2862 = vmatpush.msra.mxu0 %v2690
    %2863 = vmatpush.msra.mxu0 %v2688
    %2864 = vmatpush.msra.mxu0 %v2686
    %2865 = vmatpush.msra.mxu0 %v2684
    %2866 = vmatmul.f32.gmra.mxu0 %v2768
    %v2867 = vpop.f32.mrf.mxu0
    %v2868 = vadd.f32 %v2750, %v2867
    %2869 = vmatmul.f32.gmra.mxu0 %v2770
    %v2870 = vpop.f32.mrf.mxu0
    %v2871 = vadd.f32 %v2750, %v2870
    %2872 = vmatmul.f32.gmra.mxu0 %v2780
    %v2873 = vpop.f32.mrf.mxu0
    %v2874 = vadd.f32 %v2750, %v2873
    %2875 = vmatmul.f32.gmra.mxu0 %v2782
    %v2876 = vpop.f32.mrf.mxu0
    %v2877 = vadd.f32 %v2750, %v2876
    %2878 = vdwg.mxu0
    %2879 = vmatpush.msra.mxu0 %v2746
    %2880 = vmatpush.msra.mxu0 %v2744
    %2881 = vmatpush.msra.mxu0 %v2742
    %2882 = vmatpush.msra.mxu0 %v2740
    %2883 = vmatpush.msra.mxu0 %v2738
    %2884 = vmatpush.msra.mxu0 %v2736
    %2885 = vmatpush.msra.mxu0 %v2734
    %2886 = vmatpush.msra.mxu0 %v2732
    %2887 = vmatpush.msra.mxu0 %v2730
    %2888 = vmatpush.msra.mxu0 %v2728
    %2889 = vmatpush.msra.mxu0 %v2726
    %2890 = vmatpush.msra.mxu0 %v2724
    %2891 = vmatpush.msra.mxu0 %v2722
    %2892 = vmatpush.msra.mxu0 %v2720
    %2893 = vmatpush.msra.mxu0 %v2718
    %2894 = vmatpush.msra.mxu0 %v2716
    %2895 = vmatmul.f32.gmra.mxu0 %v2769
    %v2896 = vpop.f32.mrf.mxu0
    %v2897 = vadd.f32 %v2868, %v2896
    %2898 = vmatmul.f32.gmra.mxu0 %v2771
    %v2899 = vpop.f32.mrf.mxu0
    %v2900 = vadd.f32 %v2871, %v2899
    %2901 = vmatmul.f32.gmra.mxu0 %v2781
    %v2902 = vpop.f32.mrf.mxu0
    %v2903 = vadd.f32 %v2874, %v2902
    %2904 = vmatmul.f32.gmra.mxu0 %v2783
    %v2905 = vpop.f32.mrf.mxu0
    %v2906 = vadd.f32 %v2877, %v2905
    %2907 = vdwg.mxu0
    %s2908 = scalar_lea.vmem [#allocation25], 1024
    %v2909 = vld [vmem:[%s2908] sm:$0xff]
    %v2910 = vld [vmem:[%s2908 + $0x8] sm:$0xff]
    %v2911 = vld [vmem:[%s2908 + $0x10] sm:$0xff]
    %v2912 = vld [vmem:[%s2908 + $0x18] sm:$0xff]
    %v2913 = vld [vmem:[%s2908 + $0x20] sm:$0xff]
    %v2914 = vld [vmem:[%s2908 + $0x28] sm:$0xff]
    %v2915 = vld [vmem:[%s2908 + $0x30] sm:$0xff]
    %v2916 = vld [vmem:[%s2908 + $0x38] sm:$0xff]
    %v2917 = vld [vmem:[%s2908 + $0x40] sm:$0xff]
    %v2918 = vld [vmem:[%s2908 + $0x48] sm:$0xff]
    %v2919 = vld [vmem:[%s2908 + $0x50] sm:$0xff]
    %v2920 = vld [vmem:[%s2908 + $0x58] sm:$0xff]
    %v2921 = vld [vmem:[%s2908 + $0x60] sm:$0xff]
    %v2922 = vld [vmem:[%s2908 + $0x68] sm:$0xff]
    %v2923 = vld [vmem:[%s2908 + $0x70] sm:$0xff]
    %v2924 = vld [vmem:[%s2908 + $0x78] sm:$0xff]
    %v2925 = vld [vmem:[%s2908 + $0x80] sm:$0xff]
    %v2926 = vld [vmem:[%s2908 + $0x88] sm:$0xff]
    %v2927 = vld [vmem:[%s2908 + $0x90] sm:$0xff]
    %v2928 = vld [vmem:[%s2908 + $0x98] sm:$0xff]
    %v2929 = vld [vmem:[%s2908 + $0xa0] sm:$0xff]
    %v2930 = vld [vmem:[%s2908 + $0xa8] sm:$0xff]
    %v2931 = vld [vmem:[%s2908 + $0xb0] sm:$0xff]
    %v2932 = vld [vmem:[%s2908 + $0xb8] sm:$0xff]
    %v2933 = vld [vmem:[%s2908 + $0xc0] sm:$0xff]
    %v2934 = vld [vmem:[%s2908 + $0xc8] sm:$0xff]
    %v2935 = vld [vmem:[%s2908 + $0xd0] sm:$0xff]
    %v2936 = vld [vmem:[%s2908 + $0xd8] sm:$0xff]
    %v2937 = vld [vmem:[%s2908 + $0xe0] sm:$0xff]
    %v2938 = vld [vmem:[%s2908 + $0xe8] sm:$0xff]
    %v2939 = vld [vmem:[%s2908 + $0xf0] sm:$0xff]
    %v2940 = vld [vmem:[%s2908 + $0xf8] sm:$0xff]
    %v2941 = vld [vmem:[%s2908 + $0x100] sm:$0xff]
    %v2942 = vld [vmem:[%s2908 + $0x108] sm:$0xff]
    %v2943 = vld [vmem:[%s2908 + $0x110] sm:$0xff]
    %v2944 = vld [vmem:[%s2908 + $0x118] sm:$0xff]
    %v2945 = vld [vmem:[%s2908 + $0x120] sm:$0xff]
    %v2946 = vld [vmem:[%s2908 + $0x128] sm:$0xff]
    %v2947 = vld [vmem:[%s2908 + $0x130] sm:$0xff]
    %v2948 = vld [vmem:[%s2908 + $0x138] sm:$0xff]
    %v2949 = vld [vmem:[%s2908 + $0x140] sm:$0xff]
    %v2950 = vld [vmem:[%s2908 + $0x148] sm:$0xff]
    %v2951 = vld [vmem:[%s2908 + $0x150] sm:$0xff]
    %v2952 = vld [vmem:[%s2908 + $0x158] sm:$0xff]
    %v2953 = vld [vmem:[%s2908 + $0x160] sm:$0xff]
    %v2954 = vld [vmem:[%s2908 + $0x168] sm:$0xff]
    %v2955 = vld [vmem:[%s2908 + $0x170] sm:$0xff]
    %v2956 = vld [vmem:[%s2908 + $0x178] sm:$0xff]
    %v2957 = vld [vmem:[%s2908 + $0x180] sm:$0xff]
    %v2958 = vld [vmem:[%s2908 + $0x188] sm:$0xff]
    %v2959 = vld [vmem:[%s2908 + $0x190] sm:$0xff]
    %v2960 = vld [vmem:[%s2908 + $0x198] sm:$0xff]
    %v2961 = vld [vmem:[%s2908 + $0x1a0] sm:$0xff]
    %v2962 = vld [vmem:[%s2908 + $0x1a8] sm:$0xff]
    %v2963 = vld [vmem:[%s2908 + $0x1b0] sm:$0xff]
    %v2964 = vld [vmem:[%s2908 + $0x1b8] sm:$0xff]
    %v2965 = vld [vmem:[%s2908 + $0x1c0] sm:$0xff]
    %v2966 = vld [vmem:[%s2908 + $0x1c8] sm:$0xff]
    %v2967 = vld [vmem:[%s2908 + $0x1d0] sm:$0xff]
    %v2968 = vld [vmem:[%s2908 + $0x1d8] sm:$0xff]
    %v2969 = vld [vmem:[%s2908 + $0x1e0] sm:$0xff]
    %v2970 = vld [vmem:[%s2908 + $0x1e8] sm:$0xff]
    %v2971 = vld [vmem:[%s2908 + $0x1f0] sm:$0xff]
    %v2972 = vld [vmem:[%s2908 + $0x1f8] sm:$0xff]
    %2973 = vst [vmem:[#allocation1] ss:$4 sm:$0xff] %v2447
    %s2974 = scalar_lea.vmem [#allocation1], 1
    %2975 = vst [vmem:[%s2974] ss:$4 sm:$0xff] %v2448
    %s2976 = scalar_lea.vmem [#allocation1], 2
    %2977 = vst [vmem:[%s2976] ss:$4 sm:$0xff] %v2449
    %s2978 = scalar_lea.vmem [#allocation1], 3
    %2979 = vst [vmem:[%s2978] ss:$4 sm:$0xff] %v2450
    %s2980 = scalar_lea.vmem [#allocation1], 32
    %2981 = vst [vmem:[%s2980] ss:$4 sm:$0xff] %v2451
    %s2982 = scalar_lea.vmem [#allocation1], 33
    %2983 = vst [vmem:[%s2982] ss:$4 sm:$0xff] %v2452
    %s2984 = scalar_lea.vmem [#allocation1], 34
    %2985 = vst [vmem:[%s2984] ss:$4 sm:$0xff] %v2453
    %s2986 = scalar_lea.vmem [#allocation1], 35
    %2987 = vst [vmem:[%s2986] ss:$4 sm:$0xff] %v2454
    %v2988 = vld.sshfl [vmem:[#allocation1] sm:$0xff pattern:$0x73625140]
    %v2989 = vld.sshfl [vmem:[#allocation1 + $0x8] sm:$0xff pattern:$0x73625140]
    %v2990 = vld.sshfl [vmem:[#allocation1 + $0x20] sm:$0xff pattern:$0x73625140]
    %v2991 = vld.sshfl [vmem:[#allocation1 + $0x28] sm:$0xff pattern:$0x73625140]
    %2992 = vst [vmem:[#allocation1] ss:$4 sm:$0xff] %v2455
    %2993 = vst [vmem:[%s2974] ss:$4 sm:$0xff] %v2456
    %2994 = vst [vmem:[%s2976] ss:$4 sm:$0xff] %v2457
    %2995 = vst [vmem:[%s2978] ss:$4 sm:$0xff] %v2458
    %2996 = vst [vmem:[%s2980] ss:$4 sm:$0xff] %v2459
    %2997 = vst [vmem:[%s2982] ss:$4 sm:$0xff] %v2460
    %2998 = vst [vmem:[%s2984] ss:$4 sm:$0xff] %v2461
    %2999 = vst [vmem:[%s2986] ss:$4 sm:$0xff] %v2462
    %v3000 = vld.sshfl [vmem:[#allocation1] sm:$0xff pattern:$0x73625140]
    %v3001 = vld.sshfl [vmem:[#allocation1 + $0x8] sm:$0xff pattern:$0x73625140]
    %v3002 = vld.sshfl [vmem:[#allocation1 + $0x20] sm:$0xff pattern:$0x73625140]
    %v3003 = vld.sshfl [vmem:[#allocation1 + $0x28] sm:$0xff pattern:$0x73625140]
    %3012 = vmatpush.msra.mxu0 %v2939
    %3013 = vmatpush.msra.mxu0 %v2937
    %3014 = vmatpush.msra.mxu0 %v2935
    %3015 = vmatpush.msra.mxu0 %v2933
    %3016 = vmatpush.msra.mxu0 %v2931
    %3017 = vmatpush.msra.mxu0 %v2929
    %3018 = vmatpush.msra.mxu0 %v2927
    %3019 = vmatpush.msra.mxu0 %v2925
    %3020 = vmatpush.msra.mxu0 %v2923
    %3021 = vmatpush.msra.mxu0 %v2921
    %3022 = vmatpush.msra.mxu0 %v2919
    %3023 = vmatpush.msra.mxu0 %v2917
    %3024 = vmatpush.msra.mxu0 %v2915
    %3025 = vmatpush.msra.mxu0 %v2913
    %3026 = vmatpush.msra.mxu0 %v2911
    %3027 = vmatpush.msra.mxu0 %v2909
    %3028 = vmatmul.f32.gmra.mxu0 %v2988
    %v3029 = vpop.f32.mrf.mxu0
    %v3030 = vadd.f32 0.0, %v3029
    %3031 = vmatmul.f32.gmra.mxu0 %v2990
    %v3032 = vpop.f32.mrf.mxu0
    %v3033 = vadd.f32 0.0, %v3032
    %3034 = vmatmul.f32.gmra.mxu0 %v3000
    %v3035 = vpop.f32.mrf.mxu0
    %v3036 = vadd.f32 0.0, %v3035
    %3037 = vmatmul.f32.gmra.mxu0 %v3002
    %v3038 = vpop.f32.mrf.mxu0
    %v3039 = vadd.f32 0.0, %v3038
    %3040 = vdwg.mxu0
    %3041 = vmatpush.msra.mxu0 %v2971
    %3042 = vmatpush.msra.mxu0 %v2969
    %3043 = vmatpush.msra.mxu0 %v2967
    %3044 = vmatpush.msra.mxu0 %v2965
    %3045 = vmatpush.msra.mxu0 %v2963
    %3046 = vmatpush.msra.mxu0 %v2961
    %3047 = vmatpush.msra.mxu0 %v2959
    %3048 = vmatpush.msra.mxu0 %v2957
    %3049 = vmatpush.msra.mxu0 %v2955
    %3050 = vmatpush.msra.mxu0 %v2953
    %3051 = vmatpush.msra.mxu0 %v2951
    %3052 = vmatpush.msra.mxu0 %v2949
    %3053 = vmatpush.msra.mxu0 %v2947
    %3054 = vmatpush.msra.mxu0 %v2945
    %3055 = vmatpush.msra.mxu0 %v2943
    %3056 = vmatpush.msra.mxu0 %v2941
    %3057 = vmatmul.f32.gmra.mxu0 %v2989
    %v3058 = vpop.f32.mrf.mxu0
    %v3059 = vadd.f32 %v3030, %v3058
    %3060 = vmatmul.f32.gmra.mxu0 %v2991
    %v3061 = vpop.f32.mrf.mxu0
    %v3062 = vadd.f32 %v3033, %v3061
    %3063 = vmatmul.f32.gmra.mxu0 %v3001
    %v3064 = vpop.f32.mrf.mxu0
    %v3065 = vadd.f32 %v3036, %v3064
    %3066 = vmatmul.f32.gmra.mxu0 %v3003
    %v3067 = vpop.f32.mrf.mxu0
    %v3068 = vadd.f32 %v3039, %v3067
    %3069 = vdwg.mxu0
    %3070 = vmatpush.msra.mxu0 %v2940
    %3071 = vmatpush.msra.mxu0 %v2938
    %3072 = vmatpush.msra.mxu0 %v2936
    %3073 = vmatpush.msra.mxu0 %v2934
    %3074 = vmatpush.msra.mxu0 %v2932
    %3075 = vmatpush.msra.mxu0 %v2930
    %3076 = vmatpush.msra.mxu0 %v2928
    %3077 = vmatpush.msra.mxu0 %v2926
    %3078 = vmatpush.msra.mxu0 %v2924
    %3079 = vmatpush.msra.mxu0 %v2922
    %3080 = vmatpush.msra.mxu0 %v2920
    %3081 = vmatpush.msra.mxu0 %v2918
    %3082 = vmatpush.msra.mxu0 %v2916
    %3083 = vmatpush.msra.mxu0 %v2914
    %3084 = vmatpush.msra.mxu0 %v2912
    %3085 = vmatpush.msra.mxu0 %v2910
    %3086 = vmatmul.f32.gmra.mxu0 %v2988
    %v3087 = vpop.f32.mrf.mxu0
    %v3088 = vadd.f32 0.0, %v3087
    %3089 = vmatmul.f32.gmra.mxu0 %v2990
    %v3090 = vpop.f32.mrf.mxu0
    %v3091 = vadd.f32 0.0, %v3090
    %3092 = vmatmul.f32.gmra.mxu0 %v3000
    %v3093 = vpop.f32.mrf.mxu0
    %v3094 = vadd.f32 0.0, %v3093
    %3095 = vmatmul.f32.gmra.mxu0 %v3002
    %v3096 = vpop.f32.mrf.mxu0
    %v3097 = vadd.f32 0.0, %v3096
    %3098 = vdwg.mxu0
    %3099 = vmatpush.msra.mxu0 %v2972
    %3100 = vmatpush.msra.mxu0 %v2970
    %3101 = vmatpush.msra.mxu0 %v2968
    %3102 = vmatpush.msra.mxu0 %v2966
    %3103 = vmatpush.msra.mxu0 %v2964
    %3104 = vmatpush.msra.mxu0 %v2962
    %3105 = vmatpush.msra.mxu0 %v2960
    %3106 = vmatpush.msra.mxu0 %v2958
    %3107 = vmatpush.msra.mxu0 %v2956
    %3108 = vmatpush.msra.mxu0 %v2954
    %3109 = vmatpush.msra.mxu0 %v2952
    %3110 = vmatpush.msra.mxu0 %v2950
    %3111 = vmatpush.msra.mxu0 %v2948
    %3112 = vmatpush.msra.mxu0 %v2946
    %3113 = vmatpush.msra.mxu0 %v2944
    %3114 = vmatpush.msra.mxu0 %v2942
    %3115 = vmatmul.f32.gmra.mxu0 %v2989
    %v3116 = vpop.f32.mrf.mxu0
    %v3117 = vadd.f32 %v3088, %v3116
    %3118 = vmatmul.f32.gmra.mxu0 %v2991
    %v3119 = vpop.f32.mrf.mxu0
    %v3120 = vadd.f32 %v3091, %v3119
    %3121 = vmatmul.f32.gmra.mxu0 %v3001
    %v3122 = vpop.f32.mrf.mxu0
    %v3123 = vadd.f32 %v3094, %v3122
    %3124 = vmatmul.f32.gmra.mxu0 %v3003
    %v3125 = vpop.f32.mrf.mxu0
    %v3126 = vadd.f32 %v3097, %v3125
    %3127 = vdwg.mxu0
    %v3136 = vrot.slane %v2613, 7
    %v3137 = vrot.slane %v2671, 7
    %v3138 = vrot.slane %v2616, 7
    %v3139 = vsel %vm530, %v3136, %v3138
    %v3140 = vrot.slane %v2674, 7
    %v3141 = vsel %vm530, %v3137, %v3140
    %v3142 = vrot.slane %v2619, 7
    %v3143 = vrot.slane %v2677, 7
    %v3144 = vrot.slane %v2622, 7
    %v3145 = vsel %vm530, %v3142, %v3144
    %v3146 = vrot.slane %v2680, 7
    %v3147 = vsel %vm530, %v3143, %v3146
    %v3156 = vsel %vm530, 0.0, %v3136
    %v3157 = vsel %vm530, 0.0, %v3137
    %v3158 = vsel %vm530, 0.0, %v3142
    %v3159 = vsel %vm530, 0.0, %v3143
    %v3160 = vadd.f32 %v2839, %v3156
    %v3161 = vadd.f32 %v2897, %v3157
    %v3162 = vadd.f32 %v2842, %v3139
    %v3163 = vadd.f32 %v2900, %v3141
    %v3164 = vadd.f32 %v2845, %v3158
    %v3165 = vadd.f32 %v2903, %v3159
    %v3166 = vadd.f32 %v2848, %v3145
    %v3167 = vadd.f32 %v2906, %v3147
    %v3176 = vrot.slane %v3059, 1
    %v3177 = vrot.slane %v3062, 1
    %v3178 = vsel %vm1461, %v3176, %v3177
    %v3179 = vrot.slane %v3117, 1
    %v3180 = vrot.slane %v3120, 1
    %v3181 = vsel %vm1461, %v3179, %v3180
    %v3182 = vrot.slane %v3065, 1
    %v3183 = vrot.slane %v3068, 1
    %v3184 = vsel %vm1461, %v3182, %v3183
    %v3185 = vrot.slane %v3123, 1
    %v3186 = vrot.slane %v3126, 1
    %v3187 = vsel %vm1461, %v3185, %v3186
    %v3196 = vsel %vm1461, %v3177, 0.0
    %v3197 = vsel %vm1461, %v3180, 0.0
    %v3198 = vsel %vm1461, %v3183, 0.0
    %v3199 = vsel %vm1461, %v3186, 0.0
    %v3200 = vadd.f32 %v3160, %v3178
    %v3201 = vadd.f32 %v3161, %v3181
    %v3202 = vadd.f32 %v3162, %v3196
    %v3203 = vadd.f32 %v3163, %v3197
    %v3204 = vadd.f32 %v3164, %v3184
    %v3205 = vadd.f32 %v3165, %v3187
    %v3206 = vadd.f32 %v3166, %v3198
    %v3207 = vadd.f32 %v3167, %v3199
    %v3208 = vmul.f32 %v3200, 0.5
    %v3209 = vmul.f32 %v3201, 0.5
    %v3210 = vmul.f32 %v3202, 0.5
    %v3211 = vmul.f32 %v3203, 0.5
    %v3212 = vmul.f32 %v3204, 0.5
    %v3213 = vmul.f32 %v3205, 0.5
    %v3214 = vmul.f32 %v3206, 0.5
    %v3215 = vmul.f32 %v3207, 0.5
    %v3216 = vmul.f32 %v3200, 0.70710677
    %v3217 = vmul.f32 %v3201, 0.70710677
    %v3218 = vmul.f32 %v3202, 0.70710677
    %v3219 = vmul.f32 %v3203, 0.70710677
    %v3220 = vmul.f32 %v3204, 0.70710677
    %v3221 = vmul.f32 %v3205, 0.70710677
    %v3222 = vmul.f32 %v3206, 0.70710677
    %v3223 = vmul.f32 %v3207, 0.70710677
    %v3224 = vmul.f32 %v3216, %v3216
    %v3225 = vmin.f32 16.0, %v3224
    %v3226 = vmul.f32 %v3225, 2.1237322e-06
    %v3227 = vadd.f32 %v3226, 0.00028619796
    %v3228 = vmul.f32 %v3225, %v3227
    %v3229 = vadd.f32 %v3228, 0.0036580483
    %v3230 = vmul.f32 %v3225, %v3229
    %v3231 = vadd.f32 %v3230, 0.05243302
    %v3232 = vmul.f32 %v3225, %v3231
    %v3233 = vadd.f32 %v3232, 0.18741608
    %v3234 = vmul.f32 %v3225, %v3233
    %v3235 = vadd.f32 %v3234, 1.1283791
    %v3236 = vmul.f32 %v3216, %v3235
    %v3237 = vmul.f32 %v3225, 3.8918573e-05
    %v3238 = vadd.f32 %v3237, 0.001143296
    %v3239 = vmul.f32 %v3225, %v3238
    %v3240 = vadd.f32 %v3239, 0.014752088
    %v3241 = vmul.f32 %v3225, %v3240
    %v3242 = vadd.f32 %v3241, 0.112945676
    %v3243 = vmul.f32 %v3225, %v3242
    %v3244 = vadd.f32 %v3243, 0.4994258
    %v3245 = vmul.f32 %v3225, %v3244
    %v3246 = vadd.f32 %v3245, 1.0
    %v3247 = vrcp.pop %v3246
    %v3248 = vmul.f32 %v3246, %v3247
    %v3249 = vsub.f32 1.0, %v3248
    %v3250 = vmul.f32 %v3247, %v3249
    %v3251 = vadd.f32 %v3247, %v3250
    %vm3252 = vweird.f32 %v3246
    %vm3253 = vweird.f32 %v3247
    %vm3254 = vmor %vm3252, %vm3253
    %v3255 = vsel %vm3254, %v3247, %v3251
    %v3256 = vand.u32 2147483647, %v3246
    %vm3257 = vcmp.eq.f32.partialorder %v3256, 8.507059e+37
    %v3258 = vand.u32 %v3246, 2147483648
    %v3259 = vor.u32 1.1754944e-38, %v3258
    %v3260 = vsel %vm3257, %v3259, %v3255
    %v3261 = vmul.f32 %v3236, %v3260
    %v3262 = vmin.f32 %v3261, 1.0
    %v3263 = vmax.f32 %v3262, -1.0
    %v3264 = vmul.f32 %v3217, %v3217
    %v3265 = vmin.f32 16.0, %v3264
    %v3266 = vmul.f32 %v3265, 2.1237322e-06
    %v3267 = vadd.f32 %v3266, 0.00028619796
    %v3268 = vmul.f32 %v3265, %v3267
    %v3269 = vadd.f32 %v3268, 0.0036580483
    %v3270 = vmul.f32 %v3265, %v3269
    %v3271 = vadd.f32 %v3270, 0.05243302
    %v3272 = vmul.f32 %v3265, %v3271
    %v3273 = vadd.f32 %v3272, 0.18741608
    %v3274 = vmul.f32 %v3265, %v3273
    %v3275 = vadd.f32 %v3274, 1.1283791
    %v3276 = vmul.f32 %v3217, %v3275
    %v3277 = vmul.f32 %v3265, 3.8918573e-05
    %v3278 = vadd.f32 %v3277, 0.001143296
    %v3279 = vmul.f32 %v3265, %v3278
    %v3280 = vadd.f32 %v3279, 0.014752088
    %v3281 = vmul.f32 %v3265, %v3280
    %v3282 = vadd.f32 %v3281, 0.112945676
    %v3283 = vmul.f32 %v3265, %v3282
    %v3284 = vadd.f32 %v3283, 0.4994258
    %v3285 = vmul.f32 %v3265, %v3284
    %v3286 = vadd.f32 %v3285, 1.0
    %v3287 = vrcp.pop %v3286
    %v3288 = vmul.f32 %v3286, %v3287
    %v3289 = vsub.f32 1.0, %v3288
    %v3290 = vmul.f32 %v3287, %v3289
    %v3291 = vadd.f32 %v3287, %v3290
    %vm3292 = vweird.f32 %v3286
    %vm3293 = vweird.f32 %v3287
    %vm3294 = vmor %vm3292, %vm3293
    %v3295 = vsel %vm3294, %v3287, %v3291
    %v3296 = vand.u32 2147483647, %v3286
    %vm3297 = vcmp.eq.f32.partialorder %v3296, 8.507059e+37
    %v3298 = vand.u32 %v3286, 2147483648
    %v3299 = vor.u32 1.1754944e-38, %v3298
    %v3300 = vsel %vm3297, %v3299, %v3295
    %v3301 = vmul.f32 %v3276, %v3300
    %v3302 = vmin.f32 %v3301, 1.0
    %v3303 = vmax.f32 %v3302, -1.0
    %v3304 = vmul.f32 %v3218, %v3218
    %v3305 = vmin.f32 16.0, %v3304
    %v3306 = vmul.f32 %v3305, 2.1237322e-06
    %v3307 = vadd.f32 %v3306, 0.00028619796
    %v3308 = vmul.f32 %v3305, %v3307
    %v3309 = vadd.f32 %v3308, 0.0036580483
    %v3310 = vmul.f32 %v3305, %v3309
    %v3311 = vadd.f32 %v3310, 0.05243302
    %v3312 = vmul.f32 %v3305, %v3311
    %v3313 = vadd.f32 %v3312, 0.18741608
    %v3314 = vmul.f32 %v3305, %v3313
    %v3315 = vadd.f32 %v3314, 1.1283791
    %v3316 = vmul.f32 %v3218, %v3315
    %v3317 = vmul.f32 %v3305, 3.8918573e-05
    %v3318 = vadd.f32 %v3317, 0.001143296
    %v3319 = vmul.f32 %v3305, %v3318
    %v3320 = vadd.f32 %v3319, 0.014752088
    %v3321 = vmul.f32 %v3305, %v3320
    %v3322 = vadd.f32 %v3321, 0.112945676
    %v3323 = vmul.f32 %v3305, %v3322
    %v3324 = vadd.f32 %v3323, 0.4994258
    %v3325 = vmul.f32 %v3305, %v3324
    %v3326 = vadd.f32 %v3325, 1.0
    %v3327 = vrcp.pop %v3326
    %v3328 = vmul.f32 %v3326, %v3327
    %v3329 = vsub.f32 1.0, %v3328
    %v3330 = vmul.f32 %v3327, %v3329
    %v3331 = vadd.f32 %v3327, %v3330
    %vm3332 = vweird.f32 %v3326
    %vm3333 = vweird.f32 %v3327
    %vm3334 = vmor %vm3332, %vm3333
    %v3335 = vsel %vm3334, %v3327, %v3331
    %v3336 = vand.u32 2147483647, %v3326
    %vm3337 = vcmp.eq.f32.partialorder %v3336, 8.507059e+37
    %v3338 = vand.u32 %v3326, 2147483648
    %v3339 = vor.u32 1.1754944e-38, %v3338
    %v3340 = vsel %vm3337, %v3339, %v3335
    %v3341 = vmul.f32 %v3316, %v3340
    %v3342 = vmin.f32 %v3341, 1.0
    %v3343 = vmax.f32 %v3342, -1.0
    %v3344 = vmul.f32 %v3219, %v3219
    %v3345 = vmin.f32 16.0, %v3344
    %v3346 = vmul.f32 %v3345, 2.1237322e-06
    %v3347 = vadd.f32 %v3346, 0.00028619796
    %v3348 = vmul.f32 %v3345, %v3347
    %v3349 = vadd.f32 %v3348, 0.0036580483
    %v3350 = vmul.f32 %v3345, %v3349
    %v3351 = vadd.f32 %v3350, 0.05243302
    %v3352 = vmul.f32 %v3345, %v3351
    %v3353 = vadd.f32 %v3352, 0.18741608
    %v3354 = vmul.f32 %v3345, %v3353
    %v3355 = vadd.f32 %v3354, 1.1283791
    %v3356 = vmul.f32 %v3219, %v3355
    %v3357 = vmul.f32 %v3345, 3.8918573e-05
    %v3358 = vadd.f32 %v3357, 0.001143296
    %v3359 = vmul.f32 %v3345, %v3358
    %v3360 = vadd.f32 %v3359, 0.014752088
    %v3361 = vmul.f32 %v3345, %v3360
    %v3362 = vadd.f32 %v3361, 0.112945676
    %v3363 = vmul.f32 %v3345, %v3362
    %v3364 = vadd.f32 %v3363, 0.4994258
    %v3365 = vmul.f32 %v3345, %v3364
    %v3366 = vadd.f32 %v3365, 1.0
    %v3367 = vrcp.pop %v3366
    %v3368 = vmul.f32 %v3366, %v3367
    %v3369 = vsub.f32 1.0, %v3368
    %v3370 = vmul.f32 %v3367, %v3369
    %v3371 = vadd.f32 %v3367, %v3370
    %vm3372 = vweird.f32 %v3366
    %vm3373 = vweird.f32 %v3367
    %vm3374 = vmor %vm3372, %vm3373
    %v3375 = vsel %vm3374, %v3367, %v3371
    %v3376 = vand.u32 2147483647, %v3366
    %vm3377 = vcmp.eq.f32.partialorder %v3376, 8.507059e+37
    %v3378 = vand.u32 %v3366, 2147483648
    %v3379 = vor.u32 1.1754944e-38, %v3378
    %v3380 = vsel %vm3377, %v3379, %v3375
    %v3381 = vmul.f32 %v3356, %v3380
    %v3382 = vmin.f32 %v3381, 1.0
    %v3383 = vmax.f32 %v3382, -1.0
    %v3384 = vmul.f32 %v3220, %v3220
    %v3385 = vmin.f32 16.0, %v3384
    %v3386 = vmul.f32 %v3385, 2.1237322e-06
    %v3387 = vadd.f32 %v3386, 0.00028619796
    %v3388 = vmul.f32 %v3385, %v3387
    %v3389 = vadd.f32 %v3388, 0.0036580483
    %v3390 = vmul.f32 %v3385, %v3389
    %v3391 = vadd.f32 %v3390, 0.05243302
    %v3392 = vmul.f32 %v3385, %v3391
    %v3393 = vadd.f32 %v3392, 0.18741608
    %v3394 = vmul.f32 %v3385, %v3393
    %v3395 = vadd.f32 %v3394, 1.1283791
    %v3396 = vmul.f32 %v3220, %v3395
    %v3397 = vmul.f32 %v3385, 3.8918573e-05
    %v3398 = vadd.f32 %v3397, 0.001143296
    %v3399 = vmul.f32 %v3385, %v3398
    %v3400 = vadd.f32 %v3399, 0.014752088
    %v3401 = vmul.f32 %v3385, %v3400
    %v3402 = vadd.f32 %v3401, 0.112945676
    %v3403 = vmul.f32 %v3385, %v3402
    %v3404 = vadd.f32 %v3403, 0.4994258
    %v3405 = vmul.f32 %v3385, %v3404
    %v3406 = vadd.f32 %v3405, 1.0
    %v3407 = vrcp.pop %v3406
    %v3408 = vmul.f32 %v3406, %v3407
    %v3409 = vsub.f32 1.0, %v3408
    %v3410 = vmul.f32 %v3407, %v3409
    %v3411 = vadd.f32 %v3407, %v3410
    %vm3412 = vweird.f32 %v3406
    %vm3413 = vweird.f32 %v3407
    %vm3414 = vmor %vm3412, %vm3413
    %v3415 = vsel %vm3414, %v3407, %v3411
    %v3416 = vand.u32 2147483647, %v3406
    %vm3417 = vcmp.eq.f32.partialorder %v3416, 8.507059e+37
    %v3418 = vand.u32 %v3406, 2147483648
    %v3419 = vor.u32 1.1754944e-38, %v3418
    %v3420 = vsel %vm3417, %v3419, %v3415
    %v3421 = vmul.f32 %v3396, %v3420
    %v3422 = vmin.f32 %v3421, 1.0
    %v3423 = vmax.f32 %v3422, -1.0
    %v3424 = vmul.f32 %v3221, %v3221
    %v3425 = vmin.f32 16.0, %v3424
    %v3426 = vmul.f32 %v3425, 2.1237322e-06
    %v3427 = vadd.f32 %v3426, 0.00028619796
    %v3428 = vmul.f32 %v3425, %v3427
    %v3429 = vadd.f32 %v3428, 0.0036580483
    %v3430 = vmul.f32 %v3425, %v3429
    %v3431 = vadd.f32 %v3430, 0.05243302
    %v3432 = vmul.f32 %v3425, %v3431
    %v3433 = vadd.f32 %v3432, 0.18741608
    %v3434 = vmul.f32 %v3425, %v3433
    %v3435 = vadd.f32 %v3434, 1.1283791
    %v3436 = vmul.f32 %v3221, %v3435
    %v3437 = vmul.f32 %v3425, 3.8918573e-05
    %v3438 = vadd.f32 %v3437, 0.001143296
    %v3439 = vmul.f32 %v3425, %v3438
    %v3440 = vadd.f32 %v3439, 0.014752088
    %v3441 = vmul.f32 %v3425, %v3440
    %v3442 = vadd.f32 %v3441, 0.112945676
    %v3443 = vmul.f32 %v3425, %v3442
    %v3444 = vadd.f32 %v3443, 0.4994258
    %v3445 = vmul.f32 %v3425, %v3444
    %v3446 = vadd.f32 %v3445, 1.0
    %v3447 = vrcp.pop %v3446
    %v3448 = vmul.f32 %v3446, %v3447
    %v3449 = vsub.f32 1.0, %v3448
    %v3450 = vmul.f32 %v3447, %v3449
    %v3451 = vadd.f32 %v3447, %v3450
    %vm3452 = vweird.f32 %v3446
    %vm3453 = vweird.f32 %v3447
    %vm3454 = vmor %vm3452, %vm3453
    %v3455 = vsel %vm3454, %v3447, %v3451
    %v3456 = vand.u32 2147483647, %v3446
    %vm3457 = vcmp.eq.f32.partialorder %v3456, 8.507059e+37
    %v3458 = vand.u32 %v3446, 2147483648
    %v3459 = vor.u32 1.1754944e-38, %v3458
    %v3460 = vsel %vm3457, %v3459, %v3455
    %v3461 = vmul.f32 %v3436, %v3460
    %v3462 = vmin.f32 %v3461, 1.0
    %v3463 = vmax.f32 %v3462, -1.0
    %v3464 = vmul.f32 %v3222, %v3222
    %v3465 = vmin.f32 16.0, %v3464
    %v3466 = vmul.f32 %v3465, 2.1237322e-06
    %v3467 = vadd.f32 %v3466, 0.00028619796
    %v3468 = vmul.f32 %v3465, %v3467
    %v3469 = vadd.f32 %v3468, 0.0036580483
    %v3470 = vmul.f32 %v3465, %v3469
    %v3471 = vadd.f32 %v3470, 0.05243302
    %v3472 = vmul.f32 %v3465, %v3471
    %v3473 = vadd.f32 %v3472, 0.18741608
    %v3474 = vmul.f32 %v3465, %v3473
    %v3475 = vadd.f32 %v3474, 1.1283791
    %v3476 = vmul.f32 %v3222, %v3475
    %v3477 = vmul.f32 %v3465, 3.8918573e-05
    %v3478 = vadd.f32 %v3477, 0.001143296
    %v3479 = vmul.f32 %v3465, %v3478
    %v3480 = vadd.f32 %v3479, 0.014752088
    %v3481 = vmul.f32 %v3465, %v3480
    %v3482 = vadd.f32 %v3481, 0.112945676
    %v3483 = vmul.f32 %v3465, %v3482
    %v3484 = vadd.f32 %v3483, 0.4994258
    %v3485 = vmul.f32 %v3465, %v3484
    %v3486 = vadd.f32 %v3485, 1.0
    %v3487 = vrcp.pop %v3486
    %v3488 = vmul.f32 %v3486, %v3487
    %v3489 = vsub.f32 1.0, %v3488
    %v3490 = vmul.f32 %v3487, %v3489
    %v3491 = vadd.f32 %v3487, %v3490
    %vm3492 = vweird.f32 %v3486
    %vm3493 = vweird.f32 %v3487
    %vm3494 = vmor %vm3492, %vm3493
    %v3495 = vsel %vm3494, %v3487, %v3491
    %v3496 = vand.u32 2147483647, %v3486
    %vm3497 = vcmp.eq.f32.partialorder %v3496, 8.507059e+37
    %v3498 = vand.u32 %v3486, 2147483648
    %v3499 = vor.u32 1.1754944e-38, %v3498
    %v3500 = vsel %vm3497, %v3499, %v3495
    %v3501 = vmul.f32 %v3476, %v3500
    %v3502 = vmin.f32 %v3501, 1.0
    %v3503 = vmax.f32 %v3502, -1.0
    %v3504 = vmul.f32 %v3223, %v3223
    %v3505 = vmin.f32 16.0, %v3504
    %v3506 = vmul.f32 %v3505, 2.1237322e-06
    %v3507 = vadd.f32 %v3506, 0.00028619796
    %v3508 = vmul.f32 %v3505, %v3507
    %v3509 = vadd.f32 %v3508, 0.0036580483
    %v3510 = vmul.f32 %v3505, %v3509
    %v3511 = vadd.f32 %v3510, 0.05243302
    %v3512 = vmul.f32 %v3505, %v3511
    %v3513 = vadd.f32 %v3512, 0.18741608
    %v3514 = vmul.f32 %v3505, %v3513
    %v3515 = vadd.f32 %v3514, 1.1283791
    %v3516 = vmul.f32 %v3223, %v3515
    %v3517 = vmul.f32 %v3505, 3.8918573e-05
    %v3518 = vadd.f32 %v3517, 0.001143296
    %v3519 = vmul.f32 %v3505, %v3518
    %v3520 = vadd.f32 %v3519, 0.014752088
    %v3521 = vmul.f32 %v3505, %v3520
    %v3522 = vadd.f32 %v3521, 0.112945676
    %v3523 = vmul.f32 %v3505, %v3522
    %v3524 = vadd.f32 %v3523, 0.4994258
    %v3525 = vmul.f32 %v3505, %v3524
    %v3526 = vadd.f32 %v3525, 1.0
    %v3527 = vrcp.pop %v3526
    %v3528 = vmul.f32 %v3526, %v3527
    %v3529 = vsub.f32 1.0, %v3528
    %v3530 = vmul.f32 %v3527, %v3529
    %v3531 = vadd.f32 %v3527, %v3530
    %vm3532 = vweird.f32 %v3526
    %vm3533 = vweird.f32 %v3527
    %vm3534 = vmor %vm3532, %vm3533
    %v3535 = vsel %vm3534, %v3527, %v3531
    %v3536 = vand.u32 2147483647, %v3526
    %vm3537 = vcmp.eq.f32.partialorder %v3536, 8.507059e+37
    %v3538 = vand.u32 %v3526, 2147483648
    %v3539 = vor.u32 1.1754944e-38, %v3538
    %v3540 = vsel %vm3537, %v3539, %v3535
    %v3541 = vmul.f32 %v3516, %v3540
    %v3542 = vmin.f32 %v3541, 1.0
    %v3543 = vmax.f32 %v3542, -1.0
    %v3544 = vadd.f32 %v3263, 1.0
    %v3545 = vadd.f32 %v3303, 1.0
    %v3546 = vadd.f32 %v3343, 1.0
    %v3547 = vadd.f32 %v3383, 1.0
    %v3548 = vadd.f32 %v3423, 1.0
    %v3549 = vadd.f32 %v3463, 1.0
    %v3550 = vadd.f32 %v3503, 1.0
    %v3551 = vadd.f32 %v3543, 1.0
    %v3552 = vmul.f32 %v3208, %v3544
    %v3553 = vmul.f32 %v3209, %v3545
    %v3554 = vmul.f32 %v3210, %v3546
    %v3555 = vmul.f32 %v3211, %v3547
    %v3556 = vmul.f32 %v3212, %v3548
    %v3557 = vmul.f32 %v3213, %v3549
    %v3558 = vmul.f32 %v3214, %v3550
    %v3559 = vmul.f32 %v3215, %v3551
    %v3568 = vrot.slane %v3552, 1
    %v3569 = vrot.slane %v3554, 1
    %v3570 = vsel %vm1461, %v3568, %v3569
    %v3571 = vrot.slane %v3553, 1
    %v3572 = vrot.slane %v3555, 1
    %v3573 = vsel %vm1461, %v3571, %v3572
    %v3574 = vrot.slane %v3556, 1
    %v3575 = vrot.slane %v3558, 1
    %v3576 = vsel %vm1461, %v3574, %v3575
    %v3577 = vrot.slane %v3557, 1
    %v3578 = vrot.slane %v3559, 1
    %v3579 = vsel %vm1461, %v3577, %v3578
    %v3588 = vsel %vm1461, %v3569, 0.0
    %v3589 = vsel %vm1461, %v3572, 0.0
    %v3590 = vsel %vm1461, %v3575, 0.0
    %v3591 = vsel %vm1461, %v3578, 0.0
    %v3592 = vld [vmem:[#allocation28] sm:$0xff]
    %v3593 = vld [vmem:[#allocation28 + $0x8] sm:$0xff]
    %v3594 = vld [vmem:[#allocation28 + $0x10] sm:$0xff]
    %v3595 = vld [vmem:[#allocation28 + $0x18] sm:$0xff]
    %v3596 = vld [vmem:[#allocation28 + $0x20] sm:$0xff]
    %v3597 = vld [vmem:[#allocation28 + $0x28] sm:$0xff]
    %v3598 = vld [vmem:[#allocation28 + $0x30] sm:$0xff]
    %v3599 = vld [vmem:[#allocation28 + $0x38] sm:$0xff]
    %v3600 = vld [vmem:[#allocation28 + $0x40] sm:$0xff]
    %v3601 = vld [vmem:[#allocation28 + $0x48] sm:$0xff]
    %v3602 = vld [vmem:[#allocation28 + $0x50] sm:$0xff]
    %v3603 = vld [vmem:[#allocation28 + $0x58] sm:$0xff]
    %v3604 = vld [vmem:[#allocation28 + $0x60] sm:$0xff]
    %v3605 = vld [vmem:[#allocation28 + $0x68] sm:$0xff]
    %v3606 = vld [vmem:[#allocation28 + $0x70] sm:$0xff]
    %v3607 = vld [vmem:[#allocation28 + $0x78] sm:$0xff]
    %v3608 = vld [vmem:[#allocation28 + $0x80] sm:$0xff]
    %v3609 = vld [vmem:[#allocation28 + $0x88] sm:$0xff]
    %v3610 = vld [vmem:[#allocation28 + $0x90] sm:$0xff]
    %v3611 = vld [vmem:[#allocation28 + $0x98] sm:$0xff]
    %v3612 = vld [vmem:[#allocation28 + $0xa0] sm:$0xff]
    %v3613 = vld [vmem:[#allocation28 + $0xa8] sm:$0xff]
    %v3614 = vld [vmem:[#allocation28 + $0xb0] sm:$0xff]
    %v3615 = vld [vmem:[#allocation28 + $0xb8] sm:$0xff]
    %v3616 = vld [vmem:[#allocation28 + $0xc0] sm:$0xff]
    %v3617 = vld [vmem:[#allocation28 + $0xc8] sm:$0xff]
    %v3618 = vld [vmem:[#allocation28 + $0xd0] sm:$0xff]
    %v3619 = vld [vmem:[#allocation28 + $0xd8] sm:$0xff]
    %v3620 = vld [vmem:[#allocation28 + $0xe0] sm:$0xff]
    %v3621 = vld [vmem:[#allocation28 + $0xe8] sm:$0xff]
    %v3622 = vld [vmem:[#allocation28 + $0xf0] sm:$0xff]
    %v3623 = vld [vmem:[#allocation28 + $0xf8] sm:$0xff]
    %v3624 = vld [vmem:[#allocation28 + $0x100] sm:$0xff]
    %v3625 = vld [vmem:[#allocation28 + $0x108] sm:$0xff]
    %v3626 = vld [vmem:[#allocation28 + $0x110] sm:$0xff]
    %v3627 = vld [vmem:[#allocation28 + $0x118] sm:$0xff]
    %v3628 = vld [vmem:[#allocation28 + $0x120] sm:$0xff]
    %v3629 = vld [vmem:[#allocation28 + $0x128] sm:$0xff]
    %v3630 = vld [vmem:[#allocation28 + $0x130] sm:$0xff]
    %v3631 = vld [vmem:[#allocation28 + $0x138] sm:$0xff]
    %v3632 = vld [vmem:[#allocation28 + $0x140] sm:$0xff]
    %v3633 = vld [vmem:[#allocation28 + $0x148] sm:$0xff]
    %v3634 = vld [vmem:[#allocation28 + $0x150] sm:$0xff]
    %v3635 = vld [vmem:[#allocation28 + $0x158] sm:$0xff]
    %v3636 = vld [vmem:[#allocation28 + $0x160] sm:$0xff]
    %v3637 = vld [vmem:[#allocation28 + $0x168] sm:$0xff]
    %v3638 = vld [vmem:[#allocation28 + $0x170] sm:$0xff]
    %v3639 = vld [vmem:[#allocation28 + $0x178] sm:$0xff]
    %v3640 = vld [vmem:[#allocation28 + $0x180] sm:$0xff]
    %v3641 = vld [vmem:[#allocation28 + $0x188] sm:$0xff]
    %v3642 = vld [vmem:[#allocation28 + $0x190] sm:$0xff]
    %v3643 = vld [vmem:[#allocation28 + $0x198] sm:$0xff]
    %v3644 = vld [vmem:[#allocation28 + $0x1a0] sm:$0xff]
    %v3645 = vld [vmem:[#allocation28 + $0x1a8] sm:$0xff]
    %v3646 = vld [vmem:[#allocation28 + $0x1b0] sm:$0xff]
    %v3647 = vld [vmem:[#allocation28 + $0x1b8] sm:$0xff]
    %v3648 = vld [vmem:[#allocation28 + $0x1c0] sm:$0xff]
    %v3649 = vld [vmem:[#allocation28 + $0x1c8] sm:$0xff]
    %v3650 = vld [vmem:[#allocation28 + $0x1d0] sm:$0xff]
    %v3651 = vld [vmem:[#allocation28 + $0x1d8] sm:$0xff]
    %v3652 = vld [vmem:[#allocation28 + $0x1e0] sm:$0xff]
    %v3653 = vld [vmem:[#allocation28 + $0x1e8] sm:$0xff]
    %v3654 = vld [vmem:[#allocation28 + $0x1f0] sm:$0xff]
    %v3655 = vld [vmem:[#allocation28 + $0x1f8] sm:$0xff]
    %v3656 = vld [vmem:[#allocation28 + $0x200] sm:$0xff]
    %v3657 = vld [vmem:[#allocation28 + $0x208] sm:$0xff]
    %v3658 = vld [vmem:[#allocation28 + $0x210] sm:$0xff]
    %v3659 = vld [vmem:[#allocation28 + $0x218] sm:$0xff]
    %v3660 = vld [vmem:[#allocation28 + $0x220] sm:$0xff]
    %v3661 = vld [vmem:[#allocation28 + $0x228] sm:$0xff]
    %v3662 = vld [vmem:[#allocation28 + $0x230] sm:$0xff]
    %v3663 = vld [vmem:[#allocation28 + $0x238] sm:$0xff]
    %v3664 = vld [vmem:[#allocation28 + $0x240] sm:$0xff]
    %v3665 = vld [vmem:[#allocation28 + $0x248] sm:$0xff]
    %v3666 = vld [vmem:[#allocation28 + $0x250] sm:$0xff]
    %v3667 = vld [vmem:[#allocation28 + $0x258] sm:$0xff]
    %v3668 = vld [vmem:[#allocation28 + $0x260] sm:$0xff]
    %v3669 = vld [vmem:[#allocation28 + $0x268] sm:$0xff]
    %v3670 = vld [vmem:[#allocation28 + $0x270] sm:$0xff]
    %v3671 = vld [vmem:[#allocation28 + $0x278] sm:$0xff]
    %v3672 = vld [vmem:[#allocation28 + $0x280] sm:$0xff]
    %v3673 = vld [vmem:[#allocation28 + $0x288] sm:$0xff]
    %v3674 = vld [vmem:[#allocation28 + $0x290] sm:$0xff]
    %v3675 = vld [vmem:[#allocation28 + $0x298] sm:$0xff]
    %v3676 = vld [vmem:[#allocation28 + $0x2a0] sm:$0xff]
    %v3677 = vld [vmem:[#allocation28 + $0x2a8] sm:$0xff]
    %v3678 = vld [vmem:[#allocation28 + $0x2b0] sm:$0xff]
    %v3679 = vld [vmem:[#allocation28 + $0x2b8] sm:$0xff]
    %v3680 = vld [vmem:[#allocation28 + $0x2c0] sm:$0xff]
    %v3681 = vld [vmem:[#allocation28 + $0x2c8] sm:$0xff]
    %v3682 = vld [vmem:[#allocation28 + $0x2d0] sm:$0xff]
    %v3683 = vld [vmem:[#allocation28 + $0x2d8] sm:$0xff]
    %v3684 = vld [vmem:[#allocation28 + $0x2e0] sm:$0xff]
    %v3685 = vld [vmem:[#allocation28 + $0x2e8] sm:$0xff]
    %v3686 = vld [vmem:[#allocation28 + $0x2f0] sm:$0xff]
    %v3687 = vld [vmem:[#allocation28 + $0x2f8] sm:$0xff]
    %v3688 = vld [vmem:[#allocation28 + $0x300] sm:$0xff]
    %v3689 = vld [vmem:[#allocation28 + $0x308] sm:$0xff]
    %v3690 = vld [vmem:[#allocation28 + $0x310] sm:$0xff]
    %v3691 = vld [vmem:[#allocation28 + $0x318] sm:$0xff]
    %v3692 = vld [vmem:[#allocation28 + $0x320] sm:$0xff]
    %v3693 = vld [vmem:[#allocation28 + $0x328] sm:$0xff]
    %v3694 = vld [vmem:[#allocation28 + $0x330] sm:$0xff]
    %v3695 = vld [vmem:[#allocation28 + $0x338] sm:$0xff]
    %v3696 = vld [vmem:[#allocation28 + $0x340] sm:$0xff]
    %v3697 = vld [vmem:[#allocation28 + $0x348] sm:$0xff]
    %v3698 = vld [vmem:[#allocation28 + $0x350] sm:$0xff]
    %v3699 = vld [vmem:[#allocation28 + $0x358] sm:$0xff]
    %v3700 = vld [vmem:[#allocation28 + $0x360] sm:$0xff]
    %v3701 = vld [vmem:[#allocation28 + $0x368] sm:$0xff]
    %v3702 = vld [vmem:[#allocation28 + $0x370] sm:$0xff]
    %v3703 = vld [vmem:[#allocation28 + $0x378] sm:$0xff]
    %v3704 = vld [vmem:[#allocation28 + $0x380] sm:$0xff]
    %v3705 = vld [vmem:[#allocation28 + $0x388] sm:$0xff]
    %v3706 = vld [vmem:[#allocation28 + $0x390] sm:$0xff]
    %v3707 = vld [vmem:[#allocation28 + $0x398] sm:$0xff]
    %v3708 = vld [vmem:[#allocation28 + $0x3a0] sm:$0xff]
    %v3709 = vld [vmem:[#allocation28 + $0x3a8] sm:$0xff]
    %v3710 = vld [vmem:[#allocation28 + $0x3b0] sm:$0xff]
    %v3711 = vld [vmem:[#allocation28 + $0x3b8] sm:$0xff]
    %v3712 = vld [vmem:[#allocation28 + $0x3c0] sm:$0xff]
    %v3713 = vld [vmem:[#allocation28 + $0x3c8] sm:$0xff]
    %v3714 = vld [vmem:[#allocation28 + $0x3d0] sm:$0xff]
    %v3715 = vld [vmem:[#allocation28 + $0x3d8] sm:$0xff]
    %v3716 = vld [vmem:[#allocation28 + $0x3e0] sm:$0xff]
    %v3717 = vld [vmem:[#allocation28 + $0x3e8] sm:$0xff]
    %v3718 = vld [vmem:[#allocation28 + $0x3f0] sm:$0xff]
    %v3719 = vld [vmem:[#allocation28 + $0x3f8] sm:$0xff]
    %v3720 = vld [vmem:[#allocation30] sm:$0xf]
    %v3722 = vperm.slane %v3720, 0
    %v3723 = vperm.slane %v3720, 1
    %v3724 = vperm.slane %v3720, 2
    %v3725 = vperm.slane %v3720, 3
    %3730 = vmatpush.msra.mxu0 %v3652
    %3731 = vmatpush.msra.mxu0 %v3648
    %3732 = vmatpush.msra.mxu0 %v3644
    %3733 = vmatpush.msra.mxu0 %v3640
    %3734 = vmatpush.msra.mxu0 %v3636
    %3735 = vmatpush.msra.mxu0 %v3632
    %3736 = vmatpush.msra.mxu0 %v3628
    %3737 = vmatpush.msra.mxu0 %v3624
    %3738 = vmatpush.msra.mxu0 %v3620
    %3739 = vmatpush.msra.mxu0 %v3616
    %3740 = vmatpush.msra.mxu0 %v3612
    %3741 = vmatpush.msra.mxu0 %v3608
    %3742 = vmatpush.msra.mxu0 %v3604
    %3743 = vmatpush.msra.mxu0 %v3600
    %3744 = vmatpush.msra.mxu0 %v3596
    %3745 = vmatpush.msra.mxu0 %v3592
    %3746 = vmatmul.f32.gmra.mxu0 %v3552
    %v3747 = vpop.f32.mrf.mxu0
    %v3748 = vadd.f32 %v3722, %v3747
    %3749 = vmatmul.f32.gmra.mxu0 %v3554
    %v3750 = vpop.f32.mrf.mxu0
    %v3751 = vadd.f32 %v3722, %v3750
    %3752 = vmatmul.f32.gmra.mxu0 %v3556
    %v3753 = vpop.f32.mrf.mxu0
    %v3754 = vadd.f32 %v3722, %v3753
    %3755 = vmatmul.f32.gmra.mxu0 %v3558
    %v3756 = vpop.f32.mrf.mxu0
    %v3757 = vadd.f32 %v3722, %v3756
    %3758 = vdwg.mxu0
    %3759 = vmatpush.msra.mxu0 %v3716
    %3760 = vmatpush.msra.mxu0 %v3712
    %3761 = vmatpush.msra.mxu0 %v3708
    %3762 = vmatpush.msra.mxu0 %v3704
    %3763 = vmatpush.msra.mxu0 %v3700
    %3764 = vmatpush.msra.mxu0 %v3696
    %3765 = vmatpush.msra.mxu0 %v3692
    %3766 = vmatpush.msra.mxu0 %v3688
    %3767 = vmatpush.msra.mxu0 %v3684
    %3768 = vmatpush.msra.mxu0 %v3680
    %3769 = vmatpush.msra.mxu0 %v3676
    %3770 = vmatpush.msra.mxu0 %v3672
    %3771 = vmatpush.msra.mxu0 %v3668
    %3772 = vmatpush.msra.mxu0 %v3664
    %3773 = vmatpush.msra.mxu0 %v3660
    %3774 = vmatpush.msra.mxu0 %v3656
    %3775 = vmatmul.f32.gmra.mxu0 %v3553
    %v3776 = vpop.f32.mrf.mxu0
    %v3777 = vadd.f32 %v3748, %v3776
    %3778 = vmatmul.f32.gmra.mxu0 %v3555
    %v3779 = vpop.f32.mrf.mxu0
    %v3780 = vadd.f32 %v3751, %v3779
    %3781 = vmatmul.f32.gmra.mxu0 %v3557
    %v3782 = vpop.f32.mrf.mxu0
    %v3783 = vadd.f32 %v3754, %v3782
    %3784 = vmatmul.f32.gmra.mxu0 %v3559
    %v3785 = vpop.f32.mrf.mxu0
    %v3786 = vadd.f32 %v3757, %v3785
    %3787 = vdwg.mxu0
    %3788 = vmatpush.msra.mxu0 %v3653
    %3789 = vmatpush.msra.mxu0 %v3649
    %3790 = vmatpush.msra.mxu0 %v3645
    %3791 = vmatpush.msra.mxu0 %v3641
    %3792 = vmatpush.msra.mxu0 %v3637
    %3793 = vmatpush.msra.mxu0 %v3633
    %3794 = vmatpush.msra.mxu0 %v3629
    %3795 = vmatpush.msra.mxu0 %v3625
    %3796 = vmatpush.msra.mxu0 %v3621
    %3797 = vmatpush.msra.mxu0 %v3617
    %3798 = vmatpush.msra.mxu0 %v3613
    %3799 = vmatpush.msra.mxu0 %v3609
    %3800 = vmatpush.msra.mxu0 %v3605
    %3801 = vmatpush.msra.mxu0 %v3601
    %3802 = vmatpush.msra.mxu0 %v3597
    %3803 = vmatpush.msra.mxu0 %v3593
    %3804 = vmatmul.f32.gmra.mxu0 %v3552
    %v3805 = vpop.f32.mrf.mxu0
    %v3806 = vadd.f32 %v3723, %v3805
    %3807 = vmatmul.f32.gmra.mxu0 %v3554
    %v3808 = vpop.f32.mrf.mxu0
    %v3809 = vadd.f32 %v3723, %v3808
    %3810 = vmatmul.f32.gmra.mxu0 %v3556
    %v3811 = vpop.f32.mrf.mxu0
    %v3812 = vadd.f32 %v3723, %v3811
    %3813 = vmatmul.f32.gmra.mxu0 %v3558
    %v3814 = vpop.f32.mrf.mxu0
    %v3815 = vadd.f32 %v3723, %v3814
    %3816 = vdwg.mxu0
    %3817 = vmatpush.msra.mxu0 %v3717
    %3818 = vmatpush.msra.mxu0 %v3713
    %3819 = vmatpush.msra.mxu0 %v3709
    %3820 = vmatpush.msra.mxu0 %v3705
    %3821 = vmatpush.msra.mxu0 %v3701
    %3822 = vmatpush.msra.mxu0 %v3697
    %3823 = vmatpush.msra.mxu0 %v3693
    %3824 = vmatpush.msra.mxu0 %v3689
    %3825 = vmatpush.msra.mxu0 %v3685
    %3826 = vmatpush.msra.mxu0 %v3681
    %3827 = vmatpush.msra.mxu0 %v3677
    %3828 = vmatpush.msra.mxu0 %v3673
    %3829 = vmatpush.msra.mxu0 %v3669
    %3830 = vmatpush.msra.mxu0 %v3665
    %3831 = vmatpush.msra.mxu0 %v3661
    %3832 = vmatpush.msra.mxu0 %v3657
    %3833 = vmatmul.f32.gmra.mxu0 %v3553
    %v3834 = vpop.f32.mrf.mxu0
    %v3835 = vadd.f32 %v3806, %v3834
    %3836 = vmatmul.f32.gmra.mxu0 %v3555
    %v3837 = vpop.f32.mrf.mxu0
    %v3838 = vadd.f32 %v3809, %v3837
    %3839 = vmatmul.f32.gmra.mxu0 %v3557
    %v3840 = vpop.f32.mrf.mxu0
    %v3841 = vadd.f32 %v3812, %v3840
    %3842 = vmatmul.f32.gmra.mxu0 %v3559
    %v3843 = vpop.f32.mrf.mxu0
    %v3844 = vadd.f32 %v3815, %v3843
    %3845 = vdwg.mxu0
    %3846 = vmatpush.msra.mxu0 %v3654
    %3847 = vmatpush.msra.mxu0 %v3650
    %3848 = vmatpush.msra.mxu0 %v3646
    %3849 = vmatpush.msra.mxu0 %v3642
    %3850 = vmatpush.msra.mxu0 %v3638
    %3851 = vmatpush.msra.mxu0 %v3634
    %3852 = vmatpush.msra.mxu0 %v3630
    %3853 = vmatpush.msra.mxu0 %v3626
    %3854 = vmatpush.msra.mxu0 %v3622
    %3855 = vmatpush.msra.mxu0 %v3618
    %3856 = vmatpush.msra.mxu0 %v3614
    %3857 = vmatpush.msra.mxu0 %v3610
    %3858 = vmatpush.msra.mxu0 %v3606
    %3859 = vmatpush.msra.mxu0 %v3602
    %3860 = vmatpush.msra.mxu0 %v3598
    %3861 = vmatpush.msra.mxu0 %v3594
    %3862 = vmatmul.f32.gmra.mxu0 %v3552
    %v3863 = vpop.f32.mrf.mxu0
    %v3864 = vadd.f32 %v3724, %v3863
    %3865 = vmatmul.f32.gmra.mxu0 %v3554
    %v3866 = vpop.f32.mrf.mxu0
    %v3867 = vadd.f32 %v3724, %v3866
    %3868 = vmatmul.f32.gmra.mxu0 %v3556
    %v3869 = vpop.f32.mrf.mxu0
    %v3870 = vadd.f32 %v3724, %v3869
    %3871 = vmatmul.f32.gmra.mxu0 %v3558
    %v3872 = vpop.f32.mrf.mxu0
    %v3873 = vadd.f32 %v3724, %v3872
    %3874 = vdwg.mxu0
    %3875 = vmatpush.msra.mxu0 %v3718
    %3876 = vmatpush.msra.mxu0 %v3714
    %3877 = vmatpush.msra.mxu0 %v3710
    %3878 = vmatpush.msra.mxu0 %v3706
    %3879 = vmatpush.msra.mxu0 %v3702
    %3880 = vmatpush.msra.mxu0 %v3698
    %3881 = vmatpush.msra.mxu0 %v3694
    %3882 = vmatpush.msra.mxu0 %v3690
    %3883 = vmatpush.msra.mxu0 %v3686
    %3884 = vmatpush.msra.mxu0 %v3682
    %3885 = vmatpush.msra.mxu0 %v3678
    %3886 = vmatpush.msra.mxu0 %v3674
    %3887 = vmatpush.msra.mxu0 %v3670
    %3888 = vmatpush.msra.mxu0 %v3666
    %3889 = vmatpush.msra.mxu0 %v3662
    %3890 = vmatpush.msra.mxu0 %v3658
    %3891 = vmatmul.f32.gmra.mxu0 %v3553
    %v3892 = vpop.f32.mrf.mxu0
    %v3893 = vadd.f32 %v3864, %v3892
    %3894 = vmatmul.f32.gmra.mxu0 %v3555
    %v3895 = vpop.f32.mrf.mxu0
    %v3896 = vadd.f32 %v3867, %v3895
    %3897 = vmatmul.f32.gmra.mxu0 %v3557
    %v3898 = vpop.f32.mrf.mxu0
    %v3899 = vadd.f32 %v3870, %v3898
    %3900 = vmatmul.f32.gmra.mxu0 %v3559
    %v3901 = vpop.f32.mrf.mxu0
    %v3902 = vadd.f32 %v3873, %v3901
    %3903 = vdwg.mxu0
    %3904 = vmatpush.msra.mxu0 %v3655
    %3905 = vmatpush.msra.mxu0 %v3651
    %3906 = vmatpush.msra.mxu0 %v3647
    %3907 = vmatpush.msra.mxu0 %v3643
    %3908 = vmatpush.msra.mxu0 %v3639
    %3909 = vmatpush.msra.mxu0 %v3635
    %3910 = vmatpush.msra.mxu0 %v3631
    %3911 = vmatpush.msra.mxu0 %v3627
    %3912 = vmatpush.msra.mxu0 %v3623
    %3913 = vmatpush.msra.mxu0 %v3619
    %3914 = vmatpush.msra.mxu0 %v3615
    %3915 = vmatpush.msra.mxu0 %v3611
    %3916 = vmatpush.msra.mxu0 %v3607
    %3917 = vmatpush.msra.mxu0 %v3603
    %3918 = vmatpush.msra.mxu0 %v3599
    %3919 = vmatpush.msra.mxu0 %v3595
    %3920 = vmatmul.f32.gmra.mxu0 %v3552
    %v3921 = vpop.f32.mrf.mxu0
    %v3922 = vadd.f32 %v3725, %v3921
    %3923 = vmatmul.f32.gmra.mxu0 %v3554
    %v3924 = vpop.f32.mrf.mxu0
    %v3925 = vadd.f32 %v3725, %v3924
    %3926 = vmatmul.f32.gmra.mxu0 %v3556
    %v3927 = vpop.f32.mrf.mxu0
    %v3928 = vadd.f32 %v3725, %v3927
    %3929 = vmatmul.f32.gmra.mxu0 %v3558
    %v3930 = vpop.f32.mrf.mxu0
    %v3931 = vadd.f32 %v3725, %v3930
    %3932 = vdwg.mxu0
    %3933 = vmatpush.msra.mxu0 %v3719
    %3934 = vmatpush.msra.mxu0 %v3715
    %3935 = vmatpush.msra.mxu0 %v3711
    %3936 = vmatpush.msra.mxu0 %v3707
    %3937 = vmatpush.msra.mxu0 %v3703
    %3938 = vmatpush.msra.mxu0 %v3699
    %3939 = vmatpush.msra.mxu0 %v3695
    %3940 = vmatpush.msra.mxu0 %v3691
    %3941 = vmatpush.msra.mxu0 %v3687
    %3942 = vmatpush.msra.mxu0 %v3683
    %3943 = vmatpush.msra.mxu0 %v3679
    %3944 = vmatpush.msra.mxu0 %v3675
    %3945 = vmatpush.msra.mxu0 %v3671
    %3946 = vmatpush.msra.mxu0 %v3667
    %3947 = vmatpush.msra.mxu0 %v3663
    %3948 = vmatpush.msra.mxu0 %v3659
    %3949 = vmatmul.f32.gmra.mxu0 %v3553
    %v3950 = vpop.f32.mrf.mxu0
    %v3951 = vadd.f32 %v3922, %v3950
    %3952 = vmatmul.f32.gmra.mxu0 %v3555
    %v3953 = vpop.f32.mrf.mxu0
    %v3954 = vadd.f32 %v3925, %v3953
    %3955 = vmatmul.f32.gmra.mxu0 %v3557
    %v3956 = vpop.f32.mrf.mxu0
    %v3957 = vadd.f32 %v3928, %v3956
    %3958 = vmatmul.f32.gmra.mxu0 %v3559
    %v3959 = vpop.f32.mrf.mxu0
    %v3960 = vadd.f32 %v3931, %v3959
    %3961 = vdwg.mxu0
    %v3962 = vmul.f32 %v3777, 0.5
    %v3963 = vmul.f32 %v3835, 0.5
    %v3964 = vmul.f32 %v3893, 0.5
    %v3965 = vmul.f32 %v3951, 0.5
    %v3966 = vmul.f32 %v3780, 0.5
    %v3967 = vmul.f32 %v3838, 0.5
    %v3968 = vmul.f32 %v3896, 0.5
    %v3969 = vmul.f32 %v3954, 0.5
    %v3970 = vmul.f32 %v3783, 0.5
    %v3971 = vmul.f32 %v3841, 0.5
    %v3972 = vmul.f32 %v3899, 0.5
    %v3973 = vmul.f32 %v3957, 0.5
    %v3974 = vmul.f32 %v3786, 0.5
    %v3975 = vmul.f32 %v3844, 0.5
    %v3976 = vmul.f32 %v3902, 0.5
    %v3977 = vmul.f32 %v3960, 0.5
    %v3978 = vmul.f32 %v3777, 0.70710677
    %v3979 = vmul.f32 %v3835, 0.70710677
    %v3980 = vmul.f32 %v3893, 0.70710677
    %v3981 = vmul.f32 %v3951, 0.70710677
    %v3982 = vmul.f32 %v3780, 0.70710677
    %v3983 = vmul.f32 %v3838, 0.70710677
    %v3984 = vmul.f32 %v3896, 0.70710677
    %v3985 = vmul.f32 %v3954, 0.70710677
    %v3986 = vmul.f32 %v3783, 0.70710677
    %v3987 = vmul.f32 %v3841, 0.70710677
    %v3988 = vmul.f32 %v3899, 0.70710677
    %v3989 = vmul.f32 %v3957, 0.70710677
    %v3990 = vmul.f32 %v3786, 0.70710677
    %v3991 = vmul.f32 %v3844, 0.70710677
    %v3992 = vmul.f32 %v3902, 0.70710677
    %v3993 = vmul.f32 %v3960, 0.70710677
    %v3994 = vmul.f32 %v3978, %v3978
    %v3995 = vmin.f32 16.0, %v3994
    %v3996 = vmul.f32 %v3995, 2.1237322e-06
    %v3997 = vadd.f32 %v3996, 0.00028619796
    %v3998 = vmul.f32 %v3995, %v3997
    %v3999 = vadd.f32 %v3998, 0.0036580483
    %v4000 = vmul.f32 %v3995, %v3999
    %v4001 = vadd.f32 %v4000, 0.05243302
    %v4002 = vmul.f32 %v3995, %v4001
    %v4003 = vadd.f32 %v4002, 0.18741608
    %v4004 = vmul.f32 %v3995, %v4003
    %v4005 = vadd.f32 %v4004, 1.1283791
    %v4006 = vmul.f32 %v3978, %v4005
    %v4007 = vmul.f32 %v3995, 3.8918573e-05
    %v4008 = vadd.f32 %v4007, 0.001143296
    %v4009 = vmul.f32 %v3995, %v4008
    %v4010 = vadd.f32 %v4009, 0.014752088
    %v4011 = vmul.f32 %v3995, %v4010
    %v4012 = vadd.f32 %v4011, 0.112945676
    %v4013 = vmul.f32 %v3995, %v4012
    %v4014 = vadd.f32 %v4013, 0.4994258
    %v4015 = vmul.f32 %v3995, %v4014
    %v4016 = vadd.f32 %v4015, 1.0
    %v4017 = vrcp.pop %v4016
    %v4018 = vmul.f32 %v4016, %v4017
    %v4019 = vsub.f32 1.0, %v4018
    %v4020 = vmul.f32 %v4017, %v4019
    %v4021 = vadd.f32 %v4017, %v4020
    %vm4022 = vweird.f32 %v4016
    %vm4023 = vweird.f32 %v4017
    %vm4024 = vmor %vm4022, %vm4023
    %v4025 = vsel %vm4024, %v4017, %v4021
    %v4026 = vand.u32 2147483647, %v4016
    %vm4027 = vcmp.eq.f32.partialorder %v4026, 8.507059e+37
    %v4028 = vand.u32 %v4016, 2147483648
    %v4029 = vor.u32 1.1754944e-38, %v4028
    %v4030 = vsel %vm4027, %v4029, %v4025
    %v4031 = vmul.f32 %v4006, %v4030
    %v4032 = vmin.f32 %v4031, 1.0
    %v4033 = vmax.f32 %v4032, -1.0
    %v4034 = vmul.f32 %v3979, %v3979
    %v4035 = vmin.f32 16.0, %v4034
    %v4036 = vmul.f32 %v4035, 2.1237322e-06
    %v4037 = vadd.f32 %v4036, 0.00028619796
    %v4038 = vmul.f32 %v4035, %v4037
    %v4039 = vadd.f32 %v4038, 0.0036580483
    %v4040 = vmul.f32 %v4035, %v4039
    %v4041 = vadd.f32 %v4040, 0.05243302
    %v4042 = vmul.f32 %v4035, %v4041
    %v4043 = vadd.f32 %v4042, 0.18741608
    %v4044 = vmul.f32 %v4035, %v4043
    %v4045 = vadd.f32 %v4044, 1.1283791
    %v4046 = vmul.f32 %v3979, %v4045
    %v4047 = vmul.f32 %v4035, 3.8918573e-05
    %v4048 = vadd.f32 %v4047, 0.001143296
    %v4049 = vmul.f32 %v4035, %v4048
    %v4050 = vadd.f32 %v4049, 0.014752088
    %v4051 = vmul.f32 %v4035, %v4050
    %v4052 = vadd.f32 %v4051, 0.112945676
    %v4053 = vmul.f32 %v4035, %v4052
    %v4054 = vadd.f32 %v4053, 0.4994258
    %v4055 = vmul.f32 %v4035, %v4054
    %v4056 = vadd.f32 %v4055, 1.0
    %v4057 = vrcp.pop %v4056
    %v4058 = vmul.f32 %v4056, %v4057
    %v4059 = vsub.f32 1.0, %v4058
    %v4060 = vmul.f32 %v4057, %v4059
    %v4061 = vadd.f32 %v4057, %v4060
    %vm4062 = vweird.f32 %v4056
    %vm4063 = vweird.f32 %v4057
    %vm4064 = vmor %vm4062, %vm4063
    %v4065 = vsel %vm4064, %v4057, %v4061
    %v4066 = vand.u32 2147483647, %v4056
    %vm4067 = vcmp.eq.f32.partialorder %v4066, 8.507059e+37
    %v4068 = vand.u32 %v4056, 2147483648
    %v4069 = vor.u32 1.1754944e-38, %v4068
    %v4070 = vsel %vm4067, %v4069, %v4065
    %v4071 = vmul.f32 %v4046, %v4070
    %v4072 = vmin.f32 %v4071, 1.0
    %v4073 = vmax.f32 %v4072, -1.0
    %v4074 = vmul.f32 %v3980, %v3980
    %v4075 = vmin.f32 16.0, %v4074
    %v4076 = vmul.f32 %v4075, 2.1237322e-06
    %v4077 = vadd.f32 %v4076, 0.00028619796
    %v4078 = vmul.f32 %v4075, %v4077
    %v4079 = vadd.f32 %v4078, 0.0036580483
    %v4080 = vmul.f32 %v4075, %v4079
    %v4081 = vadd.f32 %v4080, 0.05243302
    %v4082 = vmul.f32 %v4075, %v4081
    %v4083 = vadd.f32 %v4082, 0.18741608
    %v4084 = vmul.f32 %v4075, %v4083
    %v4085 = vadd.f32 %v4084, 1.1283791
    %v4086 = vmul.f32 %v3980, %v4085
    %v4087 = vmul.f32 %v4075, 3.8918573e-05
    %v4088 = vadd.f32 %v4087, 0.001143296
    %v4089 = vmul.f32 %v4075, %v4088
    %v4090 = vadd.f32 %v4089, 0.014752088
    %v4091 = vmul.f32 %v4075, %v4090
    %v4092 = vadd.f32 %v4091, 0.112945676
    %v4093 = vmul.f32 %v4075, %v4092
    %v4094 = vadd.f32 %v4093, 0.4994258
    %v4095 = vmul.f32 %v4075, %v4094
    %v4096 = vadd.f32 %v4095, 1.0
    %v4097 = vrcp.pop %v4096
    %v4098 = vmul.f32 %v4096, %v4097
    %v4099 = vsub.f32 1.0, %v4098
    %v4100 = vmul.f32 %v4097, %v4099
    %v4101 = vadd.f32 %v4097, %v4100
    %vm4102 = vweird.f32 %v4096
    %vm4103 = vweird.f32 %v4097
    %vm4104 = vmor %vm4102, %vm4103
    %v4105 = vsel %vm4104, %v4097, %v4101
    %v4106 = vand.u32 2147483647, %v4096
    %vm4107 = vcmp.eq.f32.partialorder %v4106, 8.507059e+37
    %v4108 = vand.u32 %v4096, 2147483648
    %v4109 = vor.u32 1.1754944e-38, %v4108
    %v4110 = vsel %vm4107, %v4109, %v4105
    %v4111 = vmul.f32 %v4086, %v4110
    %v4112 = vmin.f32 %v4111, 1.0
    %v4113 = vmax.f32 %v4112, -1.0
    %v4114 = vmul.f32 %v3981, %v3981
    %v4115 = vmin.f32 16.0, %v4114
    %v4116 = vmul.f32 %v4115, 2.1237322e-06
    %v4117 = vadd.f32 %v4116, 0.00028619796
    %v4118 = vmul.f32 %v4115, %v4117
    %v4119 = vadd.f32 %v4118, 0.0036580483
    %v4120 = vmul.f32 %v4115, %v4119
    %v4121 = vadd.f32 %v4120, 0.05243302
    %v4122 = vmul.f32 %v4115, %v4121
    %v4123 = vadd.f32 %v4122, 0.18741608
    %v4124 = vmul.f32 %v4115, %v4123
    %v4125 = vadd.f32 %v4124, 1.1283791
    %v4126 = vmul.f32 %v3981, %v4125
    %v4127 = vmul.f32 %v4115, 3.8918573e-05
    %v4128 = vadd.f32 %v4127, 0.001143296
    %v4129 = vmul.f32 %v4115, %v4128
    %v4130 = vadd.f32 %v4129, 0.014752088
    %v4131 = vmul.f32 %v4115, %v4130
    %v4132 = vadd.f32 %v4131, 0.112945676
    %v4133 = vmul.f32 %v4115, %v4132
    %v4134 = vadd.f32 %v4133, 0.4994258
    %v4135 = vmul.f32 %v4115, %v4134
    %v4136 = vadd.f32 %v4135, 1.0
    %v4137 = vrcp.pop %v4136
    %v4138 = vmul.f32 %v4136, %v4137
    %v4139 = vsub.f32 1.0, %v4138
    %v4140 = vmul.f32 %v4137, %v4139
    %v4141 = vadd.f32 %v4137, %v4140
    %vm4142 = vweird.f32 %v4136
    %vm4143 = vweird.f32 %v4137
    %vm4144 = vmor %vm4142, %vm4143
    %v4145 = vsel %vm4144, %v4137, %v4141
    %v4146 = vand.u32 2147483647, %v4136
    %vm4147 = vcmp.eq.f32.partialorder %v4146, 8.507059e+37
    %v4148 = vand.u32 %v4136, 2147483648
    %v4149 = vor.u32 1.1754944e-38, %v4148
    %v4150 = vsel %vm4147, %v4149, %v4145
    %v4151 = vmul.f32 %v4126, %v4150
    %v4152 = vmin.f32 %v4151, 1.0
    %v4153 = vmax.f32 %v4152, -1.0
    %v4154 = vmul.f32 %v3982, %v3982
    %v4155 = vmin.f32 16.0, %v4154
    %v4156 = vmul.f32 %v4155, 2.1237322e-06
    %v4157 = vadd.f32 %v4156, 0.00028619796
    %v4158 = vmul.f32 %v4155, %v4157
    %v4159 = vadd.f32 %v4158, 0.0036580483
    %v4160 = vmul.f32 %v4155, %v4159
    %v4161 = vadd.f32 %v4160, 0.05243302
    %v4162 = vmul.f32 %v4155, %v4161
    %v4163 = vadd.f32 %v4162, 0.18741608
    %v4164 = vmul.f32 %v4155, %v4163
    %v4165 = vadd.f32 %v4164, 1.1283791
    %v4166 = vmul.f32 %v3982, %v4165
    %v4167 = vmul.f32 %v4155, 3.8918573e-05
    %v4168 = vadd.f32 %v4167, 0.001143296
    %v4169 = vmul.f32 %v4155, %v4168
    %v4170 = vadd.f32 %v4169, 0.014752088
    %v4171 = vmul.f32 %v4155, %v4170
    %v4172 = vadd.f32 %v4171, 0.112945676
    %v4173 = vmul.f32 %v4155, %v4172
    %v4174 = vadd.f32 %v4173, 0.4994258
    %v4175 = vmul.f32 %v4155, %v4174
    %v4176 = vadd.f32 %v4175, 1.0
    %v4177 = vrcp.pop %v4176
    %v4178 = vmul.f32 %v4176, %v4177
    %v4179 = vsub.f32 1.0, %v4178
    %v4180 = vmul.f32 %v4177, %v4179
    %v4181 = vadd.f32 %v4177, %v4180
    %vm4182 = vweird.f32 %v4176
    %vm4183 = vweird.f32 %v4177
    %vm4184 = vmor %vm4182, %vm4183
    %v4185 = vsel %vm4184, %v4177, %v4181
    %v4186 = vand.u32 2147483647, %v4176
    %vm4187 = vcmp.eq.f32.partialorder %v4186, 8.507059e+37
    %v4188 = vand.u32 %v4176, 2147483648
    %v4189 = vor.u32 1.1754944e-38, %v4188
    %v4190 = vsel %vm4187, %v4189, %v4185
    %v4191 = vmul.f32 %v4166, %v4190
    %v4192 = vmin.f32 %v4191, 1.0
    %v4193 = vmax.f32 %v4192, -1.0
    %v4194 = vmul.f32 %v3983, %v3983
    %v4195 = vmin.f32 16.0, %v4194
    %v4196 = vmul.f32 %v4195, 2.1237322e-06
    %v4197 = vadd.f32 %v4196, 0.00028619796
    %v4198 = vmul.f32 %v4195, %v4197
    %v4199 = vadd.f32 %v4198, 0.0036580483
    %v4200 = vmul.f32 %v4195, %v4199
    %v4201 = vadd.f32 %v4200, 0.05243302
    %v4202 = vmul.f32 %v4195, %v4201
    %v4203 = vadd.f32 %v4202, 0.18741608
    %v4204 = vmul.f32 %v4195, %v4203
    %v4205 = vadd.f32 %v4204, 1.1283791
    %v4206 = vmul.f32 %v3983, %v4205
    %v4207 = vmul.f32 %v4195, 3.8918573e-05
    %v4208 = vadd.f32 %v4207, 0.001143296
    %v4209 = vmul.f32 %v4195, %v4208
    %v4210 = vadd.f32 %v4209, 0.014752088
    %v4211 = vmul.f32 %v4195, %v4210
    %v4212 = vadd.f32 %v4211, 0.112945676
    %v4213 = vmul.f32 %v4195, %v4212
    %v4214 = vadd.f32 %v4213, 0.4994258
    %v4215 = vmul.f32 %v4195, %v4214
    %v4216 = vadd.f32 %v4215, 1.0
    %v4217 = vrcp.pop %v4216
    %v4218 = vmul.f32 %v4216, %v4217
    %v4219 = vsub.f32 1.0, %v4218
    %v4220 = vmul.f32 %v4217, %v4219
    %v4221 = vadd.f32 %v4217, %v4220
    %vm4222 = vweird.f32 %v4216
    %vm4223 = vweird.f32 %v4217
    %vm4224 = vmor %vm4222, %vm4223
    %v4225 = vsel %vm4224, %v4217, %v4221
    %v4226 = vand.u32 2147483647, %v4216
    %vm4227 = vcmp.eq.f32.partialorder %v4226, 8.507059e+37
    %v4228 = vand.u32 %v4216, 2147483648
    %v4229 = vor.u32 1.1754944e-38, %v4228
    %v4230 = vsel %vm4227, %v4229, %v4225
    %v4231 = vmul.f32 %v4206, %v4230
    %v4232 = vmin.f32 %v4231, 1.0
    %v4233 = vmax.f32 %v4232, -1.0
    %v4234 = vmul.f32 %v3984, %v3984
    %v4235 = vmin.f32 16.0, %v4234
    %v4236 = vmul.f32 %v4235, 2.1237322e-06
    %v4237 = vadd.f32 %v4236, 0.00028619796
    %v4238 = vmul.f32 %v4235, %v4237
    %v4239 = vadd.f32 %v4238, 0.0036580483
    %v4240 = vmul.f32 %v4235, %v4239
    %v4241 = vadd.f32 %v4240, 0.05243302
    %v4242 = vmul.f32 %v4235, %v4241
    %v4243 = vadd.f32 %v4242, 0.18741608
    %v4244 = vmul.f32 %v4235, %v4243
    %v4245 = vadd.f32 %v4244, 1.1283791
    %v4246 = vmul.f32 %v3984, %v4245
    %v4247 = vmul.f32 %v4235, 3.8918573e-05
    %v4248 = vadd.f32 %v4247, 0.001143296
    %v4249 = vmul.f32 %v4235, %v4248
    %v4250 = vadd.f32 %v4249, 0.014752088
    %v4251 = vmul.f32 %v4235, %v4250
    %v4252 = vadd.f32 %v4251, 0.112945676
    %v4253 = vmul.f32 %v4235, %v4252
    %v4254 = vadd.f32 %v4253, 0.4994258
    %v4255 = vmul.f32 %v4235, %v4254
    %v4256 = vadd.f32 %v4255, 1.0
    %v4257 = vrcp.pop %v4256
    %v4258 = vmul.f32 %v4256, %v4257
    %v4259 = vsub.f32 1.0, %v4258
    %v4260 = vmul.f32 %v4257, %v4259
    %v4261 = vadd.f32 %v4257, %v4260
    %vm4262 = vweird.f32 %v4256
    %vm4263 = vweird.f32 %v4257
    %vm4264 = vmor %vm4262, %vm4263
    %v4265 = vsel %vm4264, %v4257, %v4261
    %v4266 = vand.u32 2147483647, %v4256
    %vm4267 = vcmp.eq.f32.partialorder %v4266, 8.507059e+37
    %v4268 = vand.u32 %v4256, 2147483648
    %v4269 = vor.u32 1.1754944e-38, %v4268
    %v4270 = vsel %vm4267, %v4269, %v4265
    %v4271 = vmul.f32 %v4246, %v4270
    %v4272 = vmin.f32 %v4271, 1.0
    %v4273 = vmax.f32 %v4272, -1.0
    %v4274 = vmul.f32 %v3985, %v3985
    %v4275 = vmin.f32 16.0, %v4274
    %v4276 = vmul.f32 %v4275, 2.1237322e-06
    %v4277 = vadd.f32 %v4276, 0.00028619796
    %v4278 = vmul.f32 %v4275, %v4277
    %v4279 = vadd.f32 %v4278, 0.0036580483
    %v4280 = vmul.f32 %v4275, %v4279
    %v4281 = vadd.f32 %v4280, 0.05243302
    %v4282 = vmul.f32 %v4275, %v4281
    %v4283 = vadd.f32 %v4282, 0.18741608
    %v4284 = vmul.f32 %v4275, %v4283
    %v4285 = vadd.f32 %v4284, 1.1283791
    %v4286 = vmul.f32 %v3985, %v4285
    %v4287 = vmul.f32 %v4275, 3.8918573e-05
    %v4288 = vadd.f32 %v4287, 0.001143296
    %v4289 = vmul.f32 %v4275, %v4288
    %v4290 = vadd.f32 %v4289, 0.014752088
    %v4291 = vmul.f32 %v4275, %v4290
    %v4292 = vadd.f32 %v4291, 0.112945676
    %v4293 = vmul.f32 %v4275, %v4292
    %v4294 = vadd.f32 %v4293, 0.4994258
    %v4295 = vmul.f32 %v4275, %v4294
    %v4296 = vadd.f32 %v4295, 1.0
    %v4297 = vrcp.pop %v4296
    %v4298 = vmul.f32 %v4296, %v4297
    %v4299 = vsub.f32 1.0, %v4298
    %v4300 = vmul.f32 %v4297, %v4299
    %v4301 = vadd.f32 %v4297, %v4300
    %vm4302 = vweird.f32 %v4296
    %vm4303 = vweird.f32 %v4297
    %vm4304 = vmor %vm4302, %vm4303
    %v4305 = vsel %vm4304, %v4297, %v4301
    %v4306 = vand.u32 2147483647, %v4296
    %vm4307 = vcmp.eq.f32.partialorder %v4306, 8.507059e+37
    %v4308 = vand.u32 %v4296, 2147483648
    %v4309 = vor.u32 1.1754944e-38, %v4308
    %v4310 = vsel %vm4307, %v4309, %v4305
    %v4311 = vmul.f32 %v4286, %v4310
    %v4312 = vmin.f32 %v4311, 1.0
    %v4313 = vmax.f32 %v4312, -1.0
    %v4314 = vmul.f32 %v3986, %v3986
    %v4315 = vmin.f32 16.0, %v4314
    %v4316 = vmul.f32 %v4315, 2.1237322e-06
    %v4317 = vadd.f32 %v4316, 0.00028619796
    %v4318 = vmul.f32 %v4315, %v4317
    %v4319 = vadd.f32 %v4318, 0.0036580483
    %v4320 = vmul.f32 %v4315, %v4319
    %v4321 = vadd.f32 %v4320, 0.05243302
    %v4322 = vmul.f32 %v4315, %v4321
    %v4323 = vadd.f32 %v4322, 0.18741608
    %v4324 = vmul.f32 %v4315, %v4323
    %v4325 = vadd.f32 %v4324, 1.1283791
    %v4326 = vmul.f32 %v3986, %v4325
    %v4327 = vmul.f32 %v4315, 3.8918573e-05
    %v4328 = vadd.f32 %v4327, 0.001143296
    %v4329 = vmul.f32 %v4315, %v4328
    %v4330 = vadd.f32 %v4329, 0.014752088
    %v4331 = vmul.f32 %v4315, %v4330
    %v4332 = vadd.f32 %v4331, 0.112945676
    %v4333 = vmul.f32 %v4315, %v4332
    %v4334 = vadd.f32 %v4333, 0.4994258
    %v4335 = vmul.f32 %v4315, %v4334
    %v4336 = vadd.f32 %v4335, 1.0
    %v4337 = vrcp.pop %v4336
    %v4338 = vmul.f32 %v4336, %v4337
    %v4339 = vsub.f32 1.0, %v4338
    %v4340 = vmul.f32 %v4337, %v4339
    %v4341 = vadd.f32 %v4337, %v4340
    %vm4342 = vweird.f32 %v4336
    %vm4343 = vweird.f32 %v4337
    %vm4344 = vmor %vm4342, %vm4343
    %v4345 = vsel %vm4344, %v4337, %v4341
    %v4346 = vand.u32 2147483647, %v4336
    %vm4347 = vcmp.eq.f32.partialorder %v4346, 8.507059e+37
    %v4348 = vand.u32 %v4336, 2147483648
    %v4349 = vor.u32 1.1754944e-38, %v4348
    %v4350 = vsel %vm4347, %v4349, %v4345
    %v4351 = vmul.f32 %v4326, %v4350
    %v4352 = vmin.f32 %v4351, 1.0
    %v4353 = vmax.f32 %v4352, -1.0
    %v4354 = vmul.f32 %v3987, %v3987
    %v4355 = vmin.f32 16.0, %v4354
    %v4356 = vmul.f32 %v4355, 2.1237322e-06
    %v4357 = vadd.f32 %v4356, 0.00028619796
    %v4358 = vmul.f32 %v4355, %v4357
    %v4359 = vadd.f32 %v4358, 0.0036580483
    %v4360 = vmul.f32 %v4355, %v4359
    %v4361 = vadd.f32 %v4360, 0.05243302
    %v4362 = vmul.f32 %v4355, %v4361
    %v4363 = vadd.f32 %v4362, 0.18741608
    %v4364 = vmul.f32 %v4355, %v4363
    %v4365 = vadd.f32 %v4364, 1.1283791
    %v4366 = vmul.f32 %v3987, %v4365
    %v4367 = vmul.f32 %v4355, 3.8918573e-05
    %v4368 = vadd.f32 %v4367, 0.001143296
    %v4369 = vmul.f32 %v4355, %v4368
    %v4370 = vadd.f32 %v4369, 0.014752088
    %v4371 = vmul.f32 %v4355, %v4370
    %v4372 = vadd.f32 %v4371, 0.112945676
    %v4373 = vmul.f32 %v4355, %v4372
    %v4374 = vadd.f32 %v4373, 0.4994258
    %v4375 = vmul.f32 %v4355, %v4374
    %v4376 = vadd.f32 %v4375, 1.0
    %v4377 = vrcp.pop %v4376
    %v4378 = vmul.f32 %v4376, %v4377
    %v4379 = vsub.f32 1.0, %v4378
    %v4380 = vmul.f32 %v4377, %v4379
    %v4381 = vadd.f32 %v4377, %v4380
    %vm4382 = vweird.f32 %v4376
    %vm4383 = vweird.f32 %v4377
    %vm4384 = vmor %vm4382, %vm4383
    %v4385 = vsel %vm4384, %v4377, %v4381
    %v4386 = vand.u32 2147483647, %v4376
    %vm4387 = vcmp.eq.f32.partialorder %v4386, 8.507059e+37
    %v4388 = vand.u32 %v4376, 2147483648
    %v4389 = vor.u32 1.1754944e-38, %v4388
    %v4390 = vsel %vm4387, %v4389, %v4385
    %v4391 = vmul.f32 %v4366, %v4390
    %v4392 = vmin.f32 %v4391, 1.0
    %v4393 = vmax.f32 %v4392, -1.0
    %v4394 = vmul.f32 %v3988, %v3988
    %v4395 = vmin.f32 16.0, %v4394
    %v4396 = vmul.f32 %v4395, 2.1237322e-06
    %v4397 = vadd.f32 %v4396, 0.00028619796
    %v4398 = vmul.f32 %v4395, %v4397
    %v4399 = vadd.f32 %v4398, 0.0036580483
    %v4400 = vmul.f32 %v4395, %v4399
    %v4401 = vadd.f32 %v4400, 0.05243302
    %v4402 = vmul.f32 %v4395, %v4401
    %v4403 = vadd.f32 %v4402, 0.18741608
    %v4404 = vmul.f32 %v4395, %v4403
    %v4405 = vadd.f32 %v4404, 1.1283791
    %v4406 = vmul.f32 %v3988, %v4405
    %v4407 = vmul.f32 %v4395, 3.8918573e-05
    %v4408 = vadd.f32 %v4407, 0.001143296
    %v4409 = vmul.f32 %v4395, %v4408
    %v4410 = vadd.f32 %v4409, 0.014752088
    %v4411 = vmul.f32 %v4395, %v4410
    %v4412 = vadd.f32 %v4411, 0.112945676
    %v4413 = vmul.f32 %v4395, %v4412
    %v4414 = vadd.f32 %v4413, 0.4994258
    %v4415 = vmul.f32 %v4395, %v4414
    %v4416 = vadd.f32 %v4415, 1.0
    %v4417 = vrcp.pop %v4416
    %v4418 = vmul.f32 %v4416, %v4417
    %v4419 = vsub.f32 1.0, %v4418
    %v4420 = vmul.f32 %v4417, %v4419
    %v4421 = vadd.f32 %v4417, %v4420
    %vm4422 = vweird.f32 %v4416
    %vm4423 = vweird.f32 %v4417
    %vm4424 = vmor %vm4422, %vm4423
    %v4425 = vsel %vm4424, %v4417, %v4421
    %v4426 = vand.u32 2147483647, %v4416
    %vm4427 = vcmp.eq.f32.partialorder %v4426, 8.507059e+37
    %v4428 = vand.u32 %v4416, 2147483648
    %v4429 = vor.u32 1.1754944e-38, %v4428
    %v4430 = vsel %vm4427, %v4429, %v4425
    %v4431 = vmul.f32 %v4406, %v4430
    %v4432 = vmin.f32 %v4431, 1.0
    %v4433 = vmax.f32 %v4432, -1.0
    %v4434 = vmul.f32 %v3989, %v3989
    %v4435 = vmin.f32 16.0, %v4434
    %v4436 = vmul.f32 %v4435, 2.1237322e-06
    %v4437 = vadd.f32 %v4436, 0.00028619796
    %v4438 = vmul.f32 %v4435, %v4437
    %v4439 = vadd.f32 %v4438, 0.0036580483
    %v4440 = vmul.f32 %v4435, %v4439
    %v4441 = vadd.f32 %v4440, 0.05243302
    %v4442 = vmul.f32 %v4435, %v4441
    %v4443 = vadd.f32 %v4442, 0.18741608
    %v4444 = vmul.f32 %v4435, %v4443
    %v4445 = vadd.f32 %v4444, 1.1283791
    %v4446 = vmul.f32 %v3989, %v4445
    %v4447 = vmul.f32 %v4435, 3.8918573e-05
    %v4448 = vadd.f32 %v4447, 0.001143296
    %v4449 = vmul.f32 %v4435, %v4448
    %v4450 = vadd.f32 %v4449, 0.014752088
    %v4451 = vmul.f32 %v4435, %v4450
    %v4452 = vadd.f32 %v4451, 0.112945676
    %v4453 = vmul.f32 %v4435, %v4452
    %v4454 = vadd.f32 %v4453, 0.4994258
    %v4455 = vmul.f32 %v4435, %v4454
    %v4456 = vadd.f32 %v4455, 1.0
    %v4457 = vrcp.pop %v4456
    %v4458 = vmul.f32 %v4456, %v4457
    %v4459 = vsub.f32 1.0, %v4458
    %v4460 = vmul.f32 %v4457, %v4459
    %v4461 = vadd.f32 %v4457, %v4460
    %vm4462 = vweird.f32 %v4456
    %vm4463 = vweird.f32 %v4457
    %vm4464 = vmor %vm4462, %vm4463
    %v4465 = vsel %vm4464, %v4457, %v4461
    %v4466 = vand.u32 2147483647, %v4456
    %vm4467 = vcmp.eq.f32.partialorder %v4466, 8.507059e+37
    %v4468 = vand.u32 %v4456, 2147483648
    %v4469 = vor.u32 1.1754944e-38, %v4468
    %v4470 = vsel %vm4467, %v4469, %v4465
    %v4471 = vmul.f32 %v4446, %v4470
    %v4472 = vmin.f32 %v4471, 1.0
    %v4473 = vmax.f32 %v4472, -1.0
    %v4474 = vmul.f32 %v3990, %v3990
    %v4475 = vmin.f32 16.0, %v4474
    %v4476 = vmul.f32 %v4475, 2.1237322e-06
    %v4477 = vadd.f32 %v4476, 0.00028619796
    %v4478 = vmul.f32 %v4475, %v4477
    %v4479 = vadd.f32 %v4478, 0.0036580483
    %v4480 = vmul.f32 %v4475, %v4479
    %v4481 = vadd.f32 %v4480, 0.05243302
    %v4482 = vmul.f32 %v4475, %v4481
    %v4483 = vadd.f32 %v4482, 0.18741608
    %v4484 = vmul.f32 %v4475, %v4483
    %v4485 = vadd.f32 %v4484, 1.1283791
    %v4486 = vmul.f32 %v3990, %v4485
    %v4487 = vmul.f32 %v4475, 3.8918573e-05
    %v4488 = vadd.f32 %v4487, 0.001143296
    %v4489 = vmul.f32 %v4475, %v4488
    %v4490 = vadd.f32 %v4489, 0.014752088
    %v4491 = vmul.f32 %v4475, %v4490
    %v4492 = vadd.f32 %v4491, 0.112945676
    %v4493 = vmul.f32 %v4475, %v4492
    %v4494 = vadd.f32 %v4493, 0.4994258
    %v4495 = vmul.f32 %v4475, %v4494
    %v4496 = vadd.f32 %v4495, 1.0
    %v4497 = vrcp.pop %v4496
    %v4498 = vmul.f32 %v4496, %v4497
    %v4499 = vsub.f32 1.0, %v4498
    %v4500 = vmul.f32 %v4497, %v4499
    %v4501 = vadd.f32 %v4497, %v4500
    %vm4502 = vweird.f32 %v4496
    %vm4503 = vweird.f32 %v4497
    %vm4504 = vmor %vm4502, %vm4503
    %v4505 = vsel %vm4504, %v4497, %v4501
    %v4506 = vand.u32 2147483647, %v4496
    %vm4507 = vcmp.eq.f32.partialorder %v4506, 8.507059e+37
    %v4508 = vand.u32 %v4496, 2147483648
    %v4509 = vor.u32 1.1754944e-38, %v4508
    %v4510 = vsel %vm4507, %v4509, %v4505
    %v4511 = vmul.f32 %v4486, %v4510
    %v4512 = vmin.f32 %v4511, 1.0
    %v4513 = vmax.f32 %v4512, -1.0
    %v4514 = vmul.f32 %v3991, %v3991
    %v4515 = vmin.f32 16.0, %v4514
    %v4516 = vmul.f32 %v4515, 2.1237322e-06
    %v4517 = vadd.f32 %v4516, 0.00028619796
    %v4518 = vmul.f32 %v4515, %v4517
    %v4519 = vadd.f32 %v4518, 0.0036580483
    %v4520 = vmul.f32 %v4515, %v4519
    %v4521 = vadd.f32 %v4520, 0.05243302
    %v4522 = vmul.f32 %v4515, %v4521
    %v4523 = vadd.f32 %v4522, 0.18741608
    %v4524 = vmul.f32 %v4515, %v4523
    %v4525 = vadd.f32 %v4524, 1.1283791
    %v4526 = vmul.f32 %v3991, %v4525
    %v4527 = vmul.f32 %v4515, 3.8918573e-05
    %v4528 = vadd.f32 %v4527, 0.001143296
    %v4529 = vmul.f32 %v4515, %v4528
    %v4530 = vadd.f32 %v4529, 0.014752088
    %v4531 = vmul.f32 %v4515, %v4530
    %v4532 = vadd.f32 %v4531, 0.112945676
    %v4533 = vmul.f32 %v4515, %v4532
    %v4534 = vadd.f32 %v4533, 0.4994258
    %v4535 = vmul.f32 %v4515, %v4534
    %v4536 = vadd.f32 %v4535, 1.0
    %v4537 = vrcp.pop %v4536
    %v4538 = vmul.f32 %v4536, %v4537
    %v4539 = vsub.f32 1.0, %v4538
    %v4540 = vmul.f32 %v4537, %v4539
    %v4541 = vadd.f32 %v4537, %v4540
    %vm4542 = vweird.f32 %v4536
    %vm4543 = vweird.f32 %v4537
    %vm4544 = vmor %vm4542, %vm4543
    %v4545 = vsel %vm4544, %v4537, %v4541
    %v4546 = vand.u32 2147483647, %v4536
    %vm4547 = vcmp.eq.f32.partialorder %v4546, 8.507059e+37
    %v4548 = vand.u32 %v4536, 2147483648
    %v4549 = vor.u32 1.1754944e-38, %v4548
    %v4550 = vsel %vm4547, %v4549, %v4545
    %v4551 = vmul.f32 %v4526, %v4550
    %v4552 = vmin.f32 %v4551, 1.0
    %v4553 = vmax.f32 %v4552, -1.0
    %v4554 = vmul.f32 %v3992, %v3992
    %v4555 = vmin.f32 16.0, %v4554
    %v4556 = vmul.f32 %v4555, 2.1237322e-06
    %v4557 = vadd.f32 %v4556, 0.00028619796
    %v4558 = vmul.f32 %v4555, %v4557
    %v4559 = vadd.f32 %v4558, 0.0036580483
    %v4560 = vmul.f32 %v4555, %v4559
    %v4561 = vadd.f32 %v4560, 0.05243302
    %v4562 = vmul.f32 %v4555, %v4561
    %v4563 = vadd.f32 %v4562, 0.18741608
    %v4564 = vmul.f32 %v4555, %v4563
    %v4565 = vadd.f32 %v4564, 1.1283791
    %v4566 = vmul.f32 %v3992, %v4565
    %v4567 = vmul.f32 %v4555, 3.8918573e-05
    %v4568 = vadd.f32 %v4567, 0.001143296
    %v4569 = vmul.f32 %v4555, %v4568
    %v4570 = vadd.f32 %v4569, 0.014752088
    %v4571 = vmul.f32 %v4555, %v4570
    %v4572 = vadd.f32 %v4571, 0.112945676
    %v4573 = vmul.f32 %v4555, %v4572
    %v4574 = vadd.f32 %v4573, 0.4994258
    %v4575 = vmul.f32 %v4555, %v4574
    %v4576 = vadd.f32 %v4575, 1.0
    %v4577 = vrcp.pop %v4576
    %v4578 = vmul.f32 %v4576, %v4577
    %v4579 = vsub.f32 1.0, %v4578
    %v4580 = vmul.f32 %v4577, %v4579
    %v4581 = vadd.f32 %v4577, %v4580
    %vm4582 = vweird.f32 %v4576
    %vm4583 = vweird.f32 %v4577
    %vm4584 = vmor %vm4582, %vm4583
    %v4585 = vsel %vm4584, %v4577, %v4581
    %v4586 = vand.u32 2147483647, %v4576
    %vm4587 = vcmp.eq.f32.partialorder %v4586, 8.507059e+37
    %v4588 = vand.u32 %v4576, 2147483648
    %v4589 = vor.u32 1.1754944e-38, %v4588
    %v4590 = vsel %vm4587, %v4589, %v4585
    %v4591 = vmul.f32 %v4566, %v4590
    %v4592 = vmin.f32 %v4591, 1.0
    %v4593 = vmax.f32 %v4592, -1.0
    %v4594 = vmul.f32 %v3993, %v3993
    %v4595 = vmin.f32 16.0, %v4594
    %v4596 = vmul.f32 %v4595, 2.1237322e-06
    %v4597 = vadd.f32 %v4596, 0.00028619796
    %v4598 = vmul.f32 %v4595, %v4597
    %v4599 = vadd.f32 %v4598, 0.0036580483
    %v4600 = vmul.f32 %v4595, %v4599
    %v4601 = vadd.f32 %v4600, 0.05243302
    %v4602 = vmul.f32 %v4595, %v4601
    %v4603 = vadd.f32 %v4602, 0.18741608
    %v4604 = vmul.f32 %v4595, %v4603
    %v4605 = vadd.f32 %v4604, 1.1283791
    %v4606 = vmul.f32 %v3993, %v4605
    %v4607 = vmul.f32 %v4595, 3.8918573e-05
    %v4608 = vadd.f32 %v4607, 0.001143296
    %v4609 = vmul.f32 %v4595, %v4608
    %v4610 = vadd.f32 %v4609, 0.014752088
    %v4611 = vmul.f32 %v4595, %v4610
    %v4612 = vadd.f32 %v4611, 0.112945676
    %v4613 = vmul.f32 %v4595, %v4612
    %v4614 = vadd.f32 %v4613, 0.4994258
    %v4615 = vmul.f32 %v4595, %v4614
    %v4616 = vadd.f32 %v4615, 1.0
    %v4617 = vrcp.pop %v4616
    %v4618 = vmul.f32 %v4616, %v4617
    %v4619 = vsub.f32 1.0, %v4618
    %v4620 = vmul.f32 %v4617, %v4619
    %v4621 = vadd.f32 %v4617, %v4620
    %vm4622 = vweird.f32 %v4616
    %vm4623 = vweird.f32 %v4617
    %vm4624 = vmor %vm4622, %vm4623
    %v4625 = vsel %vm4624, %v4617, %v4621
    %v4626 = vand.u32 2147483647, %v4616
    %vm4627 = vcmp.eq.f32.partialorder %v4626, 8.507059e+37
    %v4628 = vand.u32 %v4616, 2147483648
    %v4629 = vor.u32 1.1754944e-38, %v4628
    %v4630 = vsel %vm4627, %v4629, %v4625
    %v4631 = vmul.f32 %v4606, %v4630
    %v4632 = vmin.f32 %v4631, 1.0
    %v4633 = vmax.f32 %v4632, -1.0
    %v4634 = vadd.f32 %v4033, 1.0
    %v4635 = vadd.f32 %v4073, 1.0
    %v4636 = vadd.f32 %v4113, 1.0
    %v4637 = vadd.f32 %v4153, 1.0
    %v4638 = vadd.f32 %v4193, 1.0
    %v4639 = vadd.f32 %v4233, 1.0
    %v4640 = vadd.f32 %v4273, 1.0
    %v4641 = vadd.f32 %v4313, 1.0
    %v4642 = vadd.f32 %v4353, 1.0
    %v4643 = vadd.f32 %v4393, 1.0
    %v4644 = vadd.f32 %v4433, 1.0
    %v4645 = vadd.f32 %v4473, 1.0
    %v4646 = vadd.f32 %v4513, 1.0
    %v4647 = vadd.f32 %v4553, 1.0
    %v4648 = vadd.f32 %v4593, 1.0
    %v4649 = vadd.f32 %v4633, 1.0
    %v4650 = vmul.f32 %v3962, %v4634
    %v4651 = vmul.f32 %v3963, %v4635
    %v4652 = vmul.f32 %v3964, %v4636
    %v4653 = vmul.f32 %v3965, %v4637
    %v4654 = vmul.f32 %v3966, %v4638
    %v4655 = vmul.f32 %v3967, %v4639
    %v4656 = vmul.f32 %v3968, %v4640
    %v4657 = vmul.f32 %v3969, %v4641
    %v4658 = vmul.f32 %v3970, %v4642
    %v4659 = vmul.f32 %v3971, %v4643
    %v4660 = vmul.f32 %v3972, %v4644
    %v4661 = vmul.f32 %v3973, %v4645
    %v4662 = vmul.f32 %v3974, %v4646
    %v4663 = vmul.f32 %v3975, %v4647
    %v4664 = vmul.f32 %v3976, %v4648
    %v4665 = vmul.f32 %v3977, %v4649
    %s4666 = scalar_lea.vmem [#allocation28], 1024
    %v4667 = vld [vmem:[%s4666] sm:$0xff]
    %v4668 = vld [vmem:[%s4666 + $0x8] sm:$0xff]
    %v4669 = vld [vmem:[%s4666 + $0x10] sm:$0xff]
    %v4670 = vld [vmem:[%s4666 + $0x18] sm:$0xff]
    %v4671 = vld [vmem:[%s4666 + $0x20] sm:$0xff]
    %v4672 = vld [vmem:[%s4666 + $0x28] sm:$0xff]
    %v4673 = vld [vmem:[%s4666 + $0x30] sm:$0xff]
    %v4674 = vld [vmem:[%s4666 + $0x38] sm:$0xff]
    %v4675 = vld [vmem:[%s4666 + $0x40] sm:$0xff]
    %v4676 = vld [vmem:[%s4666 + $0x48] sm:$0xff]
    %v4677 = vld [vmem:[%s4666 + $0x50] sm:$0xff]
    %v4678 = vld [vmem:[%s4666 + $0x58] sm:$0xff]
    %v4679 = vld [vmem:[%s4666 + $0x60] sm:$0xff]
    %v4680 = vld [vmem:[%s4666 + $0x68] sm:$0xff]
    %v4681 = vld [vmem:[%s4666 + $0x70] sm:$0xff]
    %v4682 = vld [vmem:[%s4666 + $0x78] sm:$0xff]
    %v4683 = vld [vmem:[%s4666 + $0x80] sm:$0xff]
    %v4684 = vld [vmem:[%s4666 + $0x88] sm:$0xff]
    %v4685 = vld [vmem:[%s4666 + $0x90] sm:$0xff]
    %v4686 = vld [vmem:[%s4666 + $0x98] sm:$0xff]
    %v4687 = vld [vmem:[%s4666 + $0xa0] sm:$0xff]
    %v4688 = vld [vmem:[%s4666 + $0xa8] sm:$0xff]
    %v4689 = vld [vmem:[%s4666 + $0xb0] sm:$0xff]
    %v4690 = vld [vmem:[%s4666 + $0xb8] sm:$0xff]
    %v4691 = vld [vmem:[%s4666 + $0xc0] sm:$0xff]
    %v4692 = vld [vmem:[%s4666 + $0xc8] sm:$0xff]
    %v4693 = vld [vmem:[%s4666 + $0xd0] sm:$0xff]
    %v4694 = vld [vmem:[%s4666 + $0xd8] sm:$0xff]
    %v4695 = vld [vmem:[%s4666 + $0xe0] sm:$0xff]
    %v4696 = vld [vmem:[%s4666 + $0xe8] sm:$0xff]
    %v4697 = vld [vmem:[%s4666 + $0xf0] sm:$0xff]
    %v4698 = vld [vmem:[%s4666 + $0xf8] sm:$0xff]
    %v4699 = vld [vmem:[%s4666 + $0x100] sm:$0xff]
    %v4700 = vld [vmem:[%s4666 + $0x108] sm:$0xff]
    %v4701 = vld [vmem:[%s4666 + $0x110] sm:$0xff]
    %v4702 = vld [vmem:[%s4666 + $0x118] sm:$0xff]
    %v4703 = vld [vmem:[%s4666 + $0x120] sm:$0xff]
    %v4704 = vld [vmem:[%s4666 + $0x128] sm:$0xff]
    %v4705 = vld [vmem:[%s4666 + $0x130] sm:$0xff]
    %v4706 = vld [vmem:[%s4666 + $0x138] sm:$0xff]
    %v4707 = vld [vmem:[%s4666 + $0x140] sm:$0xff]
    %v4708 = vld [vmem:[%s4666 + $0x148] sm:$0xff]
    %v4709 = vld [vmem:[%s4666 + $0x150] sm:$0xff]
    %v4710 = vld [vmem:[%s4666 + $0x158] sm:$0xff]
    %v4711 = vld [vmem:[%s4666 + $0x160] sm:$0xff]
    %v4712 = vld [vmem:[%s4666 + $0x168] sm:$0xff]
    %v4713 = vld [vmem:[%s4666 + $0x170] sm:$0xff]
    %v4714 = vld [vmem:[%s4666 + $0x178] sm:$0xff]
    %v4715 = vld [vmem:[%s4666 + $0x180] sm:$0xff]
    %v4716 = vld [vmem:[%s4666 + $0x188] sm:$0xff]
    %v4717 = vld [vmem:[%s4666 + $0x190] sm:$0xff]
    %v4718 = vld [vmem:[%s4666 + $0x198] sm:$0xff]
    %v4719 = vld [vmem:[%s4666 + $0x1a0] sm:$0xff]
    %v4720 = vld [vmem:[%s4666 + $0x1a8] sm:$0xff]
    %v4721 = vld [vmem:[%s4666 + $0x1b0] sm:$0xff]
    %v4722 = vld [vmem:[%s4666 + $0x1b8] sm:$0xff]
    %v4723 = vld [vmem:[%s4666 + $0x1c0] sm:$0xff]
    %v4724 = vld [vmem:[%s4666 + $0x1c8] sm:$0xff]
    %v4725 = vld [vmem:[%s4666 + $0x1d0] sm:$0xff]
    %v4726 = vld [vmem:[%s4666 + $0x1d8] sm:$0xff]
    %v4727 = vld [vmem:[%s4666 + $0x1e0] sm:$0xff]
    %v4728 = vld [vmem:[%s4666 + $0x1e8] sm:$0xff]
    %v4729 = vld [vmem:[%s4666 + $0x1f0] sm:$0xff]
    %v4730 = vld [vmem:[%s4666 + $0x1f8] sm:$0xff]
    %v4731 = vld [vmem:[%s4666 + $0x200] sm:$0xff]
    %v4732 = vld [vmem:[%s4666 + $0x208] sm:$0xff]
    %v4733 = vld [vmem:[%s4666 + $0x210] sm:$0xff]
    %v4734 = vld [vmem:[%s4666 + $0x218] sm:$0xff]
    %v4735 = vld [vmem:[%s4666 + $0x220] sm:$0xff]
    %v4736 = vld [vmem:[%s4666 + $0x228] sm:$0xff]
    %v4737 = vld [vmem:[%s4666 + $0x230] sm:$0xff]
    %v4738 = vld [vmem:[%s4666 + $0x238] sm:$0xff]
    %v4739 = vld [vmem:[%s4666 + $0x240] sm:$0xff]
    %v4740 = vld [vmem:[%s4666 + $0x248] sm:$0xff]
    %v4741 = vld [vmem:[%s4666 + $0x250] sm:$0xff]
    %v4742 = vld [vmem:[%s4666 + $0x258] sm:$0xff]
    %v4743 = vld [vmem:[%s4666 + $0x260] sm:$0xff]
    %v4744 = vld [vmem:[%s4666 + $0x268] sm:$0xff]
    %v4745 = vld [vmem:[%s4666 + $0x270] sm:$0xff]
    %v4746 = vld [vmem:[%s4666 + $0x278] sm:$0xff]
    %v4747 = vld [vmem:[%s4666 + $0x280] sm:$0xff]
    %v4748 = vld [vmem:[%s4666 + $0x288] sm:$0xff]
    %v4749 = vld [vmem:[%s4666 + $0x290] sm:$0xff]
    %v4750 = vld [vmem:[%s4666 + $0x298] sm:$0xff]
    %v4751 = vld [vmem:[%s4666 + $0x2a0] sm:$0xff]
    %v4752 = vld [vmem:[%s4666 + $0x2a8] sm:$0xff]
    %v4753 = vld [vmem:[%s4666 + $0x2b0] sm:$0xff]
    %v4754 = vld [vmem:[%s4666 + $0x2b8] sm:$0xff]
    %v4755 = vld [vmem:[%s4666 + $0x2c0] sm:$0xff]
    %v4756 = vld [vmem:[%s4666 + $0x2c8] sm:$0xff]
    %v4757 = vld [vmem:[%s4666 + $0x2d0] sm:$0xff]
    %v4758 = vld [vmem:[%s4666 + $0x2d8] sm:$0xff]
    %v4759 = vld [vmem:[%s4666 + $0x2e0] sm:$0xff]
    %v4760 = vld [vmem:[%s4666 + $0x2e8] sm:$0xff]
    %v4761 = vld [vmem:[%s4666 + $0x2f0] sm:$0xff]
    %v4762 = vld [vmem:[%s4666 + $0x2f8] sm:$0xff]
    %v4763 = vld [vmem:[%s4666 + $0x300] sm:$0xff]
    %v4764 = vld [vmem:[%s4666 + $0x308] sm:$0xff]
    %v4765 = vld [vmem:[%s4666 + $0x310] sm:$0xff]
    %v4766 = vld [vmem:[%s4666 + $0x318] sm:$0xff]
    %v4767 = vld [vmem:[%s4666 + $0x320] sm:$0xff]
    %v4768 = vld [vmem:[%s4666 + $0x328] sm:$0xff]
    %v4769 = vld [vmem:[%s4666 + $0x330] sm:$0xff]
    %v4770 = vld [vmem:[%s4666 + $0x338] sm:$0xff]
    %v4771 = vld [vmem:[%s4666 + $0x340] sm:$0xff]
    %v4772 = vld [vmem:[%s4666 + $0x348] sm:$0xff]
    %v4773 = vld [vmem:[%s4666 + $0x350] sm:$0xff]
    %v4774 = vld [vmem:[%s4666 + $0x358] sm:$0xff]
    %v4775 = vld [vmem:[%s4666 + $0x360] sm:$0xff]
    %v4776 = vld [vmem:[%s4666 + $0x368] sm:$0xff]
    %v4777 = vld [vmem:[%s4666 + $0x370] sm:$0xff]
    %v4778 = vld [vmem:[%s4666 + $0x378] sm:$0xff]
    %v4779 = vld [vmem:[%s4666 + $0x380] sm:$0xff]
    %v4780 = vld [vmem:[%s4666 + $0x388] sm:$0xff]
    %v4781 = vld [vmem:[%s4666 + $0x390] sm:$0xff]
    %v4782 = vld [vmem:[%s4666 + $0x398] sm:$0xff]
    %v4783 = vld [vmem:[%s4666 + $0x3a0] sm:$0xff]
    %v4784 = vld [vmem:[%s4666 + $0x3a8] sm:$0xff]
    %v4785 = vld [vmem:[%s4666 + $0x3b0] sm:$0xff]
    %v4786 = vld [vmem:[%s4666 + $0x3b8] sm:$0xff]
    %v4787 = vld [vmem:[%s4666 + $0x3c0] sm:$0xff]
    %v4788 = vld [vmem:[%s4666 + $0x3c8] sm:$0xff]
    %v4789 = vld [vmem:[%s4666 + $0x3d0] sm:$0xff]
    %v4790 = vld [vmem:[%s4666 + $0x3d8] sm:$0xff]
    %v4791 = vld [vmem:[%s4666 + $0x3e0] sm:$0xff]
    %v4792 = vld [vmem:[%s4666 + $0x3e8] sm:$0xff]
    %v4793 = vld [vmem:[%s4666 + $0x3f0] sm:$0xff]
    %v4794 = vld [vmem:[%s4666 + $0x3f8] sm:$0xff]
    %s4795 = scalar_lea.vmem [#allocation28], 2048
    %v4796 = vld [vmem:[%s4795] sm:$0xff]
    %v4797 = vld [vmem:[%s4795 + $0x8] sm:$0xff]
    %v4798 = vld [vmem:[%s4795 + $0x10] sm:$0xff]
    %v4799 = vld [vmem:[%s4795 + $0x18] sm:$0xff]
    %v4800 = vld [vmem:[%s4795 + $0x20] sm:$0xff]
    %v4801 = vld [vmem:[%s4795 + $0x28] sm:$0xff]
    %v4802 = vld [vmem:[%s4795 + $0x30] sm:$0xff]
    %v4803 = vld [vmem:[%s4795 + $0x38] sm:$0xff]
    %v4804 = vld [vmem:[%s4795 + $0x40] sm:$0xff]
    %v4805 = vld [vmem:[%s4795 + $0x48] sm:$0xff]
    %v4806 = vld [vmem:[%s4795 + $0x50] sm:$0xff]
    %v4807 = vld [vmem:[%s4795 + $0x58] sm:$0xff]
    %v4808 = vld [vmem:[%s4795 + $0x60] sm:$0xff]
    %v4809 = vld [vmem:[%s4795 + $0x68] sm:$0xff]
    %v4810 = vld [vmem:[%s4795 + $0x70] sm:$0xff]
    %v4811 = vld [vmem:[%s4795 + $0x78] sm:$0xff]
    %v4812 = vld [vmem:[%s4795 + $0x80] sm:$0xff]
    %v4813 = vld [vmem:[%s4795 + $0x88] sm:$0xff]
    %v4814 = vld [vmem:[%s4795 + $0x90] sm:$0xff]
    %v4815 = vld [vmem:[%s4795 + $0x98] sm:$0xff]
    %v4816 = vld [vmem:[%s4795 + $0xa0] sm:$0xff]
    %v4817 = vld [vmem:[%s4795 + $0xa8] sm:$0xff]
    %v4818 = vld [vmem:[%s4795 + $0xb0] sm:$0xff]
    %v4819 = vld [vmem:[%s4795 + $0xb8] sm:$0xff]
    %v4820 = vld [vmem:[%s4795 + $0xc0] sm:$0xff]
    %v4821 = vld [vmem:[%s4795 + $0xc8] sm:$0xff]
    %v4822 = vld [vmem:[%s4795 + $0xd0] sm:$0xff]
    %v4823 = vld [vmem:[%s4795 + $0xd8] sm:$0xff]
    %v4824 = vld [vmem:[%s4795 + $0xe0] sm:$0xff]
    %v4825 = vld [vmem:[%s4795 + $0xe8] sm:$0xff]
    %v4826 = vld [vmem:[%s4795 + $0xf0] sm:$0xff]
    %v4827 = vld [vmem:[%s4795 + $0xf8] sm:$0xff]
    %v4828 = vld [vmem:[%s4795 + $0x100] sm:$0xff]
    %v4829 = vld [vmem:[%s4795 + $0x108] sm:$0xff]
    %v4830 = vld [vmem:[%s4795 + $0x110] sm:$0xff]
    %v4831 = vld [vmem:[%s4795 + $0x118] sm:$0xff]
    %v4832 = vld [vmem:[%s4795 + $0x120] sm:$0xff]
    %v4833 = vld [vmem:[%s4795 + $0x128] sm:$0xff]
    %v4834 = vld [vmem:[%s4795 + $0x130] sm:$0xff]
    %v4835 = vld [vmem:[%s4795 + $0x138] sm:$0xff]
    %v4836 = vld [vmem:[%s4795 + $0x140] sm:$0xff]
    %v4837 = vld [vmem:[%s4795 + $0x148] sm:$0xff]
    %v4838 = vld [vmem:[%s4795 + $0x150] sm:$0xff]
    %v4839 = vld [vmem:[%s4795 + $0x158] sm:$0xff]
    %v4840 = vld [vmem:[%s4795 + $0x160] sm:$0xff]
    %v4841 = vld [vmem:[%s4795 + $0x168] sm:$0xff]
    %v4842 = vld [vmem:[%s4795 + $0x170] sm:$0xff]
    %v4843 = vld [vmem:[%s4795 + $0x178] sm:$0xff]
    %v4844 = vld [vmem:[%s4795 + $0x180] sm:$0xff]
    %v4845 = vld [vmem:[%s4795 + $0x188] sm:$0xff]
    %v4846 = vld [vmem:[%s4795 + $0x190] sm:$0xff]
    %v4847 = vld [vmem:[%s4795 + $0x198] sm:$0xff]
    %v4848 = vld [vmem:[%s4795 + $0x1a0] sm:$0xff]
    %v4849 = vld [vmem:[%s4795 + $0x1a8] sm:$0xff]
    %v4850 = vld [vmem:[%s4795 + $0x1b0] sm:$0xff]
    %v4851 = vld [vmem:[%s4795 + $0x1b8] sm:$0xff]
    %v4852 = vld [vmem:[%s4795 + $0x1c0] sm:$0xff]
    %v4853 = vld [vmem:[%s4795 + $0x1c8] sm:$0xff]
    %v4854 = vld [vmem:[%s4795 + $0x1d0] sm:$0xff]
    %v4855 = vld [vmem:[%s4795 + $0x1d8] sm:$0xff]
    %v4856 = vld [vmem:[%s4795 + $0x1e0] sm:$0xff]
    %v4857 = vld [vmem:[%s4795 + $0x1e8] sm:$0xff]
    %v4858 = vld [vmem:[%s4795 + $0x1f0] sm:$0xff]
    %v4859 = vld [vmem:[%s4795 + $0x1f8] sm:$0xff]
    %v4860 = vld [vmem:[%s4795 + $0x200] sm:$0xff]
    %v4861 = vld [vmem:[%s4795 + $0x208] sm:$0xff]
    %v4862 = vld [vmem:[%s4795 + $0x210] sm:$0xff]
    %v4863 = vld [vmem:[%s4795 + $0x218] sm:$0xff]
    %v4864 = vld [vmem:[%s4795 + $0x220] sm:$0xff]
    %v4865 = vld [vmem:[%s4795 + $0x228] sm:$0xff]
    %v4866 = vld [vmem:[%s4795 + $0x230] sm:$0xff]
    %v4867 = vld [vmem:[%s4795 + $0x238] sm:$0xff]
    %v4868 = vld [vmem:[%s4795 + $0x240] sm:$0xff]
    %v4869 = vld [vmem:[%s4795 + $0x248] sm:$0xff]
    %v4870 = vld [vmem:[%s4795 + $0x250] sm:$0xff]
    %v4871 = vld [vmem:[%s4795 + $0x258] sm:$0xff]
    %v4872 = vld [vmem:[%s4795 + $0x260] sm:$0xff]
    %v4873 = vld [vmem:[%s4795 + $0x268] sm:$0xff]
    %v4874 = vld [vmem:[%s4795 + $0x270] sm:$0xff]
    %v4875 = vld [vmem:[%s4795 + $0x278] sm:$0xff]
    %v4876 = vld [vmem:[%s4795 + $0x280] sm:$0xff]
    %v4877 = vld [vmem:[%s4795 + $0x288] sm:$0xff]
    %v4878 = vld [vmem:[%s4795 + $0x290] sm:$0xff]
    %v4879 = vld [vmem:[%s4795 + $0x298] sm:$0xff]
    %v4880 = vld [vmem:[%s4795 + $0x2a0] sm:$0xff]
    %v4881 = vld [vmem:[%s4795 + $0x2a8] sm:$0xff]
    %v4882 = vld [vmem:[%s4795 + $0x2b0] sm:$0xff]
    %v4883 = vld [vmem:[%s4795 + $0x2b8] sm:$0xff]
    %v4884 = vld [vmem:[%s4795 + $0x2c0] sm:$0xff]
    %v4885 = vld [vmem:[%s4795 + $0x2c8] sm:$0xff]
    %v4886 = vld [vmem:[%s4795 + $0x2d0] sm:$0xff]
    %v4887 = vld [vmem:[%s4795 + $0x2d8] sm:$0xff]
    %v4888 = vld [vmem:[%s4795 + $0x2e0] sm:$0xff]
    %v4889 = vld [vmem:[%s4795 + $0x2e8] sm:$0xff]
    %v4890 = vld [vmem:[%s4795 + $0x2f0] sm:$0xff]
    %v4891 = vld [vmem:[%s4795 + $0x2f8] sm:$0xff]
    %v4892 = vld [vmem:[%s4795 + $0x300] sm:$0xff]
    %v4893 = vld [vmem:[%s4795 + $0x308] sm:$0xff]
    %v4894 = vld [vmem:[%s4795 + $0x310] sm:$0xff]
    %v4895 = vld [vmem:[%s4795 + $0x318] sm:$0xff]
    %v4896 = vld [vmem:[%s4795 + $0x320] sm:$0xff]
    %v4897 = vld [vmem:[%s4795 + $0x328] sm:$0xff]
    %v4898 = vld [vmem:[%s4795 + $0x330] sm:$0xff]
    %v4899 = vld [vmem:[%s4795 + $0x338] sm:$0xff]
    %v4900 = vld [vmem:[%s4795 + $0x340] sm:$0xff]
    %v4901 = vld [vmem:[%s4795 + $0x348] sm:$0xff]
    %v4902 = vld [vmem:[%s4795 + $0x350] sm:$0xff]
    %v4903 = vld [vmem:[%s4795 + $0x358] sm:$0xff]
    %v4904 = vld [vmem:[%s4795 + $0x360] sm:$0xff]
    %v4905 = vld [vmem:[%s4795 + $0x368] sm:$0xff]
    %v4906 = vld [vmem:[%s4795 + $0x370] sm:$0xff]
    %v4907 = vld [vmem:[%s4795 + $0x378] sm:$0xff]
    %v4908 = vld [vmem:[%s4795 + $0x380] sm:$0xff]
    %v4909 = vld [vmem:[%s4795 + $0x388] sm:$0xff]
    %v4910 = vld [vmem:[%s4795 + $0x390] sm:$0xff]
    %v4911 = vld [vmem:[%s4795 + $0x398] sm:$0xff]
    %v4912 = vld [vmem:[%s4795 + $0x3a0] sm:$0xff]
    %v4913 = vld [vmem:[%s4795 + $0x3a8] sm:$0xff]
    %v4914 = vld [vmem:[%s4795 + $0x3b0] sm:$0xff]
    %v4915 = vld [vmem:[%s4795 + $0x3b8] sm:$0xff]
    %v4916 = vld [vmem:[%s4795 + $0x3c0] sm:$0xff]
    %v4917 = vld [vmem:[%s4795 + $0x3c8] sm:$0xff]
    %v4918 = vld [vmem:[%s4795 + $0x3d0] sm:$0xff]
    %v4919 = vld [vmem:[%s4795 + $0x3d8] sm:$0xff]
    %v4920 = vld [vmem:[%s4795 + $0x3e0] sm:$0xff]
    %v4921 = vld [vmem:[%s4795 + $0x3e8] sm:$0xff]
    %v4922 = vld [vmem:[%s4795 + $0x3f0] sm:$0xff]
    %v4923 = vld [vmem:[%s4795 + $0x3f8] sm:$0xff]
    %4924 = vmatpush.msra.mxu0 %v4856
    %4925 = vmatpush.msra.mxu0 %v4852
    %4926 = vmatpush.msra.mxu0 %v4848
    %4927 = vmatpush.msra.mxu0 %v4844
    %4928 = vmatpush.msra.mxu0 %v4840
    %4929 = vmatpush.msra.mxu0 %v4836
    %4930 = vmatpush.msra.mxu0 %v4832
    %4931 = vmatpush.msra.mxu0 %v4828
    %4932 = vmatpush.msra.mxu0 %v4824
    %4933 = vmatpush.msra.mxu0 %v4820
    %4934 = vmatpush.msra.mxu0 %v4816
    %4935 = vmatpush.msra.mxu0 %v4812
    %4936 = vmatpush.msra.mxu0 %v4808
    %4937 = vmatpush.msra.mxu0 %v4804
    %4938 = vmatpush.msra.mxu0 %v4800
    %4939 = vmatpush.msra.mxu0 %v4796
    %4940 = vmatmul.f32.gmra.mxu0 %v3570
    %v4941 = vpop.f32.mrf.mxu0
    %v4942 = vadd.f32 0.0, %v4941
    %4943 = vmatmul.f32.gmra.mxu0 %v3588
    %v4944 = vpop.f32.mrf.mxu0
    %v4945 = vadd.f32 0.0, %v4944
    %4946 = vmatmul.f32.gmra.mxu0 %v3576
    %v4947 = vpop.f32.mrf.mxu0
    %v4948 = vadd.f32 0.0, %v4947
    %4949 = vmatmul.f32.gmra.mxu0 %v3590
    %v4950 = vpop.f32.mrf.mxu0
    %v4951 = vadd.f32 0.0, %v4950
    %4952 = vdwg.mxu0
    %4953 = vmatpush.msra.mxu0 %v4920
    %4954 = vmatpush.msra.mxu0 %v4916
    %4955 = vmatpush.msra.mxu0 %v4912
    %4956 = vmatpush.msra.mxu0 %v4908
    %4957 = vmatpush.msra.mxu0 %v4904
    %4958 = vmatpush.msra.mxu0 %v4900
    %4959 = vmatpush.msra.mxu0 %v4896
    %4960 = vmatpush.msra.mxu0 %v4892
    %4961 = vmatpush.msra.mxu0 %v4888
    %4962 = vmatpush.msra.mxu0 %v4884
    %4963 = vmatpush.msra.mxu0 %v4880
    %4964 = vmatpush.msra.mxu0 %v4876
    %4965 = vmatpush.msra.mxu0 %v4872
    %4966 = vmatpush.msra.mxu0 %v4868
    %4967 = vmatpush.msra.mxu0 %v4864
    %4968 = vmatpush.msra.mxu0 %v4860
    %4969 = vmatmul.f32.gmra.mxu0 %v3573
    %v4970 = vpop.f32.mrf.mxu0
    %v4971 = vadd.f32 %v4942, %v4970
    %4972 = vmatmul.f32.gmra.mxu0 %v3589
    %v4973 = vpop.f32.mrf.mxu0
    %v4974 = vadd.f32 %v4945, %v4973
    %4975 = vmatmul.f32.gmra.mxu0 %v3579
    %v4976 = vpop.f32.mrf.mxu0
    %v4977 = vadd.f32 %v4948, %v4976
    %4978 = vmatmul.f32.gmra.mxu0 %v3591
    %v4979 = vpop.f32.mrf.mxu0
    %v4980 = vadd.f32 %v4951, %v4979
    %4981 = vdwg.mxu0
    %4982 = vmatpush.msra.mxu0 %v4857
    %4983 = vmatpush.msra.mxu0 %v4853
    %4984 = vmatpush.msra.mxu0 %v4849
    %4985 = vmatpush.msra.mxu0 %v4845
    %4986 = vmatpush.msra.mxu0 %v4841
    %4987 = vmatpush.msra.mxu0 %v4837
    %4988 = vmatpush.msra.mxu0 %v4833
    %4989 = vmatpush.msra.mxu0 %v4829
    %4990 = vmatpush.msra.mxu0 %v4825
    %4991 = vmatpush.msra.mxu0 %v4821
    %4992 = vmatpush.msra.mxu0 %v4817
    %4993 = vmatpush.msra.mxu0 %v4813
    %4994 = vmatpush.msra.mxu0 %v4809
    %4995 = vmatpush.msra.mxu0 %v4805
    %4996 = vmatpush.msra.mxu0 %v4801
    %4997 = vmatpush.msra.mxu0 %v4797
    %4998 = vmatmul.f32.gmra.mxu0 %v3570
    %v4999 = vpop.f32.mrf.mxu0
    %v5000 = vadd.f32 0.0, %v4999
    %5001 = vmatmul.f32.gmra.mxu0 %v3588
    %v5002 = vpop.f32.mrf.mxu0
    %v5003 = vadd.f32 0.0, %v5002
    %5004 = vmatmul.f32.gmra.mxu0 %v3576
    %v5005 = vpop.f32.mrf.mxu0
    %v5006 = vadd.f32 0.0, %v5005
    %5007 = vmatmul.f32.gmra.mxu0 %v3590
    %v5008 = vpop.f32.mrf.mxu0
    %v5009 = vadd.f32 0.0, %v5008
    %5010 = vdwg.mxu0
    %5011 = vmatpush.msra.mxu0 %v4921
    %5012 = vmatpush.msra.mxu0 %v4917
    %5013 = vmatpush.msra.mxu0 %v4913
    %5014 = vmatpush.msra.mxu0 %v4909
    %5015 = vmatpush.msra.mxu0 %v4905
    %5016 = vmatpush.msra.mxu0 %v4901
    %5017 = vmatpush.msra.mxu0 %v4897
    %5018 = vmatpush.msra.mxu0 %v4893
    %5019 = vmatpush.msra.mxu0 %v4889
    %5020 = vmatpush.msra.mxu0 %v4885
    %5021 = vmatpush.msra.mxu0 %v4881
    %5022 = vmatpush.msra.mxu0 %v4877
    %5023 = vmatpush.msra.mxu0 %v4873
    %5024 = vmatpush.msra.mxu0 %v4869
    %5025 = vmatpush.msra.mxu0 %v4865
    %5026 = vmatpush.msra.mxu0 %v4861
    %5027 = vmatmul.f32.gmra.mxu0 %v3573
    %v5028 = vpop.f32.mrf.mxu0
    %v5029 = vadd.f32 %v5000, %v5028
    %5030 = vmatmul.f32.gmra.mxu0 %v3589
    %v5031 = vpop.f32.mrf.mxu0
    %v5032 = vadd.f32 %v5003, %v5031
    %5033 = vmatmul.f32.gmra.mxu0 %v3579
    %v5034 = vpop.f32.mrf.mxu0
    %v5035 = vadd.f32 %v5006, %v5034
    %5036 = vmatmul.f32.gmra.mxu0 %v3591
    %v5037 = vpop.f32.mrf.mxu0
    %v5038 = vadd.f32 %v5009, %v5037
    %5039 = vdwg.mxu0
    %5040 = vmatpush.msra.mxu0 %v4858
    %5041 = vmatpush.msra.mxu0 %v4854
    %5042 = vmatpush.msra.mxu0 %v4850
    %5043 = vmatpush.msra.mxu0 %v4846
    %5044 = vmatpush.msra.mxu0 %v4842
    %5045 = vmatpush.msra.mxu0 %v4838
    %5046 = vmatpush.msra.mxu0 %v4834
    %5047 = vmatpush.msra.mxu0 %v4830
    %5048 = vmatpush.msra.mxu0 %v4826
    %5049 = vmatpush.msra.mxu0 %v4822
    %5050 = vmatpush.msra.mxu0 %v4818
    %5051 = vmatpush.msra.mxu0 %v4814
    %5052 = vmatpush.msra.mxu0 %v4810
    %5053 = vmatpush.msra.mxu0 %v4806
    %5054 = vmatpush.msra.mxu0 %v4802
    %5055 = vmatpush.msra.mxu0 %v4798
    %5056 = vmatmul.f32.gmra.mxu0 %v3570
    %v5057 = vpop.f32.mrf.mxu0
    %v5058 = vadd.f32 0.0, %v5057
    %5059 = vmatmul.f32.gmra.mxu0 %v3588
    %v5060 = vpop.f32.mrf.mxu0
    %v5061 = vadd.f32 0.0, %v5060
    %5062 = vmatmul.f32.gmra.mxu0 %v3576
    %v5063 = vpop.f32.mrf.mxu0
    %v5064 = vadd.f32 0.0, %v5063
    %5065 = vmatmul.f32.gmra.mxu0 %v3590
    %v5066 = vpop.f32.mrf.mxu0
    %v5067 = vadd.f32 0.0, %v5066
    %5068 = vdwg.mxu0
    %5069 = vmatpush.msra.mxu0 %v4922
    %5070 = vmatpush.msra.mxu0 %v4918
    %5071 = vmatpush.msra.mxu0 %v4914
    %5072 = vmatpush.msra.mxu0 %v4910
    %5073 = vmatpush.msra.mxu0 %v4906
    %5074 = vmatpush.msra.mxu0 %v4902
    %5075 = vmatpush.msra.mxu0 %v4898
    %5076 = vmatpush.msra.mxu0 %v4894
    %5077 = vmatpush.msra.mxu0 %v4890
    %5078 = vmatpush.msra.mxu0 %v4886
    %5079 = vmatpush.msra.mxu0 %v4882
    %5080 = vmatpush.msra.mxu0 %v4878
    %5081 = vmatpush.msra.mxu0 %v4874
    %5082 = vmatpush.msra.mxu0 %v4870
    %5083 = vmatpush.msra.mxu0 %v4866
    %5084 = vmatpush.msra.mxu0 %v4862
    %5085 = vmatmul.f32.gmra.mxu0 %v3573
    %v5086 = vpop.f32.mrf.mxu0
    %v5087 = vadd.f32 %v5058, %v5086
    %5088 = vmatmul.f32.gmra.mxu0 %v3589
    %v5089 = vpop.f32.mrf.mxu0
    %v5090 = vadd.f32 %v5061, %v5089
    %5091 = vmatmul.f32.gmra.mxu0 %v3579
    %v5092 = vpop.f32.mrf.mxu0
    %v5093 = vadd.f32 %v5064, %v5092
    %5094 = vmatmul.f32.gmra.mxu0 %v3591
    %v5095 = vpop.f32.mrf.mxu0
    %v5096 = vadd.f32 %v5067, %v5095
    %5097 = vdwg.mxu0
    %5098 = vmatpush.msra.mxu0 %v4859
    %5099 = vmatpush.msra.mxu0 %v4855
    %5100 = vmatpush.msra.mxu0 %v4851
    %5101 = vmatpush.msra.mxu0 %v4847
    %5102 = vmatpush.msra.mxu0 %v4843
    %5103 = vmatpush.msra.mxu0 %v4839
    %5104 = vmatpush.msra.mxu0 %v4835
    %5105 = vmatpush.msra.mxu0 %v4831
    %5106 = vmatpush.msra.mxu0 %v4827
    %5107 = vmatpush.msra.mxu0 %v4823
    %5108 = vmatpush.msra.mxu0 %v4819
    %5109 = vmatpush.msra.mxu0 %v4815
    %5110 = vmatpush.msra.mxu0 %v4811
    %5111 = vmatpush.msra.mxu0 %v4807
    %5112 = vmatpush.msra.mxu0 %v4803
    %5113 = vmatpush.msra.mxu0 %v4799
    %5114 = vmatmul.f32.gmra.mxu0 %v3570
    %v5115 = vpop.f32.mrf.mxu0
    %v5116 = vadd.f32 0.0, %v5115
    %5117 = vmatmul.f32.gmra.mxu0 %v3588
    %v5118 = vpop.f32.mrf.mxu0
    %v5119 = vadd.f32 0.0, %v5118
    %5120 = vmatmul.f32.gmra.mxu0 %v3576
    %v5121 = vpop.f32.mrf.mxu0
    %v5122 = vadd.f32 0.0, %v5121
    %5123 = vmatmul.f32.gmra.mxu0 %v3590
    %v5124 = vpop.f32.mrf.mxu0
    %v5125 = vadd.f32 0.0, %v5124
    %5126 = vdwg.mxu0
    %5127 = vmatpush.msra.mxu0 %v4923
    %5128 = vmatpush.msra.mxu0 %v4919
    %5129 = vmatpush.msra.mxu0 %v4915
    %5130 = vmatpush.msra.mxu0 %v4911
    %5131 = vmatpush.msra.mxu0 %v4907
    %5132 = vmatpush.msra.mxu0 %v4903
    %5133 = vmatpush.msra.mxu0 %v4899
    %5134 = vmatpush.msra.mxu0 %v4895
    %5135 = vmatpush.msra.mxu0 %v4891
    %5136 = vmatpush.msra.mxu0 %v4887
    %5137 = vmatpush.msra.mxu0 %v4883
    %5138 = vmatpush.msra.mxu0 %v4879
    %5139 = vmatpush.msra.mxu0 %v4875
    %5140 = vmatpush.msra.mxu0 %v4871
    %5141 = vmatpush.msra.mxu0 %v4867
    %5142 = vmatpush.msra.mxu0 %v4863
    %5143 = vmatmul.f32.gmra.mxu0 %v3573
    %v5144 = vpop.f32.mrf.mxu0
    %v5145 = vadd.f32 %v5116, %v5144
    %5146 = vmatmul.f32.gmra.mxu0 %v3589
    %v5147 = vpop.f32.mrf.mxu0
    %v5148 = vadd.f32 %v5119, %v5147
    %5149 = vmatmul.f32.gmra.mxu0 %v3579
    %v5150 = vpop.f32.mrf.mxu0
    %v5151 = vadd.f32 %v5122, %v5150
    %5152 = vmatmul.f32.gmra.mxu0 %v3591
    %v5153 = vpop.f32.mrf.mxu0
    %v5154 = vadd.f32 %v5125, %v5153
    %5155 = vdwg.mxu0
    %5156 = vmatpush.msra.mxu0 %v4727
    %5157 = vmatpush.msra.mxu0 %v4723
    %5158 = vmatpush.msra.mxu0 %v4719
    %5159 = vmatpush.msra.mxu0 %v4715
    %5160 = vmatpush.msra.mxu0 %v4711
    %5161 = vmatpush.msra.mxu0 %v4707
    %5162 = vmatpush.msra.mxu0 %v4703
    %5163 = vmatpush.msra.mxu0 %v4699
    %5164 = vmatpush.msra.mxu0 %v4695
    %5165 = vmatpush.msra.mxu0 %v4691
    %5166 = vmatpush.msra.mxu0 %v4687
    %5167 = vmatpush.msra.mxu0 %v4683
    %5168 = vmatpush.msra.mxu0 %v4679
    %5169 = vmatpush.msra.mxu0 %v4675
    %5170 = vmatpush.msra.mxu0 %v4671
    %5171 = vmatpush.msra.mxu0 %v4667
    %5172 = vmatmul.f32.gmra.mxu0 %v3552
    %v5173 = vpop.f32.mrf.mxu0
    %v5174 = vadd.f32 %v4971, %v5173
    %5175 = vmatmul.f32.gmra.mxu0 %v3554
    %v5176 = vpop.f32.mrf.mxu0
    %v5177 = vadd.f32 %v4974, %v5176
    %5178 = vmatmul.f32.gmra.mxu0 %v3556
    %v5179 = vpop.f32.mrf.mxu0
    %v5180 = vadd.f32 %v4977, %v5179
    %5181 = vmatmul.f32.gmra.mxu0 %v3558
    %v5182 = vpop.f32.mrf.mxu0
    %v5183 = vadd.f32 %v4980, %v5182
    %5184 = vdwg.mxu0
    %5185 = vmatpush.msra.mxu0 %v4791
    %5186 = vmatpush.msra.mxu0 %v4787
    %5187 = vmatpush.msra.mxu0 %v4783
    %5188 = vmatpush.msra.mxu0 %v4779
    %5189 = vmatpush.msra.mxu0 %v4775
    %5190 = vmatpush.msra.mxu0 %v4771
    %5191 = vmatpush.msra.mxu0 %v4767
    %5192 = vmatpush.msra.mxu0 %v4763
    %5193 = vmatpush.msra.mxu0 %v4759
    %5194 = vmatpush.msra.mxu0 %v4755
    %5195 = vmatpush.msra.mxu0 %v4751
    %5196 = vmatpush.msra.mxu0 %v4747
    %5197 = vmatpush.msra.mxu0 %v4743
    %5198 = vmatpush.msra.mxu0 %v4739
    %5199 = vmatpush.msra.mxu0 %v4735
    %5200 = vmatpush.msra.mxu0 %v4731
    %5201 = vmatmul.f32.gmra.mxu0 %v3553
    %v5202 = vpop.f32.mrf.mxu0
    %v5203 = vadd.f32 %v5174, %v5202
    %5204 = vmatmul.f32.gmra.mxu0 %v3555
    %v5205 = vpop.f32.mrf.mxu0
    %v5206 = vadd.f32 %v5177, %v5205
    %5207 = vmatmul.f32.gmra.mxu0 %v3557
    %v5208 = vpop.f32.mrf.mxu0
    %v5209 = vadd.f32 %v5180, %v5208
    %5210 = vmatmul.f32.gmra.mxu0 %v3559
    %v5211 = vpop.f32.mrf.mxu0
    %v5212 = vadd.f32 %v5183, %v5211
    %5213 = vdwg.mxu0
    %5214 = vmatpush.msra.mxu0 %v4728
    %5215 = vmatpush.msra.mxu0 %v4724
    %5216 = vmatpush.msra.mxu0 %v4720
    %5217 = vmatpush.msra.mxu0 %v4716
    %5218 = vmatpush.msra.mxu0 %v4712
    %5219 = vmatpush.msra.mxu0 %v4708
    %5220 = vmatpush.msra.mxu0 %v4704
    %5221 = vmatpush.msra.mxu0 %v4700
    %5222 = vmatpush.msra.mxu0 %v4696
    %5223 = vmatpush.msra.mxu0 %v4692
    %5224 = vmatpush.msra.mxu0 %v4688
    %5225 = vmatpush.msra.mxu0 %v4684
    %5226 = vmatpush.msra.mxu0 %v4680
    %5227 = vmatpush.msra.mxu0 %v4676
    %5228 = vmatpush.msra.mxu0 %v4672
    %5229 = vmatpush.msra.mxu0 %v4668
    %5230 = vmatmul.f32.gmra.mxu0 %v3552
    %v5231 = vpop.f32.mrf.mxu0
    %v5232 = vadd.f32 %v5029, %v5231
    %5233 = vmatmul.f32.gmra.mxu0 %v3554
    %v5234 = vpop.f32.mrf.mxu0
    %v5235 = vadd.f32 %v5032, %v5234
    %5236 = vmatmul.f32.gmra.mxu0 %v3556
    %v5237 = vpop.f32.mrf.mxu0
    %v5238 = vadd.f32 %v5035, %v5237
    %5239 = vmatmul.f32.gmra.mxu0 %v3558
    %v5240 = vpop.f32.mrf.mxu0
    %v5241 = vadd.f32 %v5038, %v5240
    %5242 = vdwg.mxu0
    %5243 = vmatpush.msra.mxu0 %v4792
    %5244 = vmatpush.msra.mxu0 %v4788
    %5245 = vmatpush.msra.mxu0 %v4784
    %5246 = vmatpush.msra.mxu0 %v4780
    %5247 = vmatpush.msra.mxu0 %v4776
    %5248 = vmatpush.msra.mxu0 %v4772
    %5249 = vmatpush.msra.mxu0 %v4768
    %5250 = vmatpush.msra.mxu0 %v4764
    %5251 = vmatpush.msra.mxu0 %v4760
    %5252 = vmatpush.msra.mxu0 %v4756
    %5253 = vmatpush.msra.mxu0 %v4752
    %5254 = vmatpush.msra.mxu0 %v4748
    %5255 = vmatpush.msra.mxu0 %v4744
    %5256 = vmatpush.msra.mxu0 %v4740
    %5257 = vmatpush.msra.mxu0 %v4736
    %5258 = vmatpush.msra.mxu0 %v4732
    %5259 = vmatmul.f32.gmra.mxu0 %v3553
    %v5260 = vpop.f32.mrf.mxu0
    %v5261 = vadd.f32 %v5232, %v5260
    %5262 = vmatmul.f32.gmra.mxu0 %v3555
    %v5263 = vpop.f32.mrf.mxu0
    %v5264 = vadd.f32 %v5235, %v5263
    %5265 = vmatmul.f32.gmra.mxu0 %v3557
    %v5266 = vpop.f32.mrf.mxu0
    %v5267 = vadd.f32 %v5238, %v5266
    %5268 = vmatmul.f32.gmra.mxu0 %v3559
    %v5269 = vpop.f32.mrf.mxu0
    %v5270 = vadd.f32 %v5241, %v5269
    %5271 = vdwg.mxu0
    %5272 = vmatpush.msra.mxu0 %v4729
    %5273 = vmatpush.msra.mxu0 %v4725
    %5274 = vmatpush.msra.mxu0 %v4721
    %5275 = vmatpush.msra.mxu0 %v4717
    %5276 = vmatpush.msra.mxu0 %v4713
    %5277 = vmatpush.msra.mxu0 %v4709
    %5278 = vmatpush.msra.mxu0 %v4705
    %5279 = vmatpush.msra.mxu0 %v4701
    %5280 = vmatpush.msra.mxu0 %v4697
    %5281 = vmatpush.msra.mxu0 %v4693
    %5282 = vmatpush.msra.mxu0 %v4689
    %5283 = vmatpush.msra.mxu0 %v4685
    %5284 = vmatpush.msra.mxu0 %v4681
    %5285 = vmatpush.msra.mxu0 %v4677
    %5286 = vmatpush.msra.mxu0 %v4673
    %5287 = vmatpush.msra.mxu0 %v4669
    %5288 = vmatmul.f32.gmra.mxu0 %v3552
    %v5289 = vpop.f32.mrf.mxu0
    %v5290 = vadd.f32 %v5087, %v5289
    %5291 = vmatmul.f32.gmra.mxu0 %v3554
    %v5292 = vpop.f32.mrf.mxu0
    %v5293 = vadd.f32 %v5090, %v5292
    %5294 = vmatmul.f32.gmra.mxu0 %v3556
    %v5295 = vpop.f32.mrf.mxu0
    %v5296 = vadd.f32 %v5093, %v5295
    %5297 = vmatmul.f32.gmra.mxu0 %v3558
    %v5298 = vpop.f32.mrf.mxu0
    %v5299 = vadd.f32 %v5096, %v5298
    %5300 = vdwg.mxu0
    %5301 = vmatpush.msra.mxu0 %v4793
    %5302 = vmatpush.msra.mxu0 %v4789
    %5303 = vmatpush.msra.mxu0 %v4785
    %5304 = vmatpush.msra.mxu0 %v4781
    %5305 = vmatpush.msra.mxu0 %v4777
    %5306 = vmatpush.msra.mxu0 %v4773
    %5307 = vmatpush.msra.mxu0 %v4769
    %5308 = vmatpush.msra.mxu0 %v4765
    %5309 = vmatpush.msra.mxu0 %v4761
    %5310 = vmatpush.msra.mxu0 %v4757
    %5311 = vmatpush.msra.mxu0 %v4753
    %5312 = vmatpush.msra.mxu0 %v4749
    %5313 = vmatpush.msra.mxu0 %v4745
    %5314 = vmatpush.msra.mxu0 %v4741
    %5315 = vmatpush.msra.mxu0 %v4737
    %5316 = vmatpush.msra.mxu0 %v4733
    %5317 = vmatmul.f32.gmra.mxu0 %v3553
    %v5318 = vpop.f32.mrf.mxu0
    %v5319 = vadd.f32 %v5290, %v5318
    %5320 = vmatmul.f32.gmra.mxu0 %v3555
    %v5321 = vpop.f32.mrf.mxu0
    %v5322 = vadd.f32 %v5293, %v5321
    %5323 = vmatmul.f32.gmra.mxu0 %v3557
    %v5324 = vpop.f32.mrf.mxu0
    %v5325 = vadd.f32 %v5296, %v5324
    %5326 = vmatmul.f32.gmra.mxu0 %v3559
    %v5327 = vpop.f32.mrf.mxu0
    %v5328 = vadd.f32 %v5299, %v5327
    %5329 = vdwg.mxu0
    %5330 = vmatpush.msra.mxu0 %v4730
    %5331 = vmatpush.msra.mxu0 %v4726
    %5332 = vmatpush.msra.mxu0 %v4722
    %5333 = vmatpush.msra.mxu0 %v4718
    %5334 = vmatpush.msra.mxu0 %v4714
    %5335 = vmatpush.msra.mxu0 %v4710
    %5336 = vmatpush.msra.mxu0 %v4706
    %5337 = vmatpush.msra.mxu0 %v4702
    %5338 = vmatpush.msra.mxu0 %v4698
    %5339 = vmatpush.msra.mxu0 %v4694
    %5340 = vmatpush.msra.mxu0 %v4690
    %5341 = vmatpush.msra.mxu0 %v4686
    %5342 = vmatpush.msra.mxu0 %v4682
    %5343 = vmatpush.msra.mxu0 %v4678
    %5344 = vmatpush.msra.mxu0 %v4674
    %5345 = vmatpush.msra.mxu0 %v4670
    %5346 = vmatmul.f32.gmra.mxu0 %v3552
    %v5347 = vpop.f32.mrf.mxu0
    %v5348 = vadd.f32 %v5145, %v5347
    %5349 = vmatmul.f32.gmra.mxu0 %v3554
    %v5350 = vpop.f32.mrf.mxu0
    %v5351 = vadd.f32 %v5148, %v5350
    %5352 = vmatmul.f32.gmra.mxu0 %v3556
    %v5353 = vpop.f32.mrf.mxu0
    %v5354 = vadd.f32 %v5151, %v5353
    %5355 = vmatmul.f32.gmra.mxu0 %v3558
    %v5356 = vpop.f32.mrf.mxu0
    %v5357 = vadd.f32 %v5154, %v5356
    %5358 = vdwg.mxu0
    %5359 = vmatpush.msra.mxu0 %v4794
    %5360 = vmatpush.msra.mxu0 %v4790
    %5361 = vmatpush.msra.mxu0 %v4786
    %5362 = vmatpush.msra.mxu0 %v4782
    %5363 = vmatpush.msra.mxu0 %v4778
    %5364 = vmatpush.msra.mxu0 %v4774
    %5365 = vmatpush.msra.mxu0 %v4770
    %5366 = vmatpush.msra.mxu0 %v4766
    %5367 = vmatpush.msra.mxu0 %v4762
    %5368 = vmatpush.msra.mxu0 %v4758
    %5369 = vmatpush.msra.mxu0 %v4754
    %5370 = vmatpush.msra.mxu0 %v4750
    %5371 = vmatpush.msra.mxu0 %v4746
    %5372 = vmatpush.msra.mxu0 %v4742
    %5373 = vmatpush.msra.mxu0 %v4738
    %5374 = vmatpush.msra.mxu0 %v4734
    %5375 = vmatmul.f32.gmra.mxu0 %v3553
    %v5376 = vpop.f32.mrf.mxu0
    %v5377 = vadd.f32 %v5348, %v5376
    %5378 = vmatmul.f32.gmra.mxu0 %v3555
    %v5379 = vpop.f32.mrf.mxu0
    %v5380 = vadd.f32 %v5351, %v5379
    %5381 = vmatmul.f32.gmra.mxu0 %v3557
    %v5382 = vpop.f32.mrf.mxu0
    %v5383 = vadd.f32 %v5354, %v5382
    %5384 = vmatmul.f32.gmra.mxu0 %v3559
    %v5385 = vpop.f32.mrf.mxu0
    %v5386 = vadd.f32 %v5357, %v5385
    %5387 = vdwg.mxu0
    %v5388 = vadd.f32 %v5203, %v3722
    %v5389 = vadd.f32 %v5261, %v3723
    %v5390 = vadd.f32 %v5319, %v3724
    %v5391 = vadd.f32 %v5377, %v3725
    %v5392 = vadd.f32 %v5206, %v3722
    %v5393 = vadd.f32 %v5264, %v3723
    %v5394 = vadd.f32 %v5322, %v3724
    %v5395 = vadd.f32 %v5380, %v3725
    %v5396 = vadd.f32 %v5209, %v3722
    %v5397 = vadd.f32 %v5267, %v3723
    %v5398 = vadd.f32 %v5325, %v3724
    %v5399 = vadd.f32 %v5383, %v3725
    %v5400 = vadd.f32 %v5212, %v3722
    %v5401 = vadd.f32 %v5270, %v3723
    %v5402 = vadd.f32 %v5328, %v3724
    %v5403 = vadd.f32 %v5386, %v3725
    %v5404 = vmul.f32 %v5388, 0.5
    %v5405 = vmul.f32 %v5389, 0.5
    %v5406 = vmul.f32 %v5390, 0.5
    %v5407 = vmul.f32 %v5391, 0.5
    %v5408 = vmul.f32 %v5392, 0.5
    %v5409 = vmul.f32 %v5393, 0.5
    %v5410 = vmul.f32 %v5394, 0.5
    %v5411 = vmul.f32 %v5395, 0.5
    %v5412 = vmul.f32 %v5396, 0.5
    %v5413 = vmul.f32 %v5397, 0.5
    %v5414 = vmul.f32 %v5398, 0.5
    %v5415 = vmul.f32 %v5399, 0.5
    %v5416 = vmul.f32 %v5400, 0.5
    %v5417 = vmul.f32 %v5401, 0.5
    %v5418 = vmul.f32 %v5402, 0.5
    %v5419 = vmul.f32 %v5403, 0.5
    %v5420 = vmul.f32 %v5388, 0.70710677
    %v5421 = vmul.f32 %v5389, 0.70710677
    %v5422 = vmul.f32 %v5390, 0.70710677
    %v5423 = vmul.f32 %v5391, 0.70710677
    %v5424 = vmul.f32 %v5392, 0.70710677
    %v5425 = vmul.f32 %v5393, 0.70710677
    %v5426 = vmul.f32 %v5394, 0.70710677
    %v5427 = vmul.f32 %v5395, 0.70710677
    %v5428 = vmul.f32 %v5396, 0.70710677
    %v5429 = vmul.f32 %v5397, 0.70710677
    %v5430 = vmul.f32 %v5398, 0.70710677
    %v5431 = vmul.f32 %v5399, 0.70710677
    %v5432 = vmul.f32 %v5400, 0.70710677
    %v5433 = vmul.f32 %v5401, 0.70710677
    %v5434 = vmul.f32 %v5402, 0.70710677
    %v5435 = vmul.f32 %v5403, 0.70710677
    %v5436 = vmul.f32 %v5420, %v5420
    %v5437 = vmin.f32 16.0, %v5436
    %v5438 = vmul.f32 %v5437, 2.1237322e-06
    %v5439 = vadd.f32 %v5438, 0.00028619796
    %v5440 = vmul.f32 %v5437, %v5439
    %v5441 = vadd.f32 %v5440, 0.0036580483
    %v5442 = vmul.f32 %v5437, %v5441
    %v5443 = vadd.f32 %v5442, 0.05243302
    %v5444 = vmul.f32 %v5437, %v5443
    %v5445 = vadd.f32 %v5444, 0.18741608
    %v5446 = vmul.f32 %v5437, %v5445
    %v5447 = vadd.f32 %v5446, 1.1283791
    %v5448 = vmul.f32 %v5420, %v5447
    %v5449 = vmul.f32 %v5437, 3.8918573e-05
    %v5450 = vadd.f32 %v5449, 0.001143296
    %v5451 = vmul.f32 %v5437, %v5450
    %v5452 = vadd.f32 %v5451, 0.014752088
    %v5453 = vmul.f32 %v5437, %v5452
    %v5454 = vadd.f32 %v5453, 0.112945676
    %v5455 = vmul.f32 %v5437, %v5454
    %v5456 = vadd.f32 %v5455, 0.4994258
    %v5457 = vmul.f32 %v5437, %v5456
    %v5458 = vadd.f32 %v5457, 1.0
    %v5459 = vrcp.pop %v5458
    %v5460 = vmul.f32 %v5458, %v5459
    %v5461 = vsub.f32 1.0, %v5460
    %v5462 = vmul.f32 %v5459, %v5461
    %v5463 = vadd.f32 %v5459, %v5462
    %vm5464 = vweird.f32 %v5458
    %vm5465 = vweird.f32 %v5459
    %vm5466 = vmor %vm5464, %vm5465
    %v5467 = vsel %vm5466, %v5459, %v5463
    %v5468 = vand.u32 2147483647, %v5458
    %vm5469 = vcmp.eq.f32.partialorder %v5468, 8.507059e+37
    %v5470 = vand.u32 %v5458, 2147483648
    %v5471 = vor.u32 1.1754944e-38, %v5470
    %v5472 = vsel %vm5469, %v5471, %v5467
    %v5473 = vmul.f32 %v5448, %v5472
    %v5474 = vmin.f32 %v5473, 1.0
    %v5475 = vmax.f32 %v5474, -1.0
    %v5476 = vmul.f32 %v5421, %v5421
    %v5477 = vmin.f32 16.0, %v5476
    %v5478 = vmul.f32 %v5477, 2.1237322e-06
    %v5479 = vadd.f32 %v5478, 0.00028619796
    %v5480 = vmul.f32 %v5477, %v5479
    %v5481 = vadd.f32 %v5480, 0.0036580483
    %v5482 = vmul.f32 %v5477, %v5481
    %v5483 = vadd.f32 %v5482, 0.05243302
    %v5484 = vmul.f32 %v5477, %v5483
    %v5485 = vadd.f32 %v5484, 0.18741608
    %v5486 = vmul.f32 %v5477, %v5485
    %v5487 = vadd.f32 %v5486, 1.1283791
    %v5488 = vmul.f32 %v5421, %v5487
    %v5489 = vmul.f32 %v5477, 3.8918573e-05
    %v5490 = vadd.f32 %v5489, 0.001143296
    %v5491 = vmul.f32 %v5477, %v5490
    %v5492 = vadd.f32 %v5491, 0.014752088
    %v5493 = vmul.f32 %v5477, %v5492
    %v5494 = vadd.f32 %v5493, 0.112945676
    %v5495 = vmul.f32 %v5477, %v5494
    %v5496 = vadd.f32 %v5495, 0.4994258
    %v5497 = vmul.f32 %v5477, %v5496
    %v5498 = vadd.f32 %v5497, 1.0
    %v5499 = vrcp.pop %v5498
    %v5500 = vmul.f32 %v5498, %v5499
    %v5501 = vsub.f32 1.0, %v5500
    %v5502 = vmul.f32 %v5499, %v5501
    %v5503 = vadd.f32 %v5499, %v5502
    %vm5504 = vweird.f32 %v5498
    %vm5505 = vweird.f32 %v5499
    %vm5506 = vmor %vm5504, %vm5505
    %v5507 = vsel %vm5506, %v5499, %v5503
    %v5508 = vand.u32 2147483647, %v5498
    %vm5509 = vcmp.eq.f32.partialorder %v5508, 8.507059e+37
    %v5510 = vand.u32 %v5498, 2147483648
    %v5511 = vor.u32 1.1754944e-38, %v5510
    %v5512 = vsel %vm5509, %v5511, %v5507
    %v5513 = vmul.f32 %v5488, %v5512
    %v5514 = vmin.f32 %v5513, 1.0
    %v5515 = vmax.f32 %v5514, -1.0
    %v5516 = vmul.f32 %v5422, %v5422
    %v5517 = vmin.f32 16.0, %v5516
    %v5518 = vmul.f32 %v5517, 2.1237322e-06
    %v5519 = vadd.f32 %v5518, 0.00028619796
    %v5520 = vmul.f32 %v5517, %v5519
    %v5521 = vadd.f32 %v5520, 0.0036580483
    %v5522 = vmul.f32 %v5517, %v5521
    %v5523 = vadd.f32 %v5522, 0.05243302
    %v5524 = vmul.f32 %v5517, %v5523
    %v5525 = vadd.f32 %v5524, 0.18741608
    %v5526 = vmul.f32 %v5517, %v5525
    %v5527 = vadd.f32 %v5526, 1.1283791
    %v5528 = vmul.f32 %v5422, %v5527
    %v5529 = vmul.f32 %v5517, 3.8918573e-05
    %v5530 = vadd.f32 %v5529, 0.001143296
    %v5531 = vmul.f32 %v5517, %v5530
    %v5532 = vadd.f32 %v5531, 0.014752088
    %v5533 = vmul.f32 %v5517, %v5532
    %v5534 = vadd.f32 %v5533, 0.112945676
    %v5535 = vmul.f32 %v5517, %v5534
    %v5536 = vadd.f32 %v5535, 0.4994258
    %v5537 = vmul.f32 %v5517, %v5536
    %v5538 = vadd.f32 %v5537, 1.0
    %v5539 = vrcp.pop %v5538
    %v5540 = vmul.f32 %v5538, %v5539
    %v5541 = vsub.f32 1.0, %v5540
    %v5542 = vmul.f32 %v5539, %v5541
    %v5543 = vadd.f32 %v5539, %v5542
    %vm5544 = vweird.f32 %v5538
    %vm5545 = vweird.f32 %v5539
    %vm5546 = vmor %vm5544, %vm5545
    %v5547 = vsel %vm5546, %v5539, %v5543
    %v5548 = vand.u32 2147483647, %v5538
    %vm5549 = vcmp.eq.f32.partialorder %v5548, 8.507059e+37
    %v5550 = vand.u32 %v5538, 2147483648
    %v5551 = vor.u32 1.1754944e-38, %v5550
    %v5552 = vsel %vm5549, %v5551, %v5547
    %v5553 = vmul.f32 %v5528, %v5552
    %v5554 = vmin.f32 %v5553, 1.0
    %v5555 = vmax.f32 %v5554, -1.0
    %v5556 = vmul.f32 %v5423, %v5423
    %v5557 = vmin.f32 16.0, %v5556
    %v5558 = vmul.f32 %v5557, 2.1237322e-06
    %v5559 = vadd.f32 %v5558, 0.00028619796
    %v5560 = vmul.f32 %v5557, %v5559
    %v5561 = vadd.f32 %v5560, 0.0036580483
    %v5562 = vmul.f32 %v5557, %v5561
    %v5563 = vadd.f32 %v5562, 0.05243302
    %v5564 = vmul.f32 %v5557, %v5563
    %v5565 = vadd.f32 %v5564, 0.18741608
    %v5566 = vmul.f32 %v5557, %v5565
    %v5567 = vadd.f32 %v5566, 1.1283791
    %v5568 = vmul.f32 %v5423, %v5567
    %v5569 = vmul.f32 %v5557, 3.8918573e-05
    %v5570 = vadd.f32 %v5569, 0.001143296
    %v5571 = vmul.f32 %v5557, %v5570
    %v5572 = vadd.f32 %v5571, 0.014752088
    %v5573 = vmul.f32 %v5557, %v5572
    %v5574 = vadd.f32 %v5573, 0.112945676
    %v5575 = vmul.f32 %v5557, %v5574
    %v5576 = vadd.f32 %v5575, 0.4994258
    %v5577 = vmul.f32 %v5557, %v5576
    %v5578 = vadd.f32 %v5577, 1.0
    %v5579 = vrcp.pop %v5578
    %v5580 = vmul.f32 %v5578, %v5579
    %v5581 = vsub.f32 1.0, %v5580
    %v5582 = vmul.f32 %v5579, %v5581
    %v5583 = vadd.f32 %v5579, %v5582
    %vm5584 = vweird.f32 %v5578
    %vm5585 = vweird.f32 %v5579
    %vm5586 = vmor %vm5584, %vm5585
    %v5587 = vsel %vm5586, %v5579, %v5583
    %v5588 = vand.u32 2147483647, %v5578
    %vm5589 = vcmp.eq.f32.partialorder %v5588, 8.507059e+37
    %v5590 = vand.u32 %v5578, 2147483648
    %v5591 = vor.u32 1.1754944e-38, %v5590
    %v5592 = vsel %vm5589, %v5591, %v5587
    %v5593 = vmul.f32 %v5568, %v5592
    %v5594 = vmin.f32 %v5593, 1.0
    %v5595 = vmax.f32 %v5594, -1.0
    %v5596 = vmul.f32 %v5424, %v5424
    %v5597 = vmin.f32 16.0, %v5596
    %v5598 = vmul.f32 %v5597, 2.1237322e-06
    %v5599 = vadd.f32 %v5598, 0.00028619796
    %v5600 = vmul.f32 %v5597, %v5599
    %v5601 = vadd.f32 %v5600, 0.0036580483
    %v5602 = vmul.f32 %v5597, %v5601
    %v5603 = vadd.f32 %v5602, 0.05243302
    %v5604 = vmul.f32 %v5597, %v5603
    %v5605 = vadd.f32 %v5604, 0.18741608
    %v5606 = vmul.f32 %v5597, %v5605
    %v5607 = vadd.f32 %v5606, 1.1283791
    %v5608 = vmul.f32 %v5424, %v5607
    %v5609 = vmul.f32 %v5597, 3.8918573e-05
    %v5610 = vadd.f32 %v5609, 0.001143296
    %v5611 = vmul.f32 %v5597, %v5610
    %v5612 = vadd.f32 %v5611, 0.014752088
    %v5613 = vmul.f32 %v5597, %v5612
    %v5614 = vadd.f32 %v5613, 0.112945676
    %v5615 = vmul.f32 %v5597, %v5614
    %v5616 = vadd.f32 %v5615, 0.4994258
    %v5617 = vmul.f32 %v5597, %v5616
    %v5618 = vadd.f32 %v5617, 1.0
    %v5619 = vrcp.pop %v5618
    %v5620 = vmul.f32 %v5618, %v5619
    %v5621 = vsub.f32 1.0, %v5620
    %v5622 = vmul.f32 %v5619, %v5621
    %v5623 = vadd.f32 %v5619, %v5622
    %vm5624 = vweird.f32 %v5618
    %vm5625 = vweird.f32 %v5619
    %vm5626 = vmor %vm5624, %vm5625
    %v5627 = vsel %vm5626, %v5619, %v5623
    %v5628 = vand.u32 2147483647, %v5618
    %vm5629 = vcmp.eq.f32.partialorder %v5628, 8.507059e+37
    %v5630 = vand.u32 %v5618, 2147483648
    %v5631 = vor.u32 1.1754944e-38, %v5630
    %v5632 = vsel %vm5629, %v5631, %v5627
    %v5633 = vmul.f32 %v5608, %v5632
    %v5634 = vmin.f32 %v5633, 1.0
    %v5635 = vmax.f32 %v5634, -1.0
    %v5636 = vmul.f32 %v5425, %v5425
    %v5637 = vmin.f32 16.0, %v5636
    %v5638 = vmul.f32 %v5637, 2.1237322e-06
    %v5639 = vadd.f32 %v5638, 0.00028619796
    %v5640 = vmul.f32 %v5637, %v5639
    %v5641 = vadd.f32 %v5640, 0.0036580483
    %v5642 = vmul.f32 %v5637, %v5641
    %v5643 = vadd.f32 %v5642, 0.05243302
    %v5644 = vmul.f32 %v5637, %v5643
    %v5645 = vadd.f32 %v5644, 0.18741608
    %v5646 = vmul.f32 %v5637, %v5645
    %v5647 = vadd.f32 %v5646, 1.1283791
    %v5648 = vmul.f32 %v5425, %v5647
    %v5649 = vmul.f32 %v5637, 3.8918573e-05
    %v5650 = vadd.f32 %v5649, 0.001143296
    %v5651 = vmul.f32 %v5637, %v5650
    %v5652 = vadd.f32 %v5651, 0.014752088
    %v5653 = vmul.f32 %v5637, %v5652
    %v5654 = vadd.f32 %v5653, 0.112945676
    %v5655 = vmul.f32 %v5637, %v5654
    %v5656 = vadd.f32 %v5655, 0.4994258
    %v5657 = vmul.f32 %v5637, %v5656
    %v5658 = vadd.f32 %v5657, 1.0
    %v5659 = vrcp.pop %v5658
    %v5660 = vmul.f32 %v5658, %v5659
    %v5661 = vsub.f32 1.0, %v5660
    %v5662 = vmul.f32 %v5659, %v5661
    %v5663 = vadd.f32 %v5659, %v5662
    %vm5664 = vweird.f32 %v5658
    %vm5665 = vweird.f32 %v5659
    %vm5666 = vmor %vm5664, %vm5665
    %v5667 = vsel %vm5666, %v5659, %v5663
    %v5668 = vand.u32 2147483647, %v5658
    %vm5669 = vcmp.eq.f32.partialorder %v5668, 8.507059e+37
    %v5670 = vand.u32 %v5658, 2147483648
    %v5671 = vor.u32 1.1754944e-38, %v5670
    %v5672 = vsel %vm5669, %v5671, %v5667
    %v5673 = vmul.f32 %v5648, %v5672
    %v5674 = vmin.f32 %v5673, 1.0
    %v5675 = vmax.f32 %v5674, -1.0
    %v5676 = vmul.f32 %v5426, %v5426
    %v5677 = vmin.f32 16.0, %v5676
    %v5678 = vmul.f32 %v5677, 2.1237322e-06
    %v5679 = vadd.f32 %v5678, 0.00028619796
    %v5680 = vmul.f32 %v5677, %v5679
    %v5681 = vadd.f32 %v5680, 0.0036580483
    %v5682 = vmul.f32 %v5677, %v5681
    %v5683 = vadd.f32 %v5682, 0.05243302
    %v5684 = vmul.f32 %v5677, %v5683
    %v5685 = vadd.f32 %v5684, 0.18741608
    %v5686 = vmul.f32 %v5677, %v5685
    %v5687 = vadd.f32 %v5686, 1.1283791
    %v5688 = vmul.f32 %v5426, %v5687
    %v5689 = vmul.f32 %v5677, 3.8918573e-05
    %v5690 = vadd.f32 %v5689, 0.001143296
    %v5691 = vmul.f32 %v5677, %v5690
    %v5692 = vadd.f32 %v5691, 0.014752088
    %v5693 = vmul.f32 %v5677, %v5692
    %v5694 = vadd.f32 %v5693, 0.112945676
    %v5695 = vmul.f32 %v5677, %v5694
    %v5696 = vadd.f32 %v5695, 0.4994258
    %v5697 = vmul.f32 %v5677, %v5696
    %v5698 = vadd.f32 %v5697, 1.0
    %v5699 = vrcp.pop %v5698
    %v5700 = vmul.f32 %v5698, %v5699
    %v5701 = vsub.f32 1.0, %v5700
    %v5702 = vmul.f32 %v5699, %v5701
    %v5703 = vadd.f32 %v5699, %v5702
    %vm5704 = vweird.f32 %v5698
    %vm5705 = vweird.f32 %v5699
    %vm5706 = vmor %vm5704, %vm5705
    %v5707 = vsel %vm5706, %v5699, %v5703
    %v5708 = vand.u32 2147483647, %v5698
    %vm5709 = vcmp.eq.f32.partialorder %v5708, 8.507059e+37
    %v5710 = vand.u32 %v5698, 2147483648
    %v5711 = vor.u32 1.1754944e-38, %v5710
    %v5712 = vsel %vm5709, %v5711, %v5707
    %v5713 = vmul.f32 %v5688, %v5712
    %v5714 = vmin.f32 %v5713, 1.0
    %v5715 = vmax.f32 %v5714, -1.0
    %v5716 = vmul.f32 %v5427, %v5427
    %v5717 = vmin.f32 16.0, %v5716
    %v5718 = vmul.f32 %v5717, 2.1237322e-06
    %v5719 = vadd.f32 %v5718, 0.00028619796
    %v5720 = vmul.f32 %v5717, %v5719
    %v5721 = vadd.f32 %v5720, 0.0036580483
    %v5722 = vmul.f32 %v5717, %v5721
    %v5723 = vadd.f32 %v5722, 0.05243302
    %v5724 = vmul.f32 %v5717, %v5723
    %v5725 = vadd.f32 %v5724, 0.18741608
    %v5726 = vmul.f32 %v5717, %v5725
    %v5727 = vadd.f32 %v5726, 1.1283791
    %v5728 = vmul.f32 %v5427, %v5727
    %v5729 = vmul.f32 %v5717, 3.8918573e-05
    %v5730 = vadd.f32 %v5729, 0.001143296
    %v5731 = vmul.f32 %v5717, %v5730
    %v5732 = vadd.f32 %v5731, 0.014752088
    %v5733 = vmul.f32 %v5717, %v5732
    %v5734 = vadd.f32 %v5733, 0.112945676
    %v5735 = vmul.f32 %v5717, %v5734
    %v5736 = vadd.f32 %v5735, 0.4994258
    %v5737 = vmul.f32 %v5717, %v5736
    %v5738 = vadd.f32 %v5737, 1.0
    %v5739 = vrcp.pop %v5738
    %v5740 = vmul.f32 %v5738, %v5739
    %v5741 = vsub.f32 1.0, %v5740
    %v5742 = vmul.f32 %v5739, %v5741
    %v5743 = vadd.f32 %v5739, %v5742
    %vm5744 = vweird.f32 %v5738
    %vm5745 = vweird.f32 %v5739
    %vm5746 = vmor %vm5744, %vm5745
    %v5747 = vsel %vm5746, %v5739, %v5743
    %v5748 = vand.u32 2147483647, %v5738
    %vm5749 = vcmp.eq.f32.partialorder %v5748, 8.507059e+37
    %v5750 = vand.u32 %v5738, 2147483648
    %v5751 = vor.u32 1.1754944e-38, %v5750
    %v5752 = vsel %vm5749, %v5751, %v5747
    %v5753 = vmul.f32 %v5728, %v5752
    %v5754 = vmin.f32 %v5753, 1.0
    %v5755 = vmax.f32 %v5754, -1.0
    %v5756 = vmul.f32 %v5428, %v5428
    %v5757 = vmin.f32 16.0, %v5756
    %v5758 = vmul.f32 %v5757, 2.1237322e-06
    %v5759 = vadd.f32 %v5758, 0.00028619796
    %v5760 = vmul.f32 %v5757, %v5759
    %v5761 = vadd.f32 %v5760, 0.0036580483
    %v5762 = vmul.f32 %v5757, %v5761
    %v5763 = vadd.f32 %v5762, 0.05243302
    %v5764 = vmul.f32 %v5757, %v5763
    %v5765 = vadd.f32 %v5764, 0.18741608
    %v5766 = vmul.f32 %v5757, %v5765
    %v5767 = vadd.f32 %v5766, 1.1283791
    %v5768 = vmul.f32 %v5428, %v5767
    %v5769 = vmul.f32 %v5757, 3.8918573e-05
    %v5770 = vadd.f32 %v5769, 0.001143296
    %v5771 = vmul.f32 %v5757, %v5770
    %v5772 = vadd.f32 %v5771, 0.014752088
    %v5773 = vmul.f32 %v5757, %v5772
    %v5774 = vadd.f32 %v5773, 0.112945676
    %v5775 = vmul.f32 %v5757, %v5774
    %v5776 = vadd.f32 %v5775, 0.4994258
    %v5777 = vmul.f32 %v5757, %v5776
    %v5778 = vadd.f32 %v5777, 1.0
    %v5779 = vrcp.pop %v5778
    %v5780 = vmul.f32 %v5778, %v5779
    %v5781 = vsub.f32 1.0, %v5780
    %v5782 = vmul.f32 %v5779, %v5781
    %v5783 = vadd.f32 %v5779, %v5782
    %vm5784 = vweird.f32 %v5778
    %vm5785 = vweird.f32 %v5779
    %vm5786 = vmor %vm5784, %vm5785
    %v5787 = vsel %vm5786, %v5779, %v5783
    %v5788 = vand.u32 2147483647, %v5778
    %vm5789 = vcmp.eq.f32.partialorder %v5788, 8.507059e+37
    %v5790 = vand.u32 %v5778, 2147483648
    %v5791 = vor.u32 1.1754944e-38, %v5790
    %v5792 = vsel %vm5789, %v5791, %v5787
    %v5793 = vmul.f32 %v5768, %v5792
    %v5794 = vmin.f32 %v5793, 1.0
    %v5795 = vmax.f32 %v5794, -1.0
    %v5796 = vmul.f32 %v5429, %v5429
    %v5797 = vmin.f32 16.0, %v5796
    %v5798 = vmul.f32 %v5797, 2.1237322e-06
    %v5799 = vadd.f32 %v5798, 0.00028619796
    %v5800 = vmul.f32 %v5797, %v5799
    %v5801 = vadd.f32 %v5800, 0.0036580483
    %v5802 = vmul.f32 %v5797, %v5801
    %v5803 = vadd.f32 %v5802, 0.05243302
    %v5804 = vmul.f32 %v5797, %v5803
    %v5805 = vadd.f32 %v5804, 0.18741608
    %v5806 = vmul.f32 %v5797, %v5805
    %v5807 = vadd.f32 %v5806, 1.1283791
    %v5808 = vmul.f32 %v5429, %v5807
    %v5809 = vmul.f32 %v5797, 3.8918573e-05
    %v5810 = vadd.f32 %v5809, 0.001143296
    %v5811 = vmul.f32 %v5797, %v5810
    %v5812 = vadd.f32 %v5811, 0.014752088
    %v5813 = vmul.f32 %v5797, %v5812
    %v5814 = vadd.f32 %v5813, 0.112945676
    %v5815 = vmul.f32 %v5797, %v5814
    %v5816 = vadd.f32 %v5815, 0.4994258
    %v5817 = vmul.f32 %v5797, %v5816
    %v5818 = vadd.f32 %v5817, 1.0
    %v5819 = vrcp.pop %v5818
    %v5820 = vmul.f32 %v5818, %v5819
    %v5821 = vsub.f32 1.0, %v5820
    %v5822 = vmul.f32 %v5819, %v5821
    %v5823 = vadd.f32 %v5819, %v5822
    %vm5824 = vweird.f32 %v5818
    %vm5825 = vweird.f32 %v5819
    %vm5826 = vmor %vm5824, %vm5825
    %v5827 = vsel %vm5826, %v5819, %v5823
    %v5828 = vand.u32 2147483647, %v5818
    %vm5829 = vcmp.eq.f32.partialorder %v5828, 8.507059e+37
    %v5830 = vand.u32 %v5818, 2147483648
    %v5831 = vor.u32 1.1754944e-38, %v5830
    %v5832 = vsel %vm5829, %v5831, %v5827
    %v5833 = vmul.f32 %v5808, %v5832
    %v5834 = vmin.f32 %v5833, 1.0
    %v5835 = vmax.f32 %v5834, -1.0
    %v5836 = vmul.f32 %v5430, %v5430
    %v5837 = vmin.f32 16.0, %v5836
    %v5838 = vmul.f32 %v5837, 2.1237322e-06
    %v5839 = vadd.f32 %v5838, 0.00028619796
    %v5840 = vmul.f32 %v5837, %v5839
    %v5841 = vadd.f32 %v5840, 0.0036580483
    %v5842 = vmul.f32 %v5837, %v5841
    %v5843 = vadd.f32 %v5842, 0.05243302
    %v5844 = vmul.f32 %v5837, %v5843
    %v5845 = vadd.f32 %v5844, 0.18741608
    %v5846 = vmul.f32 %v5837, %v5845
    %v5847 = vadd.f32 %v5846, 1.1283791
    %v5848 = vmul.f32 %v5430, %v5847
    %v5849 = vmul.f32 %v5837, 3.8918573e-05
    %v5850 = vadd.f32 %v5849, 0.001143296
    %v5851 = vmul.f32 %v5837, %v5850
    %v5852 = vadd.f32 %v5851, 0.014752088
    %v5853 = vmul.f32 %v5837, %v5852
    %v5854 = vadd.f32 %v5853, 0.112945676
    %v5855 = vmul.f32 %v5837, %v5854
    %v5856 = vadd.f32 %v5855, 0.4994258
    %v5857 = vmul.f32 %v5837, %v5856
    %v5858 = vadd.f32 %v5857, 1.0
    %v5859 = vrcp.pop %v5858
    %v5860 = vmul.f32 %v5858, %v5859
    %v5861 = vsub.f32 1.0, %v5860
    %v5862 = vmul.f32 %v5859, %v5861
    %v5863 = vadd.f32 %v5859, %v5862
    %vm5864 = vweird.f32 %v5858
    %vm5865 = vweird.f32 %v5859
    %vm5866 = vmor %vm5864, %vm5865
    %v5867 = vsel %vm5866, %v5859, %v5863
    %v5868 = vand.u32 2147483647, %v5858
    %vm5869 = vcmp.eq.f32.partialorder %v5868, 8.507059e+37
    %v5870 = vand.u32 %v5858, 2147483648
    %v5871 = vor.u32 1.1754944e-38, %v5870
    %v5872 = vsel %vm5869, %v5871, %v5867
    %v5873 = vmul.f32 %v5848, %v5872
    %v5874 = vmin.f32 %v5873, 1.0
    %v5875 = vmax.f32 %v5874, -1.0
    %v5876 = vmul.f32 %v5431, %v5431
    %v5877 = vmin.f32 16.0, %v5876
    %v5878 = vmul.f32 %v5877, 2.1237322e-06
    %v5879 = vadd.f32 %v5878, 0.00028619796
    %v5880 = vmul.f32 %v5877, %v5879
    %v5881 = vadd.f32 %v5880, 0.0036580483
    %v5882 = vmul.f32 %v5877, %v5881
    %v5883 = vadd.f32 %v5882, 0.05243302
    %v5884 = vmul.f32 %v5877, %v5883
    %v5885 = vadd.f32 %v5884, 0.18741608
    %v5886 = vmul.f32 %v5877, %v5885
    %v5887 = vadd.f32 %v5886, 1.1283791
    %v5888 = vmul.f32 %v5431, %v5887
    %v5889 = vmul.f32 %v5877, 3.8918573e-05
    %v5890 = vadd.f32 %v5889, 0.001143296
    %v5891 = vmul.f32 %v5877, %v5890
    %v5892 = vadd.f32 %v5891, 0.014752088
    %v5893 = vmul.f32 %v5877, %v5892
    %v5894 = vadd.f32 %v5893, 0.112945676
    %v5895 = vmul.f32 %v5877, %v5894
    %v5896 = vadd.f32 %v5895, 0.4994258
    %v5897 = vmul.f32 %v5877, %v5896
    %v5898 = vadd.f32 %v5897, 1.0
    %v5899 = vrcp.pop %v5898
    %v5900 = vmul.f32 %v5898, %v5899
    %v5901 = vsub.f32 1.0, %v5900
    %v5902 = vmul.f32 %v5899, %v5901
    %v5903 = vadd.f32 %v5899, %v5902
    %vm5904 = vweird.f32 %v5898
    %vm5905 = vweird.f32 %v5899
    %vm5906 = vmor %vm5904, %vm5905
    %v5907 = vsel %vm5906, %v5899, %v5903
    %v5908 = vand.u32 2147483647, %v5898
    %vm5909 = vcmp.eq.f32.partialorder %v5908, 8.507059e+37
    %v5910 = vand.u32 %v5898, 2147483648
    %v5911 = vor.u32 1.1754944e-38, %v5910
    %v5912 = vsel %vm5909, %v5911, %v5907
    %v5913 = vmul.f32 %v5888, %v5912
    %v5914 = vmin.f32 %v5913, 1.0
    %v5915 = vmax.f32 %v5914, -1.0
    %v5916 = vmul.f32 %v5432, %v5432
    %v5917 = vmin.f32 16.0, %v5916
    %v5918 = vmul.f32 %v5917, 2.1237322e-06
    %v5919 = vadd.f32 %v5918, 0.00028619796
    %v5920 = vmul.f32 %v5917, %v5919
    %v5921 = vadd.f32 %v5920, 0.0036580483
    %v5922 = vmul.f32 %v5917, %v5921
    %v5923 = vadd.f32 %v5922, 0.05243302
    %v5924 = vmul.f32 %v5917, %v5923
    %v5925 = vadd.f32 %v5924, 0.18741608
    %v5926 = vmul.f32 %v5917, %v5925
    %v5927 = vadd.f32 %v5926, 1.1283791
    %v5928 = vmul.f32 %v5432, %v5927
    %v5929 = vmul.f32 %v5917, 3.8918573e-05
    %v5930 = vadd.f32 %v5929, 0.001143296
    %v5931 = vmul.f32 %v5917, %v5930
    %v5932 = vadd.f32 %v5931, 0.014752088
    %v5933 = vmul.f32 %v5917, %v5932
    %v5934 = vadd.f32 %v5933, 0.112945676
    %v5935 = vmul.f32 %v5917, %v5934
    %v5936 = vadd.f32 %v5935, 0.4994258
    %v5937 = vmul.f32 %v5917, %v5936
    %v5938 = vadd.f32 %v5937, 1.0
    %v5939 = vrcp.pop %v5938
    %v5940 = vmul.f32 %v5938, %v5939
    %v5941 = vsub.f32 1.0, %v5940
    %v5942 = vmul.f32 %v5939, %v5941
    %v5943 = vadd.f32 %v5939, %v5942
    %vm5944 = vweird.f32 %v5938
    %vm5945 = vweird.f32 %v5939
    %vm5946 = vmor %vm5944, %vm5945
    %v5947 = vsel %vm5946, %v5939, %v5943
    %v5948 = vand.u32 2147483647, %v5938
    %vm5949 = vcmp.eq.f32.partialorder %v5948, 8.507059e+37
    %v5950 = vand.u32 %v5938, 2147483648
    %v5951 = vor.u32 1.1754944e-38, %v5950
    %v5952 = vsel %vm5949, %v5951, %v5947
    %v5953 = vmul.f32 %v5928, %v5952
    %v5954 = vmin.f32 %v5953, 1.0
    %v5955 = vmax.f32 %v5954, -1.0
    %v5956 = vmul.f32 %v5433, %v5433
    %v5957 = vmin.f32 16.0, %v5956
    %v5958 = vmul.f32 %v5957, 2.1237322e-06
    %v5959 = vadd.f32 %v5958, 0.00028619796
    %v5960 = vmul.f32 %v5957, %v5959
    %v5961 = vadd.f32 %v5960, 0.0036580483
    %v5962 = vmul.f32 %v5957, %v5961
    %v5963 = vadd.f32 %v5962, 0.05243302
    %v5964 = vmul.f32 %v5957, %v5963
    %v5965 = vadd.f32 %v5964, 0.18741608
    %v5966 = vmul.f32 %v5957, %v5965
    %v5967 = vadd.f32 %v5966, 1.1283791
    %v5968 = vmul.f32 %v5433, %v5967
    %v5969 = vmul.f32 %v5957, 3.8918573e-05
    %v5970 = vadd.f32 %v5969, 0.001143296
    %v5971 = vmul.f32 %v5957, %v5970
    %v5972 = vadd.f32 %v5971, 0.014752088
    %v5973 = vmul.f32 %v5957, %v5972
    %v5974 = vadd.f32 %v5973, 0.112945676
    %v5975 = vmul.f32 %v5957, %v5974
    %v5976 = vadd.f32 %v5975, 0.4994258
    %v5977 = vmul.f32 %v5957, %v5976
    %v5978 = vadd.f32 %v5977, 1.0
    %v5979 = vrcp.pop %v5978
    %v5980 = vmul.f32 %v5978, %v5979
    %v5981 = vsub.f32 1.0, %v5980
    %v5982 = vmul.f32 %v5979, %v5981
    %v5983 = vadd.f32 %v5979, %v5982
    %vm5984 = vweird.f32 %v5978
    %vm5985 = vweird.f32 %v5979
    %vm5986 = vmor %vm5984, %vm5985
    %v5987 = vsel %vm5986, %v5979, %v5983
    %v5988 = vand.u32 2147483647, %v5978
    %vm5989 = vcmp.eq.f32.partialorder %v5988, 8.507059e+37
    %v5990 = vand.u32 %v5978, 2147483648
    %v5991 = vor.u32 1.1754944e-38, %v5990
    %v5992 = vsel %vm5989, %v5991, %v5987
    %v5993 = vmul.f32 %v5968, %v5992
    %v5994 = vmin.f32 %v5993, 1.0
    %v5995 = vmax.f32 %v5994, -1.0
    %v5996 = vmul.f32 %v5434, %v5434
    %v5997 = vmin.f32 16.0, %v5996
    %v5998 = vmul.f32 %v5997, 2.1237322e-06
    %v5999 = vadd.f32 %v5998, 0.00028619796
    %v6000 = vmul.f32 %v5997, %v5999
    %v6001 = vadd.f32 %v6000, 0.0036580483
    %v6002 = vmul.f32 %v5997, %v6001
    %v6003 = vadd.f32 %v6002, 0.05243302
    %v6004 = vmul.f32 %v5997, %v6003
    %v6005 = vadd.f32 %v6004, 0.18741608
    %v6006 = vmul.f32 %v5997, %v6005
    %v6007 = vadd.f32 %v6006, 1.1283791
    %v6008 = vmul.f32 %v5434, %v6007
    %v6009 = vmul.f32 %v5997, 3.8918573e-05
    %v6010 = vadd.f32 %v6009, 0.001143296
    %v6011 = vmul.f32 %v5997, %v6010
    %v6012 = vadd.f32 %v6011, 0.014752088
    %v6013 = vmul.f32 %v5997, %v6012
    %v6014 = vadd.f32 %v6013, 0.112945676
    %v6015 = vmul.f32 %v5997, %v6014
    %v6016 = vadd.f32 %v6015, 0.4994258
    %v6017 = vmul.f32 %v5997, %v6016
    %v6018 = vadd.f32 %v6017, 1.0
    %v6019 = vrcp.pop %v6018
    %v6020 = vmul.f32 %v6018, %v6019
    %v6021 = vsub.f32 1.0, %v6020
    %v6022 = vmul.f32 %v6019, %v6021
    %v6023 = vadd.f32 %v6019, %v6022
    %vm6024 = vweird.f32 %v6018
    %vm6025 = vweird.f32 %v6019
    %vm6026 = vmor %vm6024, %vm6025
    %v6027 = vsel %vm6026, %v6019, %v6023
    %v6028 = vand.u32 2147483647, %v6018
    %vm6029 = vcmp.eq.f32.partialorder %v6028, 8.507059e+37
    %v6030 = vand.u32 %v6018, 2147483648
    %v6031 = vor.u32 1.1754944e-38, %v6030
    %v6032 = vsel %vm6029, %v6031, %v6027
    %v6033 = vmul.f32 %v6008, %v6032
    %v6034 = vmin.f32 %v6033, 1.0
    %v6035 = vmax.f32 %v6034, -1.0
    %v6036 = vmul.f32 %v5435, %v5435
    %v6037 = vmin.f32 16.0, %v6036
    %v6038 = vmul.f32 %v6037, 2.1237322e-06
    %v6039 = vadd.f32 %v6038, 0.00028619796
    %v6040 = vmul.f32 %v6037, %v6039
    %v6041 = vadd.f32 %v6040, 0.0036580483
    %v6042 = vmul.f32 %v6037, %v6041
    %v6043 = vadd.f32 %v6042, 0.05243302
    %v6044 = vmul.f32 %v6037, %v6043
    %v6045 = vadd.f32 %v6044, 0.18741608
    %v6046 = vmul.f32 %v6037, %v6045
    %v6047 = vadd.f32 %v6046, 1.1283791
    %v6048 = vmul.f32 %v5435, %v6047
    %v6049 = vmul.f32 %v6037, 3.8918573e-05
    %v6050 = vadd.f32 %v6049, 0.001143296
    %v6051 = vmul.f32 %v6037, %v6050
    %v6052 = vadd.f32 %v6051, 0.014752088
    %v6053 = vmul.f32 %v6037, %v6052
    %v6054 = vadd.f32 %v6053, 0.112945676
    %v6055 = vmul.f32 %v6037, %v6054
    %v6056 = vadd.f32 %v6055, 0.4994258
    %v6057 = vmul.f32 %v6037, %v6056
    %v6058 = vadd.f32 %v6057, 1.0
    %v6059 = vrcp.pop %v6058
    %v6060 = vmul.f32 %v6058, %v6059
    %v6061 = vsub.f32 1.0, %v6060
    %v6062 = vmul.f32 %v6059, %v6061
    %v6063 = vadd.f32 %v6059, %v6062
    %vm6064 = vweird.f32 %v6058
    %vm6065 = vweird.f32 %v6059
    %vm6066 = vmor %vm6064, %vm6065
    %v6067 = vsel %vm6066, %v6059, %v6063
    %v6068 = vand.u32 2147483647, %v6058
    %vm6069 = vcmp.eq.f32.partialorder %v6068, 8.507059e+37
    %v6070 = vand.u32 %v6058, 2147483648
    %v6071 = vor.u32 1.1754944e-38, %v6070
    %v6072 = vsel %vm6069, %v6071, %v6067
    %v6073 = vmul.f32 %v6048, %v6072
    %v6074 = vmin.f32 %v6073, 1.0
    %v6075 = vmax.f32 %v6074, -1.0
    %v6076 = vadd.f32 %v5475, 1.0
    %v6077 = vadd.f32 %v5515, 1.0
    %v6078 = vadd.f32 %v5555, 1.0
    %v6079 = vadd.f32 %v5595, 1.0
    %v6080 = vadd.f32 %v5635, 1.0
    %v6081 = vadd.f32 %v5675, 1.0
    %v6082 = vadd.f32 %v5715, 1.0
    %v6083 = vadd.f32 %v5755, 1.0
    %v6084 = vadd.f32 %v5795, 1.0
    %v6085 = vadd.f32 %v5835, 1.0
    %v6086 = vadd.f32 %v5875, 1.0
    %v6087 = vadd.f32 %v5915, 1.0
    %v6088 = vadd.f32 %v5955, 1.0
    %v6089 = vadd.f32 %v5995, 1.0
    %v6090 = vadd.f32 %v6035, 1.0
    %v6091 = vadd.f32 %v6075, 1.0
    %v6092 = vmul.f32 %v5404, %v6076
    %v6093 = vmul.f32 %v5405, %v6077
    %v6094 = vmul.f32 %v5406, %v6078
    %v6095 = vmul.f32 %v5407, %v6079
    %v6096 = vmul.f32 %v5408, %v6080
    %v6097 = vmul.f32 %v5409, %v6081
    %v6098 = vmul.f32 %v5410, %v6082
    %v6099 = vmul.f32 %v5411, %v6083
    %v6100 = vmul.f32 %v5412, %v6084
    %v6101 = vmul.f32 %v5413, %v6085
    %v6102 = vmul.f32 %v5414, %v6086
    %v6103 = vmul.f32 %v5415, %v6087
    %v6104 = vmul.f32 %v5416, %v6088
    %v6105 = vmul.f32 %v5417, %v6089
    %v6106 = vmul.f32 %v5418, %v6090
    %v6107 = vmul.f32 %v5419, %v6091
    %v6124 = vrot.slane %v4651, 7
    %v6125 = vrot.slane %v4652, 6
    %v6126 = vrot.slane %v4653, 5
    %v6127 = vrot.slane %v4655, 7
    %v6128 = vrot.slane %v4656, 6
    %v6129 = vrot.slane %v4657, 5
    %v6130 = vrot.slane %v4659, 7
    %v6131 = vrot.slane %v4660, 6
    %v6132 = vrot.slane %v4661, 5
    %v6133 = vrot.slane %v4663, 7
    %v6134 = vrot.slane %v4664, 6
    %v6135 = vrot.slane %v4665, 5
    %v6136 = vsel %vm530, %v4650, %v6124
    %v6137 = vsel %vm2170, %v6125, %v6126
    %v6138 = vsel %vm2446, %v6136, %v6137
    %v6139 = vsel %vm2167, %v4650, %v6124
    %v6140 = vsel %vm2173, %v6125, %v6126
    %vm6141 = vcmask 1042433
    %v6142 = vsel %vm6141, %v6139, %v6140
    %v6143 = vrot.slane %v6142, 1
    %v6144 = vsel %vm2170, %v4650, %v6124
    %v6145 = vsel %vm2176, %v6125, %v6126
    %vm6146 = vcmask 1043458
    %v6147 = vsel %vm6146, %v6144, %v6145
    %v6148 = vrot.slane %v6147, 2
    %v6149 = vsel %vm2173, %v4650, %v6124
    %v6150 = vsel %vm2179, %v6125, %v6126
    %vm6151 = vcmask 1044483
    %v6152 = vsel %vm6151, %v6149, %v6150
    %v6153 = vrot.slane %v6152, 3
    %v6154 = vsel %vm2176, %v4650, %v6124
    %v6155 = vsel %vm2182, %v6125, %v6126
    %vm6156 = vcmask 1045508
    %v6157 = vsel %vm6156, %v6154, %v6155
    %v6158 = vrot.slane %v6157, 4
    %v6159 = vsel %vm2179, %v4650, %v6124
    %v6160 = vsel %vm1461, %v6126, %v6125
    %vm6161 = vcmask 1046533
    %v6162 = vsel %vm6161, %v6159, %v6160
    %v6163 = vrot.slane %v6162, 5
    %v6164 = vsel %vm2182, %v4650, %v6124
    %v6165 = vsel %vm530, %v6125, %v6126
    %vm6166 = vcmask 1045504
    %v6167 = vsel %vm6166, %v6165, %v6164
    %v6168 = vrot.slane %v6167, 6
    %v6169 = vsel %vm1461, %v6124, %v4650
    %v6170 = vsel %vm2167, %v6125, %v6126
    %vm6171 = vcmask 1046529
    %v6172 = vsel %vm6171, %v6170, %v6169
    %v6173 = vrot.slane %v6172, 7
    %v6174 = vsel %vm530, %v4654, %v6127
    %v6175 = vsel %vm2170, %v6128, %v6129
    %v6176 = vsel %vm2446, %v6174, %v6175
    %v6177 = vsel %vm2167, %v4654, %v6127
    %v6178 = vsel %vm2173, %v6128, %v6129
    %v6179 = vsel %vm6141, %v6177, %v6178
    %v6180 = vrot.slane %v6179, 1
    %v6181 = vsel %vm2170, %v4654, %v6127
    %v6182 = vsel %vm2176, %v6128, %v6129
    %v6183 = vsel %vm6146, %v6181, %v6182
    %v6184 = vrot.slane %v6183, 2
    %v6185 = vsel %vm2173, %v4654, %v6127
    %v6186 = vsel %vm2179, %v6128, %v6129
    %v6187 = vsel %vm6151, %v6185, %v6186
    %v6188 = vrot.slane %v6187, 3
    %v6189 = vsel %vm2176, %v4654, %v6127
    %v6190 = vsel %vm2182, %v6128, %v6129
    %v6191 = vsel %vm6156, %v6189, %v6190
    %v6192 = vrot.slane %v6191, 4
    %v6193 = vsel %vm2179, %v4654, %v6127
    %v6194 = vsel %vm1461, %v6129, %v6128
    %v6195 = vsel %vm6161, %v6193, %v6194
    %v6196 = vrot.slane %v6195, 5
    %v6197 = vsel %vm2182, %v4654, %v6127
    %v6198 = vsel %vm530, %v6128, %v6129
    %v6199 = vsel %vm6166, %v6198, %v6197
    %v6200 = vrot.slane %v6199, 6
    %v6201 = vsel %vm1461, %v6127, %v4654
    %v6202 = vsel %vm2167, %v6128, %v6129
    %v6203 = vsel %vm6171, %v6202, %v6201
    %v6204 = vrot.slane %v6203, 7
    %v6205 = vsel %vm530, %v4658, %v6130
    %v6206 = vsel %vm2170, %v6131, %v6132
    %v6207 = vsel %vm2446, %v6205, %v6206
    %v6208 = vsel %vm2167, %v4658, %v6130
    %v6209 = vsel %vm2173, %v6131, %v6132
    %v6210 = vsel %vm6141, %v6208, %v6209
    %v6211 = vrot.slane %v6210, 1
    %v6212 = vsel %vm2170, %v4658, %v6130
    %v6213 = vsel %vm2176, %v6131, %v6132
    %v6214 = vsel %vm6146, %v6212, %v6213
    %v6215 = vrot.slane %v6214, 2
    %v6216 = vsel %vm2173, %v4658, %v6130
    %v6217 = vsel %vm2179, %v6131, %v6132
    %v6218 = vsel %vm6151, %v6216, %v6217
    %v6219 = vrot.slane %v6218, 3
    %v6220 = vsel %vm2176, %v4658, %v6130
    %v6221 = vsel %vm2182, %v6131, %v6132
    %v6222 = vsel %vm6156, %v6220, %v6221
    %v6223 = vrot.slane %v6222, 4
    %v6224 = vsel %vm2179, %v4658, %v6130
    %v6225 = vsel %vm1461, %v6132, %v6131
    %v6226 = vsel %vm6161, %v6224, %v6225
    %v6227 = vrot.slane %v6226, 5
    %v6228 = vsel %vm2182, %v4658, %v6130
    %v6229 = vsel %vm530, %v6131, %v6132
    %v6230 = vsel %vm6166, %v6229, %v6228
    %v6231 = vrot.slane %v6230, 6
    %v6232 = vsel %vm1461, %v6130, %v4658
    %v6233 = vsel %vm2167, %v6131, %v6132
    %v6234 = vsel %vm6171, %v6233, %v6232
    %v6235 = vrot.slane %v6234, 7
    %v6236 = vsel %vm530, %v4662, %v6133
    %v6237 = vsel %vm2170, %v6134, %v6135
    %v6238 = vsel %vm2446, %v6236, %v6237
    %v6239 = vsel %vm2167, %v4662, %v6133
    %v6240 = vsel %vm2173, %v6134, %v6135
    %v6241 = vsel %vm6141, %v6239, %v6240
    %v6242 = vrot.slane %v6241, 1
    %v6243 = vsel %vm2170, %v4662, %v6133
    %v6244 = vsel %vm2176, %v6134, %v6135
    %v6245 = vsel %vm6146, %v6243, %v6244
    %v6246 = vrot.slane %v6245, 2
    %v6247 = vsel %vm2173, %v4662, %v6133
    %v6248 = vsel %vm2179, %v6134, %v6135
    %v6249 = vsel %vm6151, %v6247, %v6248
    %v6250 = vrot.slane %v6249, 3
    %v6251 = vsel %vm2176, %v4662, %v6133
    %v6252 = vsel %vm2182, %v6134, %v6135
    %v6253 = vsel %vm6156, %v6251, %v6252
    %v6254 = vrot.slane %v6253, 4
    %v6255 = vsel %vm2179, %v4662, %v6133
    %v6256 = vsel %vm1461, %v6135, %v6134
    %v6257 = vsel %vm6161, %v6255, %v6256
    %v6258 = vrot.slane %v6257, 5
    %v6259 = vsel %vm2182, %v4662, %v6133
    %v6260 = vsel %vm530, %v6134, %v6135
    %v6261 = vsel %vm6166, %v6260, %v6259
    %v6262 = vrot.slane %v6261, 6
    %v6263 = vsel %vm1461, %v6133, %v4662
    %v6264 = vsel %vm2167, %v6134, %v6135
    %v6265 = vsel %vm6171, %v6264, %v6263
    %v6266 = vrot.slane %v6265, 7
    %v6283 = vrot.slane %v6093, 7
    %v6284 = vrot.slane %v6094, 6
    %v6285 = vrot.slane %v6095, 5
    %v6286 = vrot.slane %v6097, 7
    %v6287 = vrot.slane %v6098, 6
    %v6288 = vrot.slane %v6099, 5
    %v6289 = vrot.slane %v6101, 7
    %v6290 = vrot.slane %v6102, 6
    %v6291 = vrot.slane %v6103, 5
    %v6292 = vrot.slane %v6105, 7
    %v6293 = vrot.slane %v6106, 6
    %v6294 = vrot.slane %v6107, 5
    %v6295 = vsel %vm530, %v6092, %v6283
    %v6296 = vsel %vm2170, %v6284, %v6285
    %v6297 = vsel %vm2446, %v6295, %v6296
    %v6298 = vsel %vm2167, %v6092, %v6283
    %v6299 = vsel %vm2173, %v6284, %v6285
    %v6300 = vsel %vm6141, %v6298, %v6299
    %v6301 = vrot.slane %v6300, 1
    %v6302 = vsel %vm2170, %v6092, %v6283
    %v6303 = vsel %vm2176, %v6284, %v6285
    %v6304 = vsel %vm6146, %v6302, %v6303
    %v6305 = vrot.slane %v6304, 2
    %v6306 = vsel %vm2173, %v6092, %v6283
    %v6307 = vsel %vm2179, %v6284, %v6285
    %v6308 = vsel %vm6151, %v6306, %v6307
    %v6309 = vrot.slane %v6308, 3
    %v6310 = vsel %vm2176, %v6092, %v6283
    %v6311 = vsel %vm2182, %v6284, %v6285
    %v6312 = vsel %vm6156, %v6310, %v6311
    %v6313 = vrot.slane %v6312, 4
    %v6314 = vsel %vm2179, %v6092, %v6283
    %v6315 = vsel %vm1461, %v6285, %v6284
    %v6316 = vsel %vm6161, %v6314, %v6315
    %v6317 = vrot.slane %v6316, 5
    %v6318 = vsel %vm2182, %v6092, %v6283
    %v6319 = vsel %vm530, %v6284, %v6285
    %v6320 = vsel %vm6166, %v6319, %v6318
    %v6321 = vrot.slane %v6320, 6
    %v6322 = vsel %vm1461, %v6283, %v6092
    %v6323 = vsel %vm2167, %v6284, %v6285
    %v6324 = vsel %vm6171, %v6323, %v6322
    %v6325 = vrot.slane %v6324, 7
    %v6326 = vsel %vm530, %v6096, %v6286
    %v6327 = vsel %vm2170, %v6287, %v6288
    %v6328 = vsel %vm2446, %v6326, %v6327
    %v6329 = vsel %vm2167, %v6096, %v6286
    %v6330 = vsel %vm2173, %v6287, %v6288
    %v6331 = vsel %vm6141, %v6329, %v6330
    %v6332 = vrot.slane %v6331, 1
    %v6333 = vsel %vm2170, %v6096, %v6286
    %v6334 = vsel %vm2176, %v6287, %v6288
    %v6335 = vsel %vm6146, %v6333, %v6334
    %v6336 = vrot.slane %v6335, 2
    %v6337 = vsel %vm2173, %v6096, %v6286
    %v6338 = vsel %vm2179, %v6287, %v6288
    %v6339 = vsel %vm6151, %v6337, %v6338
    %v6340 = vrot.slane %v6339, 3
    %v6341 = vsel %vm2176, %v6096, %v6286
    %v6342 = vsel %vm2182, %v6287, %v6288
    %v6343 = vsel %vm6156, %v6341, %v6342
    %v6344 = vrot.slane %v6343, 4
    %v6345 = vsel %vm2179, %v6096, %v6286
    %v6346 = vsel %vm1461, %v6288, %v6287
    %v6347 = vsel %vm6161, %v6345, %v6346
    %v6348 = vrot.slane %v6347, 5
    %v6349 = vsel %vm2182, %v6096, %v6286
    %v6350 = vsel %vm530, %v6287, %v6288
    %v6351 = vsel %vm6166, %v6350, %v6349
    %v6352 = vrot.slane %v6351, 6
    %v6353 = vsel %vm1461, %v6286, %v6096
    %v6354 = vsel %vm2167, %v6287, %v6288
    %v6355 = vsel %vm6171, %v6354, %v6353
    %v6356 = vrot.slane %v6355, 7
    %v6357 = vsel %vm530, %v6100, %v6289
    %v6358 = vsel %vm2170, %v6290, %v6291
    %v6359 = vsel %vm2446, %v6357, %v6358
    %v6360 = vsel %vm2167, %v6100, %v6289
    %v6361 = vsel %vm2173, %v6290, %v6291
    %v6362 = vsel %vm6141, %v6360, %v6361
    %v6363 = vrot.slane %v6362, 1
    %v6364 = vsel %vm2170, %v6100, %v6289
    %v6365 = vsel %vm2176, %v6290, %v6291
    %v6366 = vsel %vm6146, %v6364, %v6365
    %v6367 = vrot.slane %v6366, 2
    %v6368 = vsel %vm2173, %v6100, %v6289
    %v6369 = vsel %vm2179, %v6290, %v6291
    %v6370 = vsel %vm6151, %v6368, %v6369
    %v6371 = vrot.slane %v6370, 3
    %v6372 = vsel %vm2176, %v6100, %v6289
    %v6373 = vsel %vm2182, %v6290, %v6291
    %v6374 = vsel %vm6156, %v6372, %v6373
    %v6375 = vrot.slane %v6374, 4
    %v6376 = vsel %vm2179, %v6100, %v6289
    %v6377 = vsel %vm1461, %v6291, %v6290
    %v6378 = vsel %vm6161, %v6376, %v6377
    %v6379 = vrot.slane %v6378, 5
    %v6380 = vsel %vm2182, %v6100, %v6289
    %v6381 = vsel %vm530, %v6290, %v6291
    %v6382 = vsel %vm6166, %v6381, %v6380
    %v6383 = vrot.slane %v6382, 6
    %v6384 = vsel %vm1461, %v6289, %v6100
    %v6385 = vsel %vm2167, %v6290, %v6291
    %v6386 = vsel %vm6171, %v6385, %v6384
    %v6387 = vrot.slane %v6386, 7
    %v6388 = vsel %vm530, %v6104, %v6292
    %v6389 = vsel %vm2170, %v6293, %v6294
    %v6390 = vsel %vm2446, %v6388, %v6389
    %v6391 = vsel %vm2167, %v6104, %v6292
    %v6392 = vsel %vm2173, %v6293, %v6294
    %v6393 = vsel %vm6141, %v6391, %v6392
    %v6394 = vrot.slane %v6393, 1
    %v6395 = vsel %vm2170, %v6104, %v6292
    %v6396 = vsel %vm2176, %v6293, %v6294
    %v6397 = vsel %vm6146, %v6395, %v6396
    %v6398 = vrot.slane %v6397, 2
    %v6399 = vsel %vm2173, %v6104, %v6292
    %v6400 = vsel %vm2179, %v6293, %v6294
    %v6401 = vsel %vm6151, %v6399, %v6400
    %v6402 = vrot.slane %v6401, 3
    %v6403 = vsel %vm2176, %v6104, %v6292
    %v6404 = vsel %vm2182, %v6293, %v6294
    %v6405 = vsel %vm6156, %v6403, %v6404
    %v6406 = vrot.slane %v6405, 4
    %v6407 = vsel %vm2179, %v6104, %v6292
    %v6408 = vsel %vm1461, %v6294, %v6293
    %v6409 = vsel %vm6161, %v6407, %v6408
    %v6410 = vrot.slane %v6409, 5
    %v6411 = vsel %vm2182, %v6104, %v6292
    %v6412 = vsel %vm530, %v6293, %v6294
    %v6413 = vsel %vm6166, %v6412, %v6411
    %v6414 = vrot.slane %v6413, 6
    %v6415 = vsel %vm1461, %v6292, %v6104
    %v6416 = vsel %vm2167, %v6293, %v6294
    %v6417 = vsel %vm6171, %v6416, %v6415
    %v6418 = vrot.slane %v6417, 7
    %v6419 = vperm.slane %v6138, 0
    %v6420 = vperm.slane %v6138, 1
    %v6421 = vperm.slane %v6138, 2
    %v6422 = vperm.slane %v6138, 3
    %v6423 = vperm.slane %v6143, 0
    %v6424 = vperm.slane %v6143, 1
    %v6425 = vperm.slane %v6143, 2
    %v6426 = vperm.slane %v6143, 3
    %v6427 = vperm.slane %v6148, 0
    %v6428 = vperm.slane %v6148, 1
    %v6429 = vperm.slane %v6148, 2
    %v6430 = vperm.slane %v6148, 3
    %v6431 = vperm.slane %v6153, 0
    %v6432 = vperm.slane %v6153, 1
    %v6433 = vperm.slane %v6153, 2
    %v6434 = vperm.slane %v6153, 3
    %v6435 = vperm.slane %v6158, 0
    %v6436 = vperm.slane %v6158, 1
    %v6437 = vperm.slane %v6158, 2
    %v6438 = vperm.slane %v6158, 3
    %v6439 = vperm.slane %v6163, 0
    %v6440 = vperm.slane %v6163, 1
    %v6441 = vperm.slane %v6163, 2
    %v6442 = vperm.slane %v6163, 3
    %v6443 = vperm.slane %v6168, 0
    %v6444 = vperm.slane %v6168, 1
    %v6445 = vperm.slane %v6168, 2
    %v6446 = vperm.slane %v6168, 3
    %v6447 = vperm.slane %v6173, 0
    %v6448 = vperm.slane %v6173, 1
    %v6449 = vperm.slane %v6173, 2
    %v6450 = vperm.slane %v6173, 3
    %v6451 = vperm.slane %v6176, 0
    %v6452 = vperm.slane %v6176, 1
    %v6453 = vperm.slane %v6176, 2
    %v6454 = vperm.slane %v6176, 3
    %v6455 = vperm.slane %v6180, 0
    %v6456 = vperm.slane %v6180, 1
    %v6457 = vperm.slane %v6180, 2
    %v6458 = vperm.slane %v6180, 3
    %v6459 = vperm.slane %v6184, 0
    %v6460 = vperm.slane %v6184, 1
    %v6461 = vperm.slane %v6184, 2
    %v6462 = vperm.slane %v6184, 3
    %v6463 = vperm.slane %v6188, 0
    %v6464 = vperm.slane %v6188, 1
    %v6465 = vperm.slane %v6188, 2
    %v6466 = vperm.slane %v6188, 3
    %v6467 = vperm.slane %v6192, 0
    %v6468 = vperm.slane %v6192, 1
    %v6469 = vperm.slane %v6192, 2
    %v6470 = vperm.slane %v6192, 3
    %v6471 = vperm.slane %v6196, 0
    %v6472 = vperm.slane %v6196, 1
    %v6473 = vperm.slane %v6196, 2
    %v6474 = vperm.slane %v6196, 3
    %v6475 = vperm.slane %v6200, 0
    %v6476 = vperm.slane %v6200, 1
    %v6477 = vperm.slane %v6200, 2
    %v6478 = vperm.slane %v6200, 3
    %v6479 = vperm.slane %v6204, 0
    %v6480 = vperm.slane %v6204, 1
    %v6481 = vperm.slane %v6204, 2
    %v6482 = vperm.slane %v6204, 3
    %v6483 = vperm.slane %v6207, 0
    %v6484 = vperm.slane %v6207, 1
    %v6485 = vperm.slane %v6207, 2
    %v6486 = vperm.slane %v6207, 3
    %v6487 = vperm.slane %v6211, 0
    %v6488 = vperm.slane %v6211, 1
    %v6489 = vperm.slane %v6211, 2
    %v6490 = vperm.slane %v6211, 3
    %v6491 = vperm.slane %v6215, 0
    %v6492 = vperm.slane %v6215, 1
    %v6493 = vperm.slane %v6215, 2
    %v6494 = vperm.slane %v6215, 3
    %v6495 = vperm.slane %v6219, 0
    %v6496 = vperm.slane %v6219, 1
    %v6497 = vperm.slane %v6219, 2
    %v6498 = vperm.slane %v6219, 3
    %v6499 = vperm.slane %v6223, 0
    %v6500 = vperm.slane %v6223, 1
    %v6501 = vperm.slane %v6223, 2
    %v6502 = vperm.slane %v6223, 3
    %v6503 = vperm.slane %v6227, 0
    %v6504 = vperm.slane %v6227, 1
    %v6505 = vperm.slane %v6227, 2
    %v6506 = vperm.slane %v6227, 3
    %v6507 = vperm.slane %v6231, 0
    %v6508 = vperm.slane %v6231, 1
    %v6509 = vperm.slane %v6231, 2
    %v6510 = vperm.slane %v6231, 3
    %v6511 = vperm.slane %v6235, 0
    %v6512 = vperm.slane %v6235, 1
    %v6513 = vperm.slane %v6235, 2
    %v6514 = vperm.slane %v6235, 3
    %v6515 = vperm.slane %v6238, 0
    %v6516 = vperm.slane %v6238, 1
    %v6517 = vperm.slane %v6238, 2
    %v6518 = vperm.slane %v6238, 3
    %v6519 = vperm.slane %v6242, 0
    %v6520 = vperm.slane %v6242, 1
    %v6521 = vperm.slane %v6242, 2
    %v6522 = vperm.slane %v6242, 3
    %v6523 = vperm.slane %v6246, 0
    %v6524 = vperm.slane %v6246, 1
    %v6525 = vperm.slane %v6246, 2
    %v6526 = vperm.slane %v6246, 3
    %v6527 = vperm.slane %v6250, 0
    %v6528 = vperm.slane %v6250, 1
    %v6529 = vperm.slane %v6250, 2
    %v6530 = vperm.slane %v6250, 3
    %v6531 = vperm.slane %v6254, 0
    %v6532 = vperm.slane %v6254, 1
    %v6533 = vperm.slane %v6254, 2
    %v6534 = vperm.slane %v6254, 3
    %v6535 = vperm.slane %v6258, 0
    %v6536 = vperm.slane %v6258, 1
    %v6537 = vperm.slane %v6258, 2
    %v6538 = vperm.slane %v6258, 3
    %v6539 = vperm.slane %v6262, 0
    %v6540 = vperm.slane %v6262, 1
    %v6541 = vperm.slane %v6262, 2
    %v6542 = vperm.slane %v6262, 3
    %v6543 = vperm.slane %v6266, 0
    %v6544 = vperm.slane %v6266, 1
    %v6545 = vperm.slane %v6266, 2
    %v6546 = vperm.slane %v6266, 3
    %v6675 = vperm.slane %v6297, 0
    %v6676 = vperm.slane %v6297, 1
    %v6677 = vperm.slane %v6297, 2
    %v6678 = vperm.slane %v6297, 3
    %v6679 = vperm.slane %v6301, 0
    %v6680 = vperm.slane %v6301, 1
    %v6681 = vperm.slane %v6301, 2
    %v6682 = vperm.slane %v6301, 3
    %v6683 = vperm.slane %v6305, 0
    %v6684 = vperm.slane %v6305, 1
    %v6685 = vperm.slane %v6305, 2
    %v6686 = vperm.slane %v6305, 3
    %v6687 = vperm.slane %v6309, 0
    %v6688 = vperm.slane %v6309, 1
    %v6689 = vperm.slane %v6309, 2
    %v6690 = vperm.slane %v6309, 3
    %v6691 = vperm.slane %v6313, 0
    %v6692 = vperm.slane %v6313, 1
    %v6693 = vperm.slane %v6313, 2
    %v6694 = vperm.slane %v6313, 3
    %v6695 = vperm.slane %v6317, 0
    %v6696 = vperm.slane %v6317, 1
    %v6697 = vperm.slane %v6317, 2
    %v6698 = vperm.slane %v6317, 3
    %v6699 = vperm.slane %v6321, 0
    %v6700 = vperm.slane %v6321, 1
    %v6701 = vperm.slane %v6321, 2
    %v6702 = vperm.slane %v6321, 3
    %v6703 = vperm.slane %v6325, 0
    %v6704 = vperm.slane %v6325, 1
    %v6705 = vperm.slane %v6325, 2
    %v6706 = vperm.slane %v6325, 3
    %v6707 = vperm.slane %v6328, 0
    %v6708 = vperm.slane %v6328, 1
    %v6709 = vperm.slane %v6328, 2
    %v6710 = vperm.slane %v6328, 3
    %v6711 = vperm.slane %v6332, 0
    %v6712 = vperm.slane %v6332, 1
    %v6713 = vperm.slane %v6332, 2
    %v6714 = vperm.slane %v6332, 3
    %v6715 = vperm.slane %v6336, 0
    %v6716 = vperm.slane %v6336, 1
    %v6717 = vperm.slane %v6336, 2
    %v6718 = vperm.slane %v6336, 3
    %v6719 = vperm.slane %v6340, 0
    %v6720 = vperm.slane %v6340, 1
    %v6721 = vperm.slane %v6340, 2
    %v6722 = vperm.slane %v6340, 3
    %v6723 = vperm.slane %v6344, 0
    %v6724 = vperm.slane %v6344, 1
    %v6725 = vperm.slane %v6344, 2
    %v6726 = vperm.slane %v6344, 3
    %v6727 = vperm.slane %v6348, 0
    %v6728 = vperm.slane %v6348, 1
    %v6729 = vperm.slane %v6348, 2
    %v6730 = vperm.slane %v6348, 3
    %v6731 = vperm.slane %v6352, 0
    %v6732 = vperm.slane %v6352, 1
    %v6733 = vperm.slane %v6352, 2
    %v6734 = vperm.slane %v6352, 3
    %v6735 = vperm.slane %v6356, 0
    %v6736 = vperm.slane %v6356, 1
    %v6737 = vperm.slane %v6356, 2
    %v6738 = vperm.slane %v6356, 3
    %v6739 = vperm.slane %v6359, 0
    %v6740 = vperm.slane %v6359, 1
    %v6741 = vperm.slane %v6359, 2
    %v6742 = vperm.slane %v6359, 3
    %v6743 = vperm.slane %v6363, 0
    %v6744 = vperm.slane %v6363, 1
    %v6745 = vperm.slane %v6363, 2
    %v6746 = vperm.slane %v6363, 3
    %v6747 = vperm.slane %v6367, 0
    %v6748 = vperm.slane %v6367, 1
    %v6749 = vperm.slane %v6367, 2
    %v6750 = vperm.slane %v6367, 3
    %v6751 = vperm.slane %v6371, 0
    %v6752 = vperm.slane %v6371, 1
    %v6753 = vperm.slane %v6371, 2
    %v6754 = vperm.slane %v6371, 3
    %v6755 = vperm.slane %v6375, 0
    %v6756 = vperm.slane %v6375, 1
    %v6757 = vperm.slane %v6375, 2
    %v6758 = vperm.slane %v6375, 3
    %v6759 = vperm.slane %v6379, 0
    %v6760 = vperm.slane %v6379, 1
    %v6761 = vperm.slane %v6379, 2
    %v6762 = vperm.slane %v6379, 3
    %v6763 = vperm.slane %v6383, 0
    %v6764 = vperm.slane %v6383, 1
    %v6765 = vperm.slane %v6383, 2
    %v6766 = vperm.slane %v6383, 3
    %v6767 = vperm.slane %v6387, 0
    %v6768 = vperm.slane %v6387, 1
    %v6769 = vperm.slane %v6387, 2
    %v6770 = vperm.slane %v6387, 3
    %v6771 = vperm.slane %v6390, 0
    %v6772 = vperm.slane %v6390, 1
    %v6773 = vperm.slane %v6390, 2
    %v6774 = vperm.slane %v6390, 3
    %v6775 = vperm.slane %v6394, 0
    %v6776 = vperm.slane %v6394, 1
    %v6777 = vperm.slane %v6394, 2
    %v6778 = vperm.slane %v6394, 3
    %v6779 = vperm.slane %v6398, 0
    %v6780 = vperm.slane %v6398, 1
    %v6781 = vperm.slane %v6398, 2
    %v6782 = vperm.slane %v6398, 3
    %v6783 = vperm.slane %v6402, 0
    %v6784 = vperm.slane %v6402, 1
    %v6785 = vperm.slane %v6402, 2
    %v6786 = vperm.slane %v6402, 3
    %v6787 = vperm.slane %v6406, 0
    %v6788 = vperm.slane %v6406, 1
    %v6789 = vperm.slane %v6406, 2
    %v6790 = vperm.slane %v6406, 3
    %v6791 = vperm.slane %v6410, 0
    %v6792 = vperm.slane %v6410, 1
    %v6793 = vperm.slane %v6410, 2
    %v6794 = vperm.slane %v6410, 3
    %v6795 = vperm.slane %v6414, 0
    %v6796 = vperm.slane %v6414, 1
    %v6797 = vperm.slane %v6414, 2
    %v6798 = vperm.slane %v6414, 3
    %v6799 = vperm.slane %v6418, 0
    %v6800 = vperm.slane %v6418, 1
    %v6801 = vperm.slane %v6418, 2
    %v6802 = vperm.slane %v6418, 3
    %v6931 = vsel %vm530, %v6419, %v6675
    %v6932 = vsel %vm530, %v6420, %v6676
    %v6933 = vsel %vm530, %v6421, %v6677
    %v6934 = vsel %vm530, %v6422, %v6678
    %v6935 = vsel %vm530, %v6423, %v6679
    %v6936 = vsel %vm530, %v6424, %v6680
    %v6937 = vsel %vm530, %v6425, %v6681
    %v6938 = vsel %vm530, %v6426, %v6682
    %v6939 = vsel %vm530, %v6427, %v6683
    %v6940 = vsel %vm530, %v6428, %v6684
    %v6941 = vsel %vm530, %v6429, %v6685
    %v6942 = vsel %vm530, %v6430, %v6686
    %v6943 = vsel %vm530, %v6431, %v6687
    %v6944 = vsel %vm530, %v6432, %v6688
    %v6945 = vsel %vm530, %v6433, %v6689
    %v6946 = vsel %vm530, %v6434, %v6690
    %v6947 = vsel %vm530, %v6435, %v6691
    %v6948 = vsel %vm530, %v6436, %v6692
    %v6949 = vsel %vm530, %v6437, %v6693
    %v6950 = vsel %vm530, %v6438, %v6694
    %v6951 = vsel %vm530, %v6439, %v6695
    %v6952 = vsel %vm530, %v6440, %v6696
    %v6953 = vsel %vm530, %v6441, %v6697
    %v6954 = vsel %vm530, %v6442, %v6698
    %v6955 = vsel %vm530, %v6443, %v6699
    %v6956 = vsel %vm530, %v6444, %v6700
    %v6957 = vsel %vm530, %v6445, %v6701
    %v6958 = vsel %vm530, %v6446, %v6702
    %v6959 = vsel %vm530, %v6447, %v6703
    %v6960 = vsel %vm530, %v6448, %v6704
    %v6961 = vsel %vm530, %v6449, %v6705
    %v6962 = vsel %vm530, %v6450, %v6706
    %v6963 = vsel %vm530, %v6451, %v6707
    %v6964 = vsel %vm530, %v6452, %v6708
    %v6965 = vsel %vm530, %v6453, %v6709
    %v6966 = vsel %vm530, %v6454, %v6710
    %v6967 = vsel %vm530, %v6455, %v6711
    %v6968 = vsel %vm530, %v6456, %v6712
    %v6969 = vsel %vm530, %v6457, %v6713
    %v6970 = vsel %vm530, %v6458, %v6714
    %v6971 = vsel %vm530, %v6459, %v6715
    %v6972 = vsel %vm530, %v6460, %v6716
    %v6973 = vsel %vm530, %v6461, %v6717
    %v6974 = vsel %vm530, %v6462, %v6718
    %v6975 = vsel %vm530, %v6463, %v6719
    %v6976 = vsel %vm530, %v6464, %v6720
    %v6977 = vsel %vm530, %v6465, %v6721
    %v6978 = vsel %vm530, %v6466, %v6722
    %v6979 = vsel %vm530, %v6467, %v6723
    %v6980 = vsel %vm530, %v6468, %v6724
    %v6981 = vsel %vm530, %v6469, %v6725
    %v6982 = vsel %vm530, %v6470, %v6726
    %v6983 = vsel %vm530, %v6471, %v6727
    %v6984 = vsel %vm530, %v6472, %v6728
    %v6985 = vsel %vm530, %v6473, %v6729
    %v6986 = vsel %vm530, %v6474, %v6730
    %v6987 = vsel %vm530, %v6475, %v6731
    %v6988 = vsel %vm530, %v6476, %v6732
    %v6989 = vsel %vm530, %v6477, %v6733
    %v6990 = vsel %vm530, %v6478, %v6734
    %v6991 = vsel %vm530, %v6479, %v6735
    %v6992 = vsel %vm530, %v6480, %v6736
    %v6993 = vsel %vm530, %v6481, %v6737
    %v6994 = vsel %vm530, %v6482, %v6738
    %v6995 = vsel %vm530, %v6483, %v6739
    %v6996 = vsel %vm530, %v6484, %v6740
    %v6997 = vsel %vm530, %v6485, %v6741
    %v6998 = vsel %vm530, %v6486, %v6742
    %v6999 = vsel %vm530, %v6487, %v6743
    %v7000 = vsel %vm530, %v6488, %v6744
    %v7001 = vsel %vm530, %v6489, %v6745
    %v7002 = vsel %vm530, %v6490, %v6746
    %v7003 = vsel %vm530, %v6491, %v6747
    %v7004 = vsel %vm530, %v6492, %v6748
    %v7005 = vsel %vm530, %v6493, %v6749
    %v7006 = vsel %vm530, %v6494, %v6750
    %v7007 = vsel %vm530, %v6495, %v6751
    %v7008 = vsel %vm530, %v6496, %v6752
    %v7009 = vsel %vm530, %v6497, %v6753
    %v7010 = vsel %vm530, %v6498, %v6754
    %v7011 = vsel %vm530, %v6499, %v6755
    %v7012 = vsel %vm530, %v6500, %v6756
    %v7013 = vsel %vm530, %v6501, %v6757
    %v7014 = vsel %vm530, %v6502, %v6758
    %v7015 = vsel %vm530, %v6503, %v6759
    %v7016 = vsel %vm530, %v6504, %v6760
    %v7017 = vsel %vm530, %v6505, %v6761
    %v7018 = vsel %vm530, %v6506, %v6762
    %v7019 = vsel %vm530, %v6507, %v6763
    %v7020 = vsel %vm530, %v6508, %v6764
    %v7021 = vsel %vm530, %v6509, %v6765
    %v7022 = vsel %vm530, %v6510, %v6766
    %v7023 = vsel %vm530, %v6511, %v6767
    %v7024 = vsel %vm530, %v6512, %v6768
    %v7025 = vsel %vm530, %v6513, %v6769
    %v7026 = vsel %vm530, %v6514, %v6770
    %v7027 = vsel %vm530, %v6515, %v6771
    %v7028 = vsel %vm530, %v6516, %v6772
    %v7029 = vsel %vm530, %v6517, %v6773
    %v7030 = vsel %vm530, %v6518, %v6774
    %v7031 = vsel %vm530, %v6519, %v6775
    %v7032 = vsel %vm530, %v6520, %v6776
    %v7033 = vsel %vm530, %v6521, %v6777
    %v7034 = vsel %vm530, %v6522, %v6778
    %v7035 = vsel %vm530, %v6523, %v6779
    %v7036 = vsel %vm530, %v6524, %v6780
    %v7037 = vsel %vm530, %v6525, %v6781
    %v7038 = vsel %vm530, %v6526, %v6782
    %v7039 = vsel %vm530, %v6527, %v6783
    %v7040 = vsel %vm530, %v6528, %v6784
    %v7041 = vsel %vm530, %v6529, %v6785
    %v7042 = vsel %vm530, %v6530, %v6786
    %v7043 = vsel %vm530, %v6531, %v6787
    %v7044 = vsel %vm530, %v6532, %v6788
    %v7045 = vsel %vm530, %v6533, %v6789
    %v7046 = vsel %vm530, %v6534, %v6790
    %v7047 = vsel %vm530, %v6535, %v6791
    %v7048 = vsel %vm530, %v6536, %v6792
    %v7049 = vsel %vm530, %v6537, %v6793
    %v7050 = vsel %vm530, %v6538, %v6794
    %v7051 = vsel %vm530, %v6539, %v6795
    %v7052 = vsel %vm530, %v6540, %v6796
    %v7053 = vsel %vm530, %v6541, %v6797
    %v7054 = vsel %vm530, %v6542, %v6798
    %v7055 = vsel %vm530, %v6543, %v6799
    %v7056 = vsel %vm530, %v6544, %v6800
    %v7057 = vsel %vm530, %v6545, %v6801
    %v7058 = vsel %vm530, %v6546, %v6802
    %v7187 = vrot.slane %v6932, 6
    %v7188 = vrot.slane %v6933, 4
    %v7189 = vrot.slane %v6934, 2
    %v7190 = vrot.slane %v6936, 6
    %v7191 = vrot.slane %v6937, 4
    %v7192 = vrot.slane %v6938, 2
    %v7193 = vrot.slane %v6940, 6
    %v7194 = vrot.slane %v6941, 4
    %v7195 = vrot.slane %v6942, 2
    %v7196 = vrot.slane %v6944, 6
    %v7197 = vrot.slane %v6945, 4
    %v7198 = vrot.slane %v6946, 2
    %v7199 = vrot.slane %v6948, 6
    %v7200 = vrot.slane %v6949, 4
    %v7201 = vrot.slane %v6950, 2
    %v7202 = vrot.slane %v6952, 6
    %v7203 = vrot.slane %v6953, 4
    %v7204 = vrot.slane %v6954, 2
    %v7205 = vrot.slane %v6956, 6
    %v7206 = vrot.slane %v6957, 4
    %v7207 = vrot.slane %v6958, 2
    %v7208 = vrot.slane %v6960, 6
    %v7209 = vrot.slane %v6961, 4
    %v7210 = vrot.slane %v6962, 2
    %v7211 = vrot.slane %v6964, 6
    %v7212 = vrot.slane %v6965, 4
    %v7213 = vrot.slane %v6966, 2
    %v7214 = vrot.slane %v6968, 6
    %v7215 = vrot.slane %v6969, 4
    %v7216 = vrot.slane %v6970, 2
    %v7217 = vrot.slane %v6972, 6
    %v7218 = vrot.slane %v6973, 4
    %v7219 = vrot.slane %v6974, 2
    %v7220 = vrot.slane %v6976, 6
    %v7221 = vrot.slane %v6977, 4
    %v7222 = vrot.slane %v6978, 2
    %v7223 = vrot.slane %v6980, 6
    %v7224 = vrot.slane %v6981, 4
    %v7225 = vrot.slane %v6982, 2
    %v7226 = vrot.slane %v6984, 6
    %v7227 = vrot.slane %v6985, 4
    %v7228 = vrot.slane %v6986, 2
    %v7229 = vrot.slane %v6988, 6
    %v7230 = vrot.slane %v6989, 4
    %v7231 = vrot.slane %v6990, 2
    %v7232 = vrot.slane %v6992, 6
    %v7233 = vrot.slane %v6993, 4
    %v7234 = vrot.slane %v6994, 2
    %v7235 = vrot.slane %v6996, 6
    %v7236 = vrot.slane %v6997, 4
    %v7237 = vrot.slane %v6998, 2
    %v7238 = vrot.slane %v7000, 6
    %v7239 = vrot.slane %v7001, 4
    %v7240 = vrot.slane %v7002, 2
    %v7241 = vrot.slane %v7004, 6
    %v7242 = vrot.slane %v7005, 4
    %v7243 = vrot.slane %v7006, 2
    %v7244 = vrot.slane %v7008, 6
    %v7245 = vrot.slane %v7009, 4
    %v7246 = vrot.slane %v7010, 2
    %v7247 = vrot.slane %v7012, 6
    %v7248 = vrot.slane %v7013, 4
    %v7249 = vrot.slane %v7014, 2
    %v7250 = vrot.slane %v7016, 6
    %v7251 = vrot.slane %v7017, 4
    %v7252 = vrot.slane %v7018, 2
    %v7253 = vrot.slane %v7020, 6
    %v7254 = vrot.slane %v7021, 4
    %v7255 = vrot.slane %v7022, 2
    %v7256 = vrot.slane %v7024, 6
    %v7257 = vrot.slane %v7025, 4
    %v7258 = vrot.slane %v7026, 2
    %v7259 = vrot.slane %v7028, 6
    %v7260 = vrot.slane %v7029, 4
    %v7261 = vrot.slane %v7030, 2
    %v7262 = vrot.slane %v7032, 6
    %v7263 = vrot.slane %v7033, 4
    %v7264 = vrot.slane %v7034, 2
    %v7265 = vrot.slane %v7036, 6
    %v7266 = vrot.slane %v7037, 4
    %v7267 = vrot.slane %v7038, 2
    %v7268 = vrot.slane %v7040, 6
    %v7269 = vrot.slane %v7041, 4
    %v7270 = vrot.slane %v7042, 2
    %v7271 = vrot.slane %v7044, 6
    %v7272 = vrot.slane %v7045, 4
    %v7273 = vrot.slane %v7046, 2
    %v7274 = vrot.slane %v7048, 6
    %v7275 = vrot.slane %v7049, 4
    %v7276 = vrot.slane %v7050, 2
    %v7277 = vrot.slane %v7052, 6
    %v7278 = vrot.slane %v7053, 4
    %v7279 = vrot.slane %v7054, 2
    %v7280 = vrot.slane %v7056, 6
    %v7281 = vrot.slane %v7057, 4
    %v7282 = vrot.slane %v7058, 2
    %v7283 = vsel %vm2446, %v6931, %v7187
    %v7284 = vsel %vm6156, %v7188, %v7189
    %vm7285 = vcmask 1043456
    %v7286 = vsel %vm7285, %v7283, %v7284
    %v7287 = vsel %vm2446, %v6935, %v7190
    %v7288 = vsel %vm6156, %v7191, %v7192
    %v7289 = vsel %vm7285, %v7287, %v7288
    %v7290 = vsel %vm2446, %v6939, %v7193
    %v7291 = vsel %vm6156, %v7194, %v7195
    %v7292 = vsel %vm7285, %v7290, %v7291
    %v7293 = vsel %vm2446, %v6943, %v7196
    %v7294 = vsel %vm6156, %v7197, %v7198
    %v7295 = vsel %vm7285, %v7293, %v7294
    %v7296 = vsel %vm2446, %v6947, %v7199
    %v7297 = vsel %vm6156, %v7200, %v7201
    %v7298 = vsel %vm7285, %v7296, %v7297
    %v7299 = vsel %vm2446, %v6951, %v7202
    %v7300 = vsel %vm6156, %v7203, %v7204
    %v7301 = vsel %vm7285, %v7299, %v7300
    %v7302 = vsel %vm2446, %v6955, %v7205
    %v7303 = vsel %vm6156, %v7206, %v7207
    %v7304 = vsel %vm7285, %v7302, %v7303
    %v7305 = vsel %vm2446, %v6959, %v7208
    %v7306 = vsel %vm6156, %v7209, %v7210
    %v7307 = vsel %vm7285, %v7305, %v7306
    %v7308 = vsel %vm2446, %v6963, %v7211
    %v7309 = vsel %vm6156, %v7212, %v7213
    %v7310 = vsel %vm7285, %v7308, %v7309
    %v7311 = vsel %vm2446, %v6967, %v7214
    %v7312 = vsel %vm6156, %v7215, %v7216
    %v7313 = vsel %vm7285, %v7311, %v7312
    %v7314 = vsel %vm2446, %v6971, %v7217
    %v7315 = vsel %vm6156, %v7218, %v7219
    %v7316 = vsel %vm7285, %v7314, %v7315
    %v7317 = vsel %vm2446, %v6975, %v7220
    %v7318 = vsel %vm6156, %v7221, %v7222
    %v7319 = vsel %vm7285, %v7317, %v7318
    %v7320 = vsel %vm2446, %v6979, %v7223
    %v7321 = vsel %vm6156, %v7224, %v7225
    %v7322 = vsel %vm7285, %v7320, %v7321
    %v7323 = vsel %vm2446, %v6983, %v7226
    %v7324 = vsel %vm6156, %v7227, %v7228
    %v7325 = vsel %vm7285, %v7323, %v7324
    %v7326 = vsel %vm2446, %v6987, %v7229
    %v7327 = vsel %vm6156, %v7230, %v7231
    %v7328 = vsel %vm7285, %v7326, %v7327
    %v7329 = vsel %vm2446, %v6991, %v7232
    %v7330 = vsel %vm6156, %v7233, %v7234
    %v7331 = vsel %vm7285, %v7329, %v7330
    %v7332 = vsel %vm2446, %v6995, %v7235
    %v7333 = vsel %vm6156, %v7236, %v7237
    %v7334 = vsel %vm7285, %v7332, %v7333
    %v7335 = vsel %vm2446, %v6999, %v7238
    %v7336 = vsel %vm6156, %v7239, %v7240
    %v7337 = vsel %vm7285, %v7335, %v7336
    %v7338 = vsel %vm2446, %v7003, %v7241
    %v7339 = vsel %vm6156, %v7242, %v7243
    %v7340 = vsel %vm7285, %v7338, %v7339
    %v7341 = vsel %vm2446, %v7007, %v7244
    %v7342 = vsel %vm6156, %v7245, %v7246
    %v7343 = vsel %vm7285, %v7341, %v7342
    %v7344 = vsel %vm2446, %v7011, %v7247
    %v7345 = vsel %vm6156, %v7248, %v7249
    %v7346 = vsel %vm7285, %v7344, %v7345
    %v7347 = vsel %vm2446, %v7015, %v7250
    %v7348 = vsel %vm6156, %v7251, %v7252
    %v7349 = vsel %vm7285, %v7347, %v7348
    %v7350 = vsel %vm2446, %v7019, %v7253
    %v7351 = vsel %vm6156, %v7254, %v7255
    %v7352 = vsel %vm7285, %v7350, %v7351
    %v7353 = vsel %vm2446, %v7023, %v7256
    %v7354 = vsel %vm6156, %v7257, %v7258
    %v7355 = vsel %vm7285, %v7353, %v7354
    %v7356 = vsel %vm2446, %v7027, %v7259
    %v7357 = vsel %vm6156, %v7260, %v7261
    %v7358 = vsel %vm7285, %v7356, %v7357
    %v7359 = vsel %vm2446, %v7031, %v7262
    %v7360 = vsel %vm6156, %v7263, %v7264
    %v7361 = vsel %vm7285, %v7359, %v7360
    %v7362 = vsel %vm2446, %v7035, %v7265
    %v7363 = vsel %vm6156, %v7266, %v7267
    %v7364 = vsel %vm7285, %v7362, %v7363
    %v7365 = vsel %vm2446, %v7039, %v7268
    %v7366 = vsel %vm6156, %v7269, %v7270
    %v7367 = vsel %vm7285, %v7365, %v7366
    %v7368 = vsel %vm2446, %v7043, %v7271
    %v7369 = vsel %vm6156, %v7272, %v7273
    %v7370 = vsel %vm7285, %v7368, %v7369
    %v7371 = vsel %vm2446, %v7047, %v7274
    %v7372 = vsel %vm6156, %v7275, %v7276
    %v7373 = vsel %vm7285, %v7371, %v7372
    %v7374 = vsel %vm2446, %v7051, %v7277
    %v7375 = vsel %vm6156, %v7278, %v7279
    %v7376 = vsel %vm7285, %v7374, %v7375
    %v7377 = vsel %vm2446, %v7055, %v7280
    %v7378 = vsel %vm6156, %v7281, %v7282
    %v7379 = vsel %vm7285, %v7377, %v7378
    %v7380 = vld [vmem:[#allocation31] sm:$0xff]
    %v7381 = vld [vmem:[#allocation31 + $0x8] sm:$0xff]
    %v7382 = vld [vmem:[#allocation31 + $0x10] sm:$0xff]
    %v7383 = vld [vmem:[#allocation31 + $0x18] sm:$0xff]
    %v7384 = vld [vmem:[#allocation31 + $0x20] sm:$0xff]
    %v7385 = vld [vmem:[#allocation31 + $0x28] sm:$0xff]
    %v7386 = vld [vmem:[#allocation31 + $0x30] sm:$0xff]
    %v7387 = vld [vmem:[#allocation31 + $0x38] sm:$0xff]
    %v7388 = vld [vmem:[#allocation31 + $0x40] sm:$0xff]
    %v7389 = vld [vmem:[#allocation31 + $0x48] sm:$0xff]
    %v7390 = vld [vmem:[#allocation31 + $0x50] sm:$0xff]
    %v7391 = vld [vmem:[#allocation31 + $0x58] sm:$0xff]
    %v7392 = vld [vmem:[#allocation31 + $0x60] sm:$0xff]
    %v7393 = vld [vmem:[#allocation31 + $0x68] sm:$0xff]
    %v7394 = vld [vmem:[#allocation31 + $0x70] sm:$0xff]
    %v7395 = vld [vmem:[#allocation31 + $0x78] sm:$0xff]
    %v7396 = vld [vmem:[#allocation31 + $0x80] sm:$0xff]
    %v7397 = vld [vmem:[#allocation31 + $0x88] sm:$0xff]
    %v7398 = vld [vmem:[#allocation31 + $0x90] sm:$0xff]
    %v7399 = vld [vmem:[#allocation31 + $0x98] sm:$0xff]
    %v7400 = vld [vmem:[#allocation31 + $0xa0] sm:$0xff]
    %v7401 = vld [vmem:[#allocation31 + $0xa8] sm:$0xff]
    %v7402 = vld [vmem:[#allocation31 + $0xb0] sm:$0xff]
    %v7403 = vld [vmem:[#allocation31 + $0xb8] sm:$0xff]
    %v7404 = vld [vmem:[#allocation31 + $0xc0] sm:$0xff]
    %v7405 = vld [vmem:[#allocation31 + $0xc8] sm:$0xff]
    %v7406 = vld [vmem:[#allocation31 + $0xd0] sm:$0xff]
    %v7407 = vld [vmem:[#allocation31 + $0xd8] sm:$0xff]
    %v7408 = vld [vmem:[#allocation31 + $0xe0] sm:$0xff]
    %v7409 = vld [vmem:[#allocation31 + $0xe8] sm:$0xff]
    %v7410 = vld [vmem:[#allocation31 + $0xf0] sm:$0xff]
    %v7411 = vld [vmem:[#allocation31 + $0xf8] sm:$0xff]
    %v7412 = vld [vmem:[#allocation31 + $0x100] sm:$0xff]
    %v7413 = vld [vmem:[#allocation31 + $0x108] sm:$0xff]
    %v7414 = vld [vmem:[#allocation31 + $0x110] sm:$0xff]
    %v7415 = vld [vmem:[#allocation31 + $0x118] sm:$0xff]
    %v7416 = vld [vmem:[#allocation31 + $0x120] sm:$0xff]
    %v7417 = vld [vmem:[#allocation31 + $0x128] sm:$0xff]
    %v7418 = vld [vmem:[#allocation31 + $0x130] sm:$0xff]
    %v7419 = vld [vmem:[#allocation31 + $0x138] sm:$0xff]
    %v7420 = vld [vmem:[#allocation31 + $0x140] sm:$0xff]
    %v7421 = vld [vmem:[#allocation31 + $0x148] sm:$0xff]
    %v7422 = vld [vmem:[#allocation31 + $0x150] sm:$0xff]
    %v7423 = vld [vmem:[#allocation31 + $0x158] sm:$0xff]
    %v7424 = vld [vmem:[#allocation31 + $0x160] sm:$0xff]
    %v7425 = vld [vmem:[#allocation31 + $0x168] sm:$0xff]
    %v7426 = vld [vmem:[#allocation31 + $0x170] sm:$0xff]
    %v7427 = vld [vmem:[#allocation31 + $0x178] sm:$0xff]
    %v7428 = vld [vmem:[#allocation31 + $0x180] sm:$0xff]
    %v7429 = vld [vmem:[#allocation31 + $0x188] sm:$0xff]
    %v7430 = vld [vmem:[#allocation31 + $0x190] sm:$0xff]
    %v7431 = vld [vmem:[#allocation31 + $0x198] sm:$0xff]
    %v7432 = vld [vmem:[#allocation31 + $0x1a0] sm:$0xff]
    %v7433 = vld [vmem:[#allocation31 + $0x1a8] sm:$0xff]
    %v7434 = vld [vmem:[#allocation31 + $0x1b0] sm:$0xff]
    %v7435 = vld [vmem:[#allocation31 + $0x1b8] sm:$0xff]
    %v7436 = vld [vmem:[#allocation31 + $0x1c0] sm:$0xff]
    %v7437 = vld [vmem:[#allocation31 + $0x1c8] sm:$0xff]
    %v7438 = vld [vmem:[#allocation31 + $0x1d0] sm:$0xff]
    %v7439 = vld [vmem:[#allocation31 + $0x1d8] sm:$0xff]
    %v7440 = vld [vmem:[#allocation31 + $0x1e0] sm:$0xff]
    %v7441 = vld [vmem:[#allocation31 + $0x1e8] sm:$0xff]
    %v7442 = vld [vmem:[#allocation31 + $0x1f0] sm:$0xff]
    %v7443 = vld [vmem:[#allocation31 + $0x1f8] sm:$0xff]
    %v7444 = vld [vmem:[#allocation31 + $0x200] sm:$0xff]
    %v7445 = vld [vmem:[#allocation31 + $0x208] sm:$0xff]
    %v7446 = vld [vmem:[#allocation31 + $0x210] sm:$0xff]
    %v7447 = vld [vmem:[#allocation31 + $0x218] sm:$0xff]
    %v7448 = vld [vmem:[#allocation31 + $0x220] sm:$0xff]
    %v7449 = vld [vmem:[#allocation31 + $0x228] sm:$0xff]
    %v7450 = vld [vmem:[#allocation31 + $0x230] sm:$0xff]
    %v7451 = vld [vmem:[#allocation31 + $0x238] sm:$0xff]
    %v7452 = vld [vmem:[#allocation31 + $0x240] sm:$0xff]
    %v7453 = vld [vmem:[#allocation31 + $0x248] sm:$0xff]
    %v7454 = vld [vmem:[#allocation31 + $0x250] sm:$0xff]
    %v7455 = vld [vmem:[#allocation31 + $0x258] sm:$0xff]
    %v7456 = vld [vmem:[#allocation31 + $0x260] sm:$0xff]
    %v7457 = vld [vmem:[#allocation31 + $0x268] sm:$0xff]
    %v7458 = vld [vmem:[#allocation31 + $0x270] sm:$0xff]
    %v7459 = vld [vmem:[#allocation31 + $0x278] sm:$0xff]
    %v7460 = vld [vmem:[#allocation31 + $0x280] sm:$0xff]
    %v7461 = vld [vmem:[#allocation31 + $0x288] sm:$0xff]
    %v7462 = vld [vmem:[#allocation31 + $0x290] sm:$0xff]
    %v7463 = vld [vmem:[#allocation31 + $0x298] sm:$0xff]
    %v7464 = vld [vmem:[#allocation31 + $0x2a0] sm:$0xff]
    %v7465 = vld [vmem:[#allocation31 + $0x2a8] sm:$0xff]
    %v7466 = vld [vmem:[#allocation31 + $0x2b0] sm:$0xff]
    %v7467 = vld [vmem:[#allocation31 + $0x2b8] sm:$0xff]
    %v7468 = vld [vmem:[#allocation31 + $0x2c0] sm:$0xff]
    %v7469 = vld [vmem:[#allocation31 + $0x2c8] sm:$0xff]
    %v7470 = vld [vmem:[#allocation31 + $0x2d0] sm:$0xff]
    %v7471 = vld [vmem:[#allocation31 + $0x2d8] sm:$0xff]
    %v7472 = vld [vmem:[#allocation31 + $0x2e0] sm:$0xff]
    %v7473 = vld [vmem:[#allocation31 + $0x2e8] sm:$0xff]
    %v7474 = vld [vmem:[#allocation31 + $0x2f0] sm:$0xff]
    %v7475 = vld [vmem:[#allocation31 + $0x2f8] sm:$0xff]
    %v7476 = vld [vmem:[#allocation31 + $0x300] sm:$0xff]
    %v7477 = vld [vmem:[#allocation31 + $0x308] sm:$0xff]
    %v7478 = vld [vmem:[#allocation31 + $0x310] sm:$0xff]
    %v7479 = vld [vmem:[#allocation31 + $0x318] sm:$0xff]
    %v7480 = vld [vmem:[#allocation31 + $0x320] sm:$0xff]
    %v7481 = vld [vmem:[#allocation31 + $0x328] sm:$0xff]
    %v7482 = vld [vmem:[#allocation31 + $0x330] sm:$0xff]
    %v7483 = vld [vmem:[#allocation31 + $0x338] sm:$0xff]
    %v7484 = vld [vmem:[#allocation31 + $0x340] sm:$0xff]
    %v7485 = vld [vmem:[#allocation31 + $0x348] sm:$0xff]
    %v7486 = vld [vmem:[#allocation31 + $0x350] sm:$0xff]
    %v7487 = vld [vmem:[#allocation31 + $0x358] sm:$0xff]
    %v7488 = vld [vmem:[#allocation31 + $0x360] sm:$0xff]
    %v7489 = vld [vmem:[#allocation31 + $0x368] sm:$0xff]
    %v7490 = vld [vmem:[#allocation31 + $0x370] sm:$0xff]
    %v7491 = vld [vmem:[#allocation31 + $0x378] sm:$0xff]
    %v7492 = vld [vmem:[#allocation31 + $0x380] sm:$0xff]
    %v7493 = vld [vmem:[#allocation31 + $0x388] sm:$0xff]
    %v7494 = vld [vmem:[#allocation31 + $0x390] sm:$0xff]
    %v7495 = vld [vmem:[#allocation31 + $0x398] sm:$0xff]
    %v7496 = vld [vmem:[#allocation31 + $0x3a0] sm:$0xff]
    %v7497 = vld [vmem:[#allocation31 + $0x3a8] sm:$0xff]
    %v7498 = vld [vmem:[#allocation31 + $0x3b0] sm:$0xff]
    %v7499 = vld [vmem:[#allocation31 + $0x3b8] sm:$0xff]
    %v7500 = vld [vmem:[#allocation31 + $0x3c0] sm:$0xff]
    %v7501 = vld [vmem:[#allocation31 + $0x3c8] sm:$0xff]
    %v7502 = vld [vmem:[#allocation31 + $0x3d0] sm:$0xff]
    %v7503 = vld [vmem:[#allocation31 + $0x3d8] sm:$0xff]
    %v7504 = vld [vmem:[#allocation31 + $0x3e0] sm:$0xff]
    %v7505 = vld [vmem:[#allocation31 + $0x3e8] sm:$0xff]
    %v7506 = vld [vmem:[#allocation31 + $0x3f0] sm:$0xff]
    %v7507 = vld [vmem:[#allocation31 + $0x3f8] sm:$0xff]
    %7508 = vst [vmem:[#allocation1] ss:$4 sm:$0xff] %v7286
    %s7509 = scalar_lea.vmem [#allocation1], 1
    %7510 = vst [vmem:[%s7509] ss:$4 sm:$0xff] %v7289
    %s7511 = scalar_lea.vmem [#allocation1], 2
    %7512 = vst [vmem:[%s7511] ss:$4 sm:$0xff] %v7292
    %s7513 = scalar_lea.vmem [#allocation1], 3
    %7514 = vst [vmem:[%s7513] ss:$4 sm:$0xff] %v7295
    %s7515 = scalar_lea.vmem [#allocation1], 32
    %7516 = vst [vmem:[%s7515] ss:$4 sm:$0xff] %v7298
    %s7517 = scalar_lea.vmem [#allocation1], 33
    %7518 = vst [vmem:[%s7517] ss:$4 sm:$0xff] %v7301
    %s7519 = scalar_lea.vmem [#allocation1], 34
    %7520 = vst [vmem:[%s7519] ss:$4 sm:$0xff] %v7304
    %s7521 = scalar_lea.vmem [#allocation1], 35
    %7522 = vst [vmem:[%s7521] ss:$4 sm:$0xff] %v7307
    %v7523 = vld.sshfl [vmem:[#allocation1] sm:$0xff pattern:$0x73625140]
    %v7524 = vld.sshfl [vmem:[#allocation1 + $0x8] sm:$0xff pattern:$0x73625140]
    %v7525 = vld.sshfl [vmem:[#allocation1 + $0x10] sm:$0xff pattern:$0x73625140]
    %v7526 = vld.sshfl [vmem:[#allocation1 + $0x18] sm:$0xff pattern:$0x73625140]
    %v7527 = vld.sshfl [vmem:[#allocation1 + $0x20] sm:$0xff pattern:$0x73625140]
    %v7528 = vld.sshfl [vmem:[#allocation1 + $0x28] sm:$0xff pattern:$0x73625140]
    %v7529 = vld.sshfl [vmem:[#allocation1 + $0x30] sm:$0xff pattern:$0x73625140]
    %v7530 = vld.sshfl [vmem:[#allocation1 + $0x38] sm:$0xff pattern:$0x73625140]
    %7531 = vst [vmem:[#allocation1] ss:$4 sm:$0xff] %v7310
    %7532 = vst [vmem:[%s7509] ss:$4 sm:$0xff] %v7313
    %7533 = vst [vmem:[%s7511] ss:$4 sm:$0xff] %v7316
    %7534 = vst [vmem:[%s7513] ss:$4 sm:$0xff] %v7319
    %7535 = vst [vmem:[%s7515] ss:$4 sm:$0xff] %v7322
    %7536 = vst [vmem:[%s7517] ss:$4 sm:$0xff] %v7325
    %7537 = vst [vmem:[%s7519] ss:$4 sm:$0xff] %v7328
    %7538 = vst [vmem:[%s7521] ss:$4 sm:$0xff] %v7331
    %v7539 = vld.sshfl [vmem:[#allocation1] sm:$0xff pattern:$0x73625140]
    %v7540 = vld.sshfl [vmem:[#allocation1 + $0x8] sm:$0xff pattern:$0x73625140]
    %v7541 = vld.sshfl [vmem:[#allocation1 + $0x10] sm:$0xff pattern:$0x73625140]
    %v7542 = vld.sshfl [vmem:[#allocation1 + $0x18] sm:$0xff pattern:$0x73625140]
    %v7543 = vld.sshfl [vmem:[#allocation1 + $0x20] sm:$0xff pattern:$0x73625140]
    %v7544 = vld.sshfl [vmem:[#allocation1 + $0x28] sm:$0xff pattern:$0x73625140]
    %v7545 = vld.sshfl [vmem:[#allocation1 + $0x30] sm:$0xff pattern:$0x73625140]
    %v7546 = vld.sshfl [vmem:[#allocation1 + $0x38] sm:$0xff pattern:$0x73625140]
    %7547 = vst [vmem:[#allocation1] ss:$4 sm:$0xff] %v7334
    %7548 = vst [vmem:[%s7509] ss:$4 sm:$0xff] %v7337
    %7549 = vst [vmem:[%s7511] ss:$4 sm:$0xff] %v7340
    %7550 = vst [vmem:[%s7513] ss:$4 sm:$0xff] %v7343
    %7551 = vst [vmem:[%s7515] ss:$4 sm:$0xff] %v7346
    %7552 = vst [vmem:[%s7517] ss:$4 sm:$0xff] %v7349
    %7553 = vst [vmem:[%s7519] ss:$4 sm:$0xff] %v7352
    %7554 = vst [vmem:[%s7521] ss:$4 sm:$0xff] %v7355
    %v7555 = vld.sshfl [vmem:[#allocation1] sm:$0xff pattern:$0x73625140]
    %v7556 = vld.sshfl [vmem:[#allocation1 + $0x8] sm:$0xff pattern:$0x73625140]
    %v7557 = vld.sshfl [vmem:[#allocation1 + $0x10] sm:$0xff pattern:$0x73625140]
    %v7558 = vld.sshfl [vmem:[#allocation1 + $0x18] sm:$0xff pattern:$0x73625140]
    %v7559 = vld.sshfl [vmem:[#allocation1 + $0x20] sm:$0xff pattern:$0x73625140]
    %v7560 = vld.sshfl [vmem:[#allocation1 + $0x28] sm:$0xff pattern:$0x73625140]
    %v7561 = vld.sshfl [vmem:[#allocation1 + $0x30] sm:$0xff pattern:$0x73625140]
    %v7562 = vld.sshfl [vmem:[#allocation1 + $0x38] sm:$0xff pattern:$0x73625140]
    %7563 = vst [vmem:[#allocation1] ss:$4 sm:$0xff] %v7358
    %7564 = vst [vmem:[%s7509] ss:$4 sm:$0xff] %v7361
    %7565 = vst [vmem:[%s7511] ss:$4 sm:$0xff] %v7364
    %7566 = vst [vmem:[%s7513] ss:$4 sm:$0xff] %v7367
    %7567 = vst [vmem:[%s7515] ss:$4 sm:$0xff] %v7370
    %7568 = vst [vmem:[%s7517] ss:$4 sm:$0xff] %v7373
    %7569 = vst [vmem:[%s7519] ss:$4 sm:$0xff] %v7376
    %7570 = vst [vmem:[%s7521] ss:$4 sm:$0xff] %v7379
    %v7571 = vld.sshfl [vmem:[#allocation1] sm:$0xff pattern:$0x73625140]
    %v7572 = vld.sshfl [vmem:[#allocation1 + $0x8] sm:$0xff pattern:$0x73625140]
    %v7573 = vld.sshfl [vmem:[#allocation1 + $0x10] sm:$0xff pattern:$0x73625140]
    %v7574 = vld.sshfl [vmem:[#allocation1 + $0x18] sm:$0xff pattern:$0x73625140]
    %v7575 = vld.sshfl [vmem:[#allocation1 + $0x20] sm:$0xff pattern:$0x73625140]
    %v7576 = vld.sshfl [vmem:[#allocation1 + $0x28] sm:$0xff pattern:$0x73625140]
    %v7577 = vld.sshfl [vmem:[#allocation1 + $0x30] sm:$0xff pattern:$0x73625140]
    %v7578 = vld.sshfl [vmem:[#allocation1 + $0x38] sm:$0xff pattern:$0x73625140]
    %7611 = vmatpush.msra.mxu0 %v7410
    %7612 = vmatpush.msra.mxu0 %v7408
    %7613 = vmatpush.msra.mxu0 %v7406
    %7614 = vmatpush.msra.mxu0 %v7404
    %7615 = vmatpush.msra.mxu0 %v7402
    %7616 = vmatpush.msra.mxu0 %v7400
    %7617 = vmatpush.msra.mxu0 %v7398
    %7618 = vmatpush.msra.mxu0 %v7396
    %7619 = vmatpush.msra.mxu0 %v7394
    %7620 = vmatpush.msra.mxu0 %v7392
    %7621 = vmatpush.msra.mxu0 %v7390
    %7622 = vmatpush.msra.mxu0 %v7388
    %7623 = vmatpush.msra.mxu0 %v7386
    %7624 = vmatpush.msra.mxu0 %v7384
    %7625 = vmatpush.msra.mxu0 %v7382
    %7626 = vmatpush.msra.mxu0 %v7380
    %7627 = vmatmul.f32.gmra.mxu0 %v7523
    %v7628 = vpop.f32.mrf.mxu0
    %v7629 = vadd.f32 0.0, %v7628
    %7630 = vmatmul.f32.gmra.mxu0 %v7527
    %v7631 = vpop.f32.mrf.mxu0
    %v7632 = vadd.f32 0.0, %v7631
    %7633 = vmatmul.f32.gmra.mxu0 %v7539
    %v7634 = vpop.f32.mrf.mxu0
    %v7635 = vadd.f32 0.0, %v7634
    %7636 = vmatmul.f32.gmra.mxu0 %v7543
    %v7637 = vpop.f32.mrf.mxu0
    %v7638 = vadd.f32 0.0, %v7637
    %7639 = vmatmul.f32.gmra.mxu0 %v7555
    %v7640 = vpop.f32.mrf.mxu0
    %v7641 = vadd.f32 0.0, %v7640
    %7642 = vmatmul.f32.gmra.mxu0 %v7559
    %v7643 = vpop.f32.mrf.mxu0
    %v7644 = vadd.f32 0.0, %v7643
    %7645 = vmatmul.f32.gmra.mxu0 %v7571
    %v7646 = vpop.f32.mrf.mxu0
    %v7647 = vadd.f32 0.0, %v7646
    %7648 = vmatmul.f32.gmra.mxu0 %v7575
    %v7649 = vpop.f32.mrf.mxu0
    %v7650 = vadd.f32 0.0, %v7649
    %7651 = vdwg.mxu0
    %7652 = vmatpush.msra.mxu0 %v7442
    %7653 = vmatpush.msra.mxu0 %v7440
    %7654 = vmatpush.msra.mxu0 %v7438
    %7655 = vmatpush.msra.mxu0 %v7436
    %7656 = vmatpush.msra.mxu0 %v7434
    %7657 = vmatpush.msra.mxu0 %v7432
    %7658 = vmatpush.msra.mxu0 %v7430
    %7659 = vmatpush.msra.mxu0 %v7428
    %7660 = vmatpush.msra.mxu0 %v7426
    %7661 = vmatpush.msra.mxu0 %v7424
    %7662 = vmatpush.msra.mxu0 %v7422
    %7663 = vmatpush.msra.mxu0 %v7420
    %7664 = vmatpush.msra.mxu0 %v7418
    %7665 = vmatpush.msra.mxu0 %v7416
    %7666 = vmatpush.msra.mxu0 %v7414
    %7667 = vmatpush.msra.mxu0 %v7412
    %7668 = vmatmul.f32.gmra.mxu0 %v7524
    %v7669 = vpop.f32.mrf.mxu0
    %v7670 = vadd.f32 %v7629, %v7669
    %7671 = vmatmul.f32.gmra.mxu0 %v7528
    %v7672 = vpop.f32.mrf.mxu0
    %v7673 = vadd.f32 %v7632, %v7672
    %7674 = vmatmul.f32.gmra.mxu0 %v7540
    %v7675 = vpop.f32.mrf.mxu0
    %v7676 = vadd.f32 %v7635, %v7675
    %7677 = vmatmul.f32.gmra.mxu0 %v7544
    %v7678 = vpop.f32.mrf.mxu0
    %v7679 = vadd.f32 %v7638, %v7678
    %7680 = vmatmul.f32.gmra.mxu0 %v7556
    %v7681 = vpop.f32.mrf.mxu0
    %v7682 = vadd.f32 %v7641, %v7681
    %7683 = vmatmul.f32.gmra.mxu0 %v7560
    %v7684 = vpop.f32.mrf.mxu0
    %v7685 = vadd.f32 %v7644, %v7684
    %7686 = vmatmul.f32.gmra.mxu0 %v7572
    %v7687 = vpop.f32.mrf.mxu0
    %v7688 = vadd.f32 %v7647, %v7687
    %7689 = vmatmul.f32.gmra.mxu0 %v7576
    %v7690 = vpop.f32.mrf.mxu0
    %v7691 = vadd.f32 %v7650, %v7690
    %7692 = vdwg.mxu0
    %7693 = vmatpush.msra.mxu0 %v7474
    %7694 = vmatpush.msra.mxu0 %v7472
    %7695 = vmatpush.msra.mxu0 %v7470
    %7696 = vmatpush.msra.mxu0 %v7468
    %7697 = vmatpush.msra.mxu0 %v7466
    %7698 = vmatpush.msra.mxu0 %v7464
    %7699 = vmatpush.msra.mxu0 %v7462
    %7700 = vmatpush.msra.mxu0 %v7460
    %7701 = vmatpush.msra.mxu0 %v7458
    %7702 = vmatpush.msra.mxu0 %v7456
    %7703 = vmatpush.msra.mxu0 %v7454
    %7704 = vmatpush.msra.mxu0 %v7452
    %7705 = vmatpush.msra.mxu0 %v7450
    %7706 = vmatpush.msra.mxu0 %v7448
    %7707 = vmatpush.msra.mxu0 %v7446
    %7708 = vmatpush.msra.mxu0 %v7444
    %7709 = vmatmul.f32.gmra.mxu0 %v7525
    %v7710 = vpop.f32.mrf.mxu0
    %v7711 = vadd.f32 %v7670, %v7710
    %7712 = vmatmul.f32.gmra.mxu0 %v7529
    %v7713 = vpop.f32.mrf.mxu0
    %v7714 = vadd.f32 %v7673, %v7713
    %7715 = vmatmul.f32.gmra.mxu0 %v7541
    %v7716 = vpop.f32.mrf.mxu0
    %v7717 = vadd.f32 %v7676, %v7716
    %7718 = vmatmul.f32.gmra.mxu0 %v7545
    %v7719 = vpop.f32.mrf.mxu0
    %v7720 = vadd.f32 %v7679, %v7719
    %7721 = vmatmul.f32.gmra.mxu0 %v7557
    %v7722 = vpop.f32.mrf.mxu0
    %v7723 = vadd.f32 %v7682, %v7722
    %7724 = vmatmul.f32.gmra.mxu0 %v7561
    %v7725 = vpop.f32.mrf.mxu0
    %v7726 = vadd.f32 %v7685, %v7725
    %7727 = vmatmul.f32.gmra.mxu0 %v7573
    %v7728 = vpop.f32.mrf.mxu0
    %v7729 = vadd.f32 %v7688, %v7728
    %7730 = vmatmul.f32.gmra.mxu0 %v7577
    %v7731 = vpop.f32.mrf.mxu0
    %v7732 = vadd.f32 %v7691, %v7731
    %7733 = vdwg.mxu0
    %7734 = vmatpush.msra.mxu0 %v7506
    %7735 = vmatpush.msra.mxu0 %v7504
    %7736 = vmatpush.msra.mxu0 %v7502
    %7737 = vmatpush.msra.mxu0 %v7500
    %7738 = vmatpush.msra.mxu0 %v7498
    %7739 = vmatpush.msra.mxu0 %v7496
    %7740 = vmatpush.msra.mxu0 %v7494
    %7741 = vmatpush.msra.mxu0 %v7492
    %7742 = vmatpush.msra.mxu0 %v7490
    %7743 = vmatpush.msra.mxu0 %v7488
    %7744 = vmatpush.msra.mxu0 %v7486
    %7745 = vmatpush.msra.mxu0 %v7484
    %7746 = vmatpush.msra.mxu0 %v7482
    %7747 = vmatpush.msra.mxu0 %v7480
    %7748 = vmatpush.msra.mxu0 %v7478
    %7749 = vmatpush.msra.mxu0 %v7476
    %7750 = vmatmul.f32.gmra.mxu0 %v7526
    %v7751 = vpop.f32.mrf.mxu0
    %v7752 = vadd.f32 %v7711, %v7751
    %7753 = vmatmul.f32.gmra.mxu0 %v7530
    %v7754 = vpop.f32.mrf.mxu0
    %v7755 = vadd.f32 %v7714, %v7754
    %7756 = vmatmul.f32.gmra.mxu0 %v7542
    %v7757 = vpop.f32.mrf.mxu0
    %v7758 = vadd.f32 %v7717, %v7757
    %7759 = vmatmul.f32.gmra.mxu0 %v7546
    %v7760 = vpop.f32.mrf.mxu0
    %v7761 = vadd.f32 %v7720, %v7760
    %7762 = vmatmul.f32.gmra.mxu0 %v7558
    %v7763 = vpop.f32.mrf.mxu0
    %v7764 = vadd.f32 %v7723, %v7763
    %7765 = vmatmul.f32.gmra.mxu0 %v7562
    %v7766 = vpop.f32.mrf.mxu0
    %v7767 = vadd.f32 %v7726, %v7766
    %7768 = vmatmul.f32.gmra.mxu0 %v7574
    %v7769 = vpop.f32.mrf.mxu0
    %v7770 = vadd.f32 %v7729, %v7769
    %7771 = vmatmul.f32.gmra.mxu0 %v7578
    %v7772 = vpop.f32.mrf.mxu0
    %v7773 = vadd.f32 %v7732, %v7772
    %7774 = vdwg.mxu0
    %7775 = vmatpush.msra.mxu0 %v7411
    %7776 = vmatpush.msra.mxu0 %v7409
    %7777 = vmatpush.msra.mxu0 %v7407
    %7778 = vmatpush.msra.mxu0 %v7405
    %7779 = vmatpush.msra.mxu0 %v7403
    %7780 = vmatpush.msra.mxu0 %v7401
    %7781 = vmatpush.msra.mxu0 %v7399
    %7782 = vmatpush.msra.mxu0 %v7397
    %7783 = vmatpush.msra.mxu0 %v7395
    %7784 = vmatpush.msra.mxu0 %v7393
    %7785 = vmatpush.msra.mxu0 %v7391
    %7786 = vmatpush.msra.mxu0 %v7389
    %7787 = vmatpush.msra.mxu0 %v7387
    %7788 = vmatpush.msra.mxu0 %v7385
    %7789 = vmatpush.msra.mxu0 %v7383
    %7790 = vmatpush.msra.mxu0 %v7381
    %7791 = vmatmul.f32.gmra.mxu0 %v7523
    %v7792 = vpop.f32.mrf.mxu0
    %v7793 = vadd.f32 0.0, %v7792
    %7794 = vmatmul.f32.gmra.mxu0 %v7527
    %v7795 = vpop.f32.mrf.mxu0
    %v7796 = vadd.f32 0.0, %v7795
    %7797 = vmatmul.f32.gmra.mxu0 %v7539
    %v7798 = vpop.f32.mrf.mxu0
    %v7799 = vadd.f32 0.0, %v7798
    %7800 = vmatmul.f32.gmra.mxu0 %v7543
    %v7801 = vpop.f32.mrf.mxu0
    %v7802 = vadd.f32 0.0, %v7801
    %7803 = vmatmul.f32.gmra.mxu0 %v7555
    %v7804 = vpop.f32.mrf.mxu0
    %v7805 = vadd.f32 0.0, %v7804
    %7806 = vmatmul.f32.gmra.mxu0 %v7559
    %v7807 = vpop.f32.mrf.mxu0
    %v7808 = vadd.f32 0.0, %v7807
    %7809 = vmatmul.f32.gmra.mxu0 %v7571
    %v7810 = vpop.f32.mrf.mxu0
    %v7811 = vadd.f32 0.0, %v7810
    %7812 = vmatmul.f32.gmra.mxu0 %v7575
    %v7813 = vpop.f32.mrf.mxu0
    %v7814 = vadd.f32 0.0, %v7813
    %7815 = vdwg.mxu0
    %7816 = vmatpush.msra.mxu0 %v7443
    %7817 = vmatpush.msra.mxu0 %v7441
    %7818 = vmatpush.msra.mxu0 %v7439
    %7819 = vmatpush.msra.mxu0 %v7437
    %7820 = vmatpush.msra.mxu0 %v7435
    %7821 = vmatpush.msra.mxu0 %v7433
    %7822 = vmatpush.msra.mxu0 %v7431
    %7823 = vmatpush.msra.mxu0 %v7429
    %7824 = vmatpush.msra.mxu0 %v7427
    %7825 = vmatpush.msra.mxu0 %v7425
    %7826 = vmatpush.msra.mxu0 %v7423
    %7827 = vmatpush.msra.mxu0 %v7421
    %7828 = vmatpush.msra.mxu0 %v7419
    %7829 = vmatpush.msra.mxu0 %v7417
    %7830 = vmatpush.msra.mxu0 %v7415
    %7831 = vmatpush.msra.mxu0 %v7413
    %7832 = vmatmul.f32.gmra.mxu0 %v7524
    %v7833 = vpop.f32.mrf.mxu0
    %v7834 = vadd.f32 %v7793, %v7833
    %7835 = vmatmul.f32.gmra.mxu0 %v7528
    %v7836 = vpop.f32.mrf.mxu0
    %v7837 = vadd.f32 %v7796, %v7836
    %7838 = vmatmul.f32.gmra.mxu0 %v7540
    %v7839 = vpop.f32.mrf.mxu0
    %v7840 = vadd.f32 %v7799, %v7839
    %7841 = vmatmul.f32.gmra.mxu0 %v7544
    %v7842 = vpop.f32.mrf.mxu0
    %v7843 = vadd.f32 %v7802, %v7842
    %7844 = vmatmul.f32.gmra.mxu0 %v7556
    %v7845 = vpop.f32.mrf.mxu0
    %v7846 = vadd.f32 %v7805, %v7845
    %7847 = vmatmul.f32.gmra.mxu0 %v7560
    %v7848 = vpop.f32.mrf.mxu0
    %v7849 = vadd.f32 %v7808, %v7848
    %7850 = vmatmul.f32.gmra.mxu0 %v7572
    %v7851 = vpop.f32.mrf.mxu0
    %v7852 = vadd.f32 %v7811, %v7851
    %7853 = vmatmul.f32.gmra.mxu0 %v7576
    %v7854 = vpop.f32.mrf.mxu0
    %v7855 = vadd.f32 %v7814, %v7854
    %7856 = vdwg.mxu0
    %7857 = vmatpush.msra.mxu0 %v7475
    %7858 = vmatpush.msra.mxu0 %v7473
    %7859 = vmatpush.msra.mxu0 %v7471
    %7860 = vmatpush.msra.mxu0 %v7469
    %7861 = vmatpush.msra.mxu0 %v7467
    %7862 = vmatpush.msra.mxu0 %v7465
    %7863 = vmatpush.msra.mxu0 %v7463
    %7864 = vmatpush.msra.mxu0 %v7461
    %7865 = vmatpush.msra.mxu0 %v7459
    %7866 = vmatpush.msra.mxu0 %v7457
    %7867 = vmatpush.msra.mxu0 %v7455
    %7868 = vmatpush.msra.mxu0 %v7453
    %7869 = vmatpush.msra.mxu0 %v7451
    %7870 = vmatpush.msra.mxu0 %v7449
    %7871 = vmatpush.msra.mxu0 %v7447
    %7872 = vmatpush.msra.mxu0 %v7445
    %7873 = vmatmul.f32.gmra.mxu0 %v7525
    %v7874 = vpop.f32.mrf.mxu0
    %v7875 = vadd.f32 %v7834, %v7874
    %7876 = vmatmul.f32.gmra.mxu0 %v7529
    %v7877 = vpop.f32.mrf.mxu0
    %v7878 = vadd.f32 %v7837, %v7877
    %7879 = vmatmul.f32.gmra.mxu0 %v7541
    %v7880 = vpop.f32.mrf.mxu0
    %v7881 = vadd.f32 %v7840, %v7880
    %7882 = vmatmul.f32.gmra.mxu0 %v7545
    %v7883 = vpop.f32.mrf.mxu0
    %v7884 = vadd.f32 %v7843, %v7883
    %7885 = vmatmul.f32.gmra.mxu0 %v7557
    %v7886 = vpop.f32.mrf.mxu0
    %v7887 = vadd.f32 %v7846, %v7886
    %7888 = vmatmul.f32.gmra.mxu0 %v7561
    %v7889 = vpop.f32.mrf.mxu0
    %v7890 = vadd.f32 %v7849, %v7889
    %7891 = vmatmul.f32.gmra.mxu0 %v7573
    %v7892 = vpop.f32.mrf.mxu0
    %v7893 = vadd.f32 %v7852, %v7892
    %7894 = vmatmul.f32.gmra.mxu0 %v7577
    %v7895 = vpop.f32.mrf.mxu0
    %v7896 = vadd.f32 %v7855, %v7895
    %7897 = vdwg.mxu0
    %7898 = vmatpush.msra.mxu0 %v7507
    %7899 = vmatpush.msra.mxu0 %v7505
    %7900 = vmatpush.msra.mxu0 %v7503
    %7901 = vmatpush.msra.mxu0 %v7501
    %7902 = vmatpush.msra.mxu0 %v7499
    %7903 = vmatpush.msra.mxu0 %v7497
    %7904 = vmatpush.msra.mxu0 %v7495
    %7905 = vmatpush.msra.mxu0 %v7493
    %7906 = vmatpush.msra.mxu0 %v7491
    %7907 = vmatpush.msra.mxu0 %v7489
    %7908 = vmatpush.msra.mxu0 %v7487
    %7909 = vmatpush.msra.mxu0 %v7485
    %7910 = vmatpush.msra.mxu0 %v7483
    %7911 = vmatpush.msra.mxu0 %v7481
    %7912 = vmatpush.msra.mxu0 %v7479
    %7913 = vmatpush.msra.mxu0 %v7477
    %7914 = vmatmul.f32.gmra.mxu0 %v7526
    %v7915 = vpop.f32.mrf.mxu0
    %v7916 = vadd.f32 %v7875, %v7915
    %7917 = vmatmul.f32.gmra.mxu0 %v7530
    %v7918 = vpop.f32.mrf.mxu0
    %v7919 = vadd.f32 %v7878, %v7918
    %7920 = vmatmul.f32.gmra.mxu0 %v7542
    %v7921 = vpop.f32.mrf.mxu0
    %v7922 = vadd.f32 %v7881, %v7921
    %7923 = vmatmul.f32.gmra.mxu0 %v7546
    %v7924 = vpop.f32.mrf.mxu0
    %v7925 = vadd.f32 %v7884, %v7924
    %7926 = vmatmul.f32.gmra.mxu0 %v7558
    %v7927 = vpop.f32.mrf.mxu0
    %v7928 = vadd.f32 %v7887, %v7927
    %7929 = vmatmul.f32.gmra.mxu0 %v7562
    %v7930 = vpop.f32.mrf.mxu0
    %v7931 = vadd.f32 %v7890, %v7930
    %7932 = vmatmul.f32.gmra.mxu0 %v7574
    %v7933 = vpop.f32.mrf.mxu0
    %v7934 = vadd.f32 %v7893, %v7933
    %7935 = vmatmul.f32.gmra.mxu0 %v7578
    %v7936 = vpop.f32.mrf.mxu0
    %v7937 = vadd.f32 %v7896, %v7936
    %7938 = vdwg.mxu0
    %s7939 = scalar_lea.vmem [#allocation31], 1024
    %v7940 = vld [vmem:[%s7939] sm:$0xff]
    %v7941 = vld [vmem:[%s7939 + $0x8] sm:$0xff]
    %v7942 = vld [vmem:[%s7939 + $0x10] sm:$0xff]
    %v7943 = vld [vmem:[%s7939 + $0x18] sm:$0xff]
    %v7944 = vld [vmem:[%s7939 + $0x20] sm:$0xff]
    %v7945 = vld [vmem:[%s7939 + $0x28] sm:$0xff]
    %v7946 = vld [vmem:[%s7939 + $0x30] sm:$0xff]
    %v7947 = vld [vmem:[%s7939 + $0x38] sm:$0xff]
    %v7948 = vld [vmem:[%s7939 + $0x40] sm:$0xff]
    %v7949 = vld [vmem:[%s7939 + $0x48] sm:$0xff]
    %v7950 = vld [vmem:[%s7939 + $0x50] sm:$0xff]
    %v7951 = vld [vmem:[%s7939 + $0x58] sm:$0xff]
    %v7952 = vld [vmem:[%s7939 + $0x60] sm:$0xff]
    %v7953 = vld [vmem:[%s7939 + $0x68] sm:$0xff]
    %v7954 = vld [vmem:[%s7939 + $0x70] sm:$0xff]
    %v7955 = vld [vmem:[%s7939 + $0x78] sm:$0xff]
    %v7956 = vld [vmem:[%s7939 + $0x80] sm:$0xff]
    %v7957 = vld [vmem:[%s7939 + $0x88] sm:$0xff]
    %v7958 = vld [vmem:[%s7939 + $0x90] sm:$0xff]
    %v7959 = vld [vmem:[%s7939 + $0x98] sm:$0xff]
    %v7960 = vld [vmem:[%s7939 + $0xa0] sm:$0xff]
    %v7961 = vld [vmem:[%s7939 + $0xa8] sm:$0xff]
    %v7962 = vld [vmem:[%s7939 + $0xb0] sm:$0xff]
    %v7963 = vld [vmem:[%s7939 + $0xb8] sm:$0xff]
    %v7964 = vld [vmem:[%s7939 + $0xc0] sm:$0xff]
    %v7965 = vld [vmem:[%s7939 + $0xc8] sm:$0xff]
    %v7966 = vld [vmem:[%s7939 + $0xd0] sm:$0xff]
    %v7967 = vld [vmem:[%s7939 + $0xd8] sm:$0xff]
    %v7968 = vld [vmem:[%s7939 + $0xe0] sm:$0xff]
    %v7969 = vld [vmem:[%s7939 + $0xe8] sm:$0xff]
    %v7970 = vld [vmem:[%s7939 + $0xf0] sm:$0xff]
    %v7971 = vld [vmem:[%s7939 + $0xf8] sm:$0xff]
    %v7972 = vld [vmem:[%s7939 + $0x100] sm:$0xff]
    %v7973 = vld [vmem:[%s7939 + $0x108] sm:$0xff]
    %v7974 = vld [vmem:[%s7939 + $0x110] sm:$0xff]
    %v7975 = vld [vmem:[%s7939 + $0x118] sm:$0xff]
    %v7976 = vld [vmem:[%s7939 + $0x120] sm:$0xff]
    %v7977 = vld [vmem:[%s7939 + $0x128] sm:$0xff]
    %v7978 = vld [vmem:[%s7939 + $0x130] sm:$0xff]
    %v7979 = vld [vmem:[%s7939 + $0x138] sm:$0xff]
    %v7980 = vld [vmem:[%s7939 + $0x140] sm:$0xff]
    %v7981 = vld [vmem:[%s7939 + $0x148] sm:$0xff]
    %v7982 = vld [vmem:[%s7939 + $0x150] sm:$0xff]
    %v7983 = vld [vmem:[%s7939 + $0x158] sm:$0xff]
    %v7984 = vld [vmem:[%s7939 + $0x160] sm:$0xff]
    %v7985 = vld [vmem:[%s7939 + $0x168] sm:$0xff]
    %v7986 = vld [vmem:[%s7939 + $0x170] sm:$0xff]
    %v7987 = vld [vmem:[%s7939 + $0x178] sm:$0xff]
    %v7988 = vld [vmem:[%s7939 + $0x180] sm:$0xff]
    %v7989 = vld [vmem:[%s7939 + $0x188] sm:$0xff]
    %v7990 = vld [vmem:[%s7939 + $0x190] sm:$0xff]
    %v7991 = vld [vmem:[%s7939 + $0x198] sm:$0xff]
    %v7992 = vld [vmem:[%s7939 + $0x1a0] sm:$0xff]
    %v7993 = vld [vmem:[%s7939 + $0x1a8] sm:$0xff]
    %v7994 = vld [vmem:[%s7939 + $0x1b0] sm:$0xff]
    %v7995 = vld [vmem:[%s7939 + $0x1b8] sm:$0xff]
    %v7996 = vld [vmem:[%s7939 + $0x1c0] sm:$0xff]
    %v7997 = vld [vmem:[%s7939 + $0x1c8] sm:$0xff]
    %v7998 = vld [vmem:[%s7939 + $0x1d0] sm:$0xff]
    %v7999 = vld [vmem:[%s7939 + $0x1d8] sm:$0xff]
    %v8000 = vld [vmem:[%s7939 + $0x1e0] sm:$0xff]
    %v8001 = vld [vmem:[%s7939 + $0x1e8] sm:$0xff]
    %v8002 = vld [vmem:[%s7939 + $0x1f0] sm:$0xff]
    %v8003 = vld [vmem:[%s7939 + $0x1f8] sm:$0xff]
    %v8004 = vld [vmem:[%s7939 + $0x200] sm:$0xff]
    %v8005 = vld [vmem:[%s7939 + $0x208] sm:$0xff]
    %v8006 = vld [vmem:[%s7939 + $0x210] sm:$0xff]
    %v8007 = vld [vmem:[%s7939 + $0x218] sm:$0xff]
    %v8008 = vld [vmem:[%s7939 + $0x220] sm:$0xff]
    %v8009 = vld [vmem:[%s7939 + $0x228] sm:$0xff]
    %v8010 = vld [vmem:[%s7939 + $0x230] sm:$0xff]
    %v8011 = vld [vmem:[%s7939 + $0x238] sm:$0xff]
    %v8012 = vld [vmem:[%s7939 + $0x240] sm:$0xff]
    %v8013 = vld [vmem:[%s7939 + $0x248] sm:$0xff]
    %v8014 = vld [vmem:[%s7939 + $0x250] sm:$0xff]
    %v8015 = vld [vmem:[%s7939 + $0x258] sm:$0xff]
    %v8016 = vld [vmem:[%s7939 + $0x260] sm:$0xff]
    %v8017 = vld [vmem:[%s7939 + $0x268] sm:$0xff]
    %v8018 = vld [vmem:[%s7939 + $0x270] sm:$0xff]
    %v8019 = vld [vmem:[%s7939 + $0x278] sm:$0xff]
    %v8020 = vld [vmem:[%s7939 + $0x280] sm:$0xff]
    %v8021 = vld [vmem:[%s7939 + $0x288] sm:$0xff]
    %v8022 = vld [vmem:[%s7939 + $0x290] sm:$0xff]
    %v8023 = vld [vmem:[%s7939 + $0x298] sm:$0xff]
    %v8024 = vld [vmem:[%s7939 + $0x2a0] sm:$0xff]
    %v8025 = vld [vmem:[%s7939 + $0x2a8] sm:$0xff]
    %v8026 = vld [vmem:[%s7939 + $0x2b0] sm:$0xff]
    %v8027 = vld [vmem:[%s7939 + $0x2b8] sm:$0xff]
    %v8028 = vld [vmem:[%s7939 + $0x2c0] sm:$0xff]
    %v8029 = vld [vmem:[%s7939 + $0x2c8] sm:$0xff]
    %v8030 = vld [vmem:[%s7939 + $0x2d0] sm:$0xff]
    %v8031 = vld [vmem:[%s7939 + $0x2d8] sm:$0xff]
    %v8032 = vld [vmem:[%s7939 + $0x2e0] sm:$0xff]
    %v8033 = vld [vmem:[%s7939 + $0x2e8] sm:$0xff]
    %v8034 = vld [vmem:[%s7939 + $0x2f0] sm:$0xff]
    %v8035 = vld [vmem:[%s7939 + $0x2f8] sm:$0xff]
    %v8036 = vld [vmem:[%s7939 + $0x300] sm:$0xff]
    %v8037 = vld [vmem:[%s7939 + $0x308] sm:$0xff]
    %v8038 = vld [vmem:[%s7939 + $0x310] sm:$0xff]
    %v8039 = vld [vmem:[%s7939 + $0x318] sm:$0xff]
    %v8040 = vld [vmem:[%s7939 + $0x320] sm:$0xff]
    %v8041 = vld [vmem:[%s7939 + $0x328] sm:$0xff]
    %v8042 = vld [vmem:[%s7939 + $0x330] sm:$0xff]
    %v8043 = vld [vmem:[%s7939 + $0x338] sm:$0xff]
    %v8044 = vld [vmem:[%s7939 + $0x340] sm:$0xff]
    %v8045 = vld [vmem:[%s7939 + $0x348] sm:$0xff]
    %v8046 = vld [vmem:[%s7939 + $0x350] sm:$0xff]
    %v8047 = vld [vmem:[%s7939 + $0x358] sm:$0xff]
    %v8048 = vld [vmem:[%s7939 + $0x360] sm:$0xff]
    %v8049 = vld [vmem:[%s7939 + $0x368] sm:$0xff]
    %v8050 = vld [vmem:[%s7939 + $0x370] sm:$0xff]
    %v8051 = vld [vmem:[%s7939 + $0x378] sm:$0xff]
    %v8052 = vld [vmem:[%s7939 + $0x380] sm:$0xff]
    %v8053 = vld [vmem:[%s7939 + $0x388] sm:$0xff]
    %v8054 = vld [vmem:[%s7939 + $0x390] sm:$0xff]
    %v8055 = vld [vmem:[%s7939 + $0x398] sm:$0xff]
    %v8056 = vld [vmem:[%s7939 + $0x3a0] sm:$0xff]
    %v8057 = vld [vmem:[%s7939 + $0x3a8] sm:$0xff]
    %v8058 = vld [vmem:[%s7939 + $0x3b0] sm:$0xff]
    %v8059 = vld [vmem:[%s7939 + $0x3b8] sm:$0xff]
    %v8060 = vld [vmem:[%s7939 + $0x3c0] sm:$0xff]
    %v8061 = vld [vmem:[%s7939 + $0x3c8] sm:$0xff]
    %v8062 = vld [vmem:[%s7939 + $0x3d0] sm:$0xff]
    %v8063 = vld [vmem:[%s7939 + $0x3d8] sm:$0xff]
    %v8064 = vld [vmem:[%s7939 + $0x3e0] sm:$0xff]
    %v8065 = vld [vmem:[%s7939 + $0x3e8] sm:$0xff]
    %v8066 = vld [vmem:[%s7939 + $0x3f0] sm:$0xff]
    %v8067 = vld [vmem:[%s7939 + $0x3f8] sm:$0xff]
    %v8068 = vld [vmem:[#allocation33] sm:$0x3]
    %v8070 = vperm.slane %v8068, 0
    %v8071 = vperm.slane %v8068, 1
    %8074 = vst [vmem:[#allocation1] ss:$4 sm:$0xff] %v7286
    %s8075 = scalar_lea.vmem [#allocation1], 1
    %8076 = vst [vmem:[%s8075] ss:$4 sm:$0xff] %v7289
    %s8077 = scalar_lea.vmem [#allocation1], 2
    %8078 = vst [vmem:[%s8077] ss:$4 sm:$0xff] %v7292
    %s8079 = scalar_lea.vmem [#allocation1], 3
    %8080 = vst [vmem:[%s8079] ss:$4 sm:$0xff] %v7295
    %s8081 = scalar_lea.vmem [#allocation1], 32
    %8082 = vst [vmem:[%s8081] ss:$4 sm:$0xff] %v7298
    %s8083 = scalar_lea.vmem [#allocation1], 33
    %8084 = vst [vmem:[%s8083] ss:$4 sm:$0xff] %v7301
    %s8085 = scalar_lea.vmem [#allocation1], 34
    %8086 = vst [vmem:[%s8085] ss:$4 sm:$0xff] %v7304
    %s8087 = scalar_lea.vmem [#allocation1], 35
    %8088 = vst [vmem:[%s8087] ss:$4 sm:$0xff] %v7307
    %v8089 = vld.sshfl [vmem:[#allocation1] sm:$0xff pattern:$0x73625140]
    %v8090 = vld.sshfl [vmem:[#allocation1 + $0x8] sm:$0xff pattern:$0x73625140]
    %v8091 = vld.sshfl [vmem:[#allocation1 + $0x10] sm:$0xff pattern:$0x73625140]
    %v8092 = vld.sshfl [vmem:[#allocation1 + $0x18] sm:$0xff pattern:$0x73625140]
    %v8093 = vld.sshfl [vmem:[#allocation1 + $0x20] sm:$0xff pattern:$0x73625140]
    %v8094 = vld.sshfl [vmem:[#allocation1 + $0x28] sm:$0xff pattern:$0x73625140]
    %v8095 = vld.sshfl [vmem:[#allocation1 + $0x30] sm:$0xff pattern:$0x73625140]
    %v8096 = vld.sshfl [vmem:[#allocation1 + $0x38] sm:$0xff pattern:$0x73625140]
    %8097 = vst [vmem:[#allocation1] ss:$4 sm:$0xff] %v7310
    %8098 = vst [vmem:[%s8075] ss:$4 sm:$0xff] %v7313
    %8099 = vst [vmem:[%s8077] ss:$4 sm:$0xff] %v7316
    %8100 = vst [vmem:[%s8079] ss:$4 sm:$0xff] %v7319
    %8101 = vst [vmem:[%s8081] ss:$4 sm:$0xff] %v7322
    %8102 = vst [vmem:[%s8083] ss:$4 sm:$0xff] %v7325
    %8103 = vst [vmem:[%s8085] ss:$4 sm:$0xff] %v7328
    %8104 = vst [vmem:[%s8087] ss:$4 sm:$0xff] %v7331
    %v8105 = vld.sshfl [vmem:[#allocation1] sm:$0xff pattern:$0x73625140]
    %v8106 = vld.sshfl [vmem:[#allocation1 + $0x8] sm:$0xff pattern:$0x73625140]
    %v8107 = vld.sshfl [vmem:[#allocation1 + $0x10] sm:$0xff pattern:$0x73625140]
    %v8108 = vld.sshfl [vmem:[#allocation1 + $0x18] sm:$0xff pattern:$0x73625140]
    %v8109 = vld.sshfl [vmem:[#allocation1 + $0x20] sm:$0xff pattern:$0x73625140]
    %v8110 = vld.sshfl [vmem:[#allocation1 + $0x28] sm:$0xff pattern:$0x73625140]
    %v8111 = vld.sshfl [vmem:[#allocation1 + $0x30] sm:$0xff pattern:$0x73625140]
    %v8112 = vld.sshfl [vmem:[#allocation1 + $0x38] sm:$0xff pattern:$0x73625140]
    %8113 = vst [vmem:[#allocation1] ss:$4 sm:$0xff] %v7334
    %8114 = vst [vmem:[%s8075] ss:$4 sm:$0xff] %v7337
    %8115 = vst [vmem:[%s8077] ss:$4 sm:$0xff] %v7340
    %8116 = vst [vmem:[%s8079] ss:$4 sm:$0xff] %v7343
    %8117 = vst [vmem:[%s8081] ss:$4 sm:$0xff] %v7346
    %8118 = vst [vmem:[%s8083] ss:$4 sm:$0xff] %v7349
    %8119 = vst [vmem:[%s8085] ss:$4 sm:$0xff] %v7352
    %8120 = vst [vmem:[%s8087] ss:$4 sm:$0xff] %v7355
    %v8121 = vld.sshfl [vmem:[#allocation1] sm:$0xff pattern:$0x73625140]
    %v8122 = vld.sshfl [vmem:[#allocation1 + $0x8] sm:$0xff pattern:$0x73625140]
    %v8123 = vld.sshfl [vmem:[#allocation1 + $0x10] sm:$0xff pattern:$0x73625140]
    %v8124 = vld.sshfl [vmem:[#allocation1 + $0x18] sm:$0xff pattern:$0x73625140]
    %v8125 = vld.sshfl [vmem:[#allocation1 + $0x20] sm:$0xff pattern:$0x73625140]
    %v8126 = vld.sshfl [vmem:[#allocation1 + $0x28] sm:$0xff pattern:$0x73625140]
    %v8127 = vld.sshfl [vmem:[#allocation1 + $0x30] sm:$0xff pattern:$0x73625140]
    %v8128 = vld.sshfl [vmem:[#allocation1 + $0x38] sm:$0xff pattern:$0x73625140]
    %8129 = vst [vmem:[#allocation1] ss:$4 sm:$0xff] %v7358
    %8130 = vst [vmem:[%s8075] ss:$4 sm:$0xff] %v7361
    %8131 = vst [vmem:[%s8077] ss:$4 sm:$0xff] %v7364
    %8132 = vst [vmem:[%s8079] ss:$4 sm:$0xff] %v7367
    %8133 = vst [vmem:[%s8081] ss:$4 sm:$0xff] %v7370
    %8134 = vst [vmem:[%s8083] ss:$4 sm:$0xff] %v7373
    %8135 = vst [vmem:[%s8085] ss:$4 sm:$0xff] %v7376
    %8136 = vst [vmem:[%s8087] ss:$4 sm:$0xff] %v7379
    %v8137 = vld.sshfl [vmem:[#allocation1] sm:$0xff pattern:$0x73625140]
    %v8138 = vld.sshfl [vmem:[#allocation1 + $0x8] sm:$0xff pattern:$0x73625140]
    %v8139 = vld.sshfl [vmem:[#allocation1 + $0x10] sm:$0xff pattern:$0x73625140]
    %v8140 = vld.sshfl [vmem:[#allocation1 + $0x18] sm:$0xff pattern:$0x73625140]
    %v8141 = vld.sshfl [vmem:[#allocation1 + $0x20] sm:$0xff pattern:$0x73625140]
    %v8142 = vld.sshfl [vmem:[#allocation1 + $0x28] sm:$0xff pattern:$0x73625140]
    %v8143 = vld.sshfl [vmem:[#allocation1 + $0x30] sm:$0xff pattern:$0x73625140]
    %v8144 = vld.sshfl [vmem:[#allocation1 + $0x38] sm:$0xff pattern:$0x73625140]
    %8177 = vmatpush.msra.mxu0 %v7970
    %8178 = vmatpush.msra.mxu0 %v7968
    %8179 = vmatpush.msra.mxu0 %v7966
    %8180 = vmatpush.msra.mxu0 %v7964
    %8181 = vmatpush.msra.mxu0 %v7962
    %8182 = vmatpush.msra.mxu0 %v7960
    %8183 = vmatpush.msra.mxu0 %v7958
    %8184 = vmatpush.msra.mxu0 %v7956
    %8185 = vmatpush.msra.mxu0 %v7954
    %8186 = vmatpush.msra.mxu0 %v7952
    %8187 = vmatpush.msra.mxu0 %v7950
    %8188 = vmatpush.msra.mxu0 %v7948
    %8189 = vmatpush.msra.mxu0 %v7946
    %8190 = vmatpush.msra.mxu0 %v7944
    %8191 = vmatpush.msra.mxu0 %v7942
    %8192 = vmatpush.msra.mxu0 %v7940
    %8193 = vmatmul.f32.gmra.mxu0 %v8089
    %v8194 = vpop.f32.mrf.mxu0
    %v8195 = vadd.f32 %v8070, %v8194
    %8196 = vmatmul.f32.gmra.mxu0 %v8093
    %v8197 = vpop.f32.mrf.mxu0
    %v8198 = vadd.f32 %v8070, %v8197
    %8199 = vmatmul.f32.gmra.mxu0 %v8105
    %v8200 = vpop.f32.mrf.mxu0
    %v8201 = vadd.f32 %v8070, %v8200
    %8202 = vmatmul.f32.gmra.mxu0 %v8109
    %v8203 = vpop.f32.mrf.mxu0
    %v8204 = vadd.f32 %v8070, %v8203
    %8205 = vmatmul.f32.gmra.mxu0 %v8121
    %v8206 = vpop.f32.mrf.mxu0
    %v8207 = vadd.f32 %v8070, %v8206
    %8208 = vmatmul.f32.gmra.mxu0 %v8125
    %v8209 = vpop.f32.mrf.mxu0
    %v8210 = vadd.f32 %v8070, %v8209
    %8211 = vmatmul.f32.gmra.mxu0 %v8137
    %v8212 = vpop.f32.mrf.mxu0
    %v8213 = vadd.f32 %v8070, %v8212
    %8214 = vmatmul.f32.gmra.mxu0 %v8141
    %v8215 = vpop.f32.mrf.mxu0
    %v8216 = vadd.f32 %v8070, %v8215
    %8217 = vdwg.mxu0
    %8218 = vmatpush.msra.mxu0 %v8002
    %8219 = vmatpush.msra.mxu0 %v8000
    %8220 = vmatpush.msra.mxu0 %v7998
    %8221 = vmatpush.msra.mxu0 %v7996
    %8222 = vmatpush.msra.mxu0 %v7994
    %8223 = vmatpush.msra.mxu0 %v7992
    %8224 = vmatpush.msra.mxu0 %v7990
    %8225 = vmatpush.msra.mxu0 %v7988
    %8226 = vmatpush.msra.mxu0 %v7986
    %8227 = vmatpush.msra.mxu0 %v7984
    %8228 = vmatpush.msra.mxu0 %v7982
    %8229 = vmatpush.msra.mxu0 %v7980
    %8230 = vmatpush.msra.mxu0 %v7978
    %8231 = vmatpush.msra.mxu0 %v7976
    %8232 = vmatpush.msra.mxu0 %v7974
    %8233 = vmatpush.msra.mxu0 %v7972
    %8234 = vmatmul.f32.gmra.mxu0 %v8090
    %v8235 = vpop.f32.mrf.mxu0
    %v8236 = vadd.f32 %v8195, %v8235
    %8237 = vmatmul.f32.gmra.mxu0 %v8094
    %v8238 = vpop.f32.mrf.mxu0
    %v8239 = vadd.f32 %v8198, %v8238
    %8240 = vmatmul.f32.gmra.mxu0 %v8106
    %v8241 = vpop.f32.mrf.mxu0
    %v8242 = vadd.f32 %v8201, %v8241
    %8243 = vmatmul.f32.gmra.mxu0 %v8110
    %v8244 = vpop.f32.mrf.mxu0
    %v8245 = vadd.f32 %v8204, %v8244
    %8246 = vmatmul.f32.gmra.mxu0 %v8122
    %v8247 = vpop.f32.mrf.mxu0
    %v8248 = vadd.f32 %v8207, %v8247
    %8249 = vmatmul.f32.gmra.mxu0 %v8126
    %v8250 = vpop.f32.mrf.mxu0
    %v8251 = vadd.f32 %v8210, %v8250
    %8252 = vmatmul.f32.gmra.mxu0 %v8138
    %v8253 = vpop.f32.mrf.mxu0
    %v8254 = vadd.f32 %v8213, %v8253
    %8255 = vmatmul.f32.gmra.mxu0 %v8142
    %v8256 = vpop.f32.mrf.mxu0
    %v8257 = vadd.f32 %v8216, %v8256
    %8258 = vdwg.mxu0
    %8259 = vmatpush.msra.mxu0 %v8034
    %8260 = vmatpush.msra.mxu0 %v8032
    %8261 = vmatpush.msra.mxu0 %v8030
    %8262 = vmatpush.msra.mxu0 %v8028
    %8263 = vmatpush.msra.mxu0 %v8026
    %8264 = vmatpush.msra.mxu0 %v8024
    %8265 = vmatpush.msra.mxu0 %v8022
    %8266 = vmatpush.msra.mxu0 %v8020
    %8267 = vmatpush.msra.mxu0 %v8018
    %8268 = vmatpush.msra.mxu0 %v8016
    %8269 = vmatpush.msra.mxu0 %v8014
    %8270 = vmatpush.msra.mxu0 %v8012
    %8271 = vmatpush.msra.mxu0 %v8010
    %8272 = vmatpush.msra.mxu0 %v8008
    %8273 = vmatpush.msra.mxu0 %v8006
    %8274 = vmatpush.msra.mxu0 %v8004
    %8275 = vmatmul.f32.gmra.mxu0 %v8091
    %v8276 = vpop.f32.mrf.mxu0
    %v8277 = vadd.f32 %v8236, %v8276
    %8278 = vmatmul.f32.gmra.mxu0 %v8095
    %v8279 = vpop.f32.mrf.mxu0
    %v8280 = vadd.f32 %v8239, %v8279
    %8281 = vmatmul.f32.gmra.mxu0 %v8107
    %v8282 = vpop.f32.mrf.mxu0
    %v8283 = vadd.f32 %v8242, %v8282
    %8284 = vmatmul.f32.gmra.mxu0 %v8111
    %v8285 = vpop.f32.mrf.mxu0
    %v8286 = vadd.f32 %v8245, %v8285
    %8287 = vmatmul.f32.gmra.mxu0 %v8123
    %v8288 = vpop.f32.mrf.mxu0
    %v8289 = vadd.f32 %v8248, %v8288
    %8290 = vmatmul.f32.gmra.mxu0 %v8127
    %v8291 = vpop.f32.mrf.mxu0
    %v8292 = vadd.f32 %v8251, %v8291
    %8293 = vmatmul.f32.gmra.mxu0 %v8139
    %v8294 = vpop.f32.mrf.mxu0
    %v8295 = vadd.f32 %v8254, %v8294
    %8296 = vmatmul.f32.gmra.mxu0 %v8143
    %v8297 = vpop.f32.mrf.mxu0
    %v8298 = vadd.f32 %v8257, %v8297
    %8299 = vdwg.mxu0
    %8300 = vmatpush.msra.mxu0 %v8066
    %8301 = vmatpush.msra.mxu0 %v8064
    %8302 = vmatpush.msra.mxu0 %v8062
    %8303 = vmatpush.msra.mxu0 %v8060
    %8304 = vmatpush.msra.mxu0 %v8058
    %8305 = vmatpush.msra.mxu0 %v8056
    %8306 = vmatpush.msra.mxu0 %v8054
    %8307 = vmatpush.msra.mxu0 %v8052
    %8308 = vmatpush.msra.mxu0 %v8050
    %8309 = vmatpush.msra.mxu0 %v8048
    %8310 = vmatpush.msra.mxu0 %v8046
    %8311 = vmatpush.msra.mxu0 %v8044
    %8312 = vmatpush.msra.mxu0 %v8042
    %8313 = vmatpush.msra.mxu0 %v8040
    %8314 = vmatpush.msra.mxu0 %v8038
    %8315 = vmatpush.msra.mxu0 %v8036
    %8316 = vmatmul.f32.gmra.mxu0 %v8092
    %v8317 = vpop.f32.mrf.mxu0
    %v8318 = vadd.f32 %v8277, %v8317
    %8319 = vmatmul.f32.gmra.mxu0 %v8096
    %v8320 = vpop.f32.mrf.mxu0
    %v8321 = vadd.f32 %v8280, %v8320
    %8322 = vmatmul.f32.gmra.mxu0 %v8108
    %v8323 = vpop.f32.mrf.mxu0
    %v8324 = vadd.f32 %v8283, %v8323
    %8325 = vmatmul.f32.gmra.mxu0 %v8112
    %v8326 = vpop.f32.mrf.mxu0
    %v8327 = vadd.f32 %v8286, %v8326
    %8328 = vmatmul.f32.gmra.mxu0 %v8124
    %v8329 = vpop.f32.mrf.mxu0
    %v8330 = vadd.f32 %v8289, %v8329
    %8331 = vmatmul.f32.gmra.mxu0 %v8128
    %v8332 = vpop.f32.mrf.mxu0
    %v8333 = vadd.f32 %v8292, %v8332
    %8334 = vmatmul.f32.gmra.mxu0 %v8140
    %v8335 = vpop.f32.mrf.mxu0
    %v8336 = vadd.f32 %v8295, %v8335
    %8337 = vmatmul.f32.gmra.mxu0 %v8144
    %v8338 = vpop.f32.mrf.mxu0
    %v8339 = vadd.f32 %v8298, %v8338
    %8340 = vdwg.mxu0
    %8341 = vmatpush.msra.mxu0 %v7971
    %8342 = vmatpush.msra.mxu0 %v7969
    %8343 = vmatpush.msra.mxu0 %v7967
    %8344 = vmatpush.msra.mxu0 %v7965
    %8345 = vmatpush.msra.mxu0 %v7963
    %8346 = vmatpush.msra.mxu0 %v7961
    %8347 = vmatpush.msra.mxu0 %v7959
    %8348 = vmatpush.msra.mxu0 %v7957
    %8349 = vmatpush.msra.mxu0 %v7955
    %8350 = vmatpush.msra.mxu0 %v7953
    %8351 = vmatpush.msra.mxu0 %v7951
    %8352 = vmatpush.msra.mxu0 %v7949
    %8353 = vmatpush.msra.mxu0 %v7947
    %8354 = vmatpush.msra.mxu0 %v7945
    %8355 = vmatpush.msra.mxu0 %v7943
    %8356 = vmatpush.msra.mxu0 %v7941
    %8357 = vmatmul.f32.gmra.mxu0 %v8089
    %v8358 = vpop.f32.mrf.mxu0
    %v8359 = vadd.f32 %v8071, %v8358
    %8360 = vmatmul.f32.gmra.mxu0 %v8093
    %v8361 = vpop.f32.mrf.mxu0
    %v8362 = vadd.f32 %v8071, %v8361
    %8363 = vmatmul.f32.gmra.mxu0 %v8105
    %v8364 = vpop.f32.mrf.mxu0
    %v8365 = vadd.f32 %v8071, %v8364
    %8366 = vmatmul.f32.gmra.mxu0 %v8109
    %v8367 = vpop.f32.mrf.mxu0
    %v8368 = vadd.f32 %v8071, %v8367
    %8369 = vmatmul.f32.gmra.mxu0 %v8121
    %v8370 = vpop.f32.mrf.mxu0
    %v8371 = vadd.f32 %v8071, %v8370
    %8372 = vmatmul.f32.gmra.mxu0 %v8125
    %v8373 = vpop.f32.mrf.mxu0
    %v8374 = vadd.f32 %v8071, %v8373
    %8375 = vmatmul.f32.gmra.mxu0 %v8137
    %v8376 = vpop.f32.mrf.mxu0
    %v8377 = vadd.f32 %v8071, %v8376
    %8378 = vmatmul.f32.gmra.mxu0 %v8141
    %v8379 = vpop.f32.mrf.mxu0
    %v8380 = vadd.f32 %v8071, %v8379
    %8381 = vdwg.mxu0
    %8382 = vmatpush.msra.mxu0 %v8003
    %8383 = vmatpush.msra.mxu0 %v8001
    %8384 = vmatpush.msra.mxu0 %v7999
    %8385 = vmatpush.msra.mxu0 %v7997
    %8386 = vmatpush.msra.mxu0 %v7995
    %8387 = vmatpush.msra.mxu0 %v7993
    %8388 = vmatpush.msra.mxu0 %v7991
    %8389 = vmatpush.msra.mxu0 %v7989
    %8390 = vmatpush.msra.mxu0 %v7987
    %8391 = vmatpush.msra.mxu0 %v7985
    %8392 = vmatpush.msra.mxu0 %v7983
    %8393 = vmatpush.msra.mxu0 %v7981
    %8394 = vmatpush.msra.mxu0 %v7979
    %8395 = vmatpush.msra.mxu0 %v7977
    %8396 = vmatpush.msra.mxu0 %v7975
    %8397 = vmatpush.msra.mxu0 %v7973
    %8398 = vmatmul.f32.gmra.mxu0 %v8090
    %v8399 = vpop.f32.mrf.mxu0
    %v8400 = vadd.f32 %v8359, %v8399
    %8401 = vmatmul.f32.gmra.mxu0 %v8094
    %v8402 = vpop.f32.mrf.mxu0
    %v8403 = vadd.f32 %v8362, %v8402
    %8404 = vmatmul.f32.gmra.mxu0 %v8106
    %v8405 = vpop.f32.mrf.mxu0
    %v8406 = vadd.f32 %v8365, %v8405
    %8407 = vmatmul.f32.gmra.mxu0 %v8110
    %v8408 = vpop.f32.mrf.mxu0
    %v8409 = vadd.f32 %v8368, %v8408
    %8410 = vmatmul.f32.gmra.mxu0 %v8122
    %v8411 = vpop.f32.mrf.mxu0
    %v8412 = vadd.f32 %v8371, %v8411
    %8413 = vmatmul.f32.gmra.mxu0 %v8126
    %v8414 = vpop.f32.mrf.mxu0
    %v8415 = vadd.f32 %v8374, %v8414
    %8416 = vmatmul.f32.gmra.mxu0 %v8138
    %v8417 = vpop.f32.mrf.mxu0
    %v8418 = vadd.f32 %v8377, %v8417
    %8419 = vmatmul.f32.gmra.mxu0 %v8142
    %v8420 = vpop.f32.mrf.mxu0
    %v8421 = vadd.f32 %v8380, %v8420
    %8422 = vdwg.mxu0
    %8423 = vmatpush.msra.mxu0 %v8035
    %8424 = vmatpush.msra.mxu0 %v8033
    %8425 = vmatpush.msra.mxu0 %v8031
    %8426 = vmatpush.msra.mxu0 %v8029
    %8427 = vmatpush.msra.mxu0 %v8027
    %8428 = vmatpush.msra.mxu0 %v8025
    %8429 = vmatpush.msra.mxu0 %v8023
    %8430 = vmatpush.msra.mxu0 %v8021
    %8431 = vmatpush.msra.mxu0 %v8019
    %8432 = vmatpush.msra.mxu0 %v8017
    %8433 = vmatpush.msra.mxu0 %v8015
    %8434 = vmatpush.msra.mxu0 %v8013
    %8435 = vmatpush.msra.mxu0 %v8011
    %8436 = vmatpush.msra.mxu0 %v8009
    %8437 = vmatpush.msra.mxu0 %v8007
    %8438 = vmatpush.msra.mxu0 %v8005
    %8439 = vmatmul.f32.gmra.mxu0 %v8091
    %v8440 = vpop.f32.mrf.mxu0
    %v8441 = vadd.f32 %v8400, %v8440
    %8442 = vmatmul.f32.gmra.mxu0 %v8095
    %v8443 = vpop.f32.mrf.mxu0
    %v8444 = vadd.f32 %v8403, %v8443
    %8445 = vmatmul.f32.gmra.mxu0 %v8107
    %v8446 = vpop.f32.mrf.mxu0
    %v8447 = vadd.f32 %v8406, %v8446
    %8448 = vmatmul.f32.gmra.mxu0 %v8111
    %v8449 = vpop.f32.mrf.mxu0
    %v8450 = vadd.f32 %v8409, %v8449
    %8451 = vmatmul.f32.gmra.mxu0 %v8123
    %v8452 = vpop.f32.mrf.mxu0
    %v8453 = vadd.f32 %v8412, %v8452
    %8454 = vmatmul.f32.gmra.mxu0 %v8127
    %v8455 = vpop.f32.mrf.mxu0
    %v8456 = vadd.f32 %v8415, %v8455
    %8457 = vmatmul.f32.gmra.mxu0 %v8139
    %v8458 = vpop.f32.mrf.mxu0
    %v8459 = vadd.f32 %v8418, %v8458
    %8460 = vmatmul.f32.gmra.mxu0 %v8143
    %v8461 = vpop.f32.mrf.mxu0
    %v8462 = vadd.f32 %v8421, %v8461
    %8463 = vdwg.mxu0
    %8464 = vmatpush.msra.mxu0 %v8067
    %8465 = vmatpush.msra.mxu0 %v8065
    %8466 = vmatpush.msra.mxu0 %v8063
    %8467 = vmatpush.msra.mxu0 %v8061
    %8468 = vmatpush.msra.mxu0 %v8059
    %8469 = vmatpush.msra.mxu0 %v8057
    %8470 = vmatpush.msra.mxu0 %v8055
    %8471 = vmatpush.msra.mxu0 %v8053
    %8472 = vmatpush.msra.mxu0 %v8051
    %8473 = vmatpush.msra.mxu0 %v8049
    %8474 = vmatpush.msra.mxu0 %v8047
    %8475 = vmatpush.msra.mxu0 %v8045
    %8476 = vmatpush.msra.mxu0 %v8043
    %8477 = vmatpush.msra.mxu0 %v8041
    %8478 = vmatpush.msra.mxu0 %v8039
    %8479 = vmatpush.msra.mxu0 %v8037
    %8480 = vmatmul.f32.gmra.mxu0 %v8092
    %v8481 = vpop.f32.mrf.mxu0
    %v8482 = vadd.f32 %v8441, %v8481
    %8483 = vmatmul.f32.gmra.mxu0 %v8096
    %v8484 = vpop.f32.mrf.mxu0
    %v8485 = vadd.f32 %v8444, %v8484
    %8486 = vmatmul.f32.gmra.mxu0 %v8108
    %v8487 = vpop.f32.mrf.mxu0
    %v8488 = vadd.f32 %v8447, %v8487
    %8489 = vmatmul.f32.gmra.mxu0 %v8112
    %v8490 = vpop.f32.mrf.mxu0
    %v8491 = vadd.f32 %v8450, %v8490
    %8492 = vmatmul.f32.gmra.mxu0 %v8124
    %v8493 = vpop.f32.mrf.mxu0
    %v8494 = vadd.f32 %v8453, %v8493
    %8495 = vmatmul.f32.gmra.mxu0 %v8128
    %v8496 = vpop.f32.mrf.mxu0
    %v8497 = vadd.f32 %v8456, %v8496
    %8498 = vmatmul.f32.gmra.mxu0 %v8140
    %v8499 = vpop.f32.mrf.mxu0
    %v8500 = vadd.f32 %v8459, %v8499
    %8501 = vmatmul.f32.gmra.mxu0 %v8144
    %v8502 = vpop.f32.mrf.mxu0
    %v8503 = vadd.f32 %v8462, %v8502
    %8504 = vdwg.mxu0
    %s8505 = scalar_lea.vmem [#allocation31], 2048
    %v8506 = vld [vmem:[%s8505] sm:$0xff]
    %v8507 = vld [vmem:[%s8505 + $0x8] sm:$0xff]
    %v8508 = vld [vmem:[%s8505 + $0x10] sm:$0xff]
    %v8509 = vld [vmem:[%s8505 + $0x18] sm:$0xff]
    %v8510 = vld [vmem:[%s8505 + $0x20] sm:$0xff]
    %v8511 = vld [vmem:[%s8505 + $0x28] sm:$0xff]
    %v8512 = vld [vmem:[%s8505 + $0x30] sm:$0xff]
    %v8513 = vld [vmem:[%s8505 + $0x38] sm:$0xff]
    %v8514 = vld [vmem:[%s8505 + $0x40] sm:$0xff]
    %v8515 = vld [vmem:[%s8505 + $0x48] sm:$0xff]
    %v8516 = vld [vmem:[%s8505 + $0x50] sm:$0xff]
    %v8517 = vld [vmem:[%s8505 + $0x58] sm:$0xff]
    %v8518 = vld [vmem:[%s8505 + $0x60] sm:$0xff]
    %v8519 = vld [vmem:[%s8505 + $0x68] sm:$0xff]
    %v8520 = vld [vmem:[%s8505 + $0x70] sm:$0xff]
    %v8521 = vld [vmem:[%s8505 + $0x78] sm:$0xff]
    %v8522 = vld [vmem:[%s8505 + $0x80] sm:$0xff]
    %v8523 = vld [vmem:[%s8505 + $0x88] sm:$0xff]
    %v8524 = vld [vmem:[%s8505 + $0x90] sm:$0xff]
    %v8525 = vld [vmem:[%s8505 + $0x98] sm:$0xff]
    %v8526 = vld [vmem:[%s8505 + $0xa0] sm:$0xff]
    %v8527 = vld [vmem:[%s8505 + $0xa8] sm:$0xff]
    %v8528 = vld [vmem:[%s8505 + $0xb0] sm:$0xff]
    %v8529 = vld [vmem:[%s8505 + $0xb8] sm:$0xff]
    %v8530 = vld [vmem:[%s8505 + $0xc0] sm:$0xff]
    %v8531 = vld [vmem:[%s8505 + $0xc8] sm:$0xff]
    %v8532 = vld [vmem:[%s8505 + $0xd0] sm:$0xff]
    %v8533 = vld [vmem:[%s8505 + $0xd8] sm:$0xff]
    %v8534 = vld [vmem:[%s8505 + $0xe0] sm:$0xff]
    %v8535 = vld [vmem:[%s8505 + $0xe8] sm:$0xff]
    %v8536 = vld [vmem:[%s8505 + $0xf0] sm:$0xff]
    %v8537 = vld [vmem:[%s8505 + $0xf8] sm:$0xff]
    %v8538 = vld [vmem:[%s8505 + $0x100] sm:$0xff]
    %v8539 = vld [vmem:[%s8505 + $0x108] sm:$0xff]
    %v8540 = vld [vmem:[%s8505 + $0x110] sm:$0xff]
    %v8541 = vld [vmem:[%s8505 + $0x118] sm:$0xff]
    %v8542 = vld [vmem:[%s8505 + $0x120] sm:$0xff]
    %v8543 = vld [vmem:[%s8505 + $0x128] sm:$0xff]
    %v8544 = vld [vmem:[%s8505 + $0x130] sm:$0xff]
    %v8545 = vld [vmem:[%s8505 + $0x138] sm:$0xff]
    %v8546 = vld [vmem:[%s8505 + $0x140] sm:$0xff]
    %v8547 = vld [vmem:[%s8505 + $0x148] sm:$0xff]
    %v8548 = vld [vmem:[%s8505 + $0x150] sm:$0xff]
    %v8549 = vld [vmem:[%s8505 + $0x158] sm:$0xff]
    %v8550 = vld [vmem:[%s8505 + $0x160] sm:$0xff]
    %v8551 = vld [vmem:[%s8505 + $0x168] sm:$0xff]
    %v8552 = vld [vmem:[%s8505 + $0x170] sm:$0xff]
    %v8553 = vld [vmem:[%s8505 + $0x178] sm:$0xff]
    %v8554 = vld [vmem:[%s8505 + $0x180] sm:$0xff]
    %v8555 = vld [vmem:[%s8505 + $0x188] sm:$0xff]
    %v8556 = vld [vmem:[%s8505 + $0x190] sm:$0xff]
    %v8557 = vld [vmem:[%s8505 + $0x198] sm:$0xff]
    %v8558 = vld [vmem:[%s8505 + $0x1a0] sm:$0xff]
    %v8559 = vld [vmem:[%s8505 + $0x1a8] sm:$0xff]
    %v8560 = vld [vmem:[%s8505 + $0x1b0] sm:$0xff]
    %v8561 = vld [vmem:[%s8505 + $0x1b8] sm:$0xff]
    %v8562 = vld [vmem:[%s8505 + $0x1c0] sm:$0xff]
    %v8563 = vld [vmem:[%s8505 + $0x1c8] sm:$0xff]
    %v8564 = vld [vmem:[%s8505 + $0x1d0] sm:$0xff]
    %v8565 = vld [vmem:[%s8505 + $0x1d8] sm:$0xff]
    %v8566 = vld [vmem:[%s8505 + $0x1e0] sm:$0xff]
    %v8567 = vld [vmem:[%s8505 + $0x1e8] sm:$0xff]
    %v8568 = vld [vmem:[%s8505 + $0x1f0] sm:$0xff]
    %v8569 = vld [vmem:[%s8505 + $0x1f8] sm:$0xff]
    %v8570 = vld [vmem:[%s8505 + $0x200] sm:$0xff]
    %v8571 = vld [vmem:[%s8505 + $0x208] sm:$0xff]
    %v8572 = vld [vmem:[%s8505 + $0x210] sm:$0xff]
    %v8573 = vld [vmem:[%s8505 + $0x218] sm:$0xff]
    %v8574 = vld [vmem:[%s8505 + $0x220] sm:$0xff]
    %v8575 = vld [vmem:[%s8505 + $0x228] sm:$0xff]
    %v8576 = vld [vmem:[%s8505 + $0x230] sm:$0xff]
    %v8577 = vld [vmem:[%s8505 + $0x238] sm:$0xff]
    %v8578 = vld [vmem:[%s8505 + $0x240] sm:$0xff]
    %v8579 = vld [vmem:[%s8505 + $0x248] sm:$0xff]
    %v8580 = vld [vmem:[%s8505 + $0x250] sm:$0xff]
    %v8581 = vld [vmem:[%s8505 + $0x258] sm:$0xff]
    %v8582 = vld [vmem:[%s8505 + $0x260] sm:$0xff]
    %v8583 = vld [vmem:[%s8505 + $0x268] sm:$0xff]
    %v8584 = vld [vmem:[%s8505 + $0x270] sm:$0xff]
    %v8585 = vld [vmem:[%s8505 + $0x278] sm:$0xff]
    %v8586 = vld [vmem:[%s8505 + $0x280] sm:$0xff]
    %v8587 = vld [vmem:[%s8505 + $0x288] sm:$0xff]
    %v8588 = vld [vmem:[%s8505 + $0x290] sm:$0xff]
    %v8589 = vld [vmem:[%s8505 + $0x298] sm:$0xff]
    %v8590 = vld [vmem:[%s8505 + $0x2a0] sm:$0xff]
    %v8591 = vld [vmem:[%s8505 + $0x2a8] sm:$0xff]
    %v8592 = vld [vmem:[%s8505 + $0x2b0] sm:$0xff]
    %v8593 = vld [vmem:[%s8505 + $0x2b8] sm:$0xff]
    %v8594 = vld [vmem:[%s8505 + $0x2c0] sm:$0xff]
    %v8595 = vld [vmem:[%s8505 + $0x2c8] sm:$0xff]
    %v8596 = vld [vmem:[%s8505 + $0x2d0] sm:$0xff]
    %v8597 = vld [vmem:[%s8505 + $0x2d8] sm:$0xff]
    %v8598 = vld [vmem:[%s8505 + $0x2e0] sm:$0xff]
    %v8599 = vld [vmem:[%s8505 + $0x2e8] sm:$0xff]
    %v8600 = vld [vmem:[%s8505 + $0x2f0] sm:$0xff]
    %v8601 = vld [vmem:[%s8505 + $0x2f8] sm:$0xff]
    %v8602 = vld [vmem:[%s8505 + $0x300] sm:$0xff]
    %v8603 = vld [vmem:[%s8505 + $0x308] sm:$0xff]
    %v8604 = vld [vmem:[%s8505 + $0x310] sm:$0xff]
    %v8605 = vld [vmem:[%s8505 + $0x318] sm:$0xff]
    %v8606 = vld [vmem:[%s8505 + $0x320] sm:$0xff]
    %v8607 = vld [vmem:[%s8505 + $0x328] sm:$0xff]
    %v8608 = vld [vmem:[%s8505 + $0x330] sm:$0xff]
    %v8609 = vld [vmem:[%s8505 + $0x338] sm:$0xff]
    %v8610 = vld [vmem:[%s8505 + $0x340] sm:$0xff]
    %v8611 = vld [vmem:[%s8505 + $0x348] sm:$0xff]
    %v8612 = vld [vmem:[%s8505 + $0x350] sm:$0xff]
    %v8613 = vld [vmem:[%s8505 + $0x358] sm:$0xff]
    %v8614 = vld [vmem:[%s8505 + $0x360] sm:$0xff]
    %v8615 = vld [vmem:[%s8505 + $0x368] sm:$0xff]
    %v8616 = vld [vmem:[%s8505 + $0x370] sm:$0xff]
    %v8617 = vld [vmem:[%s8505 + $0x378] sm:$0xff]
    %v8618 = vld [vmem:[%s8505 + $0x380] sm:$0xff]
    %v8619 = vld [vmem:[%s8505 + $0x388] sm:$0xff]
    %v8620 = vld [vmem:[%s8505 + $0x390] sm:$0xff]
    %v8621 = vld [vmem:[%s8505 + $0x398] sm:$0xff]
    %v8622 = vld [vmem:[%s8505 + $0x3a0] sm:$0xff]
    %v8623 = vld [vmem:[%s8505 + $0x3a8] sm:$0xff]
    %v8624 = vld [vmem:[%s8505 + $0x3b0] sm:$0xff]
    %v8625 = vld [vmem:[%s8505 + $0x3b8] sm:$0xff]
    %v8626 = vld [vmem:[%s8505 + $0x3c0] sm:$0xff]
    %v8627 = vld [vmem:[%s8505 + $0x3c8] sm:$0xff]
    %v8628 = vld [vmem:[%s8505 + $0x3d0] sm:$0xff]
    %v8629 = vld [vmem:[%s8505 + $0x3d8] sm:$0xff]
    %v8630 = vld [vmem:[%s8505 + $0x3e0] sm:$0xff]
    %v8631 = vld [vmem:[%s8505 + $0x3e8] sm:$0xff]
    %v8632 = vld [vmem:[%s8505 + $0x3f0] sm:$0xff]
    %v8633 = vld [vmem:[%s8505 + $0x3f8] sm:$0xff]
    %8634 = vst [vmem:[#allocation1] ss:$4 sm:$0xff] %v7286
    %s8635 = scalar_lea.vmem [#allocation1], 1
    %8636 = vst [vmem:[%s8635] ss:$4 sm:$0xff] %v7289
    %s8637 = scalar_lea.vmem [#allocation1], 2
    %8638 = vst [vmem:[%s8637] ss:$4 sm:$0xff] %v7292
    %s8639 = scalar_lea.vmem [#allocation1], 3
    %8640 = vst [vmem:[%s8639] ss:$4 sm:$0xff] %v7295
    %s8641 = scalar_lea.vmem [#allocation1], 32
    %8642 = vst [vmem:[%s8641] ss:$4 sm:$0xff] %v7298
    %s8643 = scalar_lea.vmem [#allocation1], 33
    %8644 = vst [vmem:[%s8643] ss:$4 sm:$0xff] %v7301
    %s8645 = scalar_lea.vmem [#allocation1], 34
    %8646 = vst [vmem:[%s8645] ss:$4 sm:$0xff] %v7304
    %s8647 = scalar_lea.vmem [#allocation1], 35
    %8648 = vst [vmem:[%s8647] ss:$4 sm:$0xff] %v7307
    %v8649 = vld.sshfl [vmem:[#allocation1] sm:$0xff pattern:$0x73625140]
    %v8650 = vld.sshfl [vmem:[#allocation1 + $0x8] sm:$0xff pattern:$0x73625140]
    %v8651 = vld.sshfl [vmem:[#allocation1 + $0x10] sm:$0xff pattern:$0x73625140]
    %v8652 = vld.sshfl [vmem:[#allocation1 + $0x18] sm:$0xff pattern:$0x73625140]
    %v8653 = vld.sshfl [vmem:[#allocation1 + $0x20] sm:$0xff pattern:$0x73625140]
    %v8654 = vld.sshfl [vmem:[#allocation1 + $0x28] sm:$0xff pattern:$0x73625140]
    %v8655 = vld.sshfl [vmem:[#allocation1 + $0x30] sm:$0xff pattern:$0x73625140]
    %v8656 = vld.sshfl [vmem:[#allocation1 + $0x38] sm:$0xff pattern:$0x73625140]
    %8657 = vst [vmem:[#allocation1] ss:$4 sm:$0xff] %v7310
    %8658 = vst [vmem:[%s8635] ss:$4 sm:$0xff] %v7313
    %8659 = vst [vmem:[%s8637] ss:$4 sm:$0xff] %v7316
    %8660 = vst [vmem:[%s8639] ss:$4 sm:$0xff] %v7319
    %8661 = vst [vmem:[%s8641] ss:$4 sm:$0xff] %v7322
    %8662 = vst [vmem:[%s8643] ss:$4 sm:$0xff] %v7325
    %8663 = vst [vmem:[%s8645] ss:$4 sm:$0xff] %v7328
    %8664 = vst [vmem:[%s8647] ss:$4 sm:$0xff] %v7331
    %v8665 = vld.sshfl [vmem:[#allocation1] sm:$0xff pattern:$0x73625140]
    %v8666 = vld.sshfl [vmem:[#allocation1 + $0x8] sm:$0xff pattern:$0x73625140]
    %v8667 = vld.sshfl [vmem:[#allocation1 + $0x10] sm:$0xff pattern:$0x73625140]
    %v8668 = vld.sshfl [vmem:[#allocation1 + $0x18] sm:$0xff pattern:$0x73625140]
    %v8669 = vld.sshfl [vmem:[#allocation1 + $0x20] sm:$0xff pattern:$0x73625140]
    %v8670 = vld.sshfl [vmem:[#allocation1 + $0x28] sm:$0xff pattern:$0x73625140]
    %v8671 = vld.sshfl [vmem:[#allocation1 + $0x30] sm:$0xff pattern:$0x73625140]
    %v8672 = vld.sshfl [vmem:[#allocation1 + $0x38] sm:$0xff pattern:$0x73625140]
    %8673 = vst [vmem:[#allocation1] ss:$4 sm:$0xff] %v7334
    %8674 = vst [vmem:[%s8635] ss:$4 sm:$0xff] %v7337
    %8675 = vst [vmem:[%s8637] ss:$4 sm:$0xff] %v7340
    %8676 = vst [vmem:[%s8639] ss:$4 sm:$0xff] %v7343
    %8677 = vst [vmem:[%s8641] ss:$4 sm:$0xff] %v7346
    %8678 = vst [vmem:[%s8643] ss:$4 sm:$0xff] %v7349
    %8679 = vst [vmem:[%s8645] ss:$4 sm:$0xff] %v7352
    %8680 = vst [vmem:[%s8647] ss:$4 sm:$0xff] %v7355
    %v8681 = vld.sshfl [vmem:[#allocation1] sm:$0xff pattern:$0x73625140]
    %v8682 = vld.sshfl [vmem:[#allocation1 + $0x8] sm:$0xff pattern:$0x73625140]
    %v8683 = vld.sshfl [vmem:[#allocation1 + $0x10] sm:$0xff pattern:$0x73625140]
    %v8684 = vld.sshfl [vmem:[#allocation1 + $0x18] sm:$0xff pattern:$0x73625140]
    %v8685 = vld.sshfl [vmem:[#allocation1 + $0x20] sm:$0xff pattern:$0x73625140]
    %v8686 = vld.sshfl [vmem:[#allocation1 + $0x28] sm:$0xff pattern:$0x73625140]
    %v8687 = vld.sshfl [vmem:[#allocation1 + $0x30] sm:$0xff pattern:$0x73625140]
    %v8688 = vld.sshfl [vmem:[#allocation1 + $0x38] sm:$0xff pattern:$0x73625140]
    %8689 = vst [vmem:[#allocation1] ss:$4 sm:$0xff] %v7358
    %8690 = vst [vmem:[%s8635] ss:$4 sm:$0xff] %v7361
    %8691 = vst [vmem:[%s8637] ss:$4 sm:$0xff] %v7364
    %8692 = vst [vmem:[%s8639] ss:$4 sm:$0xff] %v7367
    %8693 = vst [vmem:[%s8641] ss:$4 sm:$0xff] %v7370
    %8694 = vst [vmem:[%s8643] ss:$4 sm:$0xff] %v7373
    %8695 = vst [vmem:[%s8645] ss:$4 sm:$0xff] %v7376
    %8696 = vst [vmem:[%s8647] ss:$4 sm:$0xff] %v7379
    %v8697 = vld.sshfl [vmem:[#allocation1] sm:$0xff pattern:$0x73625140]
    %v8698 = vld.sshfl [vmem:[#allocation1 + $0x8] sm:$0xff pattern:$0x73625140]
    %v8699 = vld.sshfl [vmem:[#allocation1 + $0x10] sm:$0xff pattern:$0x73625140]
    %v8700 = vld.sshfl [vmem:[#allocation1 + $0x18] sm:$0xff pattern:$0x73625140]
    %v8701 = vld.sshfl [vmem:[#allocation1 + $0x20] sm:$0xff pattern:$0x73625140]
    %v8702 = vld.sshfl [vmem:[#allocation1 + $0x28] sm:$0xff pattern:$0x73625140]
    %v8703 = vld.sshfl [vmem:[#allocation1 + $0x30] sm:$0xff pattern:$0x73625140]
    %v8704 = vld.sshfl [vmem:[#allocation1 + $0x38] sm:$0xff pattern:$0x73625140]
    %8737 = vmatpush.msra.mxu0 %v8536
    %8738 = vmatpush.msra.mxu0 %v8534
    %8739 = vmatpush.msra.mxu0 %v8532
    %8740 = vmatpush.msra.mxu0 %v8530
    %8741 = vmatpush.msra.mxu0 %v8528
    %8742 = vmatpush.msra.mxu0 %v8526
    %8743 = vmatpush.msra.mxu0 %v8524
    %8744 = vmatpush.msra.mxu0 %v8522
    %8745 = vmatpush.msra.mxu0 %v8520
    %8746 = vmatpush.msra.mxu0 %v8518
    %8747 = vmatpush.msra.mxu0 %v8516
    %8748 = vmatpush.msra.mxu0 %v8514
    %8749 = vmatpush.msra.mxu0 %v8512
    %8750 = vmatpush.msra.mxu0 %v8510
    %8751 = vmatpush.msra.mxu0 %v8508
    %8752 = vmatpush.msra.mxu0 %v8506
    %8753 = vmatmul.f32.gmra.mxu0 %v8649
    %v8754 = vpop.f32.mrf.mxu0
    %v8755 = vadd.f32 0.0, %v8754
    %8756 = vmatmul.f32.gmra.mxu0 %v8653
    %v8757 = vpop.f32.mrf.mxu0
    %v8758 = vadd.f32 0.0, %v8757
    %8759 = vmatmul.f32.gmra.mxu0 %v8665
    %v8760 = vpop.f32.mrf.mxu0
    %v8761 = vadd.f32 0.0, %v8760
    %8762 = vmatmul.f32.gmra.mxu0 %v8669
    %v8763 = vpop.f32.mrf.mxu0
    %v8764 = vadd.f32 0.0, %v8763
    %8765 = vmatmul.f32.gmra.mxu0 %v8681
    %v8766 = vpop.f32.mrf.mxu0
    %v8767 = vadd.f32 0.0, %v8766
    %8768 = vmatmul.f32.gmra.mxu0 %v8685
    %v8769 = vpop.f32.mrf.mxu0
    %v8770 = vadd.f32 0.0, %v8769
    %8771 = vmatmul.f32.gmra.mxu0 %v8697
    %v8772 = vpop.f32.mrf.mxu0
    %v8773 = vadd.f32 0.0, %v8772
    %8774 = vmatmul.f32.gmra.mxu0 %v8701
    %v8775 = vpop.f32.mrf.mxu0
    %v8776 = vadd.f32 0.0, %v8775
    %8777 = vdwg.mxu0
    %8778 = vmatpush.msra.mxu0 %v8568
    %8779 = vmatpush.msra.mxu0 %v8566
    %8780 = vmatpush.msra.mxu0 %v8564
    %8781 = vmatpush.msra.mxu0 %v8562
    %8782 = vmatpush.msra.mxu0 %v8560
    %8783 = vmatpush.msra.mxu0 %v8558
    %8784 = vmatpush.msra.mxu0 %v8556
    %8785 = vmatpush.msra.mxu0 %v8554
    %8786 = vmatpush.msra.mxu0 %v8552
    %8787 = vmatpush.msra.mxu0 %v8550
    %8788 = vmatpush.msra.mxu0 %v8548
    %8789 = vmatpush.msra.mxu0 %v8546
    %8790 = vmatpush.msra.mxu0 %v8544
    %8791 = vmatpush.msra.mxu0 %v8542
    %8792 = vmatpush.msra.mxu0 %v8540
    %8793 = vmatpush.msra.mxu0 %v8538
    %8794 = vmatmul.f32.gmra.mxu0 %v8650
    %v8795 = vpop.f32.mrf.mxu0
    %v8796 = vadd.f32 %v8755, %v8795
    %8797 = vmatmul.f32.gmra.mxu0 %v8654
    %v8798 = vpop.f32.mrf.mxu0
    %v8799 = vadd.f32 %v8758, %v8798
    %8800 = vmatmul.f32.gmra.mxu0 %v8666
    %v8801 = vpop.f32.mrf.mxu0
    %v8802 = vadd.f32 %v8761, %v8801
    %8803 = vmatmul.f32.gmra.mxu0 %v8670
    %v8804 = vpop.f32.mrf.mxu0
    %v8805 = vadd.f32 %v8764, %v8804
    %8806 = vmatmul.f32.gmra.mxu0 %v8682
    %v8807 = vpop.f32.mrf.mxu0
    %v8808 = vadd.f32 %v8767, %v8807
    %8809 = vmatmul.f32.gmra.mxu0 %v8686
    %v8810 = vpop.f32.mrf.mxu0
    %v8811 = vadd.f32 %v8770, %v8810
    %8812 = vmatmul.f32.gmra.mxu0 %v8698
    %v8813 = vpop.f32.mrf.mxu0
    %v8814 = vadd.f32 %v8773, %v8813
    %8815 = vmatmul.f32.gmra.mxu0 %v8702
    %v8816 = vpop.f32.mrf.mxu0
    %v8817 = vadd.f32 %v8776, %v8816
    %8818 = vdwg.mxu0
    %8819 = vmatpush.msra.mxu0 %v8600
    %8820 = vmatpush.msra.mxu0 %v8598
    %8821 = vmatpush.msra.mxu0 %v8596
    %8822 = vmatpush.msra.mxu0 %v8594
    %8823 = vmatpush.msra.mxu0 %v8592
    %8824 = vmatpush.msra.mxu0 %v8590
    %8825 = vmatpush.msra.mxu0 %v8588
    %8826 = vmatpush.msra.mxu0 %v8586
    %8827 = vmatpush.msra.mxu0 %v8584
    %8828 = vmatpush.msra.mxu0 %v8582
    %8829 = vmatpush.msra.mxu0 %v8580
    %8830 = vmatpush.msra.mxu0 %v8578
    %8831 = vmatpush.msra.mxu0 %v8576
    %8832 = vmatpush.msra.mxu0 %v8574
    %8833 = vmatpush.msra.mxu0 %v8572
    %8834 = vmatpush.msra.mxu0 %v8570
    %8835 = vmatmul.f32.gmra.mxu0 %v8651
    %v8836 = vpop.f32.mrf.mxu0
    %v8837 = vadd.f32 %v8796, %v8836
    %8838 = vmatmul.f32.gmra.mxu0 %v8655
    %v8839 = vpop.f32.mrf.mxu0
    %v8840 = vadd.f32 %v8799, %v8839
    %8841 = vmatmul.f32.gmra.mxu0 %v8667
    %v8842 = vpop.f32.mrf.mxu0
    %v8843 = vadd.f32 %v8802, %v8842
    %8844 = vmatmul.f32.gmra.mxu0 %v8671
    %v8845 = vpop.f32.mrf.mxu0
    %v8846 = vadd.f32 %v8805, %v8845
    %8847 = vmatmul.f32.gmra.mxu0 %v8683
    %v8848 = vpop.f32.mrf.mxu0
    %v8849 = vadd.f32 %v8808, %v8848
    %8850 = vmatmul.f32.gmra.mxu0 %v8687
    %v8851 = vpop.f32.mrf.mxu0
    %v8852 = vadd.f32 %v8811, %v8851
    %8853 = vmatmul.f32.gmra.mxu0 %v8699
    %v8854 = vpop.f32.mrf.mxu0
    %v8855 = vadd.f32 %v8814, %v8854
    %8856 = vmatmul.f32.gmra.mxu0 %v8703
    %v8857 = vpop.f32.mrf.mxu0
    %v8858 = vadd.f32 %v8817, %v8857
    %8859 = vdwg.mxu0
    %8860 = vmatpush.msra.mxu0 %v8632
    %8861 = vmatpush.msra.mxu0 %v8630
    %8862 = vmatpush.msra.mxu0 %v8628
    %8863 = vmatpush.msra.mxu0 %v8626
    %8864 = vmatpush.msra.mxu0 %v8624
    %8865 = vmatpush.msra.mxu0 %v8622
    %8866 = vmatpush.msra.mxu0 %v8620
    %8867 = vmatpush.msra.mxu0 %v8618
    %8868 = vmatpush.msra.mxu0 %v8616
    %8869 = vmatpush.msra.mxu0 %v8614
    %8870 = vmatpush.msra.mxu0 %v8612
    %8871 = vmatpush.msra.mxu0 %v8610
    %8872 = vmatpush.msra.mxu0 %v8608
    %8873 = vmatpush.msra.mxu0 %v8606
    %8874 = vmatpush.msra.mxu0 %v8604
    %8875 = vmatpush.msra.mxu0 %v8602
    %8876 = vmatmul.f32.gmra.mxu0 %v8652
    %v8877 = vpop.f32.mrf.mxu0
    %v8878 = vadd.f32 %v8837, %v8877
    %8879 = vmatmul.f32.gmra.mxu0 %v8656
    %v8880 = vpop.f32.mrf.mxu0
    %v8881 = vadd.f32 %v8840, %v8880
    %8882 = vmatmul.f32.gmra.mxu0 %v8668
    %v8883 = vpop.f32.mrf.mxu0
    %v8884 = vadd.f32 %v8843, %v8883
    %8885 = vmatmul.f32.gmra.mxu0 %v8672
    %v8886 = vpop.f32.mrf.mxu0
    %v8887 = vadd.f32 %v8846, %v8886
    %8888 = vmatmul.f32.gmra.mxu0 %v8684
    %v8889 = vpop.f32.mrf.mxu0
    %v8890 = vadd.f32 %v8849, %v8889
    %8891 = vmatmul.f32.gmra.mxu0 %v8688
    %v8892 = vpop.f32.mrf.mxu0
    %v8893 = vadd.f32 %v8852, %v8892
    %8894 = vmatmul.f32.gmra.mxu0 %v8700
    %v8895 = vpop.f32.mrf.mxu0
    %v8896 = vadd.f32 %v8855, %v8895
    %8897 = vmatmul.f32.gmra.mxu0 %v8704
    %v8898 = vpop.f32.mrf.mxu0
    %v8899 = vadd.f32 %v8858, %v8898
    %8900 = vdwg.mxu0
    %8901 = vmatpush.msra.mxu0 %v8537
    %8902 = vmatpush.msra.mxu0 %v8535
    %8903 = vmatpush.msra.mxu0 %v8533
    %8904 = vmatpush.msra.mxu0 %v8531
    %8905 = vmatpush.msra.mxu0 %v8529
    %8906 = vmatpush.msra.mxu0 %v8527
    %8907 = vmatpush.msra.mxu0 %v8525
    %8908 = vmatpush.msra.mxu0 %v8523
    %8909 = vmatpush.msra.mxu0 %v8521
    %8910 = vmatpush.msra.mxu0 %v8519
    %8911 = vmatpush.msra.mxu0 %v8517
    %8912 = vmatpush.msra.mxu0 %v8515
    %8913 = vmatpush.msra.mxu0 %v8513
    %8914 = vmatpush.msra.mxu0 %v8511
    %8915 = vmatpush.msra.mxu0 %v8509
    %8916 = vmatpush.msra.mxu0 %v8507
    %8917 = vmatmul.f32.gmra.mxu0 %v8649
    %v8918 = vpop.f32.mrf.mxu0
    %v8919 = vadd.f32 0.0, %v8918
    %8920 = vmatmul.f32.gmra.mxu0 %v8653
    %v8921 = vpop.f32.mrf.mxu0
    %v8922 = vadd.f32 0.0, %v8921
    %8923 = vmatmul.f32.gmra.mxu0 %v8665
    %v8924 = vpop.f32.mrf.mxu0
    %v8925 = vadd.f32 0.0, %v8924
    %8926 = vmatmul.f32.gmra.mxu0 %v8669
    %v8927 = vpop.f32.mrf.mxu0
    %v8928 = vadd.f32 0.0, %v8927
    %8929 = vmatmul.f32.gmra.mxu0 %v8681
    %v8930 = vpop.f32.mrf.mxu0
    %v8931 = vadd.f32 0.0, %v8930
    %8932 = vmatmul.f32.gmra.mxu0 %v8685
    %v8933 = vpop.f32.mrf.mxu0
    %v8934 = vadd.f32 0.0, %v8933
    %8935 = vmatmul.f32.gmra.mxu0 %v8697
    %v8936 = vpop.f32.mrf.mxu0
    %v8937 = vadd.f32 0.0, %v8936
    %8938 = vmatmul.f32.gmra.mxu0 %v8701
    %v8939 = vpop.f32.mrf.mxu0
    %v8940 = vadd.f32 0.0, %v8939
    %8941 = vdwg.mxu0
    %8942 = vmatpush.msra.mxu0 %v8569
    %8943 = vmatpush.msra.mxu0 %v8567
    %8944 = vmatpush.msra.mxu0 %v8565
    %8945 = vmatpush.msra.mxu0 %v8563
    %8946 = vmatpush.msra.mxu0 %v8561
    %8947 = vmatpush.msra.mxu0 %v8559
    %8948 = vmatpush.msra.mxu0 %v8557
    %8949 = vmatpush.msra.mxu0 %v8555
    %8950 = vmatpush.msra.mxu0 %v8553
    %8951 = vmatpush.msra.mxu0 %v8551
    %8952 = vmatpush.msra.mxu0 %v8549
    %8953 = vmatpush.msra.mxu0 %v8547
    %8954 = vmatpush.msra.mxu0 %v8545
    %8955 = vmatpush.msra.mxu0 %v8543
    %8956 = vmatpush.msra.mxu0 %v8541
    %8957 = vmatpush.msra.mxu0 %v8539
    %8958 = vmatmul.f32.gmra.mxu0 %v8650
    %v8959 = vpop.f32.mrf.mxu0
    %v8960 = vadd.f32 %v8919, %v8959
    %8961 = vmatmul.f32.gmra.mxu0 %v8654
    %v8962 = vpop.f32.mrf.mxu0
    %v8963 = vadd.f32 %v8922, %v8962
    %8964 = vmatmul.f32.gmra.mxu0 %v8666
    %v8965 = vpop.f32.mrf.mxu0
    %v8966 = vadd.f32 %v8925, %v8965
    %8967 = vmatmul.f32.gmra.mxu0 %v8670
    %v8968 = vpop.f32.mrf.mxu0
    %v8969 = vadd.f32 %v8928, %v8968
    %8970 = vmatmul.f32.gmra.mxu0 %v8682
    %v8971 = vpop.f32.mrf.mxu0
    %v8972 = vadd.f32 %v8931, %v8971
    %8973 = vmatmul.f32.gmra.mxu0 %v8686
    %v8974 = vpop.f32.mrf.mxu0
    %v8975 = vadd.f32 %v8934, %v8974
    %8976 = vmatmul.f32.gmra.mxu0 %v8698
    %v8977 = vpop.f32.mrf.mxu0
    %v8978 = vadd.f32 %v8937, %v8977
    %8979 = vmatmul.f32.gmra.mxu0 %v8702
    %v8980 = vpop.f32.mrf.mxu0
    %v8981 = vadd.f32 %v8940, %v8980
    %8982 = vdwg.mxu0
    %8983 = vmatpush.msra.mxu0 %v8601
    %8984 = vmatpush.msra.mxu0 %v8599
    %8985 = vmatpush.msra.mxu0 %v8597
    %8986 = vmatpush.msra.mxu0 %v8595
    %8987 = vmatpush.msra.mxu0 %v8593
    %8988 = vmatpush.msra.mxu0 %v8591
    %8989 = vmatpush.msra.mxu0 %v8589
    %8990 = vmatpush.msra.mxu0 %v8587
    %8991 = vmatpush.msra.mxu0 %v8585
    %8992 = vmatpush.msra.mxu0 %v8583
    %8993 = vmatpush.msra.mxu0 %v8581
    %8994 = vmatpush.msra.mxu0 %v8579
    %8995 = vmatpush.msra.mxu0 %v8577
    %8996 = vmatpush.msra.mxu0 %v8575
    %8997 = vmatpush.msra.mxu0 %v8573
    %8998 = vmatpush.msra.mxu0 %v8571
    %8999 = vmatmul.f32.gmra.mxu0 %v8651
    %v9000 = vpop.f32.mrf.mxu0
    %v9001 = vadd.f32 %v8960, %v9000
    %9002 = vmatmul.f32.gmra.mxu0 %v8655
    %v9003 = vpop.f32.mrf.mxu0
    %v9004 = vadd.f32 %v8963, %v9003
    %9005 = vmatmul.f32.gmra.mxu0 %v8667
    %v9006 = vpop.f32.mrf.mxu0
    %v9007 = vadd.f32 %v8966, %v9006
    %9008 = vmatmul.f32.gmra.mxu0 %v8671
    %v9009 = vpop.f32.mrf.mxu0
    %v9010 = vadd.f32 %v8969, %v9009
    %9011 = vmatmul.f32.gmra.mxu0 %v8683
    %v9012 = vpop.f32.mrf.mxu0
    %v9013 = vadd.f32 %v8972, %v9012
    %9014 = vmatmul.f32.gmra.mxu0 %v8687
    %v9015 = vpop.f32.mrf.mxu0
    %v9016 = vadd.f32 %v8975, %v9015
    %9017 = vmatmul.f32.gmra.mxu0 %v8699
    %v9018 = vpop.f32.mrf.mxu0
    %v9019 = vadd.f32 %v8978, %v9018
    %9020 = vmatmul.f32.gmra.mxu0 %v8703
    %v9021 = vpop.f32.mrf.mxu0
    %v9022 = vadd.f32 %v8981, %v9021
    %9023 = vdwg.mxu0
    %9024 = vmatpush.msra.mxu0 %v8633
    %9025 = vmatpush.msra.mxu0 %v8631
    %9026 = vmatpush.msra.mxu0 %v8629
    %9027 = vmatpush.msra.mxu0 %v8627
    %9028 = vmatpush.msra.mxu0 %v8625
    %9029 = vmatpush.msra.mxu0 %v8623
    %9030 = vmatpush.msra.mxu0 %v8621
    %9031 = vmatpush.msra.mxu0 %v8619
    %9032 = vmatpush.msra.mxu0 %v8617
    %9033 = vmatpush.msra.mxu0 %v8615
    %9034 = vmatpush.msra.mxu0 %v8613
    %9035 = vmatpush.msra.mxu0 %v8611
    %9036 = vmatpush.msra.mxu0 %v8609
    %9037 = vmatpush.msra.mxu0 %v8607
    %9038 = vmatpush.msra.mxu0 %v8605
    %9039 = vmatpush.msra.mxu0 %v8603
    %9040 = vmatmul.f32.gmra.mxu0 %v8652
    %v9041 = vpop.f32.mrf.mxu0
    %v9042 = vadd.f32 %v9001, %v9041
    %9043 = vmatmul.f32.gmra.mxu0 %v8656
    %v9044 = vpop.f32.mrf.mxu0
    %v9045 = vadd.f32 %v9004, %v9044
    %9046 = vmatmul.f32.gmra.mxu0 %v8668
    %v9047 = vpop.f32.mrf.mxu0
    %v9048 = vadd.f32 %v9007, %v9047
    %9049 = vmatmul.f32.gmra.mxu0 %v8672
    %v9050 = vpop.f32.mrf.mxu0
    %v9051 = vadd.f32 %v9010, %v9050
    %9052 = vmatmul.f32.gmra.mxu0 %v8684
    %v9053 = vpop.f32.mrf.mxu0
    %v9054 = vadd.f32 %v9013, %v9053
    %9055 = vmatmul.f32.gmra.mxu0 %v8688
    %v9056 = vpop.f32.mrf.mxu0
    %v9057 = vadd.f32 %v9016, %v9056
    %9058 = vmatmul.f32.gmra.mxu0 %v8700
    %v9059 = vpop.f32.mrf.mxu0
    %v9060 = vadd.f32 %v9019, %v9059
    %9061 = vmatmul.f32.gmra.mxu0 %v8704
    %v9062 = vpop.f32.mrf.mxu0
    %v9063 = vadd.f32 %v9022, %v9062
    %9064 = vdwg.mxu0
    %v9081 = vrot.slane %v7752, 7
    %v9082 = vrot.slane %v7916, 7
    %v9083 = vrot.slane %v7755, 7
    %v9084 = vsel %vm530, %v9081, %v9083
    %v9085 = vrot.slane %v7919, 7
    %v9086 = vsel %vm530, %v9082, %v9085
    %v9087 = vrot.slane %v7758, 7
    %v9088 = vsel %vm530, %v9083, %v9087
    %v9089 = vrot.slane %v7922, 7
    %v9090 = vsel %vm530, %v9085, %v9089
    %v9091 = vrot.slane %v7761, 7
    %v9092 = vsel %vm530, %v9087, %v9091
    %v9093 = vrot.slane %v7925, 7
    %v9094 = vsel %vm530, %v9089, %v9093
    %v9095 = vrot.slane %v7764, 7
    %v9096 = vrot.slane %v7928, 7
    %v9097 = vrot.slane %v7767, 7
    %v9098 = vsel %vm530, %v9095, %v9097
    %v9099 = vrot.slane %v7931, 7
    %v9100 = vsel %vm530, %v9096, %v9099
    %v9101 = vrot.slane %v7770, 7
    %v9102 = vsel %vm530, %v9097, %v9101
    %v9103 = vrot.slane %v7934, 7
    %v9104 = vsel %vm530, %v9099, %v9103
    %v9105 = vrot.slane %v7773, 7
    %v9106 = vsel %vm530, %v9101, %v9105
    %v9107 = vrot.slane %v7937, 7
    %v9108 = vsel %vm530, %v9103, %v9107
    %v9125 = vsel %vm530, 0.0, %v9081
    %v9126 = vsel %vm530, 0.0, %v9082
    %v9127 = vsel %vm530, 0.0, %v9095
    %v9128 = vsel %vm530, 0.0, %v9096
    %v9129 = vadd.f32 %v8318, %v9125
    %v9130 = vadd.f32 %v8482, %v9126
    %v9131 = vadd.f32 %v8321, %v9084
    %v9132 = vadd.f32 %v8485, %v9086
    %v9133 = vadd.f32 %v8324, %v9088
    %v9134 = vadd.f32 %v8488, %v9090
    %v9135 = vadd.f32 %v8327, %v9092
    %v9136 = vadd.f32 %v8491, %v9094
    %v9137 = vadd.f32 %v8330, %v9127
    %v9138 = vadd.f32 %v8494, %v9128
    %v9139 = vadd.f32 %v8333, %v9098
    %v9140 = vadd.f32 %v8497, %v9100
    %v9141 = vadd.f32 %v8336, %v9102
    %v9142 = vadd.f32 %v8500, %v9104
    %v9143 = vadd.f32 %v8339, %v9106
    %v9144 = vadd.f32 %v8503, %v9108
    %v9161 = vrot.slane %v8878, 1
    %v9162 = vrot.slane %v8881, 1
    %v9163 = vsel %vm1461, %v9161, %v9162
    %v9164 = vrot.slane %v9042, 1
    %v9165 = vrot.slane %v9045, 1
    %v9166 = vsel %vm1461, %v9164, %v9165
    %v9167 = vrot.slane %v8884, 1
    %v9168 = vsel %vm1461, %v9162, %v9167
    %v9169 = vrot.slane %v9048, 1
    %v9170 = vsel %vm1461, %v9165, %v9169
    %v9171 = vrot.slane %v8887, 1
    %v9172 = vsel %vm1461, %v9167, %v9171
    %v9173 = vrot.slane %v9051, 1
    %v9174 = vsel %vm1461, %v9169, %v9173
    %v9175 = vrot.slane %v8890, 1
    %v9176 = vrot.slane %v8893, 1
    %v9177 = vsel %vm1461, %v9175, %v9176
    %v9178 = vrot.slane %v9054, 1
    %v9179 = vrot.slane %v9057, 1
    %v9180 = vsel %vm1461, %v9178, %v9179
    %v9181 = vrot.slane %v8896, 1
    %v9182 = vsel %vm1461, %v9176, %v9181
    %v9183 = vrot.slane %v9060, 1
    %v9184 = vsel %vm1461, %v9179, %v9183
    %v9185 = vrot.slane %v8899, 1
    %v9186 = vsel %vm1461, %v9181, %v9185
    %v9187 = vrot.slane %v9063, 1
    %v9188 = vsel %vm1461, %v9183, %v9187
    %v9205 = vsel %vm1461, %v9171, 0.0
    %v9206 = vsel %vm1461, %v9173, 0.0
    %v9207 = vsel %vm1461, %v9185, 0.0
    %v9208 = vsel %vm1461, %v9187, 0.0
    %v9209 = vadd.f32 %v9129, %v9163
    %v9210 = vadd.f32 %v9130, %v9166
    %v9211 = vadd.f32 %v9131, %v9168
    %v9212 = vadd.f32 %v9132, %v9170
    %v9213 = vadd.f32 %v9133, %v9172
    %v9214 = vadd.f32 %v9134, %v9174
    %v9215 = vadd.f32 %v9135, %v9205
    %v9216 = vadd.f32 %v9136, %v9206
    %v9217 = vadd.f32 %v9137, %v9177
    %v9218 = vadd.f32 %v9138, %v9180
    %v9219 = vadd.f32 %v9139, %v9182
    %v9220 = vadd.f32 %v9140, %v9184
    %v9221 = vadd.f32 %v9141, %v9186
    %v9222 = vadd.f32 %v9142, %v9188
    %v9223 = vadd.f32 %v9143, %v9207
    %v9224 = vadd.f32 %v9144, %v9208
    %v9225 = vmul.f32 %v9209, 0.5
    %v9226 = vmul.f32 %v9210, 0.5
    %v9227 = vmul.f32 %v9211, 0.5
    %v9228 = vmul.f32 %v9212, 0.5
    %v9229 = vmul.f32 %v9213, 0.5
    %v9230 = vmul.f32 %v9214, 0.5
    %v9231 = vmul.f32 %v9215, 0.5
    %v9232 = vmul.f32 %v9216, 0.5
    %v9233 = vmul.f32 %v9217, 0.5
    %v9234 = vmul.f32 %v9218, 0.5
    %v9235 = vmul.f32 %v9219, 0.5
    %v9236 = vmul.f32 %v9220, 0.5
    %v9237 = vmul.f32 %v9221, 0.5
    %v9238 = vmul.f32 %v9222, 0.5
    %v9239 = vmul.f32 %v9223, 0.5
    %v9240 = vmul.f32 %v9224, 0.5
    %v9241 = vmul.f32 %v9209, 0.70710677
    %v9242 = vmul.f32 %v9210, 0.70710677
    %v9243 = vmul.f32 %v9211, 0.70710677
    %v9244 = vmul.f32 %v9212, 0.70710677
    %v9245 = vmul.f32 %v9213, 0.70710677
    %v9246 = vmul.f32 %v9214, 0.70710677
    %v9247 = vmul.f32 %v9215, 0.70710677
    %v9248 = vmul.f32 %v9216, 0.70710677
    %v9249 = vmul.f32 %v9217, 0.70710677
    %v9250 = vmul.f32 %v9218, 0.70710677
    %v9251 = vmul.f32 %v9219, 0.70710677
    %v9252 = vmul.f32 %v9220, 0.70710677
    %v9253 = vmul.f32 %v9221, 0.70710677
    %v9254 = vmul.f32 %v9222, 0.70710677
    %v9255 = vmul.f32 %v9223, 0.70710677
    %v9256 = vmul.f32 %v9224, 0.70710677
    %v9257 = vmul.f32 %v9241, %v9241
    %v9258 = vmin.f32 16.0, %v9257
    %v9259 = vmul.f32 %v9258, 2.1237322e-06
    %v9260 = vadd.f32 %v9259, 0.00028619796
    %v9261 = vmul.f32 %v9258, %v9260
    %v9262 = vadd.f32 %v9261, 0.0036580483
    %v9263 = vmul.f32 %v9258, %v9262
    %v9264 = vadd.f32 %v9263, 0.05243302
    %v9265 = vmul.f32 %v9258, %v9264
    %v9266 = vadd.f32 %v9265, 0.18741608
    %v9267 = vmul.f32 %v9258, %v9266
    %v9268 = vadd.f32 %v9267, 1.1283791
    %v9269 = vmul.f32 %v9241, %v9268
    %v9270 = vmul.f32 %v9258, 3.8918573e-05
    %v9271 = vadd.f32 %v9270, 0.001143296
    %v9272 = vmul.f32 %v9258, %v9271
    %v9273 = vadd.f32 %v9272, 0.014752088
    %v9274 = vmul.f32 %v9258, %v9273
    %v9275 = vadd.f32 %v9274, 0.112945676
    %v9276 = vmul.f32 %v9258, %v9275
    %v9277 = vadd.f32 %v9276, 0.4994258
    %v9278 = vmul.f32 %v9258, %v9277
    %v9279 = vadd.f32 %v9278, 1.0
    %v9280 = vrcp.pop %v9279
    %v9281 = vmul.f32 %v9279, %v9280
    %v9282 = vsub.f32 1.0, %v9281
    %v9283 = vmul.f32 %v9280, %v9282
    %v9284 = vadd.f32 %v9280, %v9283
    %vm9285 = vweird.f32 %v9279
    %vm9286 = vweird.f32 %v9280
    %vm9287 = vmor %vm9285, %vm9286
    %v9288 = vsel %vm9287, %v9280, %v9284
    %v9289 = vand.u32 2147483647, %v9279
    %vm9290 = vcmp.eq.f32.partialorder %v9289, 8.507059e+37
    %v9291 = vand.u32 %v9279, 2147483648
    %v9292 = vor.u32 1.1754944e-38, %v9291
    %v9293 = vsel %vm9290, %v9292, %v9288
    %v9294 = vmul.f32 %v9269, %v9293
    %v9295 = vmin.f32 %v9294, 1.0
    %v9296 = vmax.f32 %v9295, -1.0
    %v9297 = vmul.f32 %v9242, %v9242
    %v9298 = vmin.f32 16.0, %v9297
    %v9299 = vmul.f32 %v9298, 2.1237322e-06
    %v9300 = vadd.f32 %v9299, 0.00028619796
    %v9301 = vmul.f32 %v9298, %v9300
    %v9302 = vadd.f32 %v9301, 0.0036580483
    %v9303 = vmul.f32 %v9298, %v9302
    %v9304 = vadd.f32 %v9303, 0.05243302
    %v9305 = vmul.f32 %v9298, %v9304
    %v9306 = vadd.f32 %v9305, 0.18741608
    %v9307 = vmul.f32 %v9298, %v9306
    %v9308 = vadd.f32 %v9307, 1.1283791
    %v9309 = vmul.f32 %v9242, %v9308
    %v9310 = vmul.f32 %v9298, 3.8918573e-05
    %v9311 = vadd.f32 %v9310, 0.001143296
    %v9312 = vmul.f32 %v9298, %v9311
    %v9313 = vadd.f32 %v9312, 0.014752088
    %v9314 = vmul.f32 %v9298, %v9313
    %v9315 = vadd.f32 %v9314, 0.112945676
    %v9316 = vmul.f32 %v9298, %v9315
    %v9317 = vadd.f32 %v9316, 0.4994258
    %v9318 = vmul.f32 %v9298, %v9317
    %v9319 = vadd.f32 %v9318, 1.0
    %v9320 = vrcp.pop %v9319
    %v9321 = vmul.f32 %v9319, %v9320
    %v9322 = vsub.f32 1.0, %v9321
    %v9323 = vmul.f32 %v9320, %v9322
    %v9324 = vadd.f32 %v9320, %v9323
    %vm9325 = vweird.f32 %v9319
    %vm9326 = vweird.f32 %v9320
    %vm9327 = vmor %vm9325, %vm9326
    %v9328 = vsel %vm9327, %v9320, %v9324
    %v9329 = vand.u32 2147483647, %v9319
    %vm9330 = vcmp.eq.f32.partialorder %v9329, 8.507059e+37
    %v9331 = vand.u32 %v9319, 2147483648
    %v9332 = vor.u32 1.1754944e-38, %v9331
    %v9333 = vsel %vm9330, %v9332, %v9328
    %v9334 = vmul.f32 %v9309, %v9333
    %v9335 = vmin.f32 %v9334, 1.0
    %v9336 = vmax.f32 %v9335, -1.0
    %v9337 = vmul.f32 %v9243, %v9243
    %v9338 = vmin.f32 16.0, %v9337
    %v9339 = vmul.f32 %v9338, 2.1237322e-06
    %v9340 = vadd.f32 %v9339, 0.00028619796
    %v9341 = vmul.f32 %v9338, %v9340
    %v9342 = vadd.f32 %v9341, 0.0036580483
    %v9343 = vmul.f32 %v9338, %v9342
    %v9344 = vadd.f32 %v9343, 0.05243302
    %v9345 = vmul.f32 %v9338, %v9344
    %v9346 = vadd.f32 %v9345, 0.18741608
    %v9347 = vmul.f32 %v9338, %v9346
    %v9348 = vadd.f32 %v9347, 1.1283791
    %v9349 = vmul.f32 %v9243, %v9348
    %v9350 = vmul.f32 %v9338, 3.8918573e-05
    %v9351 = vadd.f32 %v9350, 0.001143296
    %v9352 = vmul.f32 %v9338, %v9351
    %v9353 = vadd.f32 %v9352, 0.014752088
    %v9354 = vmul.f32 %v9338, %v9353
    %v9355 = vadd.f32 %v9354, 0.112945676
    %v9356 = vmul.f32 %v9338, %v9355
    %v9357 = vadd.f32 %v9356, 0.4994258
    %v9358 = vmul.f32 %v9338, %v9357
    %v9359 = vadd.f32 %v9358, 1.0
    %v9360 = vrcp.pop %v9359
    %v9361 = vmul.f32 %v9359, %v9360
    %v9362 = vsub.f32 1.0, %v9361
    %v9363 = vmul.f32 %v9360, %v9362
    %v9364 = vadd.f32 %v9360, %v9363
    %vm9365 = vweird.f32 %v9359
    %vm9366 = vweird.f32 %v9360
    %vm9367 = vmor %vm9365, %vm9366
    %v9368 = vsel %vm9367, %v9360, %v9364
    %v9369 = vand.u32 2147483647, %v9359
    %vm9370 = vcmp.eq.f32.partialorder %v9369, 8.507059e+37
    %v9371 = vand.u32 %v9359, 2147483648
    %v9372 = vor.u32 1.1754944e-38, %v9371
    %v9373 = vsel %vm9370, %v9372, %v9368
    %v9374 = vmul.f32 %v9349, %v9373
    %v9375 = vmin.f32 %v9374, 1.0
    %v9376 = vmax.f32 %v9375, -1.0
    %v9377 = vmul.f32 %v9244, %v9244
    %v9378 = vmin.f32 16.0, %v9377
    %v9379 = vmul.f32 %v9378, 2.1237322e-06
    %v9380 = vadd.f32 %v9379, 0.00028619796
    %v9381 = vmul.f32 %v9378, %v9380
    %v9382 = vadd.f32 %v9381, 0.0036580483
    %v9383 = vmul.f32 %v9378, %v9382
    %v9384 = vadd.f32 %v9383, 0.05243302
    %v9385 = vmul.f32 %v9378, %v9384
    %v9386 = vadd.f32 %v9385, 0.18741608
    %v9387 = vmul.f32 %v9378, %v9386
    %v9388 = vadd.f32 %v9387, 1.1283791
    %v9389 = vmul.f32 %v9244, %v9388
    %v9390 = vmul.f32 %v9378, 3.8918573e-05
    %v9391 = vadd.f32 %v9390, 0.001143296
    %v9392 = vmul.f32 %v9378, %v9391
    %v9393 = vadd.f32 %v9392, 0.014752088
    %v9394 = vmul.f32 %v9378, %v9393
    %v9395 = vadd.f32 %v9394, 0.112945676
    %v9396 = vmul.f32 %v9378, %v9395
    %v9397 = vadd.f32 %v9396, 0.4994258
    %v9398 = vmul.f32 %v9378, %v9397
    %v9399 = vadd.f32 %v9398, 1.0
    %v9400 = vrcp.pop %v9399
    %v9401 = vmul.f32 %v9399, %v9400
    %v9402 = vsub.f32 1.0, %v9401
    %v9403 = vmul.f32 %v9400, %v9402
    %v9404 = vadd.f32 %v9400, %v9403
    %vm9405 = vweird.f32 %v9399
    %vm9406 = vweird.f32 %v9400
    %vm9407 = vmor %vm9405, %vm9406
    %v9408 = vsel %vm9407, %v9400, %v9404
    %v9409 = vand.u32 2147483647, %v9399
    %vm9410 = vcmp.eq.f32.partialorder %v9409, 8.507059e+37
    %v9411 = vand.u32 %v9399, 2147483648
    %v9412 = vor.u32 1.1754944e-38, %v9411
    %v9413 = vsel %vm9410, %v9412, %v9408
    %v9414 = vmul.f32 %v9389, %v9413
    %v9415 = vmin.f32 %v9414, 1.0
    %v9416 = vmax.f32 %v9415, -1.0
    %v9417 = vmul.f32 %v9245, %v9245
    %v9418 = vmin.f32 16.0, %v9417
    %v9419 = vmul.f32 %v9418, 2.1237322e-06
    %v9420 = vadd.f32 %v9419, 0.00028619796
    %v9421 = vmul.f32 %v9418, %v9420
    %v9422 = vadd.f32 %v9421, 0.0036580483
    %v9423 = vmul.f32 %v9418, %v9422
    %v9424 = vadd.f32 %v9423, 0.05243302
    %v9425 = vmul.f32 %v9418, %v9424
    %v9426 = vadd.f32 %v9425, 0.18741608
    %v9427 = vmul.f32 %v9418, %v9426
    %v9428 = vadd.f32 %v9427, 1.1283791
    %v9429 = vmul.f32 %v9245, %v9428
    %v9430 = vmul.f32 %v9418, 3.8918573e-05
    %v9431 = vadd.f32 %v9430, 0.001143296
    %v9432 = vmul.f32 %v9418, %v9431
    %v9433 = vadd.f32 %v9432, 0.014752088
    %v9434 = vmul.f32 %v9418, %v9433
    %v9435 = vadd.f32 %v9434, 0.112945676
    %v9436 = vmul.f32 %v9418, %v9435
    %v9437 = vadd.f32 %v9436, 0.4994258
    %v9438 = vmul.f32 %v9418, %v9437
    %v9439 = vadd.f32 %v9438, 1.0
    %v9440 = vrcp.pop %v9439
    %v9441 = vmul.f32 %v9439, %v9440
    %v9442 = vsub.f32 1.0, %v9441
    %v9443 = vmul.f32 %v9440, %v9442
    %v9444 = vadd.f32 %v9440, %v9443
    %vm9445 = vweird.f32 %v9439
    %vm9446 = vweird.f32 %v9440
    %vm9447 = vmor %vm9445, %vm9446
    %v9448 = vsel %vm9447, %v9440, %v9444
    %v9449 = vand.u32 2147483647, %v9439
    %vm9450 = vcmp.eq.f32.partialorder %v9449, 8.507059e+37
    %v9451 = vand.u32 %v9439, 2147483648
    %v9452 = vor.u32 1.1754944e-38, %v9451
    %v9453 = vsel %vm9450, %v9452, %v9448
    %v9454 = vmul.f32 %v9429, %v9453
    %v9455 = vmin.f32 %v9454, 1.0
    %v9456 = vmax.f32 %v9455, -1.0
    %v9457 = vmul.f32 %v9246, %v9246
    %v9458 = vmin.f32 16.0, %v9457
    %v9459 = vmul.f32 %v9458, 2.1237322e-06
    %v9460 = vadd.f32 %v9459, 0.00028619796
    %v9461 = vmul.f32 %v9458, %v9460
    %v9462 = vadd.f32 %v9461, 0.0036580483
    %v9463 = vmul.f32 %v9458, %v9462
    %v9464 = vadd.f32 %v9463, 0.05243302
    %v9465 = vmul.f32 %v9458, %v9464
    %v9466 = vadd.f32 %v9465, 0.18741608
    %v9467 = vmul.f32 %v9458, %v9466
    %v9468 = vadd.f32 %v9467, 1.1283791
    %v9469 = vmul.f32 %v9246, %v9468
    %v9470 = vmul.f32 %v9458, 3.8918573e-05
    %v9471 = vadd.f32 %v9470, 0.001143296
    %v9472 = vmul.f32 %v9458, %v9471
    %v9473 = vadd.f32 %v9472, 0.014752088
    %v9474 = vmul.f32 %v9458, %v9473
    %v9475 = vadd.f32 %v9474, 0.112945676
    %v9476 = vmul.f32 %v9458, %v9475
    %v9477 = vadd.f32 %v9476, 0.4994258
    %v9478 = vmul.f32 %v9458, %v9477
    %v9479 = vadd.f32 %v9478, 1.0
    %v9480 = vrcp.pop %v9479
    %v9481 = vmul.f32 %v9479, %v9480
    %v9482 = vsub.f32 1.0, %v9481
    %v9483 = vmul.f32 %v9480, %v9482
    %v9484 = vadd.f32 %v9480, %v9483
    %vm9485 = vweird.f32 %v9479
    %vm9486 = vweird.f32 %v9480
    %vm9487 = vmor %vm9485, %vm9486
    %v9488 = vsel %vm9487, %v9480, %v9484
    %v9489 = vand.u32 2147483647, %v9479
    %vm9490 = vcmp.eq.f32.partialorder %v9489, 8.507059e+37
    %v9491 = vand.u32 %v9479, 2147483648
    %v9492 = vor.u32 1.1754944e-38, %v9491
    %v9493 = vsel %vm9490, %v9492, %v9488
    %v9494 = vmul.f32 %v9469, %v9493
    %v9495 = vmin.f32 %v9494, 1.0
    %v9496 = vmax.f32 %v9495, -1.0
    %v9497 = vmul.f32 %v9247, %v9247
    %v9498 = vmin.f32 16.0, %v9497
    %v9499 = vmul.f32 %v9498, 2.1237322e-06
    %v9500 = vadd.f32 %v9499, 0.00028619796
    %v9501 = vmul.f32 %v9498, %v9500
    %v9502 = vadd.f32 %v9501, 0.0036580483
    %v9503 = vmul.f32 %v9498, %v9502
    %v9504 = vadd.f32 %v9503, 0.05243302
    %v9505 = vmul.f32 %v9498, %v9504
    %v9506 = vadd.f32 %v9505, 0.18741608
    %v9507 = vmul.f32 %v9498, %v9506
    %v9508 = vadd.f32 %v9507, 1.1283791
    %v9509 = vmul.f32 %v9247, %v9508
    %v9510 = vmul.f32 %v9498, 3.8918573e-05
    %v9511 = vadd.f32 %v9510, 0.001143296
    %v9512 = vmul.f32 %v9498, %v9511
    %v9513 = vadd.f32 %v9512, 0.014752088
    %v9514 = vmul.f32 %v9498, %v9513
    %v9515 = vadd.f32 %v9514, 0.112945676
    %v9516 = vmul.f32 %v9498, %v9515
    %v9517 = vadd.f32 %v9516, 0.4994258
    %v9518 = vmul.f32 %v9498, %v9517
    %v9519 = vadd.f32 %v9518, 1.0
    %v9520 = vrcp.pop %v9519
    %v9521 = vmul.f32 %v9519, %v9520
    %v9522 = vsub.f32 1.0, %v9521
    %v9523 = vmul.f32 %v9520, %v9522
    %v9524 = vadd.f32 %v9520, %v9523
    %vm9525 = vweird.f32 %v9519
    %vm9526 = vweird.f32 %v9520
    %vm9527 = vmor %vm9525, %vm9526
    %v9528 = vsel %vm9527, %v9520, %v9524
    %v9529 = vand.u32 2147483647, %v9519
    %vm9530 = vcmp.eq.f32.partialorder %v9529, 8.507059e+37
    %v9531 = vand.u32 %v9519, 2147483648
    %v9532 = vor.u32 1.1754944e-38, %v9531
    %v9533 = vsel %vm9530, %v9532, %v9528
    %v9534 = vmul.f32 %v9509, %v9533
    %v9535 = vmin.f32 %v9534, 1.0
    %v9536 = vmax.f32 %v9535, -1.0
    %v9537 = vmul.f32 %v9248, %v9248
    %v9538 = vmin.f32 16.0, %v9537
    %v9539 = vmul.f32 %v9538, 2.1237322e-06
    %v9540 = vadd.f32 %v9539, 0.00028619796
    %v9541 = vmul.f32 %v9538, %v9540
    %v9542 = vadd.f32 %v9541, 0.0036580483
    %v9543 = vmul.f32 %v9538, %v9542
    %v9544 = vadd.f32 %v9543, 0.05243302
    %v9545 = vmul.f32 %v9538, %v9544
    %v9546 = vadd.f32 %v9545, 0.18741608
    %v9547 = vmul.f32 %v9538, %v9546
    %v9548 = vadd.f32 %v9547, 1.1283791
    %v9549 = vmul.f32 %v9248, %v9548
    %v9550 = vmul.f32 %v9538, 3.8918573e-05
    %v9551 = vadd.f32 %v9550, 0.001143296
    %v9552 = vmul.f32 %v9538, %v9551
    %v9553 = vadd.f32 %v9552, 0.014752088
    %v9554 = vmul.f32 %v9538, %v9553
    %v9555 = vadd.f32 %v9554, 0.112945676
    %v9556 = vmul.f32 %v9538, %v9555
    %v9557 = vadd.f32 %v9556, 0.4994258
    %v9558 = vmul.f32 %v9538, %v9557
    %v9559 = vadd.f32 %v9558, 1.0
    %v9560 = vrcp.pop %v9559
    %v9561 = vmul.f32 %v9559, %v9560
    %v9562 = vsub.f32 1.0, %v9561
    %v9563 = vmul.f32 %v9560, %v9562
    %v9564 = vadd.f32 %v9560, %v9563
    %vm9565 = vweird.f32 %v9559
    %vm9566 = vweird.f32 %v9560
    %vm9567 = vmor %vm9565, %vm9566
    %v9568 = vsel %vm9567, %v9560, %v9564
    %v9569 = vand.u32 2147483647, %v9559
    %vm9570 = vcmp.eq.f32.partialorder %v9569, 8.507059e+37
    %v9571 = vand.u32 %v9559, 2147483648
    %v9572 = vor.u32 1.1754944e-38, %v9571
    %v9573 = vsel %vm9570, %v9572, %v9568
    %v9574 = vmul.f32 %v9549, %v9573
    %v9575 = vmin.f32 %v9574, 1.0
    %v9576 = vmax.f32 %v9575, -1.0
    %v9577 = vmul.f32 %v9249, %v9249
    %v9578 = vmin.f32 16.0, %v9577
    %v9579 = vmul.f32 %v9578, 2.1237322e-06
    %v9580 = vadd.f32 %v9579, 0.00028619796
    %v9581 = vmul.f32 %v9578, %v9580
    %v9582 = vadd.f32 %v9581, 0.0036580483
    %v9583 = vmul.f32 %v9578, %v9582
    %v9584 = vadd.f32 %v9583, 0.05243302
    %v9585 = vmul.f32 %v9578, %v9584
    %v9586 = vadd.f32 %v9585, 0.18741608
    %v9587 = vmul.f32 %v9578, %v9586
    %v9588 = vadd.f32 %v9587, 1.1283791
    %v9589 = vmul.f32 %v9249, %v9588
    %v9590 = vmul.f32 %v9578, 3.8918573e-05
    %v9591 = vadd.f32 %v9590, 0.001143296
    %v9592 = vmul.f32 %v9578, %v9591
    %v9593 = vadd.f32 %v9592, 0.014752088
    %v9594 = vmul.f32 %v9578, %v9593
    %v9595 = vadd.f32 %v9594, 0.112945676
    %v9596 = vmul.f32 %v9578, %v9595
    %v9597 = vadd.f32 %v9596, 0.4994258
    %v9598 = vmul.f32 %v9578, %v9597
    %v9599 = vadd.f32 %v9598, 1.0
    %v9600 = vrcp.pop %v9599
    %v9601 = vmul.f32 %v9599, %v9600
    %v9602 = vsub.f32 1.0, %v9601
    %v9603 = vmul.f32 %v9600, %v9602
    %v9604 = vadd.f32 %v9600, %v9603
    %vm9605 = vweird.f32 %v9599
    %vm9606 = vweird.f32 %v9600
    %vm9607 = vmor %vm9605, %vm9606
    %v9608 = vsel %vm9607, %v9600, %v9604
    %v9609 = vand.u32 2147483647, %v9599
    %vm9610 = vcmp.eq.f32.partialorder %v9609, 8.507059e+37
    %v9611 = vand.u32 %v9599, 2147483648
    %v9612 = vor.u32 1.1754944e-38, %v9611
    %v9613 = vsel %vm9610, %v9612, %v9608
    %v9614 = vmul.f32 %v9589, %v9613
    %v9615 = vmin.f32 %v9614, 1.0
    %v9616 = vmax.f32 %v9615, -1.0
    %v9617 = vmul.f32 %v9250, %v9250
    %v9618 = vmin.f32 16.0, %v9617
    %v9619 = vmul.f32 %v9618, 2.1237322e-06
    %v9620 = vadd.f32 %v9619, 0.00028619796
    %v9621 = vmul.f32 %v9618, %v9620
    %v9622 = vadd.f32 %v9621, 0.0036580483
    %v9623 = vmul.f32 %v9618, %v9622
    %v9624 = vadd.f32 %v9623, 0.05243302
    %v9625 = vmul.f32 %v9618, %v9624
    %v9626 = vadd.f32 %v9625, 0.18741608
    %v9627 = vmul.f32 %v9618, %v9626
    %v9628 = vadd.f32 %v9627, 1.1283791
    %v9629 = vmul.f32 %v9250, %v9628
    %v9630 = vmul.f32 %v9618, 3.8918573e-05
    %v9631 = vadd.f32 %v9630, 0.001143296
    %v9632 = vmul.f32 %v9618, %v9631
    %v9633 = vadd.f32 %v9632, 0.014752088
    %v9634 = vmul.f32 %v9618, %v9633
    %v9635 = vadd.f32 %v9634, 0.112945676
    %v9636 = vmul.f32 %v9618, %v9635
    %v9637 = vadd.f32 %v9636, 0.4994258
    %v9638 = vmul.f32 %v9618, %v9637
    %v9639 = vadd.f32 %v9638, 1.0
    %v9640 = vrcp.pop %v9639
    %v9641 = vmul.f32 %v9639, %v9640
    %v9642 = vsub.f32 1.0, %v9641
    %v9643 = vmul.f32 %v9640, %v9642
    %v9644 = vadd.f32 %v9640, %v9643
    %vm9645 = vweird.f32 %v9639
    %vm9646 = vweird.f32 %v9640
    %vm9647 = vmor %vm9645, %vm9646
    %v9648 = vsel %vm9647, %v9640, %v9644
    %v9649 = vand.u32 2147483647, %v9639
    %vm9650 = vcmp.eq.f32.partialorder %v9649, 8.507059e+37
    %v9651 = vand.u32 %v9639, 2147483648
    %v9652 = vor.u32 1.1754944e-38, %v9651
    %v9653 = vsel %vm9650, %v9652, %v9648
    %v9654 = vmul.f32 %v9629, %v9653
    %v9655 = vmin.f32 %v9654, 1.0
    %v9656 = vmax.f32 %v9655, -1.0
    %v9657 = vmul.f32 %v9251, %v9251
    %v9658 = vmin.f32 16.0, %v9657
    %v9659 = vmul.f32 %v9658, 2.1237322e-06
    %v9660 = vadd.f32 %v9659, 0.00028619796
    %v9661 = vmul.f32 %v9658, %v9660
    %v9662 = vadd.f32 %v9661, 0.0036580483
    %v9663 = vmul.f32 %v9658, %v9662
    %v9664 = vadd.f32 %v9663, 0.05243302
    %v9665 = vmul.f32 %v9658, %v9664
    %v9666 = vadd.f32 %v9665, 0.18741608
    %v9667 = vmul.f32 %v9658, %v9666
    %v9668 = vadd.f32 %v9667, 1.1283791
    %v9669 = vmul.f32 %v9251, %v9668
    %v9670 = vmul.f32 %v9658, 3.8918573e-05
    %v9671 = vadd.f32 %v9670, 0.001143296
    %v9672 = vmul.f32 %v9658, %v9671
    %v9673 = vadd.f32 %v9672, 0.014752088
    %v9674 = vmul.f32 %v9658, %v9673
    %v9675 = vadd.f32 %v9674, 0.112945676
    %v9676 = vmul.f32 %v9658, %v9675
    %v9677 = vadd.f32 %v9676, 0.4994258
    %v9678 = vmul.f32 %v9658, %v9677
    %v9679 = vadd.f32 %v9678, 1.0
    %v9680 = vrcp.pop %v9679
    %v9681 = vmul.f32 %v9679, %v9680
    %v9682 = vsub.f32 1.0, %v9681
    %v9683 = vmul.f32 %v9680, %v9682
    %v9684 = vadd.f32 %v9680, %v9683
    %vm9685 = vweird.f32 %v9679
    %vm9686 = vweird.f32 %v9680
    %vm9687 = vmor %vm9685, %vm9686
    %v9688 = vsel %vm9687, %v9680, %v9684
    %v9689 = vand.u32 2147483647, %v9679
    %vm9690 = vcmp.eq.f32.partialorder %v9689, 8.507059e+37
    %v9691 = vand.u32 %v9679, 2147483648
    %v9692 = vor.u32 1.1754944e-38, %v9691
    %v9693 = vsel %vm9690, %v9692, %v9688
    %v9694 = vmul.f32 %v9669, %v9693
    %v9695 = vmin.f32 %v9694, 1.0
    %v9696 = vmax.f32 %v9695, -1.0
    %v9697 = vmul.f32 %v9252, %v9252
    %v9698 = vmin.f32 16.0, %v9697
    %v9699 = vmul.f32 %v9698, 2.1237322e-06
    %v9700 = vadd.f32 %v9699, 0.00028619796
    %v9701 = vmul.f32 %v9698, %v9700
    %v9702 = vadd.f32 %v9701, 0.0036580483
    %v9703 = vmul.f32 %v9698, %v9702
    %v9704 = vadd.f32 %v9703, 0.05243302
    %v9705 = vmul.f32 %v9698, %v9704
    %v9706 = vadd.f32 %v9705, 0.18741608
    %v9707 = vmul.f32 %v9698, %v9706
    %v9708 = vadd.f32 %v9707, 1.1283791
    %v9709 = vmul.f32 %v9252, %v9708
    %v9710 = vmul.f32 %v9698, 3.8918573e-05
    %v9711 = vadd.f32 %v9710, 0.001143296
    %v9712 = vmul.f32 %v9698, %v9711
    %v9713 = vadd.f32 %v9712, 0.014752088
    %v9714 = vmul.f32 %v9698, %v9713
    %v9715 = vadd.f32 %v9714, 0.112945676
    %v9716 = vmul.f32 %v9698, %v9715
    %v9717 = vadd.f32 %v9716, 0.4994258
    %v9718 = vmul.f32 %v9698, %v9717
    %v9719 = vadd.f32 %v9718, 1.0
    %v9720 = vrcp.pop %v9719
    %v9721 = vmul.f32 %v9719, %v9720
    %v9722 = vsub.f32 1.0, %v9721
    %v9723 = vmul.f32 %v9720, %v9722
    %v9724 = vadd.f32 %v9720, %v9723
    %vm9725 = vweird.f32 %v9719
    %vm9726 = vweird.f32 %v9720
    %vm9727 = vmor %vm9725, %vm9726
    %v9728 = vsel %vm9727, %v9720, %v9724
    %v9729 = vand.u32 2147483647, %v9719
    %vm9730 = vcmp.eq.f32.partialorder %v9729, 8.507059e+37
    %v9731 = vand.u32 %v9719, 2147483648
    %v9732 = vor.u32 1.1754944e-38, %v9731
    %v9733 = vsel %vm9730, %v9732, %v9728
    %v9734 = vmul.f32 %v9709, %v9733
    %v9735 = vmin.f32 %v9734, 1.0
    %v9736 = vmax.f32 %v9735, -1.0
    %v9737 = vmul.f32 %v9253, %v9253
    %v9738 = vmin.f32 16.0, %v9737
    %v9739 = vmul.f32 %v9738, 2.1237322e-06
    %v9740 = vadd.f32 %v9739, 0.00028619796
    %v9741 = vmul.f32 %v9738, %v9740
    %v9742 = vadd.f32 %v9741, 0.0036580483
    %v9743 = vmul.f32 %v9738, %v9742
    %v9744 = vadd.f32 %v9743, 0.05243302
    %v9745 = vmul.f32 %v9738, %v9744
    %v9746 = vadd.f32 %v9745, 0.18741608
    %v9747 = vmul.f32 %v9738, %v9746
    %v9748 = vadd.f32 %v9747, 1.1283791
    %v9749 = vmul.f32 %v9253, %v9748
    %v9750 = vmul.f32 %v9738, 3.8918573e-05
    %v9751 = vadd.f32 %v9750, 0.001143296
    %v9752 = vmul.f32 %v9738, %v9751
    %v9753 = vadd.f32 %v9752, 0.014752088
    %v9754 = vmul.f32 %v9738, %v9753
    %v9755 = vadd.f32 %v9754, 0.112945676
    %v9756 = vmul.f32 %v9738, %v9755
    %v9757 = vadd.f32 %v9756, 0.4994258
    %v9758 = vmul.f32 %v9738, %v9757
    %v9759 = vadd.f32 %v9758, 1.0
    %v9760 = vrcp.pop %v9759
    %v9761 = vmul.f32 %v9759, %v9760
    %v9762 = vsub.f32 1.0, %v9761
    %v9763 = vmul.f32 %v9760, %v9762
    %v9764 = vadd.f32 %v9760, %v9763
    %vm9765 = vweird.f32 %v9759
    %vm9766 = vweird.f32 %v9760
    %vm9767 = vmor %vm9765, %vm9766
    %v9768 = vsel %vm9767, %v9760, %v9764
    %v9769 = vand.u32 2147483647, %v9759
    %vm9770 = vcmp.eq.f32.partialorder %v9769, 8.507059e+37
    %v9771 = vand.u32 %v9759, 2147483648
    %v9772 = vor.u32 1.1754944e-38, %v9771
    %v9773 = vsel %vm9770, %v9772, %v9768
    %v9774 = vmul.f32 %v9749, %v9773
    %v9775 = vmin.f32 %v9774, 1.0
    %v9776 = vmax.f32 %v9775, -1.0
    %v9777 = vmul.f32 %v9254, %v9254
    %v9778 = vmin.f32 16.0, %v9777
    %v9779 = vmul.f32 %v9778, 2.1237322e-06
    %v9780 = vadd.f32 %v9779, 0.00028619796
    %v9781 = vmul.f32 %v9778, %v9780
    %v9782 = vadd.f32 %v9781, 0.0036580483
    %v9783 = vmul.f32 %v9778, %v9782
    %v9784 = vadd.f32 %v9783, 0.05243302
    %v9785 = vmul.f32 %v9778, %v9784
    %v9786 = vadd.f32 %v9785, 0.18741608
    %v9787 = vmul.f32 %v9778, %v9786
    %v9788 = vadd.f32 %v9787, 1.1283791
    %v9789 = vmul.f32 %v9254, %v9788
    %v9790 = vmul.f32 %v9778, 3.8918573e-05
    %v9791 = vadd.f32 %v9790, 0.001143296
    %v9792 = vmul.f32 %v9778, %v9791
    %v9793 = vadd.f32 %v9792, 0.014752088
    %v9794 = vmul.f32 %v9778, %v9793
    %v9795 = vadd.f32 %v9794, 0.112945676
    %v9796 = vmul.f32 %v9778, %v9795
    %v9797 = vadd.f32 %v9796, 0.4994258
    %v9798 = vmul.f32 %v9778, %v9797
    %v9799 = vadd.f32 %v9798, 1.0
    %v9800 = vrcp.pop %v9799
    %v9801 = vmul.f32 %v9799, %v9800
    %v9802 = vsub.f32 1.0, %v9801
    %v9803 = vmul.f32 %v9800, %v9802
    %v9804 = vadd.f32 %v9800, %v9803
    %vm9805 = vweird.f32 %v9799
    %vm9806 = vweird.f32 %v9800
    %vm9807 = vmor %vm9805, %vm9806
    %v9808 = vsel %vm9807, %v9800, %v9804
    %v9809 = vand.u32 2147483647, %v9799
    %vm9810 = vcmp.eq.f32.partialorder %v9809, 8.507059e+37
    %v9811 = vand.u32 %v9799, 2147483648
    %v9812 = vor.u32 1.1754944e-38, %v9811
    %v9813 = vsel %vm9810, %v9812, %v9808
    %v9814 = vmul.f32 %v9789, %v9813
    %v9815 = vmin.f32 %v9814, 1.0
    %v9816 = vmax.f32 %v9815, -1.0
    %v9817 = vmul.f32 %v9255, %v9255
    %v9818 = vmin.f32 16.0, %v9817
    %v9819 = vmul.f32 %v9818, 2.1237322e-06
    %v9820 = vadd.f32 %v9819, 0.00028619796
    %v9821 = vmul.f32 %v9818, %v9820
    %v9822 = vadd.f32 %v9821, 0.0036580483
    %v9823 = vmul.f32 %v9818, %v9822
    %v9824 = vadd.f32 %v9823, 0.05243302
    %v9825 = vmul.f32 %v9818, %v9824
    %v9826 = vadd.f32 %v9825, 0.18741608
    %v9827 = vmul.f32 %v9818, %v9826
    %v9828 = vadd.f32 %v9827, 1.1283791
    %v9829 = vmul.f32 %v9255, %v9828
    %v9830 = vmul.f32 %v9818, 3.8918573e-05
    %v9831 = vadd.f32 %v9830, 0.001143296
    %v9832 = vmul.f32 %v9818, %v9831
    %v9833 = vadd.f32 %v9832, 0.014752088
    %v9834 = vmul.f32 %v9818, %v9833
    %v9835 = vadd.f32 %v9834, 0.112945676
    %v9836 = vmul.f32 %v9818, %v9835
    %v9837 = vadd.f32 %v9836, 0.4994258
    %v9838 = vmul.f32 %v9818, %v9837
    %v9839 = vadd.f32 %v9838, 1.0
    %v9840 = vrcp.pop %v9839
    %v9841 = vmul.f32 %v9839, %v9840
    %v9842 = vsub.f32 1.0, %v9841
    %v9843 = vmul.f32 %v9840, %v9842
    %v9844 = vadd.f32 %v9840, %v9843
    %vm9845 = vweird.f32 %v9839
    %vm9846 = vweird.f32 %v9840
    %vm9847 = vmor %vm9845, %vm9846
    %v9848 = vsel %vm9847, %v9840, %v9844
    %v9849 = vand.u32 2147483647, %v9839
    %vm9850 = vcmp.eq.f32.partialorder %v9849, 8.507059e+37
    %v9851 = vand.u32 %v9839, 2147483648
    %v9852 = vor.u32 1.1754944e-38, %v9851
    %v9853 = vsel %vm9850, %v9852, %v9848
    %v9854 = vmul.f32 %v9829, %v9853
    %v9855 = vmin.f32 %v9854, 1.0
    %v9856 = vmax.f32 %v9855, -1.0
    %v9857 = vmul.f32 %v9256, %v9256
    %v9858 = vmin.f32 16.0, %v9857
    %v9859 = vmul.f32 %v9858, 2.1237322e-06
    %v9860 = vadd.f32 %v9859, 0.00028619796
    %v9861 = vmul.f32 %v9858, %v9860
    %v9862 = vadd.f32 %v9861, 0.0036580483
    %v9863 = vmul.f32 %v9858, %v9862
    %v9864 = vadd.f32 %v9863, 0.05243302
    %v9865 = vmul.f32 %v9858, %v9864
    %v9866 = vadd.f32 %v9865, 0.18741608
    %v9867 = vmul.f32 %v9858, %v9866
    %v9868 = vadd.f32 %v9867, 1.1283791
    %v9869 = vmul.f32 %v9256, %v9868
    %v9870 = vmul.f32 %v9858, 3.8918573e-05
    %v9871 = vadd.f32 %v9870, 0.001143296
    %v9872 = vmul.f32 %v9858, %v9871
    %v9873 = vadd.f32 %v9872, 0.014752088
    %v9874 = vmul.f32 %v9858, %v9873
    %v9875 = vadd.f32 %v9874, 0.112945676
    %v9876 = vmul.f32 %v9858, %v9875
    %v9877 = vadd.f32 %v9876, 0.4994258
    %v9878 = vmul.f32 %v9858, %v9877
    %v9879 = vadd.f32 %v9878, 1.0
    %v9880 = vrcp.pop %v9879
    %v9881 = vmul.f32 %v9879, %v9880
    %v9882 = vsub.f32 1.0, %v9881
    %v9883 = vmul.f32 %v9880, %v9882
    %v9884 = vadd.f32 %v9880, %v9883
    %vm9885 = vweird.f32 %v9879
    %vm9886 = vweird.f32 %v9880
    %vm9887 = vmor %vm9885, %vm9886
    %v9888 = vsel %vm9887, %v9880, %v9884
    %v9889 = vand.u32 2147483647, %v9879
    %vm9890 = vcmp.eq.f32.partialorder %v9889, 8.507059e+37
    %v9891 = vand.u32 %v9879, 2147483648
    %v9892 = vor.u32 1.1754944e-38, %v9891
    %v9893 = vsel %vm9890, %v9892, %v9888
    %v9894 = vmul.f32 %v9869, %v9893
    %v9895 = vmin.f32 %v9894, 1.0
    %v9896 = vmax.f32 %v9895, -1.0
    %v9897 = vadd.f32 %v9296, 1.0
    %v9898 = vadd.f32 %v9336, 1.0
    %v9899 = vadd.f32 %v9376, 1.0
    %v9900 = vadd.f32 %v9416, 1.0
    %v9901 = vadd.f32 %v9456, 1.0
    %v9902 = vadd.f32 %v9496, 1.0
    %v9903 = vadd.f32 %v9536, 1.0
    %v9904 = vadd.f32 %v9576, 1.0
    %v9905 = vadd.f32 %v9616, 1.0
    %v9906 = vadd.f32 %v9656, 1.0
    %v9907 = vadd.f32 %v9696, 1.0
    %v9908 = vadd.f32 %v9736, 1.0
    %v9909 = vadd.f32 %v9776, 1.0
    %v9910 = vadd.f32 %v9816, 1.0
    %v9911 = vadd.f32 %v9856, 1.0
    %v9912 = vadd.f32 %v9896, 1.0
    %v9913 = vmul.f32 %v9225, %v9897
    %v9914 = vmul.f32 %v9226, %v9898
    %v9915 = vmul.f32 %v9227, %v9899
    %v9916 = vmul.f32 %v9228, %v9900
    %v9917 = vmul.f32 %v9229, %v9901
    %v9918 = vmul.f32 %v9230, %v9902
    %v9919 = vmul.f32 %v9231, %v9903
    %v9920 = vmul.f32 %v9232, %v9904
    %v9921 = vmul.f32 %v9233, %v9905
    %v9922 = vmul.f32 %v9234, %v9906
    %v9923 = vmul.f32 %v9235, %v9907
    %v9924 = vmul.f32 %v9236, %v9908
    %v9925 = vmul.f32 %v9237, %v9909
    %v9926 = vmul.f32 %v9238, %v9910
    %v9927 = vmul.f32 %v9239, %v9911
    %v9928 = vmul.f32 %v9240, %v9912
    %9929 = vst [vmem:[%s21] sm:$0xff] %v9913
    %9930 = vst [vmem:[%s21 + $0x8] sm:$0xff] %v9914
    %9931 = vst [vmem:[%s21 + $0x10] sm:$0xff] %v9915
    %9932 = vst [vmem:[%s21 + $0x18] sm:$0xff] %v9916
    %9933 = vst [vmem:[%s21 + $0x20] sm:$0xff] %v9917
    %9934 = vst [vmem:[%s21 + $0x28] sm:$0xff] %v9918
    %9935 = vst [vmem:[%s21 + $0x30] sm:$0xff] %v9919
    %9936 = vst [vmem:[%s21 + $0x38] sm:$0xff] %v9920
    %9937 = vst [vmem:[%s21 + $0x40] sm:$0xff] %v9921
    %9938 = vst [vmem:[%s21 + $0x48] sm:$0xff] %v9922
    %9939 = vst [vmem:[%s21 + $0x50] sm:$0xff] %v9923
    %9940 = vst [vmem:[%s21 + $0x58] sm:$0xff] %v9924
    %9941 = vst [vmem:[%s21 + $0x60] sm:$0xff] %v9925
    %9942 = vst [vmem:[%s21 + $0x68] sm:$0xff] %v9926
    %9943 = vst [vmem:[%s21 + $0x70] sm:$0xff] %v9927
    %9944 = vst [vmem:[%s21 + $0x78] sm:$0xff] %v9928
    // Predicated region
    $region170: #{dcnn_forward.1} parent=1 // pred_check
      _
    $region171: #{dcnn_forward.1} parent=1 // pred_check_branch
      %9946 = sbr.rel (0) target = $region173
    $region172: #{dcnn_forward.1} parent=1 // pred_region
      _
    $region173: #{dcnn_forward.1} parent=1 // pred_fallthru
      _
    // Predicated region
    $region174: #{dcnn_forward.1} parent=1 // pred_check
      _
    $region175: #{dcnn_forward.1} parent=1 // pred_check_branch
      %9948 = sbr.rel (0) target = $region177
    $region176: #{dcnn_forward.1} parent=1 // pred_region
      _
    $region177: #{dcnn_forward.1} parent=1 // pred_fallthru
      _
    %9949 = vsyncpa [#allocation3], 1
    %9950 = vsyncpa [#allocation5], 1
    %9951 = vsyncpa [#allocation8], 1
    %9952 = vsyncpa [#allocation11], 1
    %9953 = vsyncpa [#allocation14], 1
    %9954 = vsyncpa [#allocation17], 1
    %9955 = vsyncpa [#allocation20], 1
    %9956 = vsyncpa [#allocation23], 1
    %9957 = vsyncpa [#allocation26], 1
    %9958 = vsyncpa [#allocation29], 1
    %9959 = vsyncpa [#allocation32], 1

</llo_original>
